<compile_context>
chip_gen: v6e
topology: v6e:2x2x1
jax: 0.10.0
libtpu: 0.0.40
codegen_flags: <defaults>
</compile_context>

<pallas_src>
import functools

import jax
import jax.numpy as jnp
from jax.experimental import pallas as pl
from jax.experimental.pallas import tpu as pltpu

# ----------------------------------------------------------------------------
# Model definition (layer sizes from the PyTorch module)
# ----------------------------------------------------------------------------
# encoder: 784->128->64->32->16->8->4 (ReLU after each)
# fc_mu / fc_log_var: 4->2
# decoder: 2->4->8->16->32->64->128->784 (ReLU between, Sigmoid at the end)
ENC_DIMS = [(784, 128), (128, 64), (64, 32), (32, 16), (16, 8), (8, 4)]
MU_DIM = (4, 2)
LV_DIM = (4, 2)
DEC_DIMS = [(2, 4), (4, 8), (8, 16), (16, 32), (32, 64), (64, 128), (128, 784)]
ALL_DIMS = ENC_DIMS + [MU_DIM, LV_DIM] + DEC_DIMS  # 15 nn.Linear layers

IMG = 784   # 28*28 (used directly; no 896 padding anymore)
HID = 128   # padded width of every hidden layer
N_MID = 12  # stacked 128x128 layers: enc1..5, fused mu|lv head, dec0..5


# ----------------------------------------------------------------------------
# Parameter construction (deterministic, PyTorch nn.Linear-style init)
# ----------------------------------------------------------------------------
def make_params(key):
  Ws, bs = [], []
  for (fan_in, fan_out) in ALL_DIMS:
    key, kw, kb = jax.random.split(key, 3)
    bound = 1.0 / jnp.sqrt(float(fan_in))
    W = jax.random.uniform(kw, (fan_in, fan_out), jnp.float32, -bound, bound)
    b = jax.random.uniform(kb, (fan_out,), jnp.float32, -bound, bound)
    Ws.append(W)
    bs.append(b)
  return Ws, bs


def pack_params(Ws, bs):
  """Pack/fuse the 15 PyTorch layers into the kernel's stacked bf16 layout.

  Returns (W0, W_mid, W_last, b_mid, b_last):
    W0    : (784, 128)      bf16   encoder layer 0
    W_mid : (12, 128, 128)  bf16   rows 0..4 enc1..5, row 5 fused mu|lv head,
                                   row 6 decoder0 (duplicated), rows 7..11 dec1..5
    W_last: (128, 784)      bf16   decoder last layer
    b_mid : (13, 1, 128)    f32    biases for layer0 + the 12 middle layers
    b_last: (1, 784)        f32    decoder last bias
  """
  f32, bf16 = jnp.float32, jnp.bfloat16
  W0 = Ws[0].astype(bf16)

  mids = []
  mids_b = [jnp.zeros((1, HID), f32).at[0, :128].set(bs[0])]

  # encoder layers 1..5, zero-padded to (128,128).
  for i in range(1, 6):
    fi, fo = ALL_DIMS[i]
    mids.append(jnp.zeros((HID, HID), f32).at[:fi, :fo].set(Ws[i]))
    mids_b.append(jnp.zeros((1, HID), f32).at[0, :fo].set(bs[i]))

  # fused mu / log_var head: mu -> cols 0:2, log_var -> cols 2:4.
  Wh = (jnp.zeros((HID, HID), f32)
        .at[:4, 0:2].set(Ws[6])
        .at[:4, 2:4].set(Ws[7]))
  bh = (jnp.zeros((1, HID), f32)
        .at[0, 0:2].set(bs[6])
        .at[0, 2:4].set(bs[7]))
  mids.append(Wh)
  mids_b.append(bh)

  # decoder layer 0 (2->4): true weight duplicated at rows 0:2 AND rows 2:4 so
  # z = [mu | eps*std | 0...] gives z @ W == (mu + eps*std) @ W exactly.
  Wd0 = (jnp.zeros((HID, HID), f32)
         .at[0:2, 0:4].set(Ws[8])
         .at[2:4, 0:4].set(Ws[8]))
  bd0 = jnp.zeros((1, HID), f32).at[0, 0:4].set(bs[8])
  mids.append(Wd0)
  mids_b.append(bd0)

  # decoder layers 1..5, zero-padded to (128,128).
  for i in range(9, 14):
    fi, fo = ALL_DIMS[i]
    mids.append(jnp.zeros((HID, HID), f32).at[:fi, :fo].set(Ws[i]))
    mids_b.append(jnp.zeros((1, HID), f32).at[0, :fo].set(bs[i]))

  W_mid = jnp.stack(mids).astype(bf16)       # (12, 128, 128)
  b_mid = jnp.stack(mids_b)                  # (13, 1, 128) f32
  W_last = Ws[14].astype(bf16)               # (128, 784)
  b_last = bs[14].reshape(1, IMG)            # (1, 784) f32
  return W0, W_mid, W_last, b_mid, b_last


# ----------------------------------------------------------------------------
# Pallas kernel: full VAE forward for one batch tile
# ----------------------------------------------------------------------------
def vae_kernel(x_ref, eps_ref, w0_ref, wmid_ref, wlast_ref, bmid_ref,
               blast_ref, xr_ref, head_ref):
  bf16 = jnp.bfloat16

  # --- encoder ---------------------------------------------------------------
  # layer 0: bf16 x @ bf16 W0, f32 accumulation.
  h = jnp.dot(x_ref[...], w0_ref[...],
              preferred_element_type=jnp.float32) + bmid_ref[0]
  h = jnp.maximum(h, 0.0)
  # layers 1..5 (stacked rows 0..4).
  for i in range(5):
    h = jnp.dot(h.astype(bf16), wmid_ref[i],
                preferred_element_type=jnp.float32) + bmid_ref[i + 1]
    h = jnp.maximum(h, 0.0)

  # --- fused mu / log_var head (stacked row 5) --------------------------------
  ml = jnp.dot(h.astype(bf16), wmid_ref[5],
               preferred_element_type=jnp.float32) + bmid_ref[6]
  # Only lanes 0:4 are meaningful (mu | log_var); emit a small (tb, 8) block.
  head_ref[...] = ml[:, 0:8]

  # --- reparameterize without lane shuffles -----------------------------------
  # eps is pre-placed in lanes 2:4 (zero elsewhere).  Lane-mask keeps mu in
  # lanes 0:2; eps * exp(0.5*log_var) lands in lanes 2:4; every other lane of z
  # is exactly zero because eps is zero there and the mask kills ml there.
  # INVARIANT: keep eps_pad zero outside lanes 2:4 and decoder0 weight rows
  # 4:128 zero, or z silently picks up garbage.
  lane_mask = (jax.lax.broadcasted_iota(jnp.int32, (1, HID), 1) < 2
               ).astype(jnp.float32)
  z = ml * lane_mask + eps_ref[...] * jnp.exp(0.5 * ml)

  # --- decoder (stacked rows 6..11 then the big last layer) -------------------
  h = z
  for i in range(6, 12):
    h = jnp.dot(h.astype(bf16), wmid_ref[i],
                preferred_element_type=jnp.float32) + bmid_ref[i + 1]
    h = jnp.maximum(h, 0.0)
  logits = jnp.dot(h.astype(bf16), wlast_ref[...],
                   preferred_element_type=jnp.float32) + blast_ref[...]
  # sigmoid: exp (EUP) + approximate reciprocal (EUP slot) -> epilogue ~free.
  # approx=True costs ~1e-3 relative error (intentional; inside 1e-2 tolerance).
  xr = pl.reciprocal(1.0 + jnp.exp(-logits), approx=True)
  xr_ref[...] = xr.astype(xr_ref.dtype)


# ----------------------------------------------------------------------------
# Wrapper: builds grid/BlockSpecs and calls the kernel
# ----------------------------------------------------------------------------
@functools.partial(jax.jit, static_argnames=("tb",))
def vae_forward(x, eps, params, *, tb=256):
  W0, W_mid, W_last, b_mid, b_last = params
  Bsz = x.shape[0]
  n_tiles = Bsz // tb
  # >= 2 parallel tiles so both v7x TensorCores get work (no-op on v5e/v6e).
  assert Bsz % tb == 0 and n_tiles >= 2, "need Bsz % tb == 0 and >= 2 tiles"
  grid = (n_tiles,)

  # bf16 input stream (the first matmul is bf16 anyway); eps placed at
  # lanes 2:4 of a 128-wide block to match the kernel's lane layout.
  # TODO(synk): eps is supplied externally (instead of pltpu.prng_* in-kernel)
  # so the kernel stays bit-comparable with the reference / torch.randn_like.
  x = x.astype(jnp.bfloat16)
  eps_pad = jnp.zeros((Bsz, HID), jnp.float32).at[:, 2:4].set(eps)

  in_specs = [
      pl.BlockSpec((tb, IMG), lambda i: (i, 0)),        # x (bf16)
      pl.BlockSpec((tb, HID), lambda i: (i, 0)),        # eps (lanes 2:4)
      pl.BlockSpec(W0.shape, lambda i: (0, 0)),         # W0
      pl.BlockSpec(W_mid.shape, lambda i: (0, 0, 0)),   # stacked middle weights
      pl.BlockSpec(W_last.shape, lambda i: (0, 0)),     # W_last
      pl.BlockSpec(b_mid.shape, lambda i: (0, 0, 0)),   # stacked biases
      pl.BlockSpec(b_last.shape, lambda i: (0, 0)),     # last bias
  ]
  out_shape = (
      jax.ShapeDtypeStruct((Bsz, IMG), jnp.bfloat16),   # x_reconstructed
      jax.ShapeDtypeStruct((Bsz, 8), jnp.float32),      # mu | log_var (lanes 0:4)
  )
  out_specs = (
      pl.BlockSpec((tb, IMG), lambda i: (i, 0)),
      pl.BlockSpec((tb, 8), lambda i: (i, 0)),
  )

  # VMEM budget derived from the per-tile footprint (double-buffered I/O +
  # resident weights + f32 compute intermediates), clamped to limits that are
  # safe on v5e/v6e (128 MiB physical) and v7x (64 MiB physical).
  io_tile = tb * IMG * 2 + tb * HID * 4 + tb * IMG * 2 + tb * 8 * 4
  w_bytes = (W0.size + W_mid.size + W_last.size) * 2 + (b_mid.size + b_last.size) * 4
  est = 2 * (io_tile + w_bytes) + 8 * tb * IMG * 4
  vmem_limit = int(min(max(est, 32 * 1024 * 1024), 56 * 1024 * 1024))

  xr, head = pl.pallas_call(
      vae_kernel,
      out_shape=out_shape,
      grid=grid,
      in_specs=in_specs,
      out_specs=out_specs,
      compiler_params=pltpu.CompilerParams(
          dimension_semantics=("parallel",),   # shard batch tiles across TCs
          vmem_limit_bytes=vmem_limit),
  )(x, eps_pad, W0, W_mid, W_last, b_mid, b_last)

  # recover the PyTorch-shaped outputs (tiny slices, stay in bf16/f32).
  return xr, head[:, 0:2], head[:, 2:4]


# ----------------------------------------------------------------------------
# Pure-JAX reference (unpadded, unfused) mirroring the kernel's quantization
# ----------------------------------------------------------------------------
def vae_reference(x_bf16, eps, Ws, bs):
  bf16 = jnp.bfloat16

  def lin(h, W, b):
    return jnp.dot(h.astype(bf16), W.astype(bf16),
                   preferred_element_type=jnp.float32) + b

  h = x_bf16
  for i in range(6):
    h = jnp.maximum(lin(h, Ws[i], bs[i]), 0.0)
  mu = lin(h, Ws[6], bs[6])
  lv = lin(h, Ws[7], bs[7])
  std = jnp.exp(0.5 * lv)
  # decoder layer 0 mirrors the kernel's lane-split: mu and eps*std are
  # quantized to bf16 separately and share the (duplicated) weight.
  W8 = Ws[8].astype(bf16)
  h = (jnp.dot(mu.astype(bf16), W8, preferred_element_type=jnp.float32)
       + jnp.dot((eps * std).astype(bf16), W8, preferred_element_type=jnp.float32)
       + bs[8])
  h = jnp.maximum(h, 0.0)
  for i in range(9, 14):
    h = jnp.maximum(lin(h, Ws[i], bs[i]), 0.0)
  logits = lin(h, Ws[14], bs[14])
  return jax.nn.sigmoid(logits), mu, lv


# ----------------------------------------------------------------------------
if __name__ == "__main__":
  key = jax.random.PRNGKey(0)
  kparam, kx, keps = jax.random.split(key, 3)

  # Parameters (deterministic, no checkpoint).
  Ws, bs = make_params(kparam)
  params = pack_params(Ws, bs)

  # Batch of flattened 28x28 images: 2 batch tiles of 256 rows each
  # (>= 2 tiles so both v7x TensorCores get work; tb=256 keeps the MXU fed).
  B, TB = 512, 256
  x = jax.random.uniform(kx, (B, IMG), jnp.float32).astype(jnp.bfloat16)
  # Noise for the reparameterization trick (plays the role of torch.randn_like).
  eps = jax.random.normal(keps, (B, 2), jnp.float32)

  xr, mu, lv = vae_forward(x, eps, params, tb=TB)
  jax.block_until_ready((xr, mu, lv))

  xr_ref, mu_ref, lv_ref = vae_reference(x, eps, Ws, bs)
  assert xr.shape == (B, IMG) and mu.shape == (B, 2) and lv.shape == (B, 2)
  # mu / log_var: kernel and reference apply identical bf16 quantization.
  assert jnp.allclose(mu, mu_ref, atol=2e-3, rtol=2e-3)
  assert jnp.allclose(lv, lv_ref, atol=2e-3, rtol=2e-3)
  # reconstruction: bf16 output + approx reciprocal -> looser tolerance.
  assert jnp.allclose(xr.astype(jnp.float32), xr_ref, atol=1e-2, rtol=1e-2)

  print("KERNEL_OK")
</pallas_src>

<mosaic_0001>
module attributes {stable_mosaic.version = 11 : i64} {
  func.func @vae_kernel(%arg0: i32, %arg1: memref<256x784xbf16, #tpu.memory_space<vmem>>, %arg2: memref<256x128xf32, #tpu.memory_space<vmem>>, %arg3: memref<784x128xbf16, #tpu.memory_space<vmem>>, %arg4: memref<12x128x128xbf16, #tpu.memory_space<vmem>>, %arg5: memref<128x784xbf16, #tpu.memory_space<vmem>>, %arg6: memref<13x1x128xf32, #tpu.memory_space<vmem>>, %arg7: memref<1x784xf32, #tpu.memory_space<vmem>>, %arg8: memref<256x784xbf16, #tpu.memory_space<vmem>>, %arg9: memref<256x8xf32, #tpu.memory_space<vmem>>) attributes {dimension_semantics = [#tpu.dimension_semantics<parallel>], iteration_bounds = array<i64: 2>, scalar_prefetch = 0 : i64, scratch_operands = 0 : i64, tpu.core_type = #tpu.core_type<tc>, window_params = [{transform_indices = @transform_0, window_bounds = array<i64: 256, 784>}, {transform_indices = @transform_1, window_bounds = array<i64: 256, 128>}, {pipeline_mode = #tpu.pipeline_mode<synchronous>, transform_indices = @transform_2, window_bounds = array<i64: 784, 128>}, {pipeline_mode = #tpu.pipeline_mode<synchronous>, transform_indices = @transform_3, window_bounds = array<i64: 12, 128, 128>}, {pipeline_mode = #tpu.pipeline_mode<synchronous>, transform_indices = @transform_4, window_bounds = array<i64: 128, 784>}, {pipeline_mode = #tpu.pipeline_mode<synchronous>, transform_indices = @transform_5, window_bounds = array<i64: 13, 1, 128>}, {pipeline_mode = #tpu.pipeline_mode<synchronous>, transform_indices = @transform_6, window_bounds = array<i64: 1, 784>}, {transform_indices = @transform_7, window_bounds = array<i64: 256, 784>}, {transform_indices = @transform_8, window_bounds = array<i64: 256, 8>}]} {
    %c0 = arith.constant 0 : index
    %c0_0 = arith.constant 0 : index
    %0 = vector.load %arg1[%c0, %c0_0] : memref<256x784xbf16, #tpu.memory_space<vmem>>, vector<256x784xbf16>
    %c0_1 = arith.constant 0 : index
    %c0_2 = arith.constant 0 : index
    %1 = vector.load %arg3[%c0_1, %c0_2] : memref<784x128xbf16, #tpu.memory_space<vmem>>, vector<784x128xbf16>
    %cst = arith.constant dense<0.000000e+00> : vector<256x128xf32>
    %2 = tpu.matmul %0, %1, %cst {dimension_numbers = #tpu.dot_dimension_numbers<[1], [0], [0], [1], [0, 0, 1, 1], [], []>} : vector<256x784xbf16>, vector<784x128xbf16>, vector<256x128xf32> -> vector<256x128xf32>
    %c0_3 = arith.constant 0 : index
    %c0_4 = arith.constant 0 : index
    %c0_5 = arith.constant 0 : index
    %3 = vector.load %arg6[%c0_3, %c0_4, %c0_5] : memref<13x1x128xf32, #tpu.memory_space<vmem>>, vector<1x1x128xf32>
    %4 = vector.shape_cast %3 : vector<1x1x128xf32> to vector<1x128xf32>
    %5 = vector.broadcast %4 : vector<1x128xf32> to vector<256x128xf32>
    %6 = arith.addf %2, %5 : vector<256x128xf32>
    %cst_6 = arith.constant 0.000000e+00 : f32
    %7 = vector.broadcast %cst_6 : f32 to vector<256x128xf32>
    %8 = arith.maximumf %6, %7 : vector<256x128xf32>
    %9 = arith.truncf %8 : vector<256x128xf32> to vector<256x128xbf16>
    %c0_7 = arith.constant 0 : index
    %c0_8 = arith.constant 0 : index
    %c0_9 = arith.constant 0 : index
    %10 = vector.load %arg4[%c0_7, %c0_8, %c0_9] : memref<12x128x128xbf16, #tpu.memory_space<vmem>>, vector<1x128x128xbf16>
    %11 = vector.shape_cast %10 : vector<1x128x128xbf16> to vector<128x128xbf16>
    %cst_10 = arith.constant dense<0.000000e+00> : vector<256x128xf32>
    %12 = tpu.matmul %9, %11, %cst_10 {dimension_numbers = #tpu.dot_dimension_numbers<[1], [0], [0], [1], [0, 0, 1, 1], [], []>} : vector<256x128xbf16>, vector<128x128xbf16>, vector<256x128xf32> -> vector<256x128xf32>
    %c1 = arith.constant 1 : index
    %c0_11 = arith.constant 0 : index
    %c0_12 = arith.constant 0 : index
    %13 = vector.load %arg6[%c1, %c0_11, %c0_12] : memref<13x1x128xf32, #tpu.memory_space<vmem>>, vector<1x1x128xf32>
    %14 = vector.shape_cast %13 : vector<1x1x128xf32> to vector<1x128xf32>
    %15 = vector.broadcast %14 : vector<1x128xf32> to vector<256x128xf32>
    %16 = arith.addf %12, %15 : vector<256x128xf32>
    %cst_13 = arith.constant 0.000000e+00 : f32
    %17 = vector.broadcast %cst_13 : f32 to vector<256x128xf32>
    %18 = arith.maximumf %16, %17 : vector<256x128xf32>
    %19 = arith.truncf %18 : vector<256x128xf32> to vector<256x128xbf16>
    %c1_14 = arith.constant 1 : index
    %c0_15 = arith.constant 0 : index
    %c0_16 = arith.constant 0 : index
    %20 = vector.load %arg4[%c1_14, %c0_15, %c0_16] : memref<12x128x128xbf16, #tpu.memory_space<vmem>>, vector<1x128x128xbf16>
    %21 = vector.shape_cast %20 : vector<1x128x128xbf16> to vector<128x128xbf16>
    %cst_17 = arith.constant dense<0.000000e+00> : vector<256x128xf32>
    %22 = tpu.matmul %19, %21, %cst_17 {dimension_numbers = #tpu.dot_dimension_numbers<[1], [0], [0], [1], [0, 0, 1, 1], [], []>} : vector<256x128xbf16>, vector<128x128xbf16>, vector<256x128xf32> -> vector<256x128xf32>
    %c2 = arith.constant 2 : index
    %c0_18 = arith.constant 0 : index
    %c0_19 = arith.constant 0 : index
    %23 = vector.load %arg6[%c2, %c0_18, %c0_19] : memref<13x1x128xf32, #tpu.memory_space<vmem>>, vector<1x1x128xf32>
    %24 = vector.shape_cast %23 : vector<1x1x128xf32> to vector<1x128xf32>
    %25 = vector.broadcast %24 : vector<1x128xf32> to vector<256x128xf32>
    %26 = arith.addf %22, %25 : vector<256x128xf32>
    %cst_20 = arith.constant 0.000000e+00 : f32
    %27 = vector.broadcast %cst_20 : f32 to vector<256x128xf32>
    %28 = arith.maximumf %26, %27 : vector<256x128xf32>
    %29 = arith.truncf %28 : vector<256x128xf32> to vector<256x128xbf16>
    %c2_21 = arith.constant 2 : index
    %c0_22 = arith.constant 0 : index
    %c0_23 = arith.constant 0 : index
    %30 = vector.load %arg4[%c2_21, %c0_22, %c0_23] : memref<12x128x128xbf16, #tpu.memory_space<vmem>>, vector<1x128x128xbf16>
    %31 = vector.shape_cast %30 : vector<1x128x128xbf16> to vector<128x128xbf16>
    %cst_24 = arith.constant dense<0.000000e+00> : vector<256x128xf32>
    %32 = tpu.matmul %29, %31, %cst_24 {dimension_numbers = #tpu.dot_dimension_numbers<[1], [0], [0], [1], [0, 0, 1, 1], [], []>} : vector<256x128xbf16>, vector<128x128xbf16>, vector<256x128xf32> -> vector<256x128xf32>
    %c3 = arith.constant 3 : index
    %c0_25 = arith.constant 0 : index
    %c0_26 = arith.constant 0 : index
    %33 = vector.load %arg6[%c3, %c0_25, %c0_26] : memref<13x1x128xf32, #tpu.memory_space<vmem>>, vector<1x1x128xf32>
    %34 = vector.shape_cast %33 : vector<1x1x128xf32> to vector<1x128xf32>
    %35 = vector.broadcast %34 : vector<1x128xf32> to vector<256x128xf32>
    %36 = arith.addf %32, %35 : vector<256x128xf32>
    %cst_27 = arith.constant 0.000000e+00 : f32
    %37 = vector.broadcast %cst_27 : f32 to vector<256x128xf32>
    %38 = arith.maximumf %36, %37 : vector<256x128xf32>
    %39 = arith.truncf %38 : vector<256x128xf32> to vector<256x128xbf16>
    %c3_28 = arith.constant 3 : index
    %c0_29 = arith.constant 0 : index
    %c0_30 = arith.constant 0 : index
    %40 = vector.load %arg4[%c3_28, %c0_29, %c0_30] : memref<12x128x128xbf16, #tpu.memory_space<vmem>>, vector<1x128x128xbf16>
    %41 = vector.shape_cast %40 : vector<1x128x128xbf16> to vector<128x128xbf16>
    %cst_31 = arith.constant dense<0.000000e+00> : vector<256x128xf32>
    %42 = tpu.matmul %39, %41, %cst_31 {dimension_numbers = #tpu.dot_dimension_numbers<[1], [0], [0], [1], [0, 0, 1, 1], [], []>} : vector<256x128xbf16>, vector<128x128xbf16>, vector<256x128xf32> -> vector<256x128xf32>
    %c4 = arith.constant 4 : index
    %c0_32 = arith.constant 0 : index
    %c0_33 = arith.constant 0 : index
    %43 = vector.load %arg6[%c4, %c0_32, %c0_33] : memref<13x1x128xf32, #tpu.memory_space<vmem>>, vector<1x1x128xf32>
    %44 = vector.shape_cast %43 : vector<1x1x128xf32> to vector<1x128xf32>
    %45 = vector.broadcast %44 : vector<1x128xf32> to vector<256x128xf32>
    %46 = arith.addf %42, %45 : vector<256x128xf32>
    %cst_34 = arith.constant 0.000000e+00 : f32
    %47 = vector.broadcast %cst_34 : f32 to vector<256x128xf32>
    %48 = arith.maximumf %46, %47 : vector<256x128xf32>
    %49 = arith.truncf %48 : vector<256x128xf32> to vector<256x128xbf16>
    %c4_35 = arith.constant 4 : index
    %c0_36 = arith.constant 0 : index
    %c0_37 = arith.constant 0 : index
    %50 = vector.load %arg4[%c4_35, %c0_36, %c0_37] : memref<12x128x128xbf16, #tpu.memory_space<vmem>>, vector<1x128x128xbf16>
    %51 = vector.shape_cast %50 : vector<1x128x128xbf16> to vector<128x128xbf16>
    %cst_38 = arith.constant dense<0.000000e+00> : vector<256x128xf32>
    %52 = tpu.matmul %49, %51, %cst_38 {dimension_numbers = #tpu.dot_dimension_numbers<[1], [0], [0], [1], [0, 0, 1, 1], [], []>} : vector<256x128xbf16>, vector<128x128xbf16>, vector<256x128xf32> -> vector<256x128xf32>
    %c5 = arith.constant 5 : index
    %c0_39 = arith.constant 0 : index
    %c0_40 = arith.constant 0 : index
    %53 = vector.load %arg6[%c5, %c0_39, %c0_40] : memref<13x1x128xf32, #tpu.memory_space<vmem>>, vector<1x1x128xf32>
    %54 = vector.shape_cast %53 : vector<1x1x128xf32> to vector<1x128xf32>
    %55 = vector.broadcast %54 : vector<1x128xf32> to vector<256x128xf32>
    %56 = arith.addf %52, %55 : vector<256x128xf32>
    %cst_41 = arith.constant 0.000000e+00 : f32
    %57 = vector.broadcast %cst_41 : f32 to vector<256x128xf32>
    %58 = arith.maximumf %56, %57 : vector<256x128xf32>
    %59 = arith.truncf %58 : vector<256x128xf32> to vector<256x128xbf16>
    %c5_42 = arith.constant 5 : index
    %c0_43 = arith.constant 0 : index
    %c0_44 = arith.constant 0 : index
    %60 = vector.load %arg4[%c5_42, %c0_43, %c0_44] : memref<12x128x128xbf16, #tpu.memory_space<vmem>>, vector<1x128x128xbf16>
    %61 = vector.shape_cast %60 : vector<1x128x128xbf16> to vector<128x128xbf16>
    %cst_45 = arith.constant dense<0.000000e+00> : vector<256x128xf32>
    %62 = tpu.matmul %59, %61, %cst_45 {dimension_numbers = #tpu.dot_dimension_numbers<[1], [0], [0], [1], [0, 0, 1, 1], [], []>} : vector<256x128xbf16>, vector<128x128xbf16>, vector<256x128xf32> -> vector<256x128xf32>
    %c6 = arith.constant 6 : index
    %c0_46 = arith.constant 0 : index
    %c0_47 = arith.constant 0 : index
    %63 = vector.load %arg6[%c6, %c0_46, %c0_47] : memref<13x1x128xf32, #tpu.memory_space<vmem>>, vector<1x1x128xf32>
    %64 = vector.shape_cast %63 : vector<1x1x128xf32> to vector<1x128xf32>
    %65 = vector.broadcast %64 : vector<1x128xf32> to vector<256x128xf32>
    %66 = arith.addf %62, %65 : vector<256x128xf32>
    %67 = vector.extract_strided_slice %66 {offsets = [0, 0], sizes = [256, 8], strides = [1, 1]} : vector<256x128xf32> to vector<256x8xf32>
    %c0_48 = arith.constant 0 : index
    %c0_49 = arith.constant 0 : index
    %68 = vector.load %arg9[%c0_48, %c0_49] : memref<256x8xf32, #tpu.memory_space<vmem>>, vector<256x8xf32>
    tpu.vector_store %arg9[%c0_48, %c0_49], %67 {strides = array<i32>} : memref<256x8xf32, #tpu.memory_space<vmem>>, vector<256x8xf32>,
    %69 = tpu.iota {dimensions = array<i32: 1>} : vector<1x128xi32>
    %c2_i32 = arith.constant 2 : i32
    %70 = vector.broadcast %c2_i32 : i32 to vector<1x128xi32>
    %71 = arith.cmpi slt, %69, %70 : vector<1x128xi32>
    %72 = arith.extui %71 : vector<1x128xi1> to vector<1x128xi32>
    %73 = arith.sitofp %72 : vector<1x128xi32> to vector<1x128xf32>
    %74 = vector.broadcast %73 : vector<1x128xf32> to vector<256x128xf32>
    %75 = arith.mulf %66, %74 : vector<256x128xf32>
    %c0_50 = arith.constant 0 : index
    %c0_51 = arith.constant 0 : index
    %76 = vector.load %arg2[%c0_50, %c0_51] : memref<256x128xf32, #tpu.memory_space<vmem>>, vector<256x128xf32>
    %cst_52 = arith.constant 5.000000e-01 : f32
    %77 = vector.broadcast %cst_52 : f32 to vector<256x128xf32>
    %78 = arith.mulf %77, %66 : vector<256x128xf32>
    %79 = math.exp %78 : vector<256x128xf32>
    %80 = arith.mulf %76, %79 : vector<256x128xf32>
    %81 = arith.addf %75, %80 : vector<256x128xf32>
    %82 = arith.truncf %81 : vector<256x128xf32> to vector<256x128xbf16>
    %c6_53 = arith.constant 6 : index
    %c0_54 = arith.constant 0 : index
    %c0_55 = arith.constant 0 : index
    %83 = vector.load %arg4[%c6_53, %c0_54, %c0_55] : memref<12x128x128xbf16, #tpu.memory_space<vmem>>, vector<1x128x128xbf16>
    %84 = vector.shape_cast %83 : vector<1x128x128xbf16> to vector<128x128xbf16>
    %cst_56 = arith.constant dense<0.000000e+00> : vector<256x128xf32>
    %85 = tpu.matmul %82, %84, %cst_56 {dimension_numbers = #tpu.dot_dimension_numbers<[1], [0], [0], [1], [0, 0, 1, 1], [], []>} : vector<256x128xbf16>, vector<128x128xbf16>, vector<256x128xf32> -> vector<256x128xf32>
    %c7 = arith.constant 7 : index
    %c0_57 = arith.constant 0 : index
    %c0_58 = arith.constant 0 : index
    %86 = vector.load %arg6[%c7, %c0_57, %c0_58] : memref<13x1x128xf32, #tpu.memory_space<vmem>>, vector<1x1x128xf32>
    %87 = vector.shape_cast %86 : vector<1x1x128xf32> to vector<1x128xf32>
    %88 = vector.broadcast %87 : vector<1x128xf32> to vector<256x128xf32>
    %89 = arith.addf %85, %88 : vector<256x128xf32>
    %cst_59 = arith.constant 0.000000e+00 : f32
    %90 = vector.broadcast %cst_59 : f32 to vector<256x128xf32>
    %91 = arith.maximumf %89, %90 : vector<256x128xf32>
    %92 = arith.truncf %91 : vector<256x128xf32> to vector<256x128xbf16>
    %c7_60 = arith.constant 7 : index
    %c0_61 = arith.constant 0 : index
    %c0_62 = arith.constant 0 : index
    %93 = vector.load %arg4[%c7_60, %c0_61, %c0_62] : memref<12x128x128xbf16, #tpu.memory_space<vmem>>, vector<1x128x128xbf16>
    %94 = vector.shape_cast %93 : vector<1x128x128xbf16> to vector<128x128xbf16>
    %cst_63 = arith.constant dense<0.000000e+00> : vector<256x128xf32>
    %95 = tpu.matmul %92, %94, %cst_63 {dimension_numbers = #tpu.dot_dimension_numbers<[1], [0], [0], [1], [0, 0, 1, 1], [], []>} : vector<256x128xbf16>, vector<128x128xbf16>, vector<256x128xf32> -> vector<256x128xf32>
    %c8 = arith.constant 8 : index
    %c0_64 = arith.constant 0 : index
    %c0_65 = arith.constant 0 : index
    %96 = vector.load %arg6[%c8, %c0_64, %c0_65] : memref<13x1x128xf32, #tpu.memory_space<vmem>>, vector<1x1x128xf32>
    %97 = vector.shape_cast %96 : vector<1x1x128xf32> to vector<1x128xf32>
    %98 = vector.broadcast %97 : vector<1x128xf32> to vector<256x128xf32>
    %99 = arith.addf %95, %98 : vector<256x128xf32>
    %cst_66 = arith.constant 0.000000e+00 : f32
    %100 = vector.broadcast %cst_66 : f32 to vector<256x128xf32>
    %101 = arith.maximumf %99, %100 : vector<256x128xf32>
    %102 = arith.truncf %101 : vector<256x128xf32> to vector<256x128xbf16>
    %c8_67 = arith.constant 8 : index
    %c0_68 = arith.constant 0 : index
    %c0_69 = arith.constant 0 : index
    %103 = vector.load %arg4[%c8_67, %c0_68, %c0_69] : memref<12x128x128xbf16, #tpu.memory_space<vmem>>, vector<1x128x128xbf16>
    %104 = vector.shape_cast %103 : vector<1x128x128xbf16> to vector<128x128xbf16>
    %cst_70 = arith.constant dense<0.000000e+00> : vector<256x128xf32>
    %105 = tpu.matmul %102, %104, %cst_70 {dimension_numbers = #tpu.dot_dimension_numbers<[1], [0], [0], [1], [0, 0, 1, 1], [], []>} : vector<256x128xbf16>, vector<128x128xbf16>, vector<256x128xf32> -> vector<256x128xf32>
    %c9 = arith.constant 9 : index
    %c0_71 = arith.constant 0 : index
    %c0_72 = arith.constant 0 : index
    %106 = vector.load %arg6[%c9, %c0_71, %c0_72] : memref<13x1x128xf32, #tpu.memory_space<vmem>>, vector<1x1x128xf32>
    %107 = vector.shape_cast %106 : vector<1x1x128xf32> to vector<1x128xf32>
    %108 = vector.broadcast %107 : vector<1x128xf32> to vector<256x128xf32>
    %109 = arith.addf %105, %108 : vector<256x128xf32>
    %cst_73 = arith.constant 0.000000e+00 : f32
    %110 = vector.broadcast %cst_73 : f32 to vector<256x128xf32>
    %111 = arith.maximumf %109, %110 : vector<256x128xf32>
    %112 = arith.truncf %111 : vector<256x128xf32> to vector<256x128xbf16>
    %c9_74 = arith.constant 9 : index
    %c0_75 = arith.constant 0 : index
    %c0_76 = arith.constant 0 : index
    %113 = vector.load %arg4[%c9_74, %c0_75, %c0_76] : memref<12x128x128xbf16, #tpu.memory_space<vmem>>, vector<1x128x128xbf16>
    %114 = vector.shape_cast %113 : vector<1x128x128xbf16> to vector<128x128xbf16>
    %cst_77 = arith.constant dense<0.000000e+00> : vector<256x128xf32>
    %115 = tpu.matmul %112, %114, %cst_77 {dimension_numbers = #tpu.dot_dimension_numbers<[1], [0], [0], [1], [0, 0, 1, 1], [], []>} : vector<256x128xbf16>, vector<128x128xbf16>, vector<256x128xf32> -> vector<256x128xf32>
    %c10 = arith.constant 10 : index
    %c0_78 = arith.constant 0 : index
    %c0_79 = arith.constant 0 : index
    %116 = vector.load %arg6[%c10, %c0_78, %c0_79] : memref<13x1x128xf32, #tpu.memory_space<vmem>>, vector<1x1x128xf32>
    %117 = vector.shape_cast %116 : vector<1x1x128xf32> to vector<1x128xf32>
    %118 = vector.broadcast %117 : vector<1x128xf32> to vector<256x128xf32>
    %119 = arith.addf %115, %118 : vector<256x128xf32>
    %cst_80 = arith.constant 0.000000e+00 : f32
    %120 = vector.broadcast %cst_80 : f32 to vector<256x128xf32>
    %121 = arith.maximumf %119, %120 : vector<256x128xf32>
    %122 = arith.truncf %121 : vector<256x128xf32> to vector<256x128xbf16>
    %c10_81 = arith.constant 10 : index
    %c0_82 = arith.constant 0 : index
    %c0_83 = arith.constant 0 : index
    %123 = vector.load %arg4[%c10_81, %c0_82, %c0_83] : memref<12x128x128xbf16, #tpu.memory_space<vmem>>, vector<1x128x128xbf16>
    %124 = vector.shape_cast %123 : vector<1x128x128xbf16> to vector<128x128xbf16>
    %cst_84 = arith.constant dense<0.000000e+00> : vector<256x128xf32>
    %125 = tpu.matmul %122, %124, %cst_84 {dimension_numbers = #tpu.dot_dimension_numbers<[1], [0], [0], [1], [0, 0, 1, 1], [], []>} : vector<256x128xbf16>, vector<128x128xbf16>, vector<256x128xf32> -> vector<256x128xf32>
    %c11 = arith.constant 11 : index
    %c0_85 = arith.constant 0 : index
    %c0_86 = arith.constant 0 : index
    %126 = vector.load %arg6[%c11, %c0_85, %c0_86] : memref<13x1x128xf32, #tpu.memory_space<vmem>>, vector<1x1x128xf32>
    %127 = vector.shape_cast %126 : vector<1x1x128xf32> to vector<1x128xf32>
    %128 = vector.broadcast %127 : vector<1x128xf32> to vector<256x128xf32>
    %129 = arith.addf %125, %128 : vector<256x128xf32>
    %cst_87 = arith.constant 0.000000e+00 : f32
    %130 = vector.broadcast %cst_87 : f32 to vector<256x128xf32>
    %131 = arith.maximumf %129, %130 : vector<256x128xf32>
    %132 = arith.truncf %131 : vector<256x128xf32> to vector<256x128xbf16>
    %c11_88 = arith.constant 11 : index
    %c0_89 = arith.constant 0 : index
    %c0_90 = arith.constant 0 : index
    %133 = vector.load %arg4[%c11_88, %c0_89, %c0_90] : memref<12x128x128xbf16, #tpu.memory_space<vmem>>, vector<1x128x128xbf16>
    %134 = vector.shape_cast %133 : vector<1x128x128xbf16> to vector<128x128xbf16>
    %cst_91 = arith.constant dense<0.000000e+00> : vector<256x128xf32>
    %135 = tpu.matmul %132, %134, %cst_91 {dimension_numbers = #tpu.dot_dimension_numbers<[1], [0], [0], [1], [0, 0, 1, 1], [], []>} : vector<256x128xbf16>, vector<128x128xbf16>, vector<256x128xf32> -> vector<256x128xf32>
    %c12 = arith.constant 12 : index
    %c0_92 = arith.constant 0 : index
    %c0_93 = arith.constant 0 : index
    %136 = vector.load %arg6[%c12, %c0_92, %c0_93] : memref<13x1x128xf32, #tpu.memory_space<vmem>>, vector<1x1x128xf32>
    %137 = vector.shape_cast %136 : vector<1x1x128xf32> to vector<1x128xf32>
    %138 = vector.broadcast %137 : vector<1x128xf32> to vector<256x128xf32>
    %139 = arith.addf %135, %138 : vector<256x128xf32>
    %cst_94 = arith.constant 0.000000e+00 : f32
    %140 = vector.broadcast %cst_94 : f32 to vector<256x128xf32>
    %141 = arith.maximumf %139, %140 : vector<256x128xf32>
    %142 = arith.truncf %141 : vector<256x128xf32> to vector<256x128xbf16>
    %c0_95 = arith.constant 0 : index
    %c0_96 = arith.constant 0 : index
    %143 = vector.load %arg5[%c0_95, %c0_96] : memref<128x784xbf16, #tpu.memory_space<vmem>>, vector<128x784xbf16>
    %cst_97 = arith.constant dense<0.000000e+00> : vector<256x784xf32>
    %144 = tpu.matmul %142, %143, %cst_97 {dimension_numbers = #tpu.dot_dimension_numbers<[1], [0], [0], [1], [0, 0, 1, 1], [], []>} : vector<256x128xbf16>, vector<128x784xbf16>, vector<256x784xf32> -> vector<256x784xf32>
    %c0_98 = arith.constant 0 : index
    %c0_99 = arith.constant 0 : index
    %145 = vector.load %arg7[%c0_98, %c0_99] : memref<1x784xf32, #tpu.memory_space<vmem>>, vector<1x784xf32>
    %146 = vector.broadcast %145 : vector<1x784xf32> to vector<256x784xf32>
    %147 = arith.addf %144, %146 : vector<256x784xf32>
    %cst_100 = arith.constant 0.000000e+00 : f32
    %148 = vector.broadcast %cst_100 : f32 to vector<256x784xf32>
    %149 = arith.subf %148, %147 : vector<256x784xf32>
    %150 = math.exp %149 : vector<256x784xf32>
    %cst_101 = arith.constant 1.000000e+00 : f32
    %151 = vector.broadcast %cst_101 : f32 to vector<256x784xf32>
    %152 = arith.addf %151, %150 : vector<256x784xf32>
    %153 = tpu.reciprocal %152 {approx = true} : vector<256x784xf32> -> vector<256x784xf32>
    %154 = arith.truncf %153 : vector<256x784xf32> to vector<256x784xbf16>
    %c0_102 = arith.constant 0 : index
    %c0_103 = arith.constant 0 : index
    %155 = vector.load %arg8[%c0_102, %c0_103] : memref<256x784xbf16, #tpu.memory_space<vmem>>, vector<256x784xbf16>
    tpu.vector_store %arg8[%c0_102, %c0_103], %154 {strides = array<i32>} : memref<256x784xbf16, #tpu.memory_space<vmem>>, vector<256x784xbf16>,
    return
  }
  func.func @transform_0(%arg0: i32) -> (i32, i32) {
    %c0_i32 = arith.constant 0 : i32
    %c0_i32_0 = arith.constant 0 : i32
    return %arg0, %c0_i32 : i32, i32
  }
  func.func @transform_1(%arg0: i32) -> (i32, i32) {
    %c0_i32 = arith.constant 0 : i32
    %c0_i32_0 = arith.constant 0 : i32
    return %arg0, %c0_i32 : i32, i32
  }
  func.func @transform_2(%arg0: i32) -> (i32, i32) {
    %c0_i32 = arith.constant 0 : i32
    %c0_i32_0 = arith.constant 0 : i32
    %c0_i32_1 = arith.constant 0 : i32
    return %c0_i32, %c0_i32_0 : i32, i32
  }
  func.func @transform_3(%arg0: i32) -> (i32, i32, i32) {
    %c0_i32 = arith.constant 0 : i32
    %c0_i32_0 = arith.constant 0 : i32
    %c0_i32_1 = arith.constant 0 : i32
    %c0_i32_2 = arith.constant 0 : i32
    return %c0_i32, %c0_i32_0, %c0_i32_1 : i32, i32, i32
  }
  func.func @transform_4(%arg0: i32) -> (i32, i32) {
    %c0_i32 = arith.constant 0 : i32
    %c0_i32_0 = arith.constant 0 : i32
    %c0_i32_1 = arith.constant 0 : i32
    return %c0_i32, %c0_i32_0 : i32, i32
  }
  func.func @transform_5(%arg0: i32) -> (i32, i32, i32) {
    %c0_i32 = arith.constant 0 : i32
    %c0_i32_0 = arith.constant 0 : i32
    %c0_i32_1 = arith.constant 0 : i32
    %c0_i32_2 = arith.constant 0 : i32
    return %c0_i32, %c0_i32_0, %c0_i32_1 : i32, i32, i32
  }
  func.func @transform_6(%arg0: i32) -> (i32, i32) {
    %c0_i32 = arith.constant 0 : i32
    %c0_i32_0 = arith.constant 0 : i32
    %c0_i32_1 = arith.constant 0 : i32
    return %c0_i32, %c0_i32_0 : i32, i32
  }
  func.func @transform_7(%arg0: i32) -> (i32, i32) {
    %c0_i32 = arith.constant 0 : i32
    %c0_i32_0 = arith.constant 0 : i32
    return %arg0, %c0_i32 : i32, i32
  }
  func.func @transform_8(%arg0: i32) -> (i32, i32) {
    %c0_i32 = arith.constant 0 : i32
    %c0_i32_0 = arith.constant 0 : i32
    return %arg0, %c0_i32 : i32, i32
  }
}

</mosaic_0001>

<llo_original>
// kernel: vae_forward.1
$region0: #{vae_forward.1}
  #allocation0 [shape = 'u32[]', space=smem, size = 0x4, offset = 0x4, fixed_abs, tag = 'smem constant byte address 0x4 - core index']
  #allocation1 [shape = 'u32[144,128]{1,0:T(1,128)}', space=vmem, size = 0x12000, scoped, tag = 'internal scratch']
  %s0 = inlined_call_operand.vmem [shape: bf16[512,784], index: 0, kind: input, shape index: {}]
  %s1 = inlined_call_operand.vmem [shape: f32[512,128], index: 1, kind: input, shape index: {}]
  %s2 = inlined_call_operand.vmem [shape: bf16[784,128], index: 2, kind: input, shape index: {}]
  %s3 = inlined_call_operand.vmem [shape: bf16[12,128,128], index: 3, kind: input, shape index: {}]
  %s4 = inlined_call_operand.vmem [shape: bf16[128,784], index: 4, kind: input, shape index: {}]
  %s5 = inlined_call_operand.vmem [shape: f32[13,1,128], index: 5, kind: input, shape index: {}]
  %s6 = inlined_call_operand.vmem [shape: f32[1,784], index: 6, kind: input, shape index: {}]
  %s7 = inlined_call_operand.vmem [shape: bf16[512,784], index: 7, kind: output, shape index: {0}]
  %s8 = inlined_call_operand.vmem [shape: f32[512,8], index: 8, kind: output, shape index: {1}]
  %9 = xla_tuple %s7, %s8
  %s10 = sld [smem:[#allocation0]]
  $region69: #{vae_forward.1} parent=0
    _
  %s12 = ssub.s32 1, %s10
  %s13 = scalar_select 0, %s12, %s10
  loop: start=0, step=1, limit=4
  $region2: #{vae_forward.1} parent=0 // loop_pre_header
    _
  $region3: #{vae_forward.1} parent=0 // loop_header
    %s15 = sphi 0, %s19
    %p16 = scmp.ge.s32.totalorder %s15, 4
    %s25 = sphi 0, %s27
    %s28 = sphi 0, %s25
    %s29 = sphi 0, %s28
    %s45 = sphi 0, %s29
    %s51 = sphi 0, %s53
    %s54 = sphi 0, %s51
    %s55 = sphi 0, %s54
    %s71 = sphi 0, %s55
    %s75 = sphi 0, %s75
    %s77 = sphi 0, %s75
    %s78 = sphi 0, %s77
    %s92 = sphi 0, %s78
    %s96 = sphi 0, %s96
    %s98 = sphi 0, %s96
    %s99 = sphi 0, %s98
    %s113 = sphi 0, %s99
    %s117 = sphi 0, %s117
    %s119 = sphi 0, %s117
    %s120 = sphi 0, %s119
    %s134 = sphi 0, %s120
    %s138 = sphi 0, %s138
    %s140 = sphi 0, %s138
    %s141 = sphi 0, %s140
    %s155 = sphi 0, %s141
    %s159 = sphi 0, %s159
    %s161 = sphi 0, %s159
    %s162 = sphi 0, %s161
    %s176 = sphi 0, %s162
    %s182 = sphi 0, %s184
    %s185 = sphi 0, %s182
    %s186 = sphi 0, %s185
    %s202 = sphi 0, %s186
    %s208 = sphi 0, %s210
    %s211 = sphi 0, %s208
    %s212 = sphi 0, %s211
    %s228 = sphi 0, %s212
  $region4: #{vae_forward.1} parent=0 // loop_header_branch
    %18 = sbr.rel (%p16) target = $region8
  $region5: #{vae_forward.1} parent=0 // loop_body
    %s20 = ssub.s32 %s15, 1
    %s21 = ssub.s32 %s15, 2
    %s22 = sadd.s32 %s15, 1
    %s23 = ssub.s32 %s15, %s22
    %p24 = scmp.eq.s32.totalorder %s23, 0
    %s26 = sadd.s32 %s25, 1
    %s27 = scalar_select %p24, %s25, %s26
    %p30 = pneg %p24
    %p31 = scmp.eq.s32.totalorder %s15, 1
    %p32 = por %p30, %p31
    %p33 = scmp.ne.s32.totalorder %s25, %s28
    %p34 = scmp.eq.s32.totalorder %s15, 0
    %p35 = por %p33, %p34
    %p36 = scmp.ne.s32.totalorder %s25, %s28
    %p37 = scmp.eq.s32.totalorder %s20, 1
    %p38 = por %p36, %p37
    %p39 = scmp.ne.s32.totalorder %s28, %s29
    %p40 = scmp.eq.s32.totalorder %s20, 0
    %p41 = por %p39, %p40
    %p42 = scmp.ne.s32.totalorder %s28, %s29
    %p43 = scmp.eq.s32.totalorder %s21, 1
    %p44 = por %p42, %p43
    %p46 = scmp.ne.s32.totalorder %s29, %s45
    %p47 = scmp.eq.s32.totalorder %s21, 0
    %p48 = por %p46, %p47
    %s49 = ssub.s32 %s15, %s22
    %p50 = scmp.eq.s32.totalorder %s49, 0
    %s52 = sadd.s32 %s51, 1
    %s53 = scalar_select %p50, %s51, %s52
    %p56 = pneg %p50
    %p57 = scmp.eq.s32.totalorder %s15, 1
    %p58 = por %p56, %p57
    %p59 = scmp.ne.s32.totalorder %s51, %s54
    %p60 = scmp.eq.s32.totalorder %s15, 0
    %p61 = por %p59, %p60
    %p62 = scmp.ne.s32.totalorder %s51, %s54
    %p63 = scmp.eq.s32.totalorder %s20, 1
    %p64 = por %p62, %p63
    %p65 = scmp.ne.s32.totalorder %s54, %s55
    %p66 = scmp.eq.s32.totalorder %s20, 0
    %p67 = por %p65, %p66
    %p68 = scmp.ne.s32.totalorder %s54, %s55
    %p69 = scmp.eq.s32.totalorder %s21, 1
    %p70 = por %p68, %p69
    %p72 = scmp.ne.s32.totalorder %s55, %s71
    %p73 = scmp.eq.s32.totalorder %s21, 0
    %p74 = por %p72, %p73
    %s76 = sadd.s32 %s75, 1
    %p79 = scmp.eq.s32.totalorder %s15, 1
    %p80 = scmp.ne.s32.totalorder %s75, %s77
    %p81 = scmp.eq.s32.totalorder %s15, 0
    %p82 = por %p80, %p81
    %p83 = scmp.ne.s32.totalorder %s75, %s77
    %p84 = scmp.eq.s32.totalorder %s20, 1
    %p85 = por %p83, %p84
    %p86 = scmp.ne.s32.totalorder %s77, %s78
    %p87 = scmp.eq.s32.totalorder %s20, 0
    %p88 = por %p86, %p87
    %p89 = scmp.ne.s32.totalorder %s77, %s78
    %p90 = scmp.eq.s32.totalorder %s21, 1
    %p91 = por %p89, %p90
    %p93 = scmp.ne.s32.totalorder %s78, %s92
    %p94 = scmp.eq.s32.totalorder %s21, 0
    %p95 = por %p93, %p94
    %s97 = sadd.s32 %s96, 1
    %p100 = scmp.eq.s32.totalorder %s15, 1
    %p101 = scmp.ne.s32.totalorder %s96, %s98
    %p102 = scmp.eq.s32.totalorder %s15, 0
    %p103 = por %p101, %p102
    %p104 = scmp.ne.s32.totalorder %s96, %s98
    %p105 = scmp.eq.s32.totalorder %s20, 1
    %p106 = por %p104, %p105
    %p107 = scmp.ne.s32.totalorder %s98, %s99
    %p108 = scmp.eq.s32.totalorder %s20, 0
    %p109 = por %p107, %p108
    %p110 = scmp.ne.s32.totalorder %s98, %s99
    %p111 = scmp.eq.s32.totalorder %s21, 1
    %p112 = por %p110, %p111
    %p114 = scmp.ne.s32.totalorder %s99, %s113
    %p115 = scmp.eq.s32.totalorder %s21, 0
    %p116 = por %p114, %p115
    %s118 = sadd.s32 %s117, 1
    %p121 = scmp.eq.s32.totalorder %s15, 1
    %p122 = scmp.ne.s32.totalorder %s117, %s119
    %p123 = scmp.eq.s32.totalorder %s15, 0
    %p124 = por %p122, %p123
    %p125 = scmp.ne.s32.totalorder %s117, %s119
    %p126 = scmp.eq.s32.totalorder %s20, 1
    %p127 = por %p125, %p126
    %p128 = scmp.ne.s32.totalorder %s119, %s120
    %p129 = scmp.eq.s32.totalorder %s20, 0
    %p130 = por %p128, %p129
    %p131 = scmp.ne.s32.totalorder %s119, %s120
    %p132 = scmp.eq.s32.totalorder %s21, 1
    %p133 = por %p131, %p132
    %p135 = scmp.ne.s32.totalorder %s120, %s134
    %p136 = scmp.eq.s32.totalorder %s21, 0
    %p137 = por %p135, %p136
    %s139 = sadd.s32 %s138, 1
    %p142 = scmp.eq.s32.totalorder %s15, 1
    %p143 = scmp.ne.s32.totalorder %s138, %s140
    %p144 = scmp.eq.s32.totalorder %s15, 0
    %p145 = por %p143, %p144
    %p146 = scmp.ne.s32.totalorder %s138, %s140
    %p147 = scmp.eq.s32.totalorder %s20, 1
    %p148 = por %p146, %p147
    %p149 = scmp.ne.s32.totalorder %s140, %s141
    %p150 = scmp.eq.s32.totalorder %s20, 0
    %p151 = por %p149, %p150
    %p152 = scmp.ne.s32.totalorder %s140, %s141
    %p153 = scmp.eq.s32.totalorder %s21, 1
    %p154 = por %p152, %p153
    %p156 = scmp.ne.s32.totalorder %s141, %s155
    %p157 = scmp.eq.s32.totalorder %s21, 0
    %p158 = por %p156, %p157
    %s160 = sadd.s32 %s159, 1
    %p163 = scmp.eq.s32.totalorder %s15, 1
    %p164 = scmp.ne.s32.totalorder %s159, %s161
    %p165 = scmp.eq.s32.totalorder %s15, 0
    %p166 = por %p164, %p165
    %p167 = scmp.ne.s32.totalorder %s159, %s161
    %p168 = scmp.eq.s32.totalorder %s20, 1
    %p169 = por %p167, %p168
    %p170 = scmp.ne.s32.totalorder %s161, %s162
    %p171 = scmp.eq.s32.totalorder %s20, 0
    %p172 = por %p170, %p171
    %p173 = scmp.ne.s32.totalorder %s161, %s162
    %p174 = scmp.eq.s32.totalorder %s21, 1
    %p175 = por %p173, %p174
    %p177 = scmp.ne.s32.totalorder %s162, %s176
    %p178 = scmp.eq.s32.totalorder %s21, 0
    %p179 = por %p177, %p178
    %s180 = ssub.s32 %s15, %s22
    %p181 = scmp.eq.s32.totalorder %s180, 0
    %s183 = sadd.s32 %s182, 1
    %s184 = scalar_select %p181, %s182, %s183
    %p187 = pneg %p181
    %p188 = scmp.eq.s32.totalorder %s15, 1
    %p189 = por %p187, %p188
    %p190 = scmp.ne.s32.totalorder %s182, %s185
    %p191 = scmp.eq.s32.totalorder %s15, 0
    %p192 = por %p190, %p191
    %p193 = scmp.ne.s32.totalorder %s182, %s185
    %p194 = scmp.eq.s32.totalorder %s20, 1
    %p195 = por %p193, %p194
    %p196 = scmp.ne.s32.totalorder %s185, %s186
    %p197 = scmp.eq.s32.totalorder %s20, 0
    %p198 = por %p196, %p197
    %p199 = scmp.ne.s32.totalorder %s185, %s186
    %p200 = scmp.eq.s32.totalorder %s21, 1
    %p201 = por %p199, %p200
    %p203 = scmp.ne.s32.totalorder %s186, %s202
    %p204 = scmp.eq.s32.totalorder %s21, 0
    %p205 = por %p203, %p204
    %s206 = ssub.s32 %s15, %s22
    %p207 = scmp.eq.s32.totalorder %s206, 0
    %s209 = sadd.s32 %s208, 1
    %s210 = scalar_select %p207, %s208, %s209
    %p213 = pneg %p207
    %p214 = scmp.eq.s32.totalorder %s15, 1
    %p215 = por %p213, %p214
    %p216 = scmp.ne.s32.totalorder %s208, %s211
    %p217 = scmp.eq.s32.totalorder %s15, 0
    %p218 = por %p216, %p217
    %p219 = scmp.ne.s32.totalorder %s208, %s211
    %p220 = scmp.eq.s32.totalorder %s20, 1
    %p221 = por %p219, %p220
    %p222 = scmp.ne.s32.totalorder %s211, %s212
    %p223 = scmp.eq.s32.totalorder %s20, 0
    %p224 = por %p222, %p223
    %p225 = scmp.ne.s32.totalorder %s211, %s212
    %p226 = scmp.eq.s32.totalorder %s21, 1
    %p227 = por %p225, %p226
    %p229 = scmp.ne.s32.totalorder %s212, %s228
    %p230 = scmp.eq.s32.totalorder %s21, 0
    %p231 = por %p229, %p230
    %p232 = scmp.le.s32.totalorder 1, %s15
    %p233 = scmp.lt.s32.totalorder %s15, 3
    %p234 = pnand %p232, %p233
    %p235 = pneg %p234
    // Predicated region
    $region9: #{vae_forward.1} parent=5 // pred_check
      _
    $region10: #{vae_forward.1} parent=5 // pred_check_branch
      %237 = sbr.rel (%p234) target = $region12
    $region11: #{vae_forward.1} parent=5 // pred_region
      %s238 = ssub.s32 %s15, 1
      // Predicated region
      $region13: #{vae_forward.1} parent=11 // pred_check
        %p239 = pneg %p88
      $region14: #{vae_forward.1} parent=11 // pred_check_branch
        %241 = sbr.rel (%p239) target = $region16
      $region15: #{vae_forward.1} parent=11 // pred_region
        _
      $region16: #{vae_forward.1} parent=11 // pred_fallthru
        _
      // Predicated region
      $region17: #{vae_forward.1} parent=11 // pred_check
        %p242 = pneg %p109
      $region18: #{vae_forward.1} parent=11 // pred_check_branch
        %244 = sbr.rel (%p242) target = $region20
      $region19: #{vae_forward.1} parent=11 // pred_region
        _
      $region20: #{vae_forward.1} parent=11 // pred_fallthru
        _
      // Predicated region
      $region21: #{vae_forward.1} parent=11 // pred_check
        %p245 = pneg %p130
      $region22: #{vae_forward.1} parent=11 // pred_check_branch
        %247 = sbr.rel (%p245) target = $region24
      $region23: #{vae_forward.1} parent=11 // pred_region
        _
      $region24: #{vae_forward.1} parent=11 // pred_fallthru
        _
      // Predicated region
      $region25: #{vae_forward.1} parent=11 // pred_check
        %p248 = pneg %p151
      $region26: #{vae_forward.1} parent=11 // pred_check_branch
        %250 = sbr.rel (%p248) target = $region28
      $region27: #{vae_forward.1} parent=11 // pred_region
        _
      $region28: #{vae_forward.1} parent=11 // pred_fallthru
        _
      // Predicated region
      $region29: #{vae_forward.1} parent=11 // pred_check
        %p251 = pneg %p172
      $region30: #{vae_forward.1} parent=11 // pred_check_branch
        %253 = sbr.rel (%p251) target = $region32
      $region31: #{vae_forward.1} parent=11 // pred_region
        _
      $region32: #{vae_forward.1} parent=11 // pred_fallthru
        _
    $region12: #{vae_forward.1} parent=5 // pred_fallthru
      _
    %p254 = scmp.lt.s32.totalorder %s15, 2
    // Predicated region
    $region33: #{vae_forward.1} parent=5 // pred_check
      %p255 = pneg %p254
    $region34: #{vae_forward.1} parent=5 // pred_check_branch
      %257 = sbr.rel (%p255) target = $region36
    $region35: #{vae_forward.1} parent=5 // pred_region
      // Predicated region
      $region37: #{vae_forward.1} parent=35 // pred_check
        %p258 = pneg %p35
      $region38: #{vae_forward.1} parent=35 // pred_check_branch
        %260 = sbr.rel (%p258) target = $region40
      $region39: #{vae_forward.1} parent=35 // pred_region
        %s261 = smul.u32 32, %s15
        %p262 = scmp.lt.s32.totalorder %s261, 63
        %s263 = scalar_select %p262, %s261, 63
        %s264 = smul.addr %s263, 7
        %s265 = smul.addr %s264, 4
        %s266 = scalar_lea.vmem %s0, %s265
        %s267 = smul.u32 32, %s15
      $region40: #{vae_forward.1} parent=35 // pred_fallthru
        _
      // Predicated region
      $region41: #{vae_forward.1} parent=35 // pred_check
        %p268 = pneg %p61
      $region42: #{vae_forward.1} parent=35 // pred_check_branch
        %270 = sbr.rel (%p268) target = $region44
      $region43: #{vae_forward.1} parent=35 // pred_region
        %s271 = smul.u32 32, %s15
        %p272 = scmp.lt.s32.totalorder %s271, 63
        %s273 = scalar_select %p272, %s271, 63
        %s274 = smul.addr %s273, 8
        %s275 = scalar_lea.vmem %s1, %s274
        %s276 = smul.u32 32, %s15
      $region44: #{vae_forward.1} parent=35 // pred_fallthru
        _
    $region36: #{vae_forward.1} parent=5 // pred_fallthru
      _
    %p277 = scmp.le.s32.totalorder 1, %s15
    %p278 = scmp.lt.s32.totalorder %s15, 3
    %p279 = pnand %p277, %p278
    %p280 = pneg %p279
    // Predicated region
    $region45: #{vae_forward.1} parent=5 // pred_check
      _
    $region46: #{vae_forward.1} parent=5 // pred_check_branch
      %282 = sbr.rel (%p279) target = $region48
    $region47: #{vae_forward.1} parent=5 // pred_region
      %s283 = ssub.s32 %s15, 1
      %s284 = smul.u32 32, %s20
      %p285 = scmp.lt.s32.totalorder %s284, 63
      %s286 = scalar_select %p285, %s284, 63
      %s287 = smul.addr %s286, 7
      %s288 = smul.addr %s287, 4
      %s289 = scalar_lea.vmem %s0, %s288
      %p290 = pneg %p41
      %p291 = pneg %p38
      %s292 = smul.u32 32, %s20
      %p293 = scmp.lt.s32.totalorder %s292, 63
      %s294 = scalar_select %p293, %s292, 63
      %s295 = smul.addr %s294, 8
      %s296 = scalar_lea.vmem %s1, %s295
      %p297 = pneg %p67
      %p298 = pneg %p64
      %p299 = pneg %p88
      %p300 = pneg %p85
      %p301 = pneg %p109
      %p302 = pneg %p106
      %p303 = pneg %p130
      %p304 = pneg %p127
      %p305 = pneg %p151
      %p306 = pneg %p148
      %p307 = pneg %p172
      %p308 = pneg %p169
      %p309 = pneg %p198
      %p310 = pneg %p195
      %s311 = smul.u32 32, %s20
      %p312 = scmp.lt.s32.totalorder %s311, 63
      %s313 = scalar_select %p312, %s311, 63
      %s314 = smul.addr %s313, 7
      %s315 = smul.addr %s314, 4
      %s316 = scalar_lea.vmem %s7, %s315
      %p317 = pneg %p224
      %p318 = pneg %p221
      %s319 = smul.u32 32, %s20
      %p320 = scmp.lt.s32.totalorder %s319, 63
      %s321 = scalar_select %p320, %s319, 63
      %s322 = smul.addr %s321, 8
      %s323 = scalar_lea.vmem %s8, %s322
      %s324 = smul.u32 32, %s20
      %p325 = scmp.lt.s32.totalorder %s324, 63
      %s326 = scalar_select %p325, %s324, 63
      %s327 = smul.addr %s326, 7
      %s328 = smul.addr %s327, 4
      %s329 = scalar_lea.vmem %s0, %s328
      %s330 = smul.u32 32, %s20
      %s331 = smul.u32 32, %s20
      %p332 = scmp.lt.s32.totalorder %s331, 63
      %s333 = scalar_select %p332, %s331, 63
      %s334 = smul.addr %s333, 8
      %s335 = scalar_lea.vmem %s1, %s334
      %s336 = smul.u32 32, %s20
      %s337 = smul.u32 32, %s20
      %p338 = scmp.lt.s32.totalorder %s337, 63
      %s339 = scalar_select %p338, %s337, 63
      %s340 = smul.addr %s339, 7
      %s341 = smul.addr %s340, 4
      %s342 = scalar_lea.vmem %s7, %s341
      %s343 = smul.u32 32, %s20
      %s344 = smul.u32 32, %s20
      %p345 = scmp.lt.s32.totalorder %s344, 63
      %s346 = scalar_select %p345, %s344, 63
      %s347 = smul.addr %s346, 8
      %s348 = scalar_lea.vmem %s8, %s347
      %s349 = smul.u32 32, %s20
      %v351 = vld [vmem:[%s329] sm:$0xff]
      %v352 = vld [vmem:[%s329 + $0x8] sm:$0xff]
      %v353 = vld [vmem:[%s329 + $0x10] sm:$0xff]
      %v354 = vld [vmem:[%s329 + $0x18] sm:$0xf]
      %v355 = vld [vmem:[%s329 + $0x1c] sm:$0xff]
      %v356 = vld [vmem:[%s329 + $0x24] sm:$0xff]
      %v357 = vld [vmem:[%s329 + $0x2c] sm:$0xff]
      %v358 = vld [vmem:[%s329 + $0x34] sm:$0xf]
      %v359 = vld [vmem:[%s329 + $0x38] sm:$0xff]
      %v360 = vld [vmem:[%s329 + $0x40] sm:$0xff]
      %v361 = vld [vmem:[%s329 + $0x48] sm:$0xff]
      %v362 = vld [vmem:[%s329 + $0x50] sm:$0xf]
      %v363 = vld [vmem:[%s329 + $0x54] sm:$0xff]
      %v364 = vld [vmem:[%s329 + $0x5c] sm:$0xff]
      %v365 = vld [vmem:[%s329 + $0x64] sm:$0xff]
      %v366 = vld [vmem:[%s329 + $0x6c] sm:$0xf]
      %v367 = vld [vmem:[%s329 + $0x70] sm:$0xff]
      %v368 = vld [vmem:[%s329 + $0x78] sm:$0xff]
      %v369 = vld [vmem:[%s329 + $0x80] sm:$0xff]
      %v370 = vld [vmem:[%s329 + $0x88] sm:$0xf]
      %v371 = vld [vmem:[%s329 + $0x8c] sm:$0xff]
      %v372 = vld [vmem:[%s329 + $0x94] sm:$0xff]
      %v373 = vld [vmem:[%s329 + $0x9c] sm:$0xff]
      %v374 = vld [vmem:[%s329 + $0xa4] sm:$0xf]
      %v375 = vld [vmem:[%s329 + $0xa8] sm:$0xff]
      %v376 = vld [vmem:[%s329 + $0xb0] sm:$0xff]
      %v377 = vld [vmem:[%s329 + $0xb8] sm:$0xff]
      %v378 = vld [vmem:[%s329 + $0xc0] sm:$0xf]
      %v379 = vld [vmem:[%s329 + $0xc4] sm:$0xff]
      %v380 = vld [vmem:[%s329 + $0xcc] sm:$0xff]
      %v381 = vld [vmem:[%s329 + $0xd4] sm:$0xff]
      %v382 = vld [vmem:[%s329 + $0xdc] sm:$0xf]
      %v383 = vld [vmem:[%s329 + $0xe0] sm:$0xff]
      %v384 = vld [vmem:[%s329 + $0xe8] sm:$0xff]
      %v385 = vld [vmem:[%s329 + $0xf0] sm:$0xff]
      %v386 = vld [vmem:[%s329 + $0xf8] sm:$0xf]
      %v387 = vld [vmem:[%s329 + $0xfc] sm:$0xff]
      %v388 = vld [vmem:[%s329 + $0x104] sm:$0xff]
      %v389 = vld [vmem:[%s329 + $0x10c] sm:$0xff]
      %v390 = vld [vmem:[%s329 + $0x114] sm:$0xf]
      %v391 = vld [vmem:[%s329 + $0x118] sm:$0xff]
      %v392 = vld [vmem:[%s329 + $0x120] sm:$0xff]
      %v393 = vld [vmem:[%s329 + $0x128] sm:$0xff]
      %v394 = vld [vmem:[%s329 + $0x130] sm:$0xf]
      %v395 = vld [vmem:[%s329 + $0x134] sm:$0xff]
      %v396 = vld [vmem:[%s329 + $0x13c] sm:$0xff]
      %v397 = vld [vmem:[%s329 + $0x144] sm:$0xff]
      %v398 = vld [vmem:[%s329 + $0x14c] sm:$0xf]
      %v399 = vld [vmem:[%s329 + $0x150] sm:$0xff]
      %v400 = vld [vmem:[%s329 + $0x158] sm:$0xff]
      %v401 = vld [vmem:[%s329 + $0x160] sm:$0xff]
      %v402 = vld [vmem:[%s329 + $0x168] sm:$0xf]
      %v403 = vld [vmem:[%s329 + $0x16c] sm:$0xff]
      %v404 = vld [vmem:[%s329 + $0x174] sm:$0xff]
      %v405 = vld [vmem:[%s329 + $0x17c] sm:$0xff]
      %v406 = vld [vmem:[%s329 + $0x184] sm:$0xf]
      %v407 = vld [vmem:[%s329 + $0x188] sm:$0xff]
      %v408 = vld [vmem:[%s329 + $0x190] sm:$0xff]
      %v409 = vld [vmem:[%s329 + $0x198] sm:$0xff]
      %v410 = vld [vmem:[%s329 + $0x1a0] sm:$0xf]
      %v411 = vld [vmem:[%s329 + $0x1a4] sm:$0xff]
      %v412 = vld [vmem:[%s329 + $0x1ac] sm:$0xff]
      %v413 = vld [vmem:[%s329 + $0x1b4] sm:$0xff]
      %v414 = vld [vmem:[%s329 + $0x1bc] sm:$0xf]
      %v415 = vld [vmem:[%s329 + $0x1c0] sm:$0xff]
      %v416 = vld [vmem:[%s329 + $0x1c8] sm:$0xff]
      %v417 = vld [vmem:[%s329 + $0x1d0] sm:$0xff]
      %v418 = vld [vmem:[%s329 + $0x1d8] sm:$0xf]
      %v419 = vld [vmem:[%s329 + $0x1dc] sm:$0xff]
      %v420 = vld [vmem:[%s329 + $0x1e4] sm:$0xff]
      %v421 = vld [vmem:[%s329 + $0x1ec] sm:$0xff]
      %v422 = vld [vmem:[%s329 + $0x1f4] sm:$0xf]
      %v423 = vld [vmem:[%s329 + $0x1f8] sm:$0xff]
      %v424 = vld [vmem:[%s329 + $0x200] sm:$0xff]
      %v425 = vld [vmem:[%s329 + $0x208] sm:$0xff]
      %v426 = vld [vmem:[%s329 + $0x210] sm:$0xf]
      %v427 = vld [vmem:[%s329 + $0x214] sm:$0xff]
      %v428 = vld [vmem:[%s329 + $0x21c] sm:$0xff]
      %v429 = vld [vmem:[%s329 + $0x224] sm:$0xff]
      %v430 = vld [vmem:[%s329 + $0x22c] sm:$0xf]
      %v431 = vld [vmem:[%s329 + $0x230] sm:$0xff]
      %v432 = vld [vmem:[%s329 + $0x238] sm:$0xff]
      %v433 = vld [vmem:[%s329 + $0x240] sm:$0xff]
      %v434 = vld [vmem:[%s329 + $0x248] sm:$0xf]
      %v435 = vld [vmem:[%s329 + $0x24c] sm:$0xff]
      %v436 = vld [vmem:[%s329 + $0x254] sm:$0xff]
      %v437 = vld [vmem:[%s329 + $0x25c] sm:$0xff]
      %v438 = vld [vmem:[%s329 + $0x264] sm:$0xf]
      %v439 = vld [vmem:[%s329 + $0x268] sm:$0xff]
      %v440 = vld [vmem:[%s329 + $0x270] sm:$0xff]
      %v441 = vld [vmem:[%s329 + $0x278] sm:$0xff]
      %v442 = vld [vmem:[%s329 + $0x280] sm:$0xf]
      %v443 = vld [vmem:[%s329 + $0x284] sm:$0xff]
      %v444 = vld [vmem:[%s329 + $0x28c] sm:$0xff]
      %v445 = vld [vmem:[%s329 + $0x294] sm:$0xff]
      %v446 = vld [vmem:[%s329 + $0x29c] sm:$0xf]
      %v447 = vld [vmem:[%s329 + $0x2a0] sm:$0xff]
      %v448 = vld [vmem:[%s329 + $0x2a8] sm:$0xff]
      %v449 = vld [vmem:[%s329 + $0x2b0] sm:$0xff]
      %v450 = vld [vmem:[%s329 + $0x2b8] sm:$0xf]
      %v451 = vld [vmem:[%s329 + $0x2bc] sm:$0xff]
      %v452 = vld [vmem:[%s329 + $0x2c4] sm:$0xff]
      %v453 = vld [vmem:[%s329 + $0x2cc] sm:$0xff]
      %v454 = vld [vmem:[%s329 + $0x2d4] sm:$0xf]
      %v455 = vld [vmem:[%s329 + $0x2d8] sm:$0xff]
      %v456 = vld [vmem:[%s329 + $0x2e0] sm:$0xff]
      %v457 = vld [vmem:[%s329 + $0x2e8] sm:$0xff]
      %v458 = vld [vmem:[%s329 + $0x2f0] sm:$0xf]
      %v459 = vld [vmem:[%s329 + $0x2f4] sm:$0xff]
      %v460 = vld [vmem:[%s329 + $0x2fc] sm:$0xff]
      %v461 = vld [vmem:[%s329 + $0x304] sm:$0xff]
      %v462 = vld [vmem:[%s329 + $0x30c] sm:$0xf]
      %v463 = vld [vmem:[%s329 + $0x310] sm:$0xff]
      %v464 = vld [vmem:[%s329 + $0x318] sm:$0xff]
      %v465 = vld [vmem:[%s329 + $0x320] sm:$0xff]
      %v466 = vld [vmem:[%s329 + $0x328] sm:$0xf]
      %v467 = vld [vmem:[%s329 + $0x32c] sm:$0xff]
      %v468 = vld [vmem:[%s329 + $0x334] sm:$0xff]
      %v469 = vld [vmem:[%s329 + $0x33c] sm:$0xff]
      %v470 = vld [vmem:[%s329 + $0x344] sm:$0xf]
      %v471 = vld [vmem:[%s329 + $0x348] sm:$0xff]
      %v472 = vld [vmem:[%s329 + $0x350] sm:$0xff]
      %v473 = vld [vmem:[%s329 + $0x358] sm:$0xff]
      %v474 = vld [vmem:[%s329 + $0x360] sm:$0xf]
      %v475 = vld [vmem:[%s329 + $0x364] sm:$0xff]
      %v476 = vld [vmem:[%s329 + $0x36c] sm:$0xff]
      %v477 = vld [vmem:[%s329 + $0x374] sm:$0xff]
      %v478 = vld [vmem:[%s329 + $0x37c] sm:$0xf]
      %v479 = vld [vmem:[%s2] sm:$0xf]
      %v480 = vld [vmem:[%s2 + $0x4] sm:$0xf]
      %v481 = vld [vmem:[%s2 + $0x8] sm:$0xf]
      %v482 = vld [vmem:[%s2 + $0xc] sm:$0xf]
      %v483 = vld [vmem:[%s2 + $0x10] sm:$0xf]
      %v484 = vld [vmem:[%s2 + $0x14] sm:$0xf]
      %v485 = vld [vmem:[%s2 + $0x18] sm:$0xf]
      %v486 = vld [vmem:[%s2 + $0x1c] sm:$0xf]
      %v487 = vld [vmem:[%s2 + $0x20] sm:$0xf]
      %v488 = vld [vmem:[%s2 + $0x24] sm:$0xf]
      %v489 = vld [vmem:[%s2 + $0x28] sm:$0xf]
      %v490 = vld [vmem:[%s2 + $0x2c] sm:$0xf]
      %v491 = vld [vmem:[%s2 + $0x30] sm:$0xf]
      %v492 = vld [vmem:[%s2 + $0x34] sm:$0xf]
      %v493 = vld [vmem:[%s2 + $0x38] sm:$0xf]
      %v494 = vld [vmem:[%s2 + $0x3c] sm:$0xf]
      %v495 = vld [vmem:[%s2 + $0x40] sm:$0xf]
      %v496 = vld [vmem:[%s2 + $0x44] sm:$0xf]
      %v497 = vld [vmem:[%s2 + $0x48] sm:$0xf]
      %v498 = vld [vmem:[%s2 + $0x4c] sm:$0xf]
      %v499 = vld [vmem:[%s2 + $0x50] sm:$0xf]
      %v500 = vld [vmem:[%s2 + $0x54] sm:$0xf]
      %v501 = vld [vmem:[%s2 + $0x58] sm:$0xf]
      %v502 = vld [vmem:[%s2 + $0x5c] sm:$0xf]
      %v503 = vld [vmem:[%s2 + $0x60] sm:$0xf]
      %v504 = vld [vmem:[%s2 + $0x64] sm:$0xf]
      %v505 = vld [vmem:[%s2 + $0x68] sm:$0xf]
      %v506 = vld [vmem:[%s2 + $0x6c] sm:$0xf]
      %v507 = vld [vmem:[%s2 + $0x70] sm:$0xf]
      %v508 = vld [vmem:[%s2 + $0x74] sm:$0xf]
      %v509 = vld [vmem:[%s2 + $0x78] sm:$0xf]
      %v510 = vld [vmem:[%s2 + $0x7c] sm:$0xf]
      %v511 = vld [vmem:[%s2 + $0x80] sm:$0xf]
      %v512 = vld [vmem:[%s2 + $0x84] sm:$0xf]
      %v513 = vld [vmem:[%s2 + $0x88] sm:$0xf]
      %v514 = vld [vmem:[%s2 + $0x8c] sm:$0xf]
      %v515 = vld [vmem:[%s2 + $0x90] sm:$0xf]
      %v516 = vld [vmem:[%s2 + $0x94] sm:$0xf]
      %v517 = vld [vmem:[%s2 + $0x98] sm:$0xf]
      %v518 = vld [vmem:[%s2 + $0x9c] sm:$0xf]
      %v519 = vld [vmem:[%s2 + $0xa0] sm:$0xf]
      %v520 = vld [vmem:[%s2 + $0xa4] sm:$0xf]
      %v521 = vld [vmem:[%s2 + $0xa8] sm:$0xf]
      %v522 = vld [vmem:[%s2 + $0xac] sm:$0xf]
      %v523 = vld [vmem:[%s2 + $0xb0] sm:$0xf]
      %v524 = vld [vmem:[%s2 + $0xb4] sm:$0xf]
      %v525 = vld [vmem:[%s2 + $0xb8] sm:$0xf]
      %v526 = vld [vmem:[%s2 + $0xbc] sm:$0xf]
      %v527 = vld [vmem:[%s2 + $0xc0] sm:$0xf]
      %v528 = vld [vmem:[%s2 + $0xc4] sm:$0xf]
      %v529 = vld [vmem:[%s2 + $0xc8] sm:$0xf]
      %v530 = vld [vmem:[%s2 + $0xcc] sm:$0xf]
      %v531 = vld [vmem:[%s2 + $0xd0] sm:$0xf]
      %v532 = vld [vmem:[%s2 + $0xd4] sm:$0xf]
      %v533 = vld [vmem:[%s2 + $0xd8] sm:$0xf]
      %v534 = vld [vmem:[%s2 + $0xdc] sm:$0xf]
      %v535 = vld [vmem:[%s2 + $0xe0] sm:$0xf]
      %v536 = vld [vmem:[%s2 + $0xe4] sm:$0xf]
      %v537 = vld [vmem:[%s2 + $0xe8] sm:$0xf]
      %v538 = vld [vmem:[%s2 + $0xec] sm:$0xf]
      %v539 = vld [vmem:[%s2 + $0xf0] sm:$0xf]
      %v540 = vld [vmem:[%s2 + $0xf4] sm:$0xf]
      %v541 = vld [vmem:[%s2 + $0xf8] sm:$0xf]
      %v542 = vld [vmem:[%s2 + $0xfc] sm:$0xf]
      %v543 = vld [vmem:[%s2 + $0x100] sm:$0xf]
      %v544 = vld [vmem:[%s2 + $0x104] sm:$0xf]
      %v545 = vld [vmem:[%s2 + $0x108] sm:$0xf]
      %v546 = vld [vmem:[%s2 + $0x10c] sm:$0xf]
      %v547 = vld [vmem:[%s2 + $0x110] sm:$0xf]
      %v548 = vld [vmem:[%s2 + $0x114] sm:$0xf]
      %v549 = vld [vmem:[%s2 + $0x118] sm:$0xf]
      %v550 = vld [vmem:[%s2 + $0x11c] sm:$0xf]
      %v551 = vld [vmem:[%s2 + $0x120] sm:$0xf]
      %v552 = vld [vmem:[%s2 + $0x124] sm:$0xf]
      %v553 = vld [vmem:[%s2 + $0x128] sm:$0xf]
      %v554 = vld [vmem:[%s2 + $0x12c] sm:$0xf]
      %v555 = vld [vmem:[%s2 + $0x130] sm:$0xf]
      %v556 = vld [vmem:[%s2 + $0x134] sm:$0xf]
      %v557 = vld [vmem:[%s2 + $0x138] sm:$0xf]
      %v558 = vld [vmem:[%s2 + $0x13c] sm:$0xf]
      %v559 = vld [vmem:[%s2 + $0x140] sm:$0xf]
      %v560 = vld [vmem:[%s2 + $0x144] sm:$0xf]
      %v561 = vld [vmem:[%s2 + $0x148] sm:$0xf]
      %v562 = vld [vmem:[%s2 + $0x14c] sm:$0xf]
      %v563 = vld [vmem:[%s2 + $0x150] sm:$0xf]
      %v564 = vld [vmem:[%s2 + $0x154] sm:$0xf]
      %v565 = vld [vmem:[%s2 + $0x158] sm:$0xf]
      %v566 = vld [vmem:[%s2 + $0x15c] sm:$0xf]
      %v567 = vld [vmem:[%s2 + $0x160] sm:$0xf]
      %v568 = vld [vmem:[%s2 + $0x164] sm:$0xf]
      %v569 = vld [vmem:[%s2 + $0x168] sm:$0xf]
      %v570 = vld [vmem:[%s2 + $0x16c] sm:$0xf]
      %v571 = vld [vmem:[%s2 + $0x170] sm:$0xf]
      %v572 = vld [vmem:[%s2 + $0x174] sm:$0xf]
      %v573 = vld [vmem:[%s2 + $0x178] sm:$0xf]
      %v574 = vld [vmem:[%s2 + $0x17c] sm:$0xf]
      %v575 = vld [vmem:[%s2 + $0x180] sm:$0xf]
      %v576 = vld [vmem:[%s2 + $0x184] sm:$0xf]
      %v577 = vld [vmem:[%s5] sm:$0x1]
      %v579 = vlaneseq
      %v580 = vshrl.u32 %v579, 7
      %v581 = vsub.s32 0, %v580
      %v582 = vrot.slane %v577, %v581
      %v712 = vunpack.c.l.b16 %v351
      %v713 = vunpack.c.h.b16 %v351
      %v714 = vunpack.c.l.b16 %v352
      %v715 = vunpack.c.h.b16 %v352
      %v716 = vunpack.c.l.b16 %v353
      %v717 = vunpack.c.h.b16 %v353
      %v718 = vunpack.c.l.b16 %v354
      %v719 = vunpack.c.l.b16 %v355
      %v720 = vunpack.c.h.b16 %v355
      %v721 = vunpack.c.l.b16 %v356
      %v722 = vunpack.c.h.b16 %v356
      %v723 = vunpack.c.l.b16 %v357
      %v724 = vunpack.c.h.b16 %v357
      %v725 = vunpack.c.l.b16 %v358
      %v726 = vunpack.c.l.b16 %v359
      %v727 = vunpack.c.h.b16 %v359
      %v728 = vunpack.c.l.b16 %v360
      %v729 = vunpack.c.h.b16 %v360
      %v730 = vunpack.c.l.b16 %v361
      %v731 = vunpack.c.h.b16 %v361
      %v732 = vunpack.c.l.b16 %v362
      %v733 = vunpack.c.l.b16 %v363
      %v734 = vunpack.c.h.b16 %v363
      %v735 = vunpack.c.l.b16 %v364
      %v736 = vunpack.c.h.b16 %v364
      %v737 = vunpack.c.l.b16 %v365
      %v738 = vunpack.c.h.b16 %v365
      %v739 = vunpack.c.l.b16 %v366
      %v740 = vunpack.c.l.b16 %v367
      %v741 = vunpack.c.h.b16 %v367
      %v742 = vunpack.c.l.b16 %v368
      %v743 = vunpack.c.h.b16 %v368
      %v744 = vunpack.c.l.b16 %v369
      %v745 = vunpack.c.h.b16 %v369
      %v746 = vunpack.c.l.b16 %v370
      %v747 = vunpack.c.l.b16 %v371
      %v748 = vunpack.c.h.b16 %v371
      %v749 = vunpack.c.l.b16 %v372
      %v750 = vunpack.c.h.b16 %v372
      %v751 = vunpack.c.l.b16 %v373
      %v752 = vunpack.c.h.b16 %v373
      %v753 = vunpack.c.l.b16 %v374
      %v754 = vunpack.c.l.b16 %v375
      %v755 = vunpack.c.h.b16 %v375
      %v756 = vunpack.c.l.b16 %v376
      %v757 = vunpack.c.h.b16 %v376
      %v758 = vunpack.c.l.b16 %v377
      %v759 = vunpack.c.h.b16 %v377
      %v760 = vunpack.c.l.b16 %v378
      %v761 = vunpack.c.l.b16 %v379
      %v762 = vunpack.c.h.b16 %v379
      %v763 = vunpack.c.l.b16 %v380
      %v764 = vunpack.c.h.b16 %v380
      %v765 = vunpack.c.l.b16 %v381
      %v766 = vunpack.c.h.b16 %v381
      %v767 = vunpack.c.l.b16 %v382
      %v768 = vunpack.c.l.b16 %v383
      %v769 = vunpack.c.h.b16 %v383
      %v770 = vunpack.c.l.b16 %v384
      %v771 = vunpack.c.h.b16 %v384
      %v772 = vunpack.c.l.b16 %v385
      %v773 = vunpack.c.h.b16 %v385
      %v774 = vunpack.c.l.b16 %v386
      %v775 = vunpack.c.l.b16 %v387
      %v776 = vunpack.c.h.b16 %v387
      %v777 = vunpack.c.l.b16 %v388
      %v778 = vunpack.c.h.b16 %v388
      %v779 = vunpack.c.l.b16 %v389
      %v780 = vunpack.c.h.b16 %v389
      %v781 = vunpack.c.l.b16 %v390
      %v782 = vunpack.c.l.b16 %v391
      %v783 = vunpack.c.h.b16 %v391
      %v784 = vunpack.c.l.b16 %v392
      %v785 = vunpack.c.h.b16 %v392
      %v786 = vunpack.c.l.b16 %v393
      %v787 = vunpack.c.h.b16 %v393
      %v788 = vunpack.c.l.b16 %v394
      %v789 = vunpack.c.l.b16 %v395
      %v790 = vunpack.c.h.b16 %v395
      %v791 = vunpack.c.l.b16 %v396
      %v792 = vunpack.c.h.b16 %v396
      %v793 = vunpack.c.l.b16 %v397
      %v794 = vunpack.c.h.b16 %v397
      %v795 = vunpack.c.l.b16 %v398
      %v796 = vunpack.c.l.b16 %v399
      %v797 = vunpack.c.h.b16 %v399
      %v798 = vunpack.c.l.b16 %v400
      %v799 = vunpack.c.h.b16 %v400
      %v800 = vunpack.c.l.b16 %v401
      %v801 = vunpack.c.h.b16 %v401
      %v802 = vunpack.c.l.b16 %v402
      %v803 = vunpack.c.l.b16 %v403
      %v804 = vunpack.c.h.b16 %v403
      %v805 = vunpack.c.l.b16 %v404
      %v806 = vunpack.c.h.b16 %v404
      %v807 = vunpack.c.l.b16 %v405
      %v808 = vunpack.c.h.b16 %v405
      %v809 = vunpack.c.l.b16 %v406
      %v810 = vunpack.c.l.b16 %v407
      %v811 = vunpack.c.h.b16 %v407
      %v812 = vunpack.c.l.b16 %v408
      %v813 = vunpack.c.h.b16 %v408
      %v814 = vunpack.c.l.b16 %v409
      %v815 = vunpack.c.h.b16 %v409
      %v816 = vunpack.c.l.b16 %v410
      %v817 = vunpack.c.l.b16 %v411
      %v818 = vunpack.c.h.b16 %v411
      %v819 = vunpack.c.l.b16 %v412
      %v820 = vunpack.c.h.b16 %v412
      %v821 = vunpack.c.l.b16 %v413
      %v822 = vunpack.c.h.b16 %v413
      %v823 = vunpack.c.l.b16 %v414
      %v824 = vunpack.c.l.b16 %v415
      %v825 = vunpack.c.h.b16 %v415
      %v826 = vunpack.c.l.b16 %v416
      %v827 = vunpack.c.h.b16 %v416
      %v828 = vunpack.c.l.b16 %v417
      %v829 = vunpack.c.h.b16 %v417
      %v830 = vunpack.c.l.b16 %v418
      %v831 = vunpack.c.l.b16 %v419
      %v832 = vunpack.c.h.b16 %v419
      %v833 = vunpack.c.l.b16 %v420
      %v834 = vunpack.c.h.b16 %v420
      %v835 = vunpack.c.l.b16 %v421
      %v836 = vunpack.c.h.b16 %v421
      %v837 = vunpack.c.l.b16 %v422
      %v838 = vunpack.c.l.b16 %v423
      %v839 = vunpack.c.h.b16 %v423
      %v840 = vunpack.c.l.b16 %v424
      %v841 = vunpack.c.h.b16 %v424
      %v842 = vunpack.c.l.b16 %v425
      %v843 = vunpack.c.h.b16 %v425
      %v844 = vunpack.c.l.b16 %v426
      %v845 = vunpack.c.l.b16 %v427
      %v846 = vunpack.c.h.b16 %v427
      %v847 = vunpack.c.l.b16 %v428
      %v848 = vunpack.c.h.b16 %v428
      %v849 = vunpack.c.l.b16 %v429
      %v850 = vunpack.c.h.b16 %v429
      %v851 = vunpack.c.l.b16 %v430
      %v852 = vunpack.c.l.b16 %v431
      %v853 = vunpack.c.h.b16 %v431
      %v854 = vunpack.c.l.b16 %v432
      %v855 = vunpack.c.h.b16 %v432
      %v856 = vunpack.c.l.b16 %v433
      %v857 = vunpack.c.h.b16 %v433
      %v858 = vunpack.c.l.b16 %v434
      %v859 = vunpack.c.l.b16 %v435
      %v860 = vunpack.c.h.b16 %v435
      %v861 = vunpack.c.l.b16 %v436
      %v862 = vunpack.c.h.b16 %v436
      %v863 = vunpack.c.l.b16 %v437
      %v864 = vunpack.c.h.b16 %v437
      %v865 = vunpack.c.l.b16 %v438
      %v866 = vunpack.c.l.b16 %v439
      %v867 = vunpack.c.h.b16 %v439
      %v868 = vunpack.c.l.b16 %v440
      %v869 = vunpack.c.h.b16 %v440
      %v870 = vunpack.c.l.b16 %v441
      %v871 = vunpack.c.h.b16 %v441
      %v872 = vunpack.c.l.b16 %v442
      %v873 = vunpack.c.l.b16 %v443
      %v874 = vunpack.c.h.b16 %v443
      %v875 = vunpack.c.l.b16 %v444
      %v876 = vunpack.c.h.b16 %v444
      %v877 = vunpack.c.l.b16 %v445
      %v878 = vunpack.c.h.b16 %v445
      %v879 = vunpack.c.l.b16 %v446
      %v880 = vunpack.c.l.b16 %v447
      %v881 = vunpack.c.h.b16 %v447
      %v882 = vunpack.c.l.b16 %v448
      %v883 = vunpack.c.h.b16 %v448
      %v884 = vunpack.c.l.b16 %v449
      %v885 = vunpack.c.h.b16 %v449
      %v886 = vunpack.c.l.b16 %v450
      %v887 = vunpack.c.l.b16 %v451
      %v888 = vunpack.c.h.b16 %v451
      %v889 = vunpack.c.l.b16 %v452
      %v890 = vunpack.c.h.b16 %v452
      %v891 = vunpack.c.l.b16 %v453
      %v892 = vunpack.c.h.b16 %v453
      %v893 = vunpack.c.l.b16 %v454
      %v894 = vunpack.c.l.b16 %v455
      %v895 = vunpack.c.h.b16 %v455
      %v896 = vunpack.c.l.b16 %v456
      %v897 = vunpack.c.h.b16 %v456
      %v898 = vunpack.c.l.b16 %v457
      %v899 = vunpack.c.h.b16 %v457
      %v900 = vunpack.c.l.b16 %v458
      %v901 = vunpack.c.l.b16 %v459
      %v902 = vunpack.c.h.b16 %v459
      %v903 = vunpack.c.l.b16 %v460
      %v904 = vunpack.c.h.b16 %v460
      %v905 = vunpack.c.l.b16 %v461
      %v906 = vunpack.c.h.b16 %v461
      %v907 = vunpack.c.l.b16 %v462
      %v908 = vunpack.c.l.b16 %v463
      %v909 = vunpack.c.h.b16 %v463
      %v910 = vunpack.c.l.b16 %v464
      %v911 = vunpack.c.h.b16 %v464
      %v912 = vunpack.c.l.b16 %v465
      %v913 = vunpack.c.h.b16 %v465
      %v914 = vunpack.c.l.b16 %v466
      %v915 = vunpack.c.l.b16 %v467
      %v916 = vunpack.c.h.b16 %v467
      %v917 = vunpack.c.l.b16 %v468
      %v918 = vunpack.c.h.b16 %v468
      %v919 = vunpack.c.l.b16 %v469
      %v920 = vunpack.c.h.b16 %v469
      %v921 = vunpack.c.l.b16 %v470
      %v922 = vunpack.c.l.b16 %v471
      %v923 = vunpack.c.h.b16 %v471
      %v924 = vunpack.c.l.b16 %v472
      %v925 = vunpack.c.h.b16 %v472
      %v926 = vunpack.c.l.b16 %v473
      %v927 = vunpack.c.h.b16 %v473
      %v928 = vunpack.c.l.b16 %v474
      %v929 = vunpack.c.l.b16 %v475
      %v930 = vunpack.c.h.b16 %v475
      %v931 = vunpack.c.l.b16 %v476
      %v932 = vunpack.c.h.b16 %v476
      %v933 = vunpack.c.l.b16 %v477
      %v934 = vunpack.c.h.b16 %v477
      %v935 = vunpack.c.l.b16 %v478
      %v936 = vpack.c.b16 %v719, %v712
      %v937 = vpack.c.b16 %v720, %v713
      %v938 = vpack.c.b16 %v721, %v714
      %v939 = vpack.c.b16 %v722, %v715
      %v940 = vpack.c.b16 %v723, %v716
      %v941 = vpack.c.b16 %v724, %v717
      %v942 = vpack.c.b16 %v725, %v718
      %v943 = vpack.c.b16 %v733, %v726
      %v944 = vpack.c.b16 %v734, %v727
      %v945 = vpack.c.b16 %v735, %v728
      %v946 = vpack.c.b16 %v736, %v729
      %v947 = vpack.c.b16 %v737, %v730
      %v948 = vpack.c.b16 %v738, %v731
      %v949 = vpack.c.b16 %v739, %v732
      %v950 = vpack.c.b16 %v747, %v740
      %v951 = vpack.c.b16 %v748, %v741
      %v952 = vpack.c.b16 %v749, %v742
      %v953 = vpack.c.b16 %v750, %v743
      %v954 = vpack.c.b16 %v751, %v744
      %v955 = vpack.c.b16 %v752, %v745
      %v956 = vpack.c.b16 %v753, %v746
      %v957 = vpack.c.b16 %v761, %v754
      %v958 = vpack.c.b16 %v762, %v755
      %v959 = vpack.c.b16 %v763, %v756
      %v960 = vpack.c.b16 %v764, %v757
      %v961 = vpack.c.b16 %v765, %v758
      %v962 = vpack.c.b16 %v766, %v759
      %v963 = vpack.c.b16 %v767, %v760
      %v964 = vpack.c.b16 %v775, %v768
      %v965 = vpack.c.b16 %v776, %v769
      %v966 = vpack.c.b16 %v777, %v770
      %v967 = vpack.c.b16 %v778, %v771
      %v968 = vpack.c.b16 %v779, %v772
      %v969 = vpack.c.b16 %v780, %v773
      %v970 = vpack.c.b16 %v781, %v774
      %v971 = vpack.c.b16 %v789, %v782
      %v972 = vpack.c.b16 %v790, %v783
      %v973 = vpack.c.b16 %v791, %v784
      %v974 = vpack.c.b16 %v792, %v785
      %v975 = vpack.c.b16 %v793, %v786
      %v976 = vpack.c.b16 %v794, %v787
      %v977 = vpack.c.b16 %v795, %v788
      %v978 = vpack.c.b16 %v803, %v796
      %v979 = vpack.c.b16 %v804, %v797
      %v980 = vpack.c.b16 %v805, %v798
      %v981 = vpack.c.b16 %v806, %v799
      %v982 = vpack.c.b16 %v807, %v800
      %v983 = vpack.c.b16 %v808, %v801
      %v984 = vpack.c.b16 %v809, %v802
      %v985 = vpack.c.b16 %v817, %v810
      %v986 = vpack.c.b16 %v818, %v811
      %v987 = vpack.c.b16 %v819, %v812
      %v988 = vpack.c.b16 %v820, %v813
      %v989 = vpack.c.b16 %v821, %v814
      %v990 = vpack.c.b16 %v822, %v815
      %v991 = vpack.c.b16 %v823, %v816
      %v992 = vpack.c.b16 %v831, %v824
      %v993 = vpack.c.b16 %v832, %v825
      %v994 = vpack.c.b16 %v833, %v826
      %v995 = vpack.c.b16 %v834, %v827
      %v996 = vpack.c.b16 %v835, %v828
      %v997 = vpack.c.b16 %v836, %v829
      %v998 = vpack.c.b16 %v837, %v830
      %v999 = vpack.c.b16 %v845, %v838
      %v1000 = vpack.c.b16 %v846, %v839
      %v1001 = vpack.c.b16 %v847, %v840
      %v1002 = vpack.c.b16 %v848, %v841
      %v1003 = vpack.c.b16 %v849, %v842
      %v1004 = vpack.c.b16 %v850, %v843
      %v1005 = vpack.c.b16 %v851, %v844
      %v1006 = vpack.c.b16 %v859, %v852
      %v1007 = vpack.c.b16 %v860, %v853
      %v1008 = vpack.c.b16 %v861, %v854
      %v1009 = vpack.c.b16 %v862, %v855
      %v1010 = vpack.c.b16 %v863, %v856
      %v1011 = vpack.c.b16 %v864, %v857
      %v1012 = vpack.c.b16 %v865, %v858
      %v1013 = vpack.c.b16 %v873, %v866
      %v1014 = vpack.c.b16 %v874, %v867
      %v1015 = vpack.c.b16 %v875, %v868
      %v1016 = vpack.c.b16 %v876, %v869
      %v1017 = vpack.c.b16 %v877, %v870
      %v1018 = vpack.c.b16 %v878, %v871
      %v1019 = vpack.c.b16 %v879, %v872
      %v1020 = vpack.c.b16 %v887, %v880
      %v1021 = vpack.c.b16 %v888, %v881
      %v1022 = vpack.c.b16 %v889, %v882
      %v1023 = vpack.c.b16 %v890, %v883
      %v1024 = vpack.c.b16 %v891, %v884
      %v1025 = vpack.c.b16 %v892, %v885
      %v1026 = vpack.c.b16 %v893, %v886
      %v1027 = vpack.c.b16 %v901, %v894
      %v1028 = vpack.c.b16 %v902, %v895
      %v1029 = vpack.c.b16 %v903, %v896
      %v1030 = vpack.c.b16 %v904, %v897
      %v1031 = vpack.c.b16 %v905, %v898
      %v1032 = vpack.c.b16 %v906, %v899
      %v1033 = vpack.c.b16 %v907, %v900
      %v1034 = vpack.c.b16 %v915, %v908
      %v1035 = vpack.c.b16 %v916, %v909
      %v1036 = vpack.c.b16 %v917, %v910
      %v1037 = vpack.c.b16 %v918, %v911
      %v1038 = vpack.c.b16 %v919, %v912
      %v1039 = vpack.c.b16 %v920, %v913
      %v1040 = vpack.c.b16 %v921, %v914
      %v1041 = vpack.c.b16 %v929, %v922
      %v1042 = vpack.c.b16 %v930, %v923
      %v1043 = vpack.c.b16 %v931, %v924
      %v1044 = vpack.c.b16 %v932, %v925
      %v1045 = vpack.c.b16 %v933, %v926
      %v1046 = vpack.c.b16 %v934, %v927
      %v1047 = vpack.c.b16 %v935, %v928
      %v1242 = vunpack.c.l.b16 %v479
      %v1243 = vunpack.c.l.b16 %v480
      %v1244 = vunpack.c.l.b16 %v481
      %v1245 = vunpack.c.l.b16 %v482
      %v1246 = vunpack.c.l.b16 %v483
      %v1247 = vunpack.c.l.b16 %v484
      %v1248 = vunpack.c.l.b16 %v485
      %v1249 = vunpack.c.l.b16 %v486
      %v1250 = vunpack.c.l.b16 %v487
      %v1251 = vunpack.c.l.b16 %v488
      %v1252 = vunpack.c.l.b16 %v489
      %v1253 = vunpack.c.l.b16 %v490
      %v1254 = vunpack.c.l.b16 %v491
      %v1255 = vunpack.c.l.b16 %v492
      %v1256 = vunpack.c.l.b16 %v493
      %v1257 = vunpack.c.l.b16 %v494
      %v1258 = vunpack.c.l.b16 %v495
      %v1259 = vunpack.c.l.b16 %v496
      %v1260 = vunpack.c.l.b16 %v497
      %v1261 = vunpack.c.l.b16 %v498
      %v1262 = vunpack.c.l.b16 %v499
      %v1263 = vunpack.c.l.b16 %v500
      %v1264 = vunpack.c.l.b16 %v501
      %v1265 = vunpack.c.l.b16 %v502
      %v1266 = vunpack.c.l.b16 %v503
      %v1267 = vunpack.c.l.b16 %v504
      %v1268 = vunpack.c.l.b16 %v505
      %v1269 = vunpack.c.l.b16 %v506
      %v1270 = vunpack.c.l.b16 %v507
      %v1271 = vunpack.c.l.b16 %v508
      %v1272 = vunpack.c.l.b16 %v509
      %v1273 = vunpack.c.l.b16 %v510
      %v1274 = vunpack.c.l.b16 %v511
      %v1275 = vunpack.c.l.b16 %v512
      %v1276 = vunpack.c.l.b16 %v513
      %v1277 = vunpack.c.l.b16 %v514
      %v1278 = vunpack.c.l.b16 %v515
      %v1279 = vunpack.c.l.b16 %v516
      %v1280 = vunpack.c.l.b16 %v517
      %v1281 = vunpack.c.l.b16 %v518
      %v1282 = vunpack.c.l.b16 %v519
      %v1283 = vunpack.c.l.b16 %v520
      %v1284 = vunpack.c.l.b16 %v521
      %v1285 = vunpack.c.l.b16 %v522
      %v1286 = vunpack.c.l.b16 %v523
      %v1287 = vunpack.c.l.b16 %v524
      %v1288 = vunpack.c.l.b16 %v525
      %v1289 = vunpack.c.l.b16 %v526
      %v1290 = vunpack.c.l.b16 %v527
      %v1291 = vunpack.c.l.b16 %v528
      %v1292 = vunpack.c.l.b16 %v529
      %v1293 = vunpack.c.l.b16 %v530
      %v1294 = vunpack.c.l.b16 %v531
      %v1295 = vunpack.c.l.b16 %v532
      %v1296 = vunpack.c.l.b16 %v533
      %v1297 = vunpack.c.l.b16 %v534
      %v1298 = vunpack.c.l.b16 %v535
      %v1299 = vunpack.c.l.b16 %v536
      %v1300 = vunpack.c.l.b16 %v537
      %v1301 = vunpack.c.l.b16 %v538
      %v1302 = vunpack.c.l.b16 %v539
      %v1303 = vunpack.c.l.b16 %v540
      %v1304 = vunpack.c.l.b16 %v541
      %v1305 = vunpack.c.l.b16 %v542
      %v1306 = vunpack.c.l.b16 %v543
      %v1307 = vunpack.c.l.b16 %v544
      %v1308 = vunpack.c.l.b16 %v545
      %v1309 = vunpack.c.l.b16 %v546
      %v1310 = vunpack.c.l.b16 %v547
      %v1311 = vunpack.c.l.b16 %v548
      %v1312 = vunpack.c.l.b16 %v549
      %v1313 = vunpack.c.l.b16 %v550
      %v1314 = vunpack.c.l.b16 %v551
      %v1315 = vunpack.c.l.b16 %v552
      %v1316 = vunpack.c.l.b16 %v553
      %v1317 = vunpack.c.l.b16 %v554
      %v1318 = vunpack.c.l.b16 %v555
      %v1319 = vunpack.c.l.b16 %v556
      %v1320 = vunpack.c.l.b16 %v557
      %v1321 = vunpack.c.l.b16 %v558
      %v1322 = vunpack.c.l.b16 %v559
      %v1323 = vunpack.c.l.b16 %v560
      %v1324 = vunpack.c.l.b16 %v561
      %v1325 = vunpack.c.l.b16 %v562
      %v1326 = vunpack.c.l.b16 %v563
      %v1327 = vunpack.c.l.b16 %v564
      %v1328 = vunpack.c.l.b16 %v565
      %v1329 = vunpack.c.l.b16 %v566
      %v1330 = vunpack.c.l.b16 %v567
      %v1331 = vunpack.c.l.b16 %v568
      %v1332 = vunpack.c.l.b16 %v569
      %v1333 = vunpack.c.l.b16 %v570
      %v1334 = vunpack.c.l.b16 %v571
      %v1335 = vunpack.c.l.b16 %v572
      %v1336 = vunpack.c.l.b16 %v573
      %v1337 = vunpack.c.l.b16 %v574
      %v1338 = vunpack.c.l.b16 %v575
      %v1339 = vunpack.c.l.b16 %v576
      %v1340 = vpack.c.b16 %v1243, %v1242
      %v1341 = vpack.c.b16 %v1245, %v1244
      %v1342 = vpack.c.b16 %v1247, %v1246
      %v1343 = vpack.c.b16 %v1249, %v1248
      %v1344 = vpack.c.b16 %v1251, %v1250
      %v1345 = vpack.c.b16 %v1253, %v1252
      %v1346 = vpack.c.b16 %v1255, %v1254
      %v1347 = vpack.c.b16 %v1257, %v1256
      %v1348 = vpack.c.b16 %v1259, %v1258
      %v1349 = vpack.c.b16 %v1261, %v1260
      %v1350 = vpack.c.b16 %v1263, %v1262
      %v1351 = vpack.c.b16 %v1265, %v1264
      %v1352 = vpack.c.b16 %v1267, %v1266
      %v1353 = vpack.c.b16 %v1269, %v1268
      %v1354 = vpack.c.b16 %v1271, %v1270
      %v1355 = vpack.c.b16 %v1273, %v1272
      %v1356 = vpack.c.b16 %v1275, %v1274
      %v1357 = vpack.c.b16 %v1277, %v1276
      %v1358 = vpack.c.b16 %v1279, %v1278
      %v1359 = vpack.c.b16 %v1281, %v1280
      %v1360 = vpack.c.b16 %v1283, %v1282
      %v1361 = vpack.c.b16 %v1285, %v1284
      %v1362 = vpack.c.b16 %v1287, %v1286
      %v1363 = vpack.c.b16 %v1289, %v1288
      %v1364 = vpack.c.b16 %v1291, %v1290
      %v1365 = vpack.c.b16 %v1293, %v1292
      %v1366 = vpack.c.b16 %v1295, %v1294
      %v1367 = vpack.c.b16 %v1297, %v1296
      %v1368 = vpack.c.b16 %v1299, %v1298
      %v1369 = vpack.c.b16 %v1301, %v1300
      %v1370 = vpack.c.b16 %v1303, %v1302
      %v1371 = vpack.c.b16 %v1305, %v1304
      %v1372 = vpack.c.b16 %v1307, %v1306
      %v1373 = vpack.c.b16 %v1309, %v1308
      %v1374 = vpack.c.b16 %v1311, %v1310
      %v1375 = vpack.c.b16 %v1313, %v1312
      %v1376 = vpack.c.b16 %v1315, %v1314
      %v1377 = vpack.c.b16 %v1317, %v1316
      %v1378 = vpack.c.b16 %v1319, %v1318
      %v1379 = vpack.c.b16 %v1321, %v1320
      %v1380 = vpack.c.b16 %v1323, %v1322
      %v1381 = vpack.c.b16 %v1325, %v1324
      %v1382 = vpack.c.b16 %v1327, %v1326
      %v1383 = vpack.c.b16 %v1329, %v1328
      %v1384 = vpack.c.b16 %v1331, %v1330
      %v1385 = vpack.c.b16 %v1333, %v1332
      %v1386 = vpack.c.b16 %v1335, %v1334
      %v1387 = vpack.c.b16 %v1337, %v1336
      %v1388 = vpack.c.b16 %v1339, %v1338
      %vm1438 = vcmask 130048
      %v1440 = vsel %vm1438, %v942, 0
      %v1443 = vsel %vm1438, %v949, 0
      %v1446 = vsel %vm1438, %v956, 0
      %v1449 = vsel %vm1438, %v963, 0
      %v1452 = vsel %vm1438, %v970, 0
      %v1455 = vsel %vm1438, %v977, 0
      %v1458 = vsel %vm1438, %v984, 0
      %v1461 = vsel %vm1438, %v991, 0
      %v1464 = vsel %vm1438, %v998, 0
      %v1467 = vsel %vm1438, %v1005, 0
      %v1470 = vsel %vm1438, %v1012, 0
      %v1473 = vsel %vm1438, %v1019, 0
      %v1476 = vsel %vm1438, %v1026, 0
      %v1479 = vsel %vm1438, %v1033, 0
      %v1482 = vsel %vm1438, %v1040, 0
      %v1485 = vsel %vm1438, %v1047, 0
      %1487 = vmatprep.subr.bf16.mxu0 0
      %1488 = vmatpush1.bf16.msra.mxu0 %v1347
      %1489 = vmatprep.subr.bf16.mxu0 0
      %1490 = vmatpush1.bf16.msra.mxu0 %v1346
      %1491 = vmatprep.subr.bf16.mxu0 0
      %1492 = vmatpush1.bf16.msra.mxu0 %v1345
      %1493 = vmatprep.subr.bf16.mxu0 0
      %1494 = vmatpush1.bf16.msra.mxu0 %v1344
      %1495 = vmatprep.subr.bf16.mxu0 0
      %1496 = vmatpush1.bf16.msra.mxu0 %v1343
      %1497 = vmatprep.subr.bf16.mxu0 0
      %1498 = vmatpush1.bf16.msra.mxu0 %v1342
      %1499 = vmatprep.subr.bf16.mxu0 0
      %1500 = vmatpush1.bf16.msra.mxu0 %v1341
      %1501 = vmatprep.subr.bf16.mxu0 0
      %1502 = vmatpush1.bf16.msra.mxu0 %v1340
      %1503 = vmatprep.subr.bf16.mxu0 0
      %1504 = vmatpush2.bf16.msra.mxu0 %v1355
      %1505 = vmatprep.subr.bf16.mxu0 0
      %1506 = vmatpush2.bf16.msra.mxu0 %v1354
      %1507 = vmatprep.subr.bf16.mxu0 0
      %1508 = vmatpush2.bf16.msra.mxu0 %v1353
      %1509 = vmatprep.subr.bf16.mxu0 0
      %1510 = vmatpush2.bf16.msra.mxu0 %v1352
      %1511 = vmatprep.subr.bf16.mxu0 0
      %1512 = vmatpush2.bf16.msra.mxu0 %v1351
      %1513 = vmatprep.subr.bf16.mxu0 0
      %1514 = vmatpush2.bf16.msra.mxu0 %v1350
      %1515 = vmatprep.subr.bf16.mxu0 0
      %1516 = vmatpush2.bf16.msra.mxu0 %v1349
      %1517 = vmatprep.subr.bf16.mxu0 0
      %1518 = vmatpush2.bf16.msra.mxu0 %v1348
      %1519 = vmatprep.mubr.bf16.mxu0 %v937
      %1520 = vmatmul.mubr.bf16.gmra.mxu0 %v936
      %v1521 = vpop.f32.mrf.mxu0
      %v1522 = vadd.f32 %v582, %v1521
      %v1523 = vpop.f32.mrf.mxu0
      %v1524 = vpop.f32.mrf.mxu0
      %v1525 = vadd.f32 %v582, %v1524
      %v1526 = vpop.f32.mrf.mxu0
      %1527 = vmatprep.mubr.bf16.mxu0 %v944
      %1528 = vmatmul.mubr.bf16.gmra.mxu0 %v943
      %v1529 = vpop.f32.mrf.mxu0
      %v1530 = vadd.f32 %v582, %v1529
      %v1531 = vpop.f32.mrf.mxu0
      %v1532 = vpop.f32.mrf.mxu0
      %v1533 = vadd.f32 %v582, %v1532
      %v1534 = vpop.f32.mrf.mxu0
      %1535 = vmatprep.mubr.bf16.mxu0 %v951
      %1536 = vmatmul.mubr.bf16.gmra.mxu0 %v950
      %v1537 = vpop.f32.mrf.mxu0
      %v1538 = vadd.f32 %v582, %v1537
      %v1539 = vpop.f32.mrf.mxu0
      %v1540 = vpop.f32.mrf.mxu0
      %v1541 = vadd.f32 %v582, %v1540
      %v1542 = vpop.f32.mrf.mxu0
      %1543 = vmatprep.mubr.bf16.mxu0 %v958
      %1544 = vmatmul.mubr.bf16.gmra.mxu0 %v957
      %v1545 = vpop.f32.mrf.mxu0
      %v1546 = vadd.f32 %v582, %v1545
      %v1547 = vpop.f32.mrf.mxu0
      %v1548 = vpop.f32.mrf.mxu0
      %v1549 = vadd.f32 %v582, %v1548
      %v1550 = vpop.f32.mrf.mxu0
      %1551 = vmatprep.mubr.bf16.mxu0 %v965
      %1552 = vmatmul.mubr.bf16.gmra.mxu0 %v964
      %v1553 = vpop.f32.mrf.mxu0
      %v1554 = vadd.f32 %v582, %v1553
      %v1555 = vpop.f32.mrf.mxu0
      %v1556 = vpop.f32.mrf.mxu0
      %v1557 = vadd.f32 %v582, %v1556
      %v1558 = vpop.f32.mrf.mxu0
      %1559 = vmatprep.mubr.bf16.mxu0 %v972
      %1560 = vmatmul.mubr.bf16.gmra.mxu0 %v971
      %v1561 = vpop.f32.mrf.mxu0
      %v1562 = vadd.f32 %v582, %v1561
      %v1563 = vpop.f32.mrf.mxu0
      %v1564 = vpop.f32.mrf.mxu0
      %v1565 = vadd.f32 %v582, %v1564
      %v1566 = vpop.f32.mrf.mxu0
      %1567 = vmatprep.mubr.bf16.mxu0 %v979
      %1568 = vmatmul.mubr.bf16.gmra.mxu0 %v978
      %v1569 = vpop.f32.mrf.mxu0
      %v1570 = vadd.f32 %v582, %v1569
      %v1571 = vpop.f32.mrf.mxu0
      %v1572 = vpop.f32.mrf.mxu0
      %v1573 = vadd.f32 %v582, %v1572
      %v1574 = vpop.f32.mrf.mxu0
      %1575 = vmatprep.mubr.bf16.mxu0 %v986
      %1576 = vmatmul.mubr.bf16.gmra.mxu0 %v985
      %v1577 = vpop.f32.mrf.mxu0
      %v1578 = vadd.f32 %v582, %v1577
      %v1579 = vpop.f32.mrf.mxu0
      %v1580 = vpop.f32.mrf.mxu0
      %v1581 = vadd.f32 %v582, %v1580
      %v1582 = vpop.f32.mrf.mxu0
      %1583 = vmatprep.mubr.bf16.mxu0 %v993
      %1584 = vmatmul.mubr.bf16.gmra.mxu0 %v992
      %v1585 = vpop.f32.mrf.mxu0
      %v1586 = vadd.f32 %v582, %v1585
      %v1587 = vpop.f32.mrf.mxu0
      %v1588 = vpop.f32.mrf.mxu0
      %v1589 = vadd.f32 %v582, %v1588
      %v1590 = vpop.f32.mrf.mxu0
      %1591 = vmatprep.mubr.bf16.mxu0 %v1000
      %1592 = vmatmul.mubr.bf16.gmra.mxu0 %v999
      %v1593 = vpop.f32.mrf.mxu0
      %v1594 = vadd.f32 %v582, %v1593
      %v1595 = vpop.f32.mrf.mxu0
      %v1596 = vpop.f32.mrf.mxu0
      %v1597 = vadd.f32 %v582, %v1596
      %v1598 = vpop.f32.mrf.mxu0
      %1599 = vmatprep.mubr.bf16.mxu0 %v1007
      %1600 = vmatmul.mubr.bf16.gmra.mxu0 %v1006
      %v1601 = vpop.f32.mrf.mxu0
      %v1602 = vadd.f32 %v582, %v1601
      %v1603 = vpop.f32.mrf.mxu0
      %v1604 = vpop.f32.mrf.mxu0
      %v1605 = vadd.f32 %v582, %v1604
      %v1606 = vpop.f32.mrf.mxu0
      %1607 = vmatprep.mubr.bf16.mxu0 %v1014
      %1608 = vmatmul.mubr.bf16.gmra.mxu0 %v1013
      %v1609 = vpop.f32.mrf.mxu0
      %v1610 = vadd.f32 %v582, %v1609
      %v1611 = vpop.f32.mrf.mxu0
      %v1612 = vpop.f32.mrf.mxu0
      %v1613 = vadd.f32 %v582, %v1612
      %v1614 = vpop.f32.mrf.mxu0
      %1615 = vmatprep.mubr.bf16.mxu0 %v1021
      %1616 = vmatmul.mubr.bf16.gmra.mxu0 %v1020
      %v1617 = vpop.f32.mrf.mxu0
      %v1618 = vadd.f32 %v582, %v1617
      %v1619 = vpop.f32.mrf.mxu0
      %v1620 = vpop.f32.mrf.mxu0
      %v1621 = vadd.f32 %v582, %v1620
      %v1622 = vpop.f32.mrf.mxu0
      %1623 = vmatprep.mubr.bf16.mxu0 %v1028
      %1624 = vmatmul.mubr.bf16.gmra.mxu0 %v1027
      %v1625 = vpop.f32.mrf.mxu0
      %v1626 = vadd.f32 %v582, %v1625
      %v1627 = vpop.f32.mrf.mxu0
      %v1628 = vpop.f32.mrf.mxu0
      %v1629 = vadd.f32 %v582, %v1628
      %v1630 = vpop.f32.mrf.mxu0
      %1631 = vmatprep.mubr.bf16.mxu0 %v1035
      %1632 = vmatmul.mubr.bf16.gmra.mxu0 %v1034
      %v1633 = vpop.f32.mrf.mxu0
      %v1634 = vadd.f32 %v582, %v1633
      %v1635 = vpop.f32.mrf.mxu0
      %v1636 = vpop.f32.mrf.mxu0
      %v1637 = vadd.f32 %v582, %v1636
      %v1638 = vpop.f32.mrf.mxu0
      %1639 = vmatprep.mubr.bf16.mxu0 %v1042
      %1640 = vmatmul.mubr.bf16.gmra.mxu0 %v1041
      %v1641 = vpop.f32.mrf.mxu0
      %v1642 = vadd.f32 %v582, %v1641
      %v1643 = vpop.f32.mrf.mxu0
      %v1644 = vpop.f32.mrf.mxu0
      %v1645 = vadd.f32 %v582, %v1644
      %v1646 = vpop.f32.mrf.mxu0
      %1647 = vdwg.mxu0
      %1648 = vmatprep.subr.bf16.mxu0 0
      %1649 = vmatpush1.bf16.msra.mxu0 %v1363
      %1650 = vmatprep.subr.bf16.mxu0 0
      %1651 = vmatpush1.bf16.msra.mxu0 %v1362
      %1652 = vmatprep.subr.bf16.mxu0 0
      %1653 = vmatpush1.bf16.msra.mxu0 %v1361
      %1654 = vmatprep.subr.bf16.mxu0 0
      %1655 = vmatpush1.bf16.msra.mxu0 %v1360
      %1656 = vmatprep.subr.bf16.mxu0 0
      %1657 = vmatpush1.bf16.msra.mxu0 %v1359
      %1658 = vmatprep.subr.bf16.mxu0 0
      %1659 = vmatpush1.bf16.msra.mxu0 %v1358
      %1660 = vmatprep.subr.bf16.mxu0 0
      %1661 = vmatpush1.bf16.msra.mxu0 %v1357
      %1662 = vmatprep.subr.bf16.mxu0 0
      %1663 = vmatpush1.bf16.msra.mxu0 %v1356
      %1664 = vmatprep.subr.bf16.mxu0 0
      %1665 = vmatpush2.bf16.msra.mxu0 %v1371
      %1666 = vmatprep.subr.bf16.mxu0 0
      %1667 = vmatpush2.bf16.msra.mxu0 %v1370
      %1668 = vmatprep.subr.bf16.mxu0 0
      %1669 = vmatpush2.bf16.msra.mxu0 %v1369
      %1670 = vmatprep.subr.bf16.mxu0 0
      %1671 = vmatpush2.bf16.msra.mxu0 %v1368
      %1672 = vmatprep.subr.bf16.mxu0 0
      %1673 = vmatpush2.bf16.msra.mxu0 %v1367
      %1674 = vmatprep.subr.bf16.mxu0 0
      %1675 = vmatpush2.bf16.msra.mxu0 %v1366
      %1676 = vmatprep.subr.bf16.mxu0 0
      %1677 = vmatpush2.bf16.msra.mxu0 %v1365
      %1678 = vmatprep.subr.bf16.mxu0 0
      %1679 = vmatpush2.bf16.msra.mxu0 %v1364
      %1680 = vmatprep.mubr.bf16.mxu0 %v939
      %1681 = vmatmul.mubr.bf16.gmra.mxu0 %v938
      %v1682 = vpop.f32.mrf.mxu0
      %v1683 = vadd.f32 %v1522, %v1682
      %v1684 = vpop.f32.mrf.mxu0
      %v1685 = vpop.f32.mrf.mxu0
      %v1686 = vadd.f32 %v1525, %v1685
      %v1687 = vpop.f32.mrf.mxu0
      %1688 = vmatprep.mubr.bf16.mxu0 %v946
      %1689 = vmatmul.mubr.bf16.gmra.mxu0 %v945
      %v1690 = vpop.f32.mrf.mxu0
      %v1691 = vadd.f32 %v1530, %v1690
      %v1692 = vpop.f32.mrf.mxu0
      %v1693 = vpop.f32.mrf.mxu0
      %v1694 = vadd.f32 %v1533, %v1693
      %v1695 = vpop.f32.mrf.mxu0
      %1696 = vmatprep.mubr.bf16.mxu0 %v953
      %1697 = vmatmul.mubr.bf16.gmra.mxu0 %v952
      %v1698 = vpop.f32.mrf.mxu0
      %v1699 = vadd.f32 %v1538, %v1698
      %v1700 = vpop.f32.mrf.mxu0
      %v1701 = vpop.f32.mrf.mxu0
      %v1702 = vadd.f32 %v1541, %v1701
      %v1703 = vpop.f32.mrf.mxu0
      %1704 = vmatprep.mubr.bf16.mxu0 %v960
      %1705 = vmatmul.mubr.bf16.gmra.mxu0 %v959
      %v1706 = vpop.f32.mrf.mxu0
      %v1707 = vadd.f32 %v1546, %v1706
      %v1708 = vpop.f32.mrf.mxu0
      %v1709 = vpop.f32.mrf.mxu0
      %v1710 = vadd.f32 %v1549, %v1709
      %v1711 = vpop.f32.mrf.mxu0
      %1712 = vmatprep.mubr.bf16.mxu0 %v967
      %1713 = vmatmul.mubr.bf16.gmra.mxu0 %v966
      %v1714 = vpop.f32.mrf.mxu0
      %v1715 = vadd.f32 %v1554, %v1714
      %v1716 = vpop.f32.mrf.mxu0
      %v1717 = vpop.f32.mrf.mxu0
      %v1718 = vadd.f32 %v1557, %v1717
      %v1719 = vpop.f32.mrf.mxu0
      %1720 = vmatprep.mubr.bf16.mxu0 %v974
      %1721 = vmatmul.mubr.bf16.gmra.mxu0 %v973
      %v1722 = vpop.f32.mrf.mxu0
      %v1723 = vadd.f32 %v1562, %v1722
      %v1724 = vpop.f32.mrf.mxu0
      %v1725 = vpop.f32.mrf.mxu0
      %v1726 = vadd.f32 %v1565, %v1725
      %v1727 = vpop.f32.mrf.mxu0
      %1728 = vmatprep.mubr.bf16.mxu0 %v981
      %1729 = vmatmul.mubr.bf16.gmra.mxu0 %v980
      %v1730 = vpop.f32.mrf.mxu0
      %v1731 = vadd.f32 %v1570, %v1730
      %v1732 = vpop.f32.mrf.mxu0
      %v1733 = vpop.f32.mrf.mxu0
      %v1734 = vadd.f32 %v1573, %v1733
      %v1735 = vpop.f32.mrf.mxu0
      %1736 = vmatprep.mubr.bf16.mxu0 %v988
      %1737 = vmatmul.mubr.bf16.gmra.mxu0 %v987
      %v1738 = vpop.f32.mrf.mxu0
      %v1739 = vadd.f32 %v1578, %v1738
      %v1740 = vpop.f32.mrf.mxu0
      %v1741 = vpop.f32.mrf.mxu0
      %v1742 = vadd.f32 %v1581, %v1741
      %v1743 = vpop.f32.mrf.mxu0
      %1744 = vmatprep.mubr.bf16.mxu0 %v995
      %1745 = vmatmul.mubr.bf16.gmra.mxu0 %v994
      %v1746 = vpop.f32.mrf.mxu0
      %v1747 = vadd.f32 %v1586, %v1746
      %v1748 = vpop.f32.mrf.mxu0
      %v1749 = vpop.f32.mrf.mxu0
      %v1750 = vadd.f32 %v1589, %v1749
      %v1751 = vpop.f32.mrf.mxu0
      %1752 = vmatprep.mubr.bf16.mxu0 %v1002
      %1753 = vmatmul.mubr.bf16.gmra.mxu0 %v1001
      %v1754 = vpop.f32.mrf.mxu0
      %v1755 = vadd.f32 %v1594, %v1754
      %v1756 = vpop.f32.mrf.mxu0
      %v1757 = vpop.f32.mrf.mxu0
      %v1758 = vadd.f32 %v1597, %v1757
      %v1759 = vpop.f32.mrf.mxu0
      %1760 = vmatprep.mubr.bf16.mxu0 %v1009
      %1761 = vmatmul.mubr.bf16.gmra.mxu0 %v1008
      %v1762 = vpop.f32.mrf.mxu0
      %v1763 = vadd.f32 %v1602, %v1762
      %v1764 = vpop.f32.mrf.mxu0
      %v1765 = vpop.f32.mrf.mxu0
      %v1766 = vadd.f32 %v1605, %v1765
      %v1767 = vpop.f32.mrf.mxu0
      %1768 = vmatprep.mubr.bf16.mxu0 %v1016
      %1769 = vmatmul.mubr.bf16.gmra.mxu0 %v1015
      %v1770 = vpop.f32.mrf.mxu0
      %v1771 = vadd.f32 %v1610, %v1770
      %v1772 = vpop.f32.mrf.mxu0
      %v1773 = vpop.f32.mrf.mxu0
      %v1774 = vadd.f32 %v1613, %v1773
      %v1775 = vpop.f32.mrf.mxu0
      %1776 = vmatprep.mubr.bf16.mxu0 %v1023
      %1777 = vmatmul.mubr.bf16.gmra.mxu0 %v1022
      %v1778 = vpop.f32.mrf.mxu0
      %v1779 = vadd.f32 %v1618, %v1778
      %v1780 = vpop.f32.mrf.mxu0
      %v1781 = vpop.f32.mrf.mxu0
      %v1782 = vadd.f32 %v1621, %v1781
      %v1783 = vpop.f32.mrf.mxu0
      %1784 = vmatprep.mubr.bf16.mxu0 %v1030
      %1785 = vmatmul.mubr.bf16.gmra.mxu0 %v1029
      %v1786 = vpop.f32.mrf.mxu0
      %v1787 = vadd.f32 %v1626, %v1786
      %v1788 = vpop.f32.mrf.mxu0
      %v1789 = vpop.f32.mrf.mxu0
      %v1790 = vadd.f32 %v1629, %v1789
      %v1791 = vpop.f32.mrf.mxu0
      %1792 = vmatprep.mubr.bf16.mxu0 %v1037
      %1793 = vmatmul.mubr.bf16.gmra.mxu0 %v1036
      %v1794 = vpop.f32.mrf.mxu0
      %v1795 = vadd.f32 %v1634, %v1794
      %v1796 = vpop.f32.mrf.mxu0
      %v1797 = vpop.f32.mrf.mxu0
      %v1798 = vadd.f32 %v1637, %v1797
      %v1799 = vpop.f32.mrf.mxu0
      %1800 = vmatprep.mubr.bf16.mxu0 %v1044
      %1801 = vmatmul.mubr.bf16.gmra.mxu0 %v1043
      %v1802 = vpop.f32.mrf.mxu0
      %v1803 = vadd.f32 %v1642, %v1802
      %v1804 = vpop.f32.mrf.mxu0
      %v1805 = vpop.f32.mrf.mxu0
      %v1806 = vadd.f32 %v1645, %v1805
      %v1807 = vpop.f32.mrf.mxu0
      %1808 = vdwg.mxu0
      %1809 = vmatprep.subr.bf16.mxu0 0
      %1810 = vmatpush1.bf16.msra.mxu0 %v1379
      %1811 = vmatprep.subr.bf16.mxu0 0
      %1812 = vmatpush1.bf16.msra.mxu0 %v1378
      %1813 = vmatprep.subr.bf16.mxu0 0
      %1814 = vmatpush1.bf16.msra.mxu0 %v1377
      %1815 = vmatprep.subr.bf16.mxu0 0
      %1816 = vmatpush1.bf16.msra.mxu0 %v1376
      %1817 = vmatprep.subr.bf16.mxu0 0
      %1818 = vmatpush1.bf16.msra.mxu0 %v1375
      %1819 = vmatprep.subr.bf16.mxu0 0
      %1820 = vmatpush1.bf16.msra.mxu0 %v1374
      %1821 = vmatprep.subr.bf16.mxu0 0
      %1822 = vmatpush1.bf16.msra.mxu0 %v1373
      %1823 = vmatprep.subr.bf16.mxu0 0
      %1824 = vmatpush1.bf16.msra.mxu0 %v1372
      %1825 = vmatprep.subr.bf16.mxu0 0
      %1826 = vmatpush2.bf16.msra.mxu0 %v1387
      %1827 = vmatprep.subr.bf16.mxu0 0
      %1828 = vmatpush2.bf16.msra.mxu0 %v1386
      %1829 = vmatprep.subr.bf16.mxu0 0
      %1830 = vmatpush2.bf16.msra.mxu0 %v1385
      %1831 = vmatprep.subr.bf16.mxu0 0
      %1832 = vmatpush2.bf16.msra.mxu0 %v1384
      %1833 = vmatprep.subr.bf16.mxu0 0
      %1834 = vmatpush2.bf16.msra.mxu0 %v1383
      %1835 = vmatprep.subr.bf16.mxu0 0
      %1836 = vmatpush2.bf16.msra.mxu0 %v1382
      %1837 = vmatprep.subr.bf16.mxu0 0
      %1838 = vmatpush2.bf16.msra.mxu0 %v1381
      %1839 = vmatprep.subr.bf16.mxu0 0
      %1840 = vmatpush2.bf16.msra.mxu0 %v1380
      %1841 = vmatprep.mubr.bf16.mxu0 %v941
      %1842 = vmatmul.mubr.bf16.gmra.mxu0 %v940
      %v1843 = vpop.f32.mrf.mxu0
      %v1844 = vadd.f32 %v1683, %v1843
      %v1845 = vpop.f32.mrf.mxu0
      %v1846 = vpop.f32.mrf.mxu0
      %v1847 = vadd.f32 %v1686, %v1846
      %v1848 = vpop.f32.mrf.mxu0
      %1849 = vmatprep.mubr.bf16.mxu0 %v948
      %1850 = vmatmul.mubr.bf16.gmra.mxu0 %v947
      %v1851 = vpop.f32.mrf.mxu0
      %v1852 = vadd.f32 %v1691, %v1851
      %v1853 = vpop.f32.mrf.mxu0
      %v1854 = vpop.f32.mrf.mxu0
      %v1855 = vadd.f32 %v1694, %v1854
      %v1856 = vpop.f32.mrf.mxu0
      %1857 = vmatprep.mubr.bf16.mxu0 %v955
      %1858 = vmatmul.mubr.bf16.gmra.mxu0 %v954
      %v1859 = vpop.f32.mrf.mxu0
      %v1860 = vadd.f32 %v1699, %v1859
      %v1861 = vpop.f32.mrf.mxu0
      %v1862 = vpop.f32.mrf.mxu0
      %v1863 = vadd.f32 %v1702, %v1862
      %v1864 = vpop.f32.mrf.mxu0
      %1865 = vmatprep.mubr.bf16.mxu0 %v962
      %1866 = vmatmul.mubr.bf16.gmra.mxu0 %v961
      %v1867 = vpop.f32.mrf.mxu0
      %v1868 = vadd.f32 %v1707, %v1867
      %v1869 = vpop.f32.mrf.mxu0
      %v1870 = vpop.f32.mrf.mxu0
      %v1871 = vadd.f32 %v1710, %v1870
      %v1872 = vpop.f32.mrf.mxu0
      %1873 = vmatprep.mubr.bf16.mxu0 %v969
      %1874 = vmatmul.mubr.bf16.gmra.mxu0 %v968
      %v1875 = vpop.f32.mrf.mxu0
      %v1876 = vadd.f32 %v1715, %v1875
      %v1877 = vpop.f32.mrf.mxu0
      %v1878 = vpop.f32.mrf.mxu0
      %v1879 = vadd.f32 %v1718, %v1878
      %v1880 = vpop.f32.mrf.mxu0
      %1881 = vmatprep.mubr.bf16.mxu0 %v976
      %1882 = vmatmul.mubr.bf16.gmra.mxu0 %v975
      %v1883 = vpop.f32.mrf.mxu0
      %v1884 = vadd.f32 %v1723, %v1883
      %v1885 = vpop.f32.mrf.mxu0
      %v1886 = vpop.f32.mrf.mxu0
      %v1887 = vadd.f32 %v1726, %v1886
      %v1888 = vpop.f32.mrf.mxu0
      %1889 = vmatprep.mubr.bf16.mxu0 %v983
      %1890 = vmatmul.mubr.bf16.gmra.mxu0 %v982
      %v1891 = vpop.f32.mrf.mxu0
      %v1892 = vadd.f32 %v1731, %v1891
      %v1893 = vpop.f32.mrf.mxu0
      %v1894 = vpop.f32.mrf.mxu0
      %v1895 = vadd.f32 %v1734, %v1894
      %v1896 = vpop.f32.mrf.mxu0
      %1897 = vmatprep.mubr.bf16.mxu0 %v990
      %1898 = vmatmul.mubr.bf16.gmra.mxu0 %v989
      %v1899 = vpop.f32.mrf.mxu0
      %v1900 = vadd.f32 %v1739, %v1899
      %v1901 = vpop.f32.mrf.mxu0
      %v1902 = vpop.f32.mrf.mxu0
      %v1903 = vadd.f32 %v1742, %v1902
      %v1904 = vpop.f32.mrf.mxu0
      %1905 = vmatprep.mubr.bf16.mxu0 %v997
      %1906 = vmatmul.mubr.bf16.gmra.mxu0 %v996
      %v1907 = vpop.f32.mrf.mxu0
      %v1908 = vadd.f32 %v1747, %v1907
      %v1909 = vpop.f32.mrf.mxu0
      %v1910 = vpop.f32.mrf.mxu0
      %v1911 = vadd.f32 %v1750, %v1910
      %v1912 = vpop.f32.mrf.mxu0
      %1913 = vmatprep.mubr.bf16.mxu0 %v1004
      %1914 = vmatmul.mubr.bf16.gmra.mxu0 %v1003
      %v1915 = vpop.f32.mrf.mxu0
      %v1916 = vadd.f32 %v1755, %v1915
      %v1917 = vpop.f32.mrf.mxu0
      %v1918 = vpop.f32.mrf.mxu0
      %v1919 = vadd.f32 %v1758, %v1918
      %v1920 = vpop.f32.mrf.mxu0
      %1921 = vmatprep.mubr.bf16.mxu0 %v1011
      %1922 = vmatmul.mubr.bf16.gmra.mxu0 %v1010
      %v1923 = vpop.f32.mrf.mxu0
      %v1924 = vadd.f32 %v1763, %v1923
      %v1925 = vpop.f32.mrf.mxu0
      %v1926 = vpop.f32.mrf.mxu0
      %v1927 = vadd.f32 %v1766, %v1926
      %v1928 = vpop.f32.mrf.mxu0
      %1929 = vmatprep.mubr.bf16.mxu0 %v1018
      %1930 = vmatmul.mubr.bf16.gmra.mxu0 %v1017
      %v1931 = vpop.f32.mrf.mxu0
      %v1932 = vadd.f32 %v1771, %v1931
      %v1933 = vpop.f32.mrf.mxu0
      %v1934 = vpop.f32.mrf.mxu0
      %v1935 = vadd.f32 %v1774, %v1934
      %v1936 = vpop.f32.mrf.mxu0
      %1937 = vmatprep.mubr.bf16.mxu0 %v1025
      %1938 = vmatmul.mubr.bf16.gmra.mxu0 %v1024
      %v1939 = vpop.f32.mrf.mxu0
      %v1940 = vadd.f32 %v1779, %v1939
      %v1941 = vpop.f32.mrf.mxu0
      %v1942 = vpop.f32.mrf.mxu0
      %v1943 = vadd.f32 %v1782, %v1942
      %v1944 = vpop.f32.mrf.mxu0
      %1945 = vmatprep.mubr.bf16.mxu0 %v1032
      %1946 = vmatmul.mubr.bf16.gmra.mxu0 %v1031
      %v1947 = vpop.f32.mrf.mxu0
      %v1948 = vadd.f32 %v1787, %v1947
      %v1949 = vpop.f32.mrf.mxu0
      %v1950 = vpop.f32.mrf.mxu0
      %v1951 = vadd.f32 %v1790, %v1950
      %v1952 = vpop.f32.mrf.mxu0
      %1953 = vmatprep.mubr.bf16.mxu0 %v1039
      %1954 = vmatmul.mubr.bf16.gmra.mxu0 %v1038
      %v1955 = vpop.f32.mrf.mxu0
      %v1956 = vadd.f32 %v1795, %v1955
      %v1957 = vpop.f32.mrf.mxu0
      %v1958 = vpop.f32.mrf.mxu0
      %v1959 = vadd.f32 %v1798, %v1958
      %v1960 = vpop.f32.mrf.mxu0
      %1961 = vmatprep.mubr.bf16.mxu0 %v1046
      %1962 = vmatmul.mubr.bf16.gmra.mxu0 %v1045
      %v1963 = vpop.f32.mrf.mxu0
      %v1964 = vadd.f32 %v1803, %v1963
      %v1965 = vpop.f32.mrf.mxu0
      %v1966 = vpop.f32.mrf.mxu0
      %v1967 = vadd.f32 %v1806, %v1966
      %v1968 = vpop.f32.mrf.mxu0
      %1969 = vdwg.mxu0
      %1970 = vmatprep.subr.bf16.mxu0 0
      %1971 = vmatpush1.bf16.msra.mxu0 0
      %1972 = vmatprep.subr.bf16.mxu0 0
      %1973 = vmatpush1.bf16.msra.mxu0 0
      %1974 = vmatprep.subr.bf16.mxu0 0
      %1975 = vmatpush1.bf16.msra.mxu0 0
      %1976 = vmatprep.subr.bf16.mxu0 0
      %1977 = vmatpush1.bf16.msra.mxu0 0
      %1978 = vmatprep.subr.bf16.mxu0 0
      %1979 = vmatpush1.bf16.msra.mxu0 0
      %1980 = vmatprep.subr.bf16.mxu0 0
      %1981 = vmatpush1.bf16.msra.mxu0 0
      %1982 = vmatprep.subr.bf16.mxu0 0
      %1983 = vmatpush1.bf16.msra.mxu0 0
      %1984 = vmatprep.subr.bf16.mxu0 0
      %1985 = vmatpush1.bf16.msra.mxu0 %v1388
      %1986 = vmatprep.subr.bf16.mxu0 0
      %1987 = vmatpush2.bf16.msra.mxu0 0
      %1988 = vmatprep.subr.bf16.mxu0 0
      %1989 = vmatpush2.bf16.msra.mxu0 0
      %1990 = vmatprep.subr.bf16.mxu0 0
      %1991 = vmatpush2.bf16.msra.mxu0 0
      %1992 = vmatprep.subr.bf16.mxu0 0
      %1993 = vmatpush2.bf16.msra.mxu0 0
      %1994 = vmatprep.subr.bf16.mxu0 0
      %1995 = vmatpush2.bf16.msra.mxu0 0
      %1996 = vmatprep.subr.bf16.mxu0 0
      %1997 = vmatpush2.bf16.msra.mxu0 0
      %1998 = vmatprep.subr.bf16.mxu0 0
      %1999 = vmatpush2.bf16.msra.mxu0 0
      %2000 = vmatprep.subr.bf16.mxu0 0
      %2001 = vmatpush2.bf16.msra.mxu0 0
      %2002 = vmatprep.mubr.bf16.mxu0 0
      %2003 = vmatmul.mubr.bf16.gmra.mxu0 %v1440
      %v2004 = vpop.f32.mrf.mxu0
      %v2005 = vadd.f32 %v1844, %v2004
      %v2006 = vpop.f32.mrf.mxu0
      %v2007 = vpop.f32.mrf.mxu0
      %v2008 = vadd.f32 %v1847, %v2007
      %v2009 = vpop.f32.mrf.mxu0
      %2010 = vmatprep.mubr.bf16.mxu0 0
      %2011 = vmatmul.mubr.bf16.gmra.mxu0 %v1443
      %v2012 = vpop.f32.mrf.mxu0
      %v2013 = vadd.f32 %v1852, %v2012
      %v2014 = vpop.f32.mrf.mxu0
      %v2015 = vpop.f32.mrf.mxu0
      %v2016 = vadd.f32 %v1855, %v2015
      %v2017 = vpop.f32.mrf.mxu0
      %2018 = vmatprep.mubr.bf16.mxu0 0
      %2019 = vmatmul.mubr.bf16.gmra.mxu0 %v1446
      %v2020 = vpop.f32.mrf.mxu0
      %v2021 = vadd.f32 %v1860, %v2020
      %v2022 = vpop.f32.mrf.mxu0
      %v2023 = vpop.f32.mrf.mxu0
      %v2024 = vadd.f32 %v1863, %v2023
      %v2025 = vpop.f32.mrf.mxu0
      %2026 = vmatprep.mubr.bf16.mxu0 0
      %2027 = vmatmul.mubr.bf16.gmra.mxu0 %v1449
      %v2028 = vpop.f32.mrf.mxu0
      %v2029 = vadd.f32 %v1868, %v2028
      %v2030 = vpop.f32.mrf.mxu0
      %v2031 = vpop.f32.mrf.mxu0
      %v2032 = vadd.f32 %v1871, %v2031
      %v2033 = vpop.f32.mrf.mxu0
      %2034 = vmatprep.mubr.bf16.mxu0 0
      %2035 = vmatmul.mubr.bf16.gmra.mxu0 %v1452
      %v2036 = vpop.f32.mrf.mxu0
      %v2037 = vadd.f32 %v1876, %v2036
      %v2038 = vpop.f32.mrf.mxu0
      %v2039 = vpop.f32.mrf.mxu0
      %v2040 = vadd.f32 %v1879, %v2039
      %v2041 = vpop.f32.mrf.mxu0
      %2042 = vmatprep.mubr.bf16.mxu0 0
      %2043 = vmatmul.mubr.bf16.gmra.mxu0 %v1455
      %v2044 = vpop.f32.mrf.mxu0
      %v2045 = vadd.f32 %v1884, %v2044
      %v2046 = vpop.f32.mrf.mxu0
      %v2047 = vpop.f32.mrf.mxu0
      %v2048 = vadd.f32 %v1887, %v2047
      %v2049 = vpop.f32.mrf.mxu0
      %2050 = vmatprep.mubr.bf16.mxu0 0
      %2051 = vmatmul.mubr.bf16.gmra.mxu0 %v1458
      %v2052 = vpop.f32.mrf.mxu0
      %v2053 = vadd.f32 %v1892, %v2052
      %v2054 = vpop.f32.mrf.mxu0
      %v2055 = vpop.f32.mrf.mxu0
      %v2056 = vadd.f32 %v1895, %v2055
      %v2057 = vpop.f32.mrf.mxu0
      %2058 = vmatprep.mubr.bf16.mxu0 0
      %2059 = vmatmul.mubr.bf16.gmra.mxu0 %v1461
      %v2060 = vpop.f32.mrf.mxu0
      %v2061 = vadd.f32 %v1900, %v2060
      %v2062 = vpop.f32.mrf.mxu0
      %v2063 = vpop.f32.mrf.mxu0
      %v2064 = vadd.f32 %v1903, %v2063
      %v2065 = vpop.f32.mrf.mxu0
      %2066 = vmatprep.mubr.bf16.mxu0 0
      %2067 = vmatmul.mubr.bf16.gmra.mxu0 %v1464
      %v2068 = vpop.f32.mrf.mxu0
      %v2069 = vadd.f32 %v1908, %v2068
      %v2070 = vpop.f32.mrf.mxu0
      %v2071 = vpop.f32.mrf.mxu0
      %v2072 = vadd.f32 %v1911, %v2071
      %v2073 = vpop.f32.mrf.mxu0
      %2074 = vmatprep.mubr.bf16.mxu0 0
      %2075 = vmatmul.mubr.bf16.gmra.mxu0 %v1467
      %v2076 = vpop.f32.mrf.mxu0
      %v2077 = vadd.f32 %v1916, %v2076
      %v2078 = vpop.f32.mrf.mxu0
      %v2079 = vpop.f32.mrf.mxu0
      %v2080 = vadd.f32 %v1919, %v2079
      %v2081 = vpop.f32.mrf.mxu0
      %2082 = vmatprep.mubr.bf16.mxu0 0
      %2083 = vmatmul.mubr.bf16.gmra.mxu0 %v1470
      %v2084 = vpop.f32.mrf.mxu0
      %v2085 = vadd.f32 %v1924, %v2084
      %v2086 = vpop.f32.mrf.mxu0
      %v2087 = vpop.f32.mrf.mxu0
      %v2088 = vadd.f32 %v1927, %v2087
      %v2089 = vpop.f32.mrf.mxu0
      %2090 = vmatprep.mubr.bf16.mxu0 0
      %2091 = vmatmul.mubr.bf16.gmra.mxu0 %v1473
      %v2092 = vpop.f32.mrf.mxu0
      %v2093 = vadd.f32 %v1932, %v2092
      %v2094 = vpop.f32.mrf.mxu0
      %v2095 = vpop.f32.mrf.mxu0
      %v2096 = vadd.f32 %v1935, %v2095
      %v2097 = vpop.f32.mrf.mxu0
      %2098 = vmatprep.mubr.bf16.mxu0 0
      %2099 = vmatmul.mubr.bf16.gmra.mxu0 %v1476
      %v2100 = vpop.f32.mrf.mxu0
      %v2101 = vadd.f32 %v1940, %v2100
      %v2102 = vpop.f32.mrf.mxu0
      %v2103 = vpop.f32.mrf.mxu0
      %v2104 = vadd.f32 %v1943, %v2103
      %v2105 = vpop.f32.mrf.mxu0
      %2106 = vmatprep.mubr.bf16.mxu0 0
      %2107 = vmatmul.mubr.bf16.gmra.mxu0 %v1479
      %v2108 = vpop.f32.mrf.mxu0
      %v2109 = vadd.f32 %v1948, %v2108
      %v2110 = vpop.f32.mrf.mxu0
      %v2111 = vpop.f32.mrf.mxu0
      %v2112 = vadd.f32 %v1951, %v2111
      %v2113 = vpop.f32.mrf.mxu0
      %2114 = vmatprep.mubr.bf16.mxu0 0
      %2115 = vmatmul.mubr.bf16.gmra.mxu0 %v1482
      %v2116 = vpop.f32.mrf.mxu0
      %v2117 = vadd.f32 %v1956, %v2116
      %v2118 = vpop.f32.mrf.mxu0
      %v2119 = vpop.f32.mrf.mxu0
      %v2120 = vadd.f32 %v1959, %v2119
      %v2121 = vpop.f32.mrf.mxu0
      %2122 = vmatprep.mubr.bf16.mxu0 0
      %2123 = vmatmul.mubr.bf16.gmra.mxu0 %v1485
      %v2124 = vpop.f32.mrf.mxu0
      %v2125 = vadd.f32 %v1964, %v2124
      %v2126 = vpop.f32.mrf.mxu0
      %v2127 = vpop.f32.mrf.mxu0
      %v2128 = vadd.f32 %v1967, %v2127
      %v2129 = vpop.f32.mrf.mxu0
      %2130 = vdwg.mxu0
      %v2131 = vmax.f32 %v2005, 0.0
      %v2132 = vmax.f32 %v2008, 0.0
      %v2133 = vmax.f32 %v2013, 0.0
      %v2134 = vmax.f32 %v2016, 0.0
      %v2135 = vmax.f32 %v2021, 0.0
      %v2136 = vmax.f32 %v2024, 0.0
      %v2137 = vmax.f32 %v2029, 0.0
      %v2138 = vmax.f32 %v2032, 0.0
      %v2139 = vmax.f32 %v2037, 0.0
      %v2140 = vmax.f32 %v2040, 0.0
      %v2141 = vmax.f32 %v2045, 0.0
      %v2142 = vmax.f32 %v2048, 0.0
      %v2143 = vmax.f32 %v2053, 0.0
      %v2144 = vmax.f32 %v2056, 0.0
      %v2145 = vmax.f32 %v2061, 0.0
      %v2146 = vmax.f32 %v2064, 0.0
      %v2147 = vmax.f32 %v2069, 0.0
      %v2148 = vmax.f32 %v2072, 0.0
      %v2149 = vmax.f32 %v2077, 0.0
      %v2150 = vmax.f32 %v2080, 0.0
      %v2151 = vmax.f32 %v2085, 0.0
      %v2152 = vmax.f32 %v2088, 0.0
      %v2153 = vmax.f32 %v2093, 0.0
      %v2154 = vmax.f32 %v2096, 0.0
      %v2155 = vmax.f32 %v2101, 0.0
      %v2156 = vmax.f32 %v2104, 0.0
      %v2157 = vmax.f32 %v2109, 0.0
      %v2158 = vmax.f32 %v2112, 0.0
      %v2159 = vmax.f32 %v2117, 0.0
      %v2160 = vmax.f32 %v2120, 0.0
      %v2161 = vmax.f32 %v2125, 0.0
      %v2162 = vmax.f32 %v2128, 0.0
      %v2163 = vpack.c.bf16 %v2132, %v2131
      %v2164 = vpack.c.bf16 %v2134, %v2133
      %v2165 = vpack.c.bf16 %v2136, %v2135
      %v2166 = vpack.c.bf16 %v2138, %v2137
      %v2167 = vpack.c.bf16 %v2140, %v2139
      %v2168 = vpack.c.bf16 %v2142, %v2141
      %v2169 = vpack.c.bf16 %v2144, %v2143
      %v2170 = vpack.c.bf16 %v2146, %v2145
      %v2171 = vpack.c.bf16 %v2148, %v2147
      %v2172 = vpack.c.bf16 %v2150, %v2149
      %v2173 = vpack.c.bf16 %v2152, %v2151
      %v2174 = vpack.c.bf16 %v2154, %v2153
      %v2175 = vpack.c.bf16 %v2156, %v2155
      %v2176 = vpack.c.bf16 %v2158, %v2157
      %v2177 = vpack.c.bf16 %v2160, %v2159
      %v2178 = vpack.c.bf16 %v2162, %v2161
      %v2179 = vld [vmem:[%s3] sm:$0xf]
      %v2180 = vld [vmem:[%s3 + $0x4] sm:$0xf]
      %v2181 = vld [vmem:[%s3 + $0x8] sm:$0xf]
      %v2182 = vld [vmem:[%s3 + $0xc] sm:$0xf]
      %v2183 = vld [vmem:[%s3 + $0x10] sm:$0xf]
      %v2184 = vld [vmem:[%s3 + $0x14] sm:$0xf]
      %v2185 = vld [vmem:[%s3 + $0x18] sm:$0xf]
      %v2186 = vld [vmem:[%s3 + $0x1c] sm:$0xf]
      %v2187 = vld [vmem:[%s3 + $0x20] sm:$0xf]
      %v2188 = vld [vmem:[%s3 + $0x24] sm:$0xf]
      %v2189 = vld [vmem:[%s3 + $0x28] sm:$0xf]
      %v2190 = vld [vmem:[%s3 + $0x2c] sm:$0xf]
      %v2191 = vld [vmem:[%s3 + $0x30] sm:$0xf]
      %v2192 = vld [vmem:[%s3 + $0x34] sm:$0xf]
      %v2193 = vld [vmem:[%s3 + $0x38] sm:$0xf]
      %v2194 = vld [vmem:[%s3 + $0x3c] sm:$0xf]
      %s2195 = scalar_lea.vmem %s5, 1
      %v2196 = vld [vmem:[%s2195] sm:$0x1]
      %v2198 = vlaneseq
      %v2199 = vshrl.u32 %v2198, 7
      %v2200 = vsub.s32 0, %v2199
      %v2201 = vrot.slane %v2196, %v2200
      %v2219 = vunpack.c.l.b16 %v2179
      %v2220 = vunpack.c.l.b16 %v2180
      %v2221 = vunpack.c.l.b16 %v2181
      %v2222 = vunpack.c.l.b16 %v2182
      %v2223 = vunpack.c.l.b16 %v2183
      %v2224 = vunpack.c.l.b16 %v2184
      %v2225 = vunpack.c.l.b16 %v2185
      %v2226 = vunpack.c.l.b16 %v2186
      %v2227 = vunpack.c.l.b16 %v2187
      %v2228 = vunpack.c.l.b16 %v2188
      %v2229 = vunpack.c.l.b16 %v2189
      %v2230 = vunpack.c.l.b16 %v2190
      %v2231 = vunpack.c.l.b16 %v2191
      %v2232 = vunpack.c.l.b16 %v2192
      %v2233 = vunpack.c.l.b16 %v2193
      %v2234 = vunpack.c.l.b16 %v2194
      %v2235 = vpack.c.b16 %v2220, %v2219
      %v2236 = vpack.c.b16 %v2222, %v2221
      %v2237 = vpack.c.b16 %v2224, %v2223
      %v2238 = vpack.c.b16 %v2226, %v2225
      %v2239 = vpack.c.b16 %v2228, %v2227
      %v2240 = vpack.c.b16 %v2230, %v2229
      %v2241 = vpack.c.b16 %v2232, %v2231
      %v2242 = vpack.c.b16 %v2234, %v2233
      %2251 = vmatprep.subr.bf16.mxu0 0
      %2252 = vmatpush1.bf16.msra.mxu0 %v2242
      %2253 = vmatprep.subr.bf16.mxu0 0
      %2254 = vmatpush1.bf16.msra.mxu0 %v2241
      %2255 = vmatprep.subr.bf16.mxu0 0
      %2256 = vmatpush1.bf16.msra.mxu0 %v2240
      %2257 = vmatprep.subr.bf16.mxu0 0
      %2258 = vmatpush1.bf16.msra.mxu0 %v2239
      %2259 = vmatprep.subr.bf16.mxu0 0
      %2260 = vmatpush1.bf16.msra.mxu0 %v2238
      %2261 = vmatprep.subr.bf16.mxu0 0
      %2262 = vmatpush1.bf16.msra.mxu0 %v2237
      %2263 = vmatprep.subr.bf16.mxu0 0
      %2264 = vmatpush1.bf16.msra.mxu0 %v2236
      %2265 = vmatprep.subr.bf16.mxu0 0
      %2266 = vmatpush1.bf16.msra.mxu0 %v2235
      %2267 = vmatprep.subr.bf16.mxu0 0
      %2268 = vmatpush2.bf16.msra.mxu0 0
      %2269 = vmatprep.subr.bf16.mxu0 0
      %2270 = vmatpush2.bf16.msra.mxu0 0
      %2271 = vmatprep.subr.bf16.mxu0 0
      %2272 = vmatpush2.bf16.msra.mxu0 0
      %2273 = vmatprep.subr.bf16.mxu0 0
      %2274 = vmatpush2.bf16.msra.mxu0 0
      %2275 = vmatprep.subr.bf16.mxu0 0
      %2276 = vmatpush2.bf16.msra.mxu0 0
      %2277 = vmatprep.subr.bf16.mxu0 0
      %2278 = vmatpush2.bf16.msra.mxu0 0
      %2279 = vmatprep.subr.bf16.mxu0 0
      %2280 = vmatpush2.bf16.msra.mxu0 0
      %2281 = vmatprep.subr.bf16.mxu0 0
      %2282 = vmatpush2.bf16.msra.mxu0 0
      %2283 = vmatprep.mubr.bf16.mxu0 0
      %2284 = vmatmul.mubr.bf16.gmra.mxu0 %v2163
      %v2285 = vpop.f32.mrf.mxu0
      %v2286 = vadd.f32 %v2201, %v2285
      %v2287 = vpop.f32.mrf.mxu0
      %v2288 = vpop.f32.mrf.mxu0
      %v2289 = vadd.f32 %v2201, %v2288
      %v2290 = vpop.f32.mrf.mxu0
      %2291 = vmatprep.mubr.bf16.mxu0 0
      %2292 = vmatmul.mubr.bf16.gmra.mxu0 %v2164
      %v2293 = vpop.f32.mrf.mxu0
      %v2294 = vadd.f32 %v2201, %v2293
      %v2295 = vpop.f32.mrf.mxu0
      %v2296 = vpop.f32.mrf.mxu0
      %v2297 = vadd.f32 %v2201, %v2296
      %v2298 = vpop.f32.mrf.mxu0
      %2299 = vmatprep.mubr.bf16.mxu0 0
      %2300 = vmatmul.mubr.bf16.gmra.mxu0 %v2165
      %v2301 = vpop.f32.mrf.mxu0
      %v2302 = vadd.f32 %v2201, %v2301
      %v2303 = vpop.f32.mrf.mxu0
      %v2304 = vpop.f32.mrf.mxu0
      %v2305 = vadd.f32 %v2201, %v2304
      %v2306 = vpop.f32.mrf.mxu0
      %2307 = vmatprep.mubr.bf16.mxu0 0
      %2308 = vmatmul.mubr.bf16.gmra.mxu0 %v2166
      %v2309 = vpop.f32.mrf.mxu0
      %v2310 = vadd.f32 %v2201, %v2309
      %v2311 = vpop.f32.mrf.mxu0
      %v2312 = vpop.f32.mrf.mxu0
      %v2313 = vadd.f32 %v2201, %v2312
      %v2314 = vpop.f32.mrf.mxu0
      %2315 = vmatprep.mubr.bf16.mxu0 0
      %2316 = vmatmul.mubr.bf16.gmra.mxu0 %v2167
      %v2317 = vpop.f32.mrf.mxu0
      %v2318 = vadd.f32 %v2201, %v2317
      %v2319 = vpop.f32.mrf.mxu0
      %v2320 = vpop.f32.mrf.mxu0
      %v2321 = vadd.f32 %v2201, %v2320
      %v2322 = vpop.f32.mrf.mxu0
      %2323 = vmatprep.mubr.bf16.mxu0 0
      %2324 = vmatmul.mubr.bf16.gmra.mxu0 %v2168
      %v2325 = vpop.f32.mrf.mxu0
      %v2326 = vadd.f32 %v2201, %v2325
      %v2327 = vpop.f32.mrf.mxu0
      %v2328 = vpop.f32.mrf.mxu0
      %v2329 = vadd.f32 %v2201, %v2328
      %v2330 = vpop.f32.mrf.mxu0
      %2331 = vmatprep.mubr.bf16.mxu0 0
      %2332 = vmatmul.mubr.bf16.gmra.mxu0 %v2169
      %v2333 = vpop.f32.mrf.mxu0
      %v2334 = vadd.f32 %v2201, %v2333
      %v2335 = vpop.f32.mrf.mxu0
      %v2336 = vpop.f32.mrf.mxu0
      %v2337 = vadd.f32 %v2201, %v2336
      %v2338 = vpop.f32.mrf.mxu0
      %2339 = vmatprep.mubr.bf16.mxu0 0
      %2340 = vmatmul.mubr.bf16.gmra.mxu0 %v2170
      %v2341 = vpop.f32.mrf.mxu0
      %v2342 = vadd.f32 %v2201, %v2341
      %v2343 = vpop.f32.mrf.mxu0
      %v2344 = vpop.f32.mrf.mxu0
      %v2345 = vadd.f32 %v2201, %v2344
      %v2346 = vpop.f32.mrf.mxu0
      %2347 = vmatprep.mubr.bf16.mxu0 0
      %2348 = vmatmul.mubr.bf16.gmra.mxu0 %v2171
      %v2349 = vpop.f32.mrf.mxu0
      %v2350 = vadd.f32 %v2201, %v2349
      %v2351 = vpop.f32.mrf.mxu0
      %v2352 = vpop.f32.mrf.mxu0
      %v2353 = vadd.f32 %v2201, %v2352
      %v2354 = vpop.f32.mrf.mxu0
      %2355 = vmatprep.mubr.bf16.mxu0 0
      %2356 = vmatmul.mubr.bf16.gmra.mxu0 %v2172
      %v2357 = vpop.f32.mrf.mxu0
      %v2358 = vadd.f32 %v2201, %v2357
      %v2359 = vpop.f32.mrf.mxu0
      %v2360 = vpop.f32.mrf.mxu0
      %v2361 = vadd.f32 %v2201, %v2360
      %v2362 = vpop.f32.mrf.mxu0
      %2363 = vmatprep.mubr.bf16.mxu0 0
      %2364 = vmatmul.mubr.bf16.gmra.mxu0 %v2173
      %v2365 = vpop.f32.mrf.mxu0
      %v2366 = vadd.f32 %v2201, %v2365
      %v2367 = vpop.f32.mrf.mxu0
      %v2368 = vpop.f32.mrf.mxu0
      %v2369 = vadd.f32 %v2201, %v2368
      %v2370 = vpop.f32.mrf.mxu0
      %2371 = vmatprep.mubr.bf16.mxu0 0
      %2372 = vmatmul.mubr.bf16.gmra.mxu0 %v2174
      %v2373 = vpop.f32.mrf.mxu0
      %v2374 = vadd.f32 %v2201, %v2373
      %v2375 = vpop.f32.mrf.mxu0
      %v2376 = vpop.f32.mrf.mxu0
      %v2377 = vadd.f32 %v2201, %v2376
      %v2378 = vpop.f32.mrf.mxu0
      %2379 = vmatprep.mubr.bf16.mxu0 0
      %2380 = vmatmul.mubr.bf16.gmra.mxu0 %v2175
      %v2381 = vpop.f32.mrf.mxu0
      %v2382 = vadd.f32 %v2201, %v2381
      %v2383 = vpop.f32.mrf.mxu0
      %v2384 = vpop.f32.mrf.mxu0
      %v2385 = vadd.f32 %v2201, %v2384
      %v2386 = vpop.f32.mrf.mxu0
      %2387 = vmatprep.mubr.bf16.mxu0 0
      %2388 = vmatmul.mubr.bf16.gmra.mxu0 %v2176
      %v2389 = vpop.f32.mrf.mxu0
      %v2390 = vadd.f32 %v2201, %v2389
      %v2391 = vpop.f32.mrf.mxu0
      %v2392 = vpop.f32.mrf.mxu0
      %v2393 = vadd.f32 %v2201, %v2392
      %v2394 = vpop.f32.mrf.mxu0
      %2395 = vmatprep.mubr.bf16.mxu0 0
      %2396 = vmatmul.mubr.bf16.gmra.mxu0 %v2177
      %v2397 = vpop.f32.mrf.mxu0
      %v2398 = vadd.f32 %v2201, %v2397
      %v2399 = vpop.f32.mrf.mxu0
      %v2400 = vpop.f32.mrf.mxu0
      %v2401 = vadd.f32 %v2201, %v2400
      %v2402 = vpop.f32.mrf.mxu0
      %2403 = vmatprep.mubr.bf16.mxu0 0
      %2404 = vmatmul.mubr.bf16.gmra.mxu0 %v2178
      %v2405 = vpop.f32.mrf.mxu0
      %v2406 = vadd.f32 %v2201, %v2405
      %v2407 = vpop.f32.mrf.mxu0
      %v2408 = vpop.f32.mrf.mxu0
      %v2409 = vadd.f32 %v2201, %v2408
      %v2410 = vpop.f32.mrf.mxu0
      %2411 = vdwg.mxu0
      %v2412 = vmax.f32 %v2286, 0.0
      %v2413 = vmax.f32 %v2289, 0.0
      %v2414 = vmax.f32 %v2294, 0.0
      %v2415 = vmax.f32 %v2297, 0.0
      %v2416 = vmax.f32 %v2302, 0.0
      %v2417 = vmax.f32 %v2305, 0.0
      %v2418 = vmax.f32 %v2310, 0.0
      %v2419 = vmax.f32 %v2313, 0.0
      %v2420 = vmax.f32 %v2318, 0.0
      %v2421 = vmax.f32 %v2321, 0.0
      %v2422 = vmax.f32 %v2326, 0.0
      %v2423 = vmax.f32 %v2329, 0.0
      %v2424 = vmax.f32 %v2334, 0.0
      %v2425 = vmax.f32 %v2337, 0.0
      %v2426 = vmax.f32 %v2342, 0.0
      %v2427 = vmax.f32 %v2345, 0.0
      %v2428 = vmax.f32 %v2350, 0.0
      %v2429 = vmax.f32 %v2353, 0.0
      %v2430 = vmax.f32 %v2358, 0.0
      %v2431 = vmax.f32 %v2361, 0.0
      %v2432 = vmax.f32 %v2366, 0.0
      %v2433 = vmax.f32 %v2369, 0.0
      %v2434 = vmax.f32 %v2374, 0.0
      %v2435 = vmax.f32 %v2377, 0.0
      %v2436 = vmax.f32 %v2382, 0.0
      %v2437 = vmax.f32 %v2385, 0.0
      %v2438 = vmax.f32 %v2390, 0.0
      %v2439 = vmax.f32 %v2393, 0.0
      %v2440 = vmax.f32 %v2398, 0.0
      %v2441 = vmax.f32 %v2401, 0.0
      %v2442 = vmax.f32 %v2406, 0.0
      %v2443 = vmax.f32 %v2409, 0.0
      %v2444 = vpack.c.bf16 %v2413, %v2412
      %v2445 = vpack.c.bf16 %v2415, %v2414
      %v2446 = vpack.c.bf16 %v2417, %v2416
      %v2447 = vpack.c.bf16 %v2419, %v2418
      %v2448 = vpack.c.bf16 %v2421, %v2420
      %v2449 = vpack.c.bf16 %v2423, %v2422
      %v2450 = vpack.c.bf16 %v2425, %v2424
      %v2451 = vpack.c.bf16 %v2427, %v2426
      %v2452 = vpack.c.bf16 %v2429, %v2428
      %v2453 = vpack.c.bf16 %v2431, %v2430
      %v2454 = vpack.c.bf16 %v2433, %v2432
      %v2455 = vpack.c.bf16 %v2435, %v2434
      %v2456 = vpack.c.bf16 %v2437, %v2436
      %v2457 = vpack.c.bf16 %v2439, %v2438
      %v2458 = vpack.c.bf16 %v2441, %v2440
      %v2459 = vpack.c.bf16 %v2443, %v2442
      %s2460 = scalar_lea.vmem %s3, 64
      %v2461 = vld [vmem:[%s2460] sm:$0xf]
      %v2462 = vld [vmem:[%s2460 + $0x4] sm:$0xf]
      %v2463 = vld [vmem:[%s2460 + $0x8] sm:$0xf]
      %v2464 = vld [vmem:[%s2460 + $0xc] sm:$0xf]
      %v2465 = vld [vmem:[%s2460 + $0x10] sm:$0xf]
      %v2466 = vld [vmem:[%s2460 + $0x14] sm:$0xf]
      %v2467 = vld [vmem:[%s2460 + $0x18] sm:$0xf]
      %v2468 = vld [vmem:[%s2460 + $0x1c] sm:$0xf]
      %v2469 = vld [vmem:[%s2460 + $0x20] sm:$0xf]
      %v2470 = vld [vmem:[%s2460 + $0x24] sm:$0xf]
      %v2471 = vld [vmem:[%s2460 + $0x28] sm:$0xf]
      %v2472 = vld [vmem:[%s2460 + $0x2c] sm:$0xf]
      %v2473 = vld [vmem:[%s2460 + $0x30] sm:$0xf]
      %v2474 = vld [vmem:[%s2460 + $0x34] sm:$0xf]
      %v2475 = vld [vmem:[%s2460 + $0x38] sm:$0xf]
      %v2476 = vld [vmem:[%s2460 + $0x3c] sm:$0xf]
      %s2477 = scalar_lea.vmem %s5, 2
      %v2478 = vld [vmem:[%s2477] sm:$0x1]
      %v2480 = vlaneseq
      %v2481 = vshrl.u32 %v2480, 7
      %v2482 = vsub.s32 0, %v2481
      %v2483 = vrot.slane %v2478, %v2482
      %v2501 = vunpack.c.l.b16 %v2461
      %v2502 = vunpack.c.l.b16 %v2462
      %v2503 = vunpack.c.l.b16 %v2463
      %v2504 = vunpack.c.l.b16 %v2464
      %v2505 = vunpack.c.l.b16 %v2465
      %v2506 = vunpack.c.l.b16 %v2466
      %v2507 = vunpack.c.l.b16 %v2467
      %v2508 = vunpack.c.l.b16 %v2468
      %v2509 = vunpack.c.l.b16 %v2469
      %v2510 = vunpack.c.l.b16 %v2470
      %v2511 = vunpack.c.l.b16 %v2471
      %v2512 = vunpack.c.l.b16 %v2472
      %v2513 = vunpack.c.l.b16 %v2473
      %v2514 = vunpack.c.l.b16 %v2474
      %v2515 = vunpack.c.l.b16 %v2475
      %v2516 = vunpack.c.l.b16 %v2476
      %v2517 = vpack.c.b16 %v2502, %v2501
      %v2518 = vpack.c.b16 %v2504, %v2503
      %v2519 = vpack.c.b16 %v2506, %v2505
      %v2520 = vpack.c.b16 %v2508, %v2507
      %v2521 = vpack.c.b16 %v2510, %v2509
      %v2522 = vpack.c.b16 %v2512, %v2511
      %v2523 = vpack.c.b16 %v2514, %v2513
      %v2524 = vpack.c.b16 %v2516, %v2515
      %2533 = vmatprep.subr.bf16.mxu0 0
      %2534 = vmatpush1.bf16.msra.mxu0 %v2524
      %2535 = vmatprep.subr.bf16.mxu0 0
      %2536 = vmatpush1.bf16.msra.mxu0 %v2523
      %2537 = vmatprep.subr.bf16.mxu0 0
      %2538 = vmatpush1.bf16.msra.mxu0 %v2522
      %2539 = vmatprep.subr.bf16.mxu0 0
      %2540 = vmatpush1.bf16.msra.mxu0 %v2521
      %2541 = vmatprep.subr.bf16.mxu0 0
      %2542 = vmatpush1.bf16.msra.mxu0 %v2520
      %2543 = vmatprep.subr.bf16.mxu0 0
      %2544 = vmatpush1.bf16.msra.mxu0 %v2519
      %2545 = vmatprep.subr.bf16.mxu0 0
      %2546 = vmatpush1.bf16.msra.mxu0 %v2518
      %2547 = vmatprep.subr.bf16.mxu0 0
      %2548 = vmatpush1.bf16.msra.mxu0 %v2517
      %2549 = vmatprep.subr.bf16.mxu0 0
      %2550 = vmatpush2.bf16.msra.mxu0 0
      %2551 = vmatprep.subr.bf16.mxu0 0
      %2552 = vmatpush2.bf16.msra.mxu0 0
      %2553 = vmatprep.subr.bf16.mxu0 0
      %2554 = vmatpush2.bf16.msra.mxu0 0
      %2555 = vmatprep.subr.bf16.mxu0 0
      %2556 = vmatpush2.bf16.msra.mxu0 0
      %2557 = vmatprep.subr.bf16.mxu0 0
      %2558 = vmatpush2.bf16.msra.mxu0 0
      %2559 = vmatprep.subr.bf16.mxu0 0
      %2560 = vmatpush2.bf16.msra.mxu0 0
      %2561 = vmatprep.subr.bf16.mxu0 0
      %2562 = vmatpush2.bf16.msra.mxu0 0
      %2563 = vmatprep.subr.bf16.mxu0 0
      %2564 = vmatpush2.bf16.msra.mxu0 0
      %2565 = vmatprep.mubr.bf16.mxu0 0
      %2566 = vmatmul.mubr.bf16.gmra.mxu0 %v2444
      %v2567 = vpop.f32.mrf.mxu0
      %v2568 = vadd.f32 %v2483, %v2567
      %v2569 = vpop.f32.mrf.mxu0
      %v2570 = vpop.f32.mrf.mxu0
      %v2571 = vadd.f32 %v2483, %v2570
      %v2572 = vpop.f32.mrf.mxu0
      %2573 = vmatprep.mubr.bf16.mxu0 0
      %2574 = vmatmul.mubr.bf16.gmra.mxu0 %v2445
      %v2575 = vpop.f32.mrf.mxu0
      %v2576 = vadd.f32 %v2483, %v2575
      %v2577 = vpop.f32.mrf.mxu0
      %v2578 = vpop.f32.mrf.mxu0
      %v2579 = vadd.f32 %v2483, %v2578
      %v2580 = vpop.f32.mrf.mxu0
      %2581 = vmatprep.mubr.bf16.mxu0 0
      %2582 = vmatmul.mubr.bf16.gmra.mxu0 %v2446
      %v2583 = vpop.f32.mrf.mxu0
      %v2584 = vadd.f32 %v2483, %v2583
      %v2585 = vpop.f32.mrf.mxu0
      %v2586 = vpop.f32.mrf.mxu0
      %v2587 = vadd.f32 %v2483, %v2586
      %v2588 = vpop.f32.mrf.mxu0
      %2589 = vmatprep.mubr.bf16.mxu0 0
      %2590 = vmatmul.mubr.bf16.gmra.mxu0 %v2447
      %v2591 = vpop.f32.mrf.mxu0
      %v2592 = vadd.f32 %v2483, %v2591
      %v2593 = vpop.f32.mrf.mxu0
      %v2594 = vpop.f32.mrf.mxu0
      %v2595 = vadd.f32 %v2483, %v2594
      %v2596 = vpop.f32.mrf.mxu0
      %2597 = vmatprep.mubr.bf16.mxu0 0
      %2598 = vmatmul.mubr.bf16.gmra.mxu0 %v2448
      %v2599 = vpop.f32.mrf.mxu0
      %v2600 = vadd.f32 %v2483, %v2599
      %v2601 = vpop.f32.mrf.mxu0
      %v2602 = vpop.f32.mrf.mxu0
      %v2603 = vadd.f32 %v2483, %v2602
      %v2604 = vpop.f32.mrf.mxu0
      %2605 = vmatprep.mubr.bf16.mxu0 0
      %2606 = vmatmul.mubr.bf16.gmra.mxu0 %v2449
      %v2607 = vpop.f32.mrf.mxu0
      %v2608 = vadd.f32 %v2483, %v2607
      %v2609 = vpop.f32.mrf.mxu0
      %v2610 = vpop.f32.mrf.mxu0
      %v2611 = vadd.f32 %v2483, %v2610
      %v2612 = vpop.f32.mrf.mxu0
      %2613 = vmatprep.mubr.bf16.mxu0 0
      %2614 = vmatmul.mubr.bf16.gmra.mxu0 %v2450
      %v2615 = vpop.f32.mrf.mxu0
      %v2616 = vadd.f32 %v2483, %v2615
      %v2617 = vpop.f32.mrf.mxu0
      %v2618 = vpop.f32.mrf.mxu0
      %v2619 = vadd.f32 %v2483, %v2618
      %v2620 = vpop.f32.mrf.mxu0
      %2621 = vmatprep.mubr.bf16.mxu0 0
      %2622 = vmatmul.mubr.bf16.gmra.mxu0 %v2451
      %v2623 = vpop.f32.mrf.mxu0
      %v2624 = vadd.f32 %v2483, %v2623
      %v2625 = vpop.f32.mrf.mxu0
      %v2626 = vpop.f32.mrf.mxu0
      %v2627 = vadd.f32 %v2483, %v2626
      %v2628 = vpop.f32.mrf.mxu0
      %2629 = vmatprep.mubr.bf16.mxu0 0
      %2630 = vmatmul.mubr.bf16.gmra.mxu0 %v2452
      %v2631 = vpop.f32.mrf.mxu0
      %v2632 = vadd.f32 %v2483, %v2631
      %v2633 = vpop.f32.mrf.mxu0
      %v2634 = vpop.f32.mrf.mxu0
      %v2635 = vadd.f32 %v2483, %v2634
      %v2636 = vpop.f32.mrf.mxu0
      %2637 = vmatprep.mubr.bf16.mxu0 0
      %2638 = vmatmul.mubr.bf16.gmra.mxu0 %v2453
      %v2639 = vpop.f32.mrf.mxu0
      %v2640 = vadd.f32 %v2483, %v2639
      %v2641 = vpop.f32.mrf.mxu0
      %v2642 = vpop.f32.mrf.mxu0
      %v2643 = vadd.f32 %v2483, %v2642
      %v2644 = vpop.f32.mrf.mxu0
      %2645 = vmatprep.mubr.bf16.mxu0 0
      %2646 = vmatmul.mubr.bf16.gmra.mxu0 %v2454
      %v2647 = vpop.f32.mrf.mxu0
      %v2648 = vadd.f32 %v2483, %v2647
      %v2649 = vpop.f32.mrf.mxu0
      %v2650 = vpop.f32.mrf.mxu0
      %v2651 = vadd.f32 %v2483, %v2650
      %v2652 = vpop.f32.mrf.mxu0
      %2653 = vmatprep.mubr.bf16.mxu0 0
      %2654 = vmatmul.mubr.bf16.gmra.mxu0 %v2455
      %v2655 = vpop.f32.mrf.mxu0
      %v2656 = vadd.f32 %v2483, %v2655
      %v2657 = vpop.f32.mrf.mxu0
      %v2658 = vpop.f32.mrf.mxu0
      %v2659 = vadd.f32 %v2483, %v2658
      %v2660 = vpop.f32.mrf.mxu0
      %2661 = vmatprep.mubr.bf16.mxu0 0
      %2662 = vmatmul.mubr.bf16.gmra.mxu0 %v2456
      %v2663 = vpop.f32.mrf.mxu0
      %v2664 = vadd.f32 %v2483, %v2663
      %v2665 = vpop.f32.mrf.mxu0
      %v2666 = vpop.f32.mrf.mxu0
      %v2667 = vadd.f32 %v2483, %v2666
      %v2668 = vpop.f32.mrf.mxu0
      %2669 = vmatprep.mubr.bf16.mxu0 0
      %2670 = vmatmul.mubr.bf16.gmra.mxu0 %v2457
      %v2671 = vpop.f32.mrf.mxu0
      %v2672 = vadd.f32 %v2483, %v2671
      %v2673 = vpop.f32.mrf.mxu0
      %v2674 = vpop.f32.mrf.mxu0
      %v2675 = vadd.f32 %v2483, %v2674
      %v2676 = vpop.f32.mrf.mxu0
      %2677 = vmatprep.mubr.bf16.mxu0 0
      %2678 = vmatmul.mubr.bf16.gmra.mxu0 %v2458
      %v2679 = vpop.f32.mrf.mxu0
      %v2680 = vadd.f32 %v2483, %v2679
      %v2681 = vpop.f32.mrf.mxu0
      %v2682 = vpop.f32.mrf.mxu0
      %v2683 = vadd.f32 %v2483, %v2682
      %v2684 = vpop.f32.mrf.mxu0
      %2685 = vmatprep.mubr.bf16.mxu0 0
      %2686 = vmatmul.mubr.bf16.gmra.mxu0 %v2459
      %v2687 = vpop.f32.mrf.mxu0
      %v2688 = vadd.f32 %v2483, %v2687
      %v2689 = vpop.f32.mrf.mxu0
      %v2690 = vpop.f32.mrf.mxu0
      %v2691 = vadd.f32 %v2483, %v2690
      %v2692 = vpop.f32.mrf.mxu0
      %2693 = vdwg.mxu0
      %v2694 = vmax.f32 %v2568, 0.0
      %v2695 = vmax.f32 %v2571, 0.0
      %v2696 = vmax.f32 %v2576, 0.0
      %v2697 = vmax.f32 %v2579, 0.0
      %v2698 = vmax.f32 %v2584, 0.0
      %v2699 = vmax.f32 %v2587, 0.0
      %v2700 = vmax.f32 %v2592, 0.0
      %v2701 = vmax.f32 %v2595, 0.0
      %v2702 = vmax.f32 %v2600, 0.0
      %v2703 = vmax.f32 %v2603, 0.0
      %v2704 = vmax.f32 %v2608, 0.0
      %v2705 = vmax.f32 %v2611, 0.0
      %v2706 = vmax.f32 %v2616, 0.0
      %v2707 = vmax.f32 %v2619, 0.0
      %v2708 = vmax.f32 %v2624, 0.0
      %v2709 = vmax.f32 %v2627, 0.0
      %v2710 = vmax.f32 %v2632, 0.0
      %v2711 = vmax.f32 %v2635, 0.0
      %v2712 = vmax.f32 %v2640, 0.0
      %v2713 = vmax.f32 %v2643, 0.0
      %v2714 = vmax.f32 %v2648, 0.0
      %v2715 = vmax.f32 %v2651, 0.0
      %v2716 = vmax.f32 %v2656, 0.0
      %v2717 = vmax.f32 %v2659, 0.0
      %v2718 = vmax.f32 %v2664, 0.0
      %v2719 = vmax.f32 %v2667, 0.0
      %v2720 = vmax.f32 %v2672, 0.0
      %v2721 = vmax.f32 %v2675, 0.0
      %v2722 = vmax.f32 %v2680, 0.0
      %v2723 = vmax.f32 %v2683, 0.0
      %v2724 = vmax.f32 %v2688, 0.0
      %v2725 = vmax.f32 %v2691, 0.0
      %v2726 = vpack.c.bf16 %v2695, %v2694
      %v2727 = vpack.c.bf16 %v2697, %v2696
      %v2728 = vpack.c.bf16 %v2699, %v2698
      %v2729 = vpack.c.bf16 %v2701, %v2700
      %v2730 = vpack.c.bf16 %v2703, %v2702
      %v2731 = vpack.c.bf16 %v2705, %v2704
      %v2732 = vpack.c.bf16 %v2707, %v2706
      %v2733 = vpack.c.bf16 %v2709, %v2708
      %v2734 = vpack.c.bf16 %v2711, %v2710
      %v2735 = vpack.c.bf16 %v2713, %v2712
      %v2736 = vpack.c.bf16 %v2715, %v2714
      %v2737 = vpack.c.bf16 %v2717, %v2716
      %v2738 = vpack.c.bf16 %v2719, %v2718
      %v2739 = vpack.c.bf16 %v2721, %v2720
      %v2740 = vpack.c.bf16 %v2723, %v2722
      %v2741 = vpack.c.bf16 %v2725, %v2724
      %s2742 = scalar_lea.vmem %s3, 128
      %v2743 = vld [vmem:[%s2742] sm:$0xf]
      %v2744 = vld [vmem:[%s2742 + $0x4] sm:$0xf]
      %v2745 = vld [vmem:[%s2742 + $0x8] sm:$0xf]
      %v2746 = vld [vmem:[%s2742 + $0xc] sm:$0xf]
      %v2747 = vld [vmem:[%s2742 + $0x10] sm:$0xf]
      %v2748 = vld [vmem:[%s2742 + $0x14] sm:$0xf]
      %v2749 = vld [vmem:[%s2742 + $0x18] sm:$0xf]
      %v2750 = vld [vmem:[%s2742 + $0x1c] sm:$0xf]
      %v2751 = vld [vmem:[%s2742 + $0x20] sm:$0xf]
      %v2752 = vld [vmem:[%s2742 + $0x24] sm:$0xf]
      %v2753 = vld [vmem:[%s2742 + $0x28] sm:$0xf]
      %v2754 = vld [vmem:[%s2742 + $0x2c] sm:$0xf]
      %v2755 = vld [vmem:[%s2742 + $0x30] sm:$0xf]
      %v2756 = vld [vmem:[%s2742 + $0x34] sm:$0xf]
      %v2757 = vld [vmem:[%s2742 + $0x38] sm:$0xf]
      %v2758 = vld [vmem:[%s2742 + $0x3c] sm:$0xf]
      %s2759 = scalar_lea.vmem %s5, 3
      %v2760 = vld [vmem:[%s2759] sm:$0x1]
      %v2762 = vlaneseq
      %v2763 = vshrl.u32 %v2762, 7
      %v2764 = vsub.s32 0, %v2763
      %v2765 = vrot.slane %v2760, %v2764
      %v2783 = vunpack.c.l.b16 %v2743
      %v2784 = vunpack.c.l.b16 %v2744
      %v2785 = vunpack.c.l.b16 %v2745
      %v2786 = vunpack.c.l.b16 %v2746
      %v2787 = vunpack.c.l.b16 %v2747
      %v2788 = vunpack.c.l.b16 %v2748
      %v2789 = vunpack.c.l.b16 %v2749
      %v2790 = vunpack.c.l.b16 %v2750
      %v2791 = vunpack.c.l.b16 %v2751
      %v2792 = vunpack.c.l.b16 %v2752
      %v2793 = vunpack.c.l.b16 %v2753
      %v2794 = vunpack.c.l.b16 %v2754
      %v2795 = vunpack.c.l.b16 %v2755
      %v2796 = vunpack.c.l.b16 %v2756
      %v2797 = vunpack.c.l.b16 %v2757
      %v2798 = vunpack.c.l.b16 %v2758
      %v2799 = vpack.c.b16 %v2784, %v2783
      %v2800 = vpack.c.b16 %v2786, %v2785
      %v2801 = vpack.c.b16 %v2788, %v2787
      %v2802 = vpack.c.b16 %v2790, %v2789
      %v2803 = vpack.c.b16 %v2792, %v2791
      %v2804 = vpack.c.b16 %v2794, %v2793
      %v2805 = vpack.c.b16 %v2796, %v2795
      %v2806 = vpack.c.b16 %v2798, %v2797
      %2815 = vmatprep.subr.bf16.mxu0 0
      %2816 = vmatpush1.bf16.msra.mxu0 %v2806
      %2817 = vmatprep.subr.bf16.mxu0 0
      %2818 = vmatpush1.bf16.msra.mxu0 %v2805
      %2819 = vmatprep.subr.bf16.mxu0 0
      %2820 = vmatpush1.bf16.msra.mxu0 %v2804
      %2821 = vmatprep.subr.bf16.mxu0 0
      %2822 = vmatpush1.bf16.msra.mxu0 %v2803
      %2823 = vmatprep.subr.bf16.mxu0 0
      %2824 = vmatpush1.bf16.msra.mxu0 %v2802
      %2825 = vmatprep.subr.bf16.mxu0 0
      %2826 = vmatpush1.bf16.msra.mxu0 %v2801
      %2827 = vmatprep.subr.bf16.mxu0 0
      %2828 = vmatpush1.bf16.msra.mxu0 %v2800
      %2829 = vmatprep.subr.bf16.mxu0 0
      %2830 = vmatpush1.bf16.msra.mxu0 %v2799
      %2831 = vmatprep.subr.bf16.mxu0 0
      %2832 = vmatpush2.bf16.msra.mxu0 0
      %2833 = vmatprep.subr.bf16.mxu0 0
      %2834 = vmatpush2.bf16.msra.mxu0 0
      %2835 = vmatprep.subr.bf16.mxu0 0
      %2836 = vmatpush2.bf16.msra.mxu0 0
      %2837 = vmatprep.subr.bf16.mxu0 0
      %2838 = vmatpush2.bf16.msra.mxu0 0
      %2839 = vmatprep.subr.bf16.mxu0 0
      %2840 = vmatpush2.bf16.msra.mxu0 0
      %2841 = vmatprep.subr.bf16.mxu0 0
      %2842 = vmatpush2.bf16.msra.mxu0 0
      %2843 = vmatprep.subr.bf16.mxu0 0
      %2844 = vmatpush2.bf16.msra.mxu0 0
      %2845 = vmatprep.subr.bf16.mxu0 0
      %2846 = vmatpush2.bf16.msra.mxu0 0
      %2847 = vmatprep.mubr.bf16.mxu0 0
      %2848 = vmatmul.mubr.bf16.gmra.mxu0 %v2726
      %v2849 = vpop.f32.mrf.mxu0
      %v2850 = vadd.f32 %v2765, %v2849
      %v2851 = vpop.f32.mrf.mxu0
      %v2852 = vpop.f32.mrf.mxu0
      %v2853 = vadd.f32 %v2765, %v2852
      %v2854 = vpop.f32.mrf.mxu0
      %2855 = vmatprep.mubr.bf16.mxu0 0
      %2856 = vmatmul.mubr.bf16.gmra.mxu0 %v2727
      %v2857 = vpop.f32.mrf.mxu0
      %v2858 = vadd.f32 %v2765, %v2857
      %v2859 = vpop.f32.mrf.mxu0
      %v2860 = vpop.f32.mrf.mxu0
      %v2861 = vadd.f32 %v2765, %v2860
      %v2862 = vpop.f32.mrf.mxu0
      %2863 = vmatprep.mubr.bf16.mxu0 0
      %2864 = vmatmul.mubr.bf16.gmra.mxu0 %v2728
      %v2865 = vpop.f32.mrf.mxu0
      %v2866 = vadd.f32 %v2765, %v2865
      %v2867 = vpop.f32.mrf.mxu0
      %v2868 = vpop.f32.mrf.mxu0
      %v2869 = vadd.f32 %v2765, %v2868
      %v2870 = vpop.f32.mrf.mxu0
      %2871 = vmatprep.mubr.bf16.mxu0 0
      %2872 = vmatmul.mubr.bf16.gmra.mxu0 %v2729
      %v2873 = vpop.f32.mrf.mxu0
      %v2874 = vadd.f32 %v2765, %v2873
      %v2875 = vpop.f32.mrf.mxu0
      %v2876 = vpop.f32.mrf.mxu0
      %v2877 = vadd.f32 %v2765, %v2876
      %v2878 = vpop.f32.mrf.mxu0
      %2879 = vmatprep.mubr.bf16.mxu0 0
      %2880 = vmatmul.mubr.bf16.gmra.mxu0 %v2730
      %v2881 = vpop.f32.mrf.mxu0
      %v2882 = vadd.f32 %v2765, %v2881
      %v2883 = vpop.f32.mrf.mxu0
      %v2884 = vpop.f32.mrf.mxu0
      %v2885 = vadd.f32 %v2765, %v2884
      %v2886 = vpop.f32.mrf.mxu0
      %2887 = vmatprep.mubr.bf16.mxu0 0
      %2888 = vmatmul.mubr.bf16.gmra.mxu0 %v2731
      %v2889 = vpop.f32.mrf.mxu0
      %v2890 = vadd.f32 %v2765, %v2889
      %v2891 = vpop.f32.mrf.mxu0
      %v2892 = vpop.f32.mrf.mxu0
      %v2893 = vadd.f32 %v2765, %v2892
      %v2894 = vpop.f32.mrf.mxu0
      %2895 = vmatprep.mubr.bf16.mxu0 0
      %2896 = vmatmul.mubr.bf16.gmra.mxu0 %v2732
      %v2897 = vpop.f32.mrf.mxu0
      %v2898 = vadd.f32 %v2765, %v2897
      %v2899 = vpop.f32.mrf.mxu0
      %v2900 = vpop.f32.mrf.mxu0
      %v2901 = vadd.f32 %v2765, %v2900
      %v2902 = vpop.f32.mrf.mxu0
      %2903 = vmatprep.mubr.bf16.mxu0 0
      %2904 = vmatmul.mubr.bf16.gmra.mxu0 %v2733
      %v2905 = vpop.f32.mrf.mxu0
      %v2906 = vadd.f32 %v2765, %v2905
      %v2907 = vpop.f32.mrf.mxu0
      %v2908 = vpop.f32.mrf.mxu0
      %v2909 = vadd.f32 %v2765, %v2908
      %v2910 = vpop.f32.mrf.mxu0
      %2911 = vmatprep.mubr.bf16.mxu0 0
      %2912 = vmatmul.mubr.bf16.gmra.mxu0 %v2734
      %v2913 = vpop.f32.mrf.mxu0
      %v2914 = vadd.f32 %v2765, %v2913
      %v2915 = vpop.f32.mrf.mxu0
      %v2916 = vpop.f32.mrf.mxu0
      %v2917 = vadd.f32 %v2765, %v2916
      %v2918 = vpop.f32.mrf.mxu0
      %2919 = vmatprep.mubr.bf16.mxu0 0
      %2920 = vmatmul.mubr.bf16.gmra.mxu0 %v2735
      %v2921 = vpop.f32.mrf.mxu0
      %v2922 = vadd.f32 %v2765, %v2921
      %v2923 = vpop.f32.mrf.mxu0
      %v2924 = vpop.f32.mrf.mxu0
      %v2925 = vadd.f32 %v2765, %v2924
      %v2926 = vpop.f32.mrf.mxu0
      %2927 = vmatprep.mubr.bf16.mxu0 0
      %2928 = vmatmul.mubr.bf16.gmra.mxu0 %v2736
      %v2929 = vpop.f32.mrf.mxu0
      %v2930 = vadd.f32 %v2765, %v2929
      %v2931 = vpop.f32.mrf.mxu0
      %v2932 = vpop.f32.mrf.mxu0
      %v2933 = vadd.f32 %v2765, %v2932
      %v2934 = vpop.f32.mrf.mxu0
      %2935 = vmatprep.mubr.bf16.mxu0 0
      %2936 = vmatmul.mubr.bf16.gmra.mxu0 %v2737
      %v2937 = vpop.f32.mrf.mxu0
      %v2938 = vadd.f32 %v2765, %v2937
      %v2939 = vpop.f32.mrf.mxu0
      %v2940 = vpop.f32.mrf.mxu0
      %v2941 = vadd.f32 %v2765, %v2940
      %v2942 = vpop.f32.mrf.mxu0
      %2943 = vmatprep.mubr.bf16.mxu0 0
      %2944 = vmatmul.mubr.bf16.gmra.mxu0 %v2738
      %v2945 = vpop.f32.mrf.mxu0
      %v2946 = vadd.f32 %v2765, %v2945
      %v2947 = vpop.f32.mrf.mxu0
      %v2948 = vpop.f32.mrf.mxu0
      %v2949 = vadd.f32 %v2765, %v2948
      %v2950 = vpop.f32.mrf.mxu0
      %2951 = vmatprep.mubr.bf16.mxu0 0
      %2952 = vmatmul.mubr.bf16.gmra.mxu0 %v2739
      %v2953 = vpop.f32.mrf.mxu0
      %v2954 = vadd.f32 %v2765, %v2953
      %v2955 = vpop.f32.mrf.mxu0
      %v2956 = vpop.f32.mrf.mxu0
      %v2957 = vadd.f32 %v2765, %v2956
      %v2958 = vpop.f32.mrf.mxu0
      %2959 = vmatprep.mubr.bf16.mxu0 0
      %2960 = vmatmul.mubr.bf16.gmra.mxu0 %v2740
      %v2961 = vpop.f32.mrf.mxu0
      %v2962 = vadd.f32 %v2765, %v2961
      %v2963 = vpop.f32.mrf.mxu0
      %v2964 = vpop.f32.mrf.mxu0
      %v2965 = vadd.f32 %v2765, %v2964
      %v2966 = vpop.f32.mrf.mxu0
      %2967 = vmatprep.mubr.bf16.mxu0 0
      %2968 = vmatmul.mubr.bf16.gmra.mxu0 %v2741
      %v2969 = vpop.f32.mrf.mxu0
      %v2970 = vadd.f32 %v2765, %v2969
      %v2971 = vpop.f32.mrf.mxu0
      %v2972 = vpop.f32.mrf.mxu0
      %v2973 = vadd.f32 %v2765, %v2972
      %v2974 = vpop.f32.mrf.mxu0
      %2975 = vdwg.mxu0
      %v2976 = vmax.f32 %v2850, 0.0
      %v2977 = vmax.f32 %v2853, 0.0
      %v2978 = vmax.f32 %v2858, 0.0
      %v2979 = vmax.f32 %v2861, 0.0
      %v2980 = vmax.f32 %v2866, 0.0
      %v2981 = vmax.f32 %v2869, 0.0
      %v2982 = vmax.f32 %v2874, 0.0
      %v2983 = vmax.f32 %v2877, 0.0
      %v2984 = vmax.f32 %v2882, 0.0
      %v2985 = vmax.f32 %v2885, 0.0
      %v2986 = vmax.f32 %v2890, 0.0
      %v2987 = vmax.f32 %v2893, 0.0
      %v2988 = vmax.f32 %v2898, 0.0
      %v2989 = vmax.f32 %v2901, 0.0
      %v2990 = vmax.f32 %v2906, 0.0
      %v2991 = vmax.f32 %v2909, 0.0
      %v2992 = vmax.f32 %v2914, 0.0
      %v2993 = vmax.f32 %v2917, 0.0
      %v2994 = vmax.f32 %v2922, 0.0
      %v2995 = vmax.f32 %v2925, 0.0
      %v2996 = vmax.f32 %v2930, 0.0
      %v2997 = vmax.f32 %v2933, 0.0
      %v2998 = vmax.f32 %v2938, 0.0
      %v2999 = vmax.f32 %v2941, 0.0
      %v3000 = vmax.f32 %v2946, 0.0
      %v3001 = vmax.f32 %v2949, 0.0
      %v3002 = vmax.f32 %v2954, 0.0
      %v3003 = vmax.f32 %v2957, 0.0
      %v3004 = vmax.f32 %v2962, 0.0
      %v3005 = vmax.f32 %v2965, 0.0
      %v3006 = vmax.f32 %v2970, 0.0
      %v3007 = vmax.f32 %v2973, 0.0
      %v3008 = vpack.c.bf16 %v2977, %v2976
      %v3009 = vpack.c.bf16 %v2979, %v2978
      %v3010 = vpack.c.bf16 %v2981, %v2980
      %v3011 = vpack.c.bf16 %v2983, %v2982
      %v3012 = vpack.c.bf16 %v2985, %v2984
      %v3013 = vpack.c.bf16 %v2987, %v2986
      %v3014 = vpack.c.bf16 %v2989, %v2988
      %v3015 = vpack.c.bf16 %v2991, %v2990
      %v3016 = vpack.c.bf16 %v2993, %v2992
      %v3017 = vpack.c.bf16 %v2995, %v2994
      %v3018 = vpack.c.bf16 %v2997, %v2996
      %v3019 = vpack.c.bf16 %v2999, %v2998
      %v3020 = vpack.c.bf16 %v3001, %v3000
      %v3021 = vpack.c.bf16 %v3003, %v3002
      %v3022 = vpack.c.bf16 %v3005, %v3004
      %v3023 = vpack.c.bf16 %v3007, %v3006
      %s3024 = scalar_lea.vmem %s3, 192
      %v3025 = vld [vmem:[%s3024] sm:$0xf]
      %v3026 = vld [vmem:[%s3024 + $0x4] sm:$0xf]
      %v3027 = vld [vmem:[%s3024 + $0x8] sm:$0xf]
      %v3028 = vld [vmem:[%s3024 + $0xc] sm:$0xf]
      %v3029 = vld [vmem:[%s3024 + $0x10] sm:$0xf]
      %v3030 = vld [vmem:[%s3024 + $0x14] sm:$0xf]
      %v3031 = vld [vmem:[%s3024 + $0x18] sm:$0xf]
      %v3032 = vld [vmem:[%s3024 + $0x1c] sm:$0xf]
      %v3033 = vld [vmem:[%s3024 + $0x20] sm:$0xf]
      %v3034 = vld [vmem:[%s3024 + $0x24] sm:$0xf]
      %v3035 = vld [vmem:[%s3024 + $0x28] sm:$0xf]
      %v3036 = vld [vmem:[%s3024 + $0x2c] sm:$0xf]
      %v3037 = vld [vmem:[%s3024 + $0x30] sm:$0xf]
      %v3038 = vld [vmem:[%s3024 + $0x34] sm:$0xf]
      %v3039 = vld [vmem:[%s3024 + $0x38] sm:$0xf]
      %v3040 = vld [vmem:[%s3024 + $0x3c] sm:$0xf]
      %s3041 = scalar_lea.vmem %s5, 4
      %v3042 = vld [vmem:[%s3041] sm:$0x1]
      %v3044 = vlaneseq
      %v3045 = vshrl.u32 %v3044, 7
      %v3046 = vsub.s32 0, %v3045
      %v3047 = vrot.slane %v3042, %v3046
      %v3065 = vunpack.c.l.b16 %v3025
      %v3066 = vunpack.c.l.b16 %v3026
      %v3067 = vunpack.c.l.b16 %v3027
      %v3068 = vunpack.c.l.b16 %v3028
      %v3069 = vunpack.c.l.b16 %v3029
      %v3070 = vunpack.c.l.b16 %v3030
      %v3071 = vunpack.c.l.b16 %v3031
      %v3072 = vunpack.c.l.b16 %v3032
      %v3073 = vunpack.c.l.b16 %v3033
      %v3074 = vunpack.c.l.b16 %v3034
      %v3075 = vunpack.c.l.b16 %v3035
      %v3076 = vunpack.c.l.b16 %v3036
      %v3077 = vunpack.c.l.b16 %v3037
      %v3078 = vunpack.c.l.b16 %v3038
      %v3079 = vunpack.c.l.b16 %v3039
      %v3080 = vunpack.c.l.b16 %v3040
      %v3081 = vpack.c.b16 %v3066, %v3065
      %v3082 = vpack.c.b16 %v3068, %v3067
      %v3083 = vpack.c.b16 %v3070, %v3069
      %v3084 = vpack.c.b16 %v3072, %v3071
      %v3085 = vpack.c.b16 %v3074, %v3073
      %v3086 = vpack.c.b16 %v3076, %v3075
      %v3087 = vpack.c.b16 %v3078, %v3077
      %v3088 = vpack.c.b16 %v3080, %v3079
      %3097 = vmatprep.subr.bf16.mxu0 0
      %3098 = vmatpush1.bf16.msra.mxu0 %v3088
      %3099 = vmatprep.subr.bf16.mxu0 0
      %3100 = vmatpush1.bf16.msra.mxu0 %v3087
      %3101 = vmatprep.subr.bf16.mxu0 0
      %3102 = vmatpush1.bf16.msra.mxu0 %v3086
      %3103 = vmatprep.subr.bf16.mxu0 0
      %3104 = vmatpush1.bf16.msra.mxu0 %v3085
      %3105 = vmatprep.subr.bf16.mxu0 0
      %3106 = vmatpush1.bf16.msra.mxu0 %v3084
      %3107 = vmatprep.subr.bf16.mxu0 0
      %3108 = vmatpush1.bf16.msra.mxu0 %v3083
      %3109 = vmatprep.subr.bf16.mxu0 0
      %3110 = vmatpush1.bf16.msra.mxu0 %v3082
      %3111 = vmatprep.subr.bf16.mxu0 0
      %3112 = vmatpush1.bf16.msra.mxu0 %v3081
      %3113 = vmatprep.subr.bf16.mxu0 0
      %3114 = vmatpush2.bf16.msra.mxu0 0
      %3115 = vmatprep.subr.bf16.mxu0 0
      %3116 = vmatpush2.bf16.msra.mxu0 0
      %3117 = vmatprep.subr.bf16.mxu0 0
      %3118 = vmatpush2.bf16.msra.mxu0 0
      %3119 = vmatprep.subr.bf16.mxu0 0
      %3120 = vmatpush2.bf16.msra.mxu0 0
      %3121 = vmatprep.subr.bf16.mxu0 0
      %3122 = vmatpush2.bf16.msra.mxu0 0
      %3123 = vmatprep.subr.bf16.mxu0 0
      %3124 = vmatpush2.bf16.msra.mxu0 0
      %3125 = vmatprep.subr.bf16.mxu0 0
      %3126 = vmatpush2.bf16.msra.mxu0 0
      %3127 = vmatprep.subr.bf16.mxu0 0
      %3128 = vmatpush2.bf16.msra.mxu0 0
      %3129 = vmatprep.mubr.bf16.mxu0 0
      %3130 = vmatmul.mubr.bf16.gmra.mxu0 %v3008
      %v3131 = vpop.f32.mrf.mxu0
      %v3132 = vadd.f32 %v3047, %v3131
      %v3133 = vpop.f32.mrf.mxu0
      %v3134 = vpop.f32.mrf.mxu0
      %v3135 = vadd.f32 %v3047, %v3134
      %v3136 = vpop.f32.mrf.mxu0
      %3137 = vmatprep.mubr.bf16.mxu0 0
      %3138 = vmatmul.mubr.bf16.gmra.mxu0 %v3009
      %v3139 = vpop.f32.mrf.mxu0
      %v3140 = vadd.f32 %v3047, %v3139
      %v3141 = vpop.f32.mrf.mxu0
      %v3142 = vpop.f32.mrf.mxu0
      %v3143 = vadd.f32 %v3047, %v3142
      %v3144 = vpop.f32.mrf.mxu0
      %3145 = vmatprep.mubr.bf16.mxu0 0
      %3146 = vmatmul.mubr.bf16.gmra.mxu0 %v3010
      %v3147 = vpop.f32.mrf.mxu0
      %v3148 = vadd.f32 %v3047, %v3147
      %v3149 = vpop.f32.mrf.mxu0
      %v3150 = vpop.f32.mrf.mxu0
      %v3151 = vadd.f32 %v3047, %v3150
      %v3152 = vpop.f32.mrf.mxu0
      %3153 = vmatprep.mubr.bf16.mxu0 0
      %3154 = vmatmul.mubr.bf16.gmra.mxu0 %v3011
      %v3155 = vpop.f32.mrf.mxu0
      %v3156 = vadd.f32 %v3047, %v3155
      %v3157 = vpop.f32.mrf.mxu0
      %v3158 = vpop.f32.mrf.mxu0
      %v3159 = vadd.f32 %v3047, %v3158
      %v3160 = vpop.f32.mrf.mxu0
      %3161 = vmatprep.mubr.bf16.mxu0 0
      %3162 = vmatmul.mubr.bf16.gmra.mxu0 %v3012
      %v3163 = vpop.f32.mrf.mxu0
      %v3164 = vadd.f32 %v3047, %v3163
      %v3165 = vpop.f32.mrf.mxu0
      %v3166 = vpop.f32.mrf.mxu0
      %v3167 = vadd.f32 %v3047, %v3166
      %v3168 = vpop.f32.mrf.mxu0
      %3169 = vmatprep.mubr.bf16.mxu0 0
      %3170 = vmatmul.mubr.bf16.gmra.mxu0 %v3013
      %v3171 = vpop.f32.mrf.mxu0
      %v3172 = vadd.f32 %v3047, %v3171
      %v3173 = vpop.f32.mrf.mxu0
      %v3174 = vpop.f32.mrf.mxu0
      %v3175 = vadd.f32 %v3047, %v3174
      %v3176 = vpop.f32.mrf.mxu0
      %3177 = vmatprep.mubr.bf16.mxu0 0
      %3178 = vmatmul.mubr.bf16.gmra.mxu0 %v3014
      %v3179 = vpop.f32.mrf.mxu0
      %v3180 = vadd.f32 %v3047, %v3179
      %v3181 = vpop.f32.mrf.mxu0
      %v3182 = vpop.f32.mrf.mxu0
      %v3183 = vadd.f32 %v3047, %v3182
      %v3184 = vpop.f32.mrf.mxu0
      %3185 = vmatprep.mubr.bf16.mxu0 0
      %3186 = vmatmul.mubr.bf16.gmra.mxu0 %v3015
      %v3187 = vpop.f32.mrf.mxu0
      %v3188 = vadd.f32 %v3047, %v3187
      %v3189 = vpop.f32.mrf.mxu0
      %v3190 = vpop.f32.mrf.mxu0
      %v3191 = vadd.f32 %v3047, %v3190
      %v3192 = vpop.f32.mrf.mxu0
      %3193 = vmatprep.mubr.bf16.mxu0 0
      %3194 = vmatmul.mubr.bf16.gmra.mxu0 %v3016
      %v3195 = vpop.f32.mrf.mxu0
      %v3196 = vadd.f32 %v3047, %v3195
      %v3197 = vpop.f32.mrf.mxu0
      %v3198 = vpop.f32.mrf.mxu0
      %v3199 = vadd.f32 %v3047, %v3198
      %v3200 = vpop.f32.mrf.mxu0
      %3201 = vmatprep.mubr.bf16.mxu0 0
      %3202 = vmatmul.mubr.bf16.gmra.mxu0 %v3017
      %v3203 = vpop.f32.mrf.mxu0
      %v3204 = vadd.f32 %v3047, %v3203
      %v3205 = vpop.f32.mrf.mxu0
      %v3206 = vpop.f32.mrf.mxu0
      %v3207 = vadd.f32 %v3047, %v3206
      %v3208 = vpop.f32.mrf.mxu0
      %3209 = vmatprep.mubr.bf16.mxu0 0
      %3210 = vmatmul.mubr.bf16.gmra.mxu0 %v3018
      %v3211 = vpop.f32.mrf.mxu0
      %v3212 = vadd.f32 %v3047, %v3211
      %v3213 = vpop.f32.mrf.mxu0
      %v3214 = vpop.f32.mrf.mxu0
      %v3215 = vadd.f32 %v3047, %v3214
      %v3216 = vpop.f32.mrf.mxu0
      %3217 = vmatprep.mubr.bf16.mxu0 0
      %3218 = vmatmul.mubr.bf16.gmra.mxu0 %v3019
      %v3219 = vpop.f32.mrf.mxu0
      %v3220 = vadd.f32 %v3047, %v3219
      %v3221 = vpop.f32.mrf.mxu0
      %v3222 = vpop.f32.mrf.mxu0
      %v3223 = vadd.f32 %v3047, %v3222
      %v3224 = vpop.f32.mrf.mxu0
      %3225 = vmatprep.mubr.bf16.mxu0 0
      %3226 = vmatmul.mubr.bf16.gmra.mxu0 %v3020
      %v3227 = vpop.f32.mrf.mxu0
      %v3228 = vadd.f32 %v3047, %v3227
      %v3229 = vpop.f32.mrf.mxu0
      %v3230 = vpop.f32.mrf.mxu0
      %v3231 = vadd.f32 %v3047, %v3230
      %v3232 = vpop.f32.mrf.mxu0
      %3233 = vmatprep.mubr.bf16.mxu0 0
      %3234 = vmatmul.mubr.bf16.gmra.mxu0 %v3021
      %v3235 = vpop.f32.mrf.mxu0
      %v3236 = vadd.f32 %v3047, %v3235
      %v3237 = vpop.f32.mrf.mxu0
      %v3238 = vpop.f32.mrf.mxu0
      %v3239 = vadd.f32 %v3047, %v3238
      %v3240 = vpop.f32.mrf.mxu0
      %3241 = vmatprep.mubr.bf16.mxu0 0
      %3242 = vmatmul.mubr.bf16.gmra.mxu0 %v3022
      %v3243 = vpop.f32.mrf.mxu0
      %v3244 = vadd.f32 %v3047, %v3243
      %v3245 = vpop.f32.mrf.mxu0
      %v3246 = vpop.f32.mrf.mxu0
      %v3247 = vadd.f32 %v3047, %v3246
      %v3248 = vpop.f32.mrf.mxu0
      %3249 = vmatprep.mubr.bf16.mxu0 0
      %3250 = vmatmul.mubr.bf16.gmra.mxu0 %v3023
      %v3251 = vpop.f32.mrf.mxu0
      %v3252 = vadd.f32 %v3047, %v3251
      %v3253 = vpop.f32.mrf.mxu0
      %v3254 = vpop.f32.mrf.mxu0
      %v3255 = vadd.f32 %v3047, %v3254
      %v3256 = vpop.f32.mrf.mxu0
      %3257 = vdwg.mxu0
      %v3258 = vmax.f32 %v3132, 0.0
      %v3259 = vmax.f32 %v3135, 0.0
      %v3260 = vmax.f32 %v3140, 0.0
      %v3261 = vmax.f32 %v3143, 0.0
      %v3262 = vmax.f32 %v3148, 0.0
      %v3263 = vmax.f32 %v3151, 0.0
      %v3264 = vmax.f32 %v3156, 0.0
      %v3265 = vmax.f32 %v3159, 0.0
      %v3266 = vmax.f32 %v3164, 0.0
      %v3267 = vmax.f32 %v3167, 0.0
      %v3268 = vmax.f32 %v3172, 0.0
      %v3269 = vmax.f32 %v3175, 0.0
      %v3270 = vmax.f32 %v3180, 0.0
      %v3271 = vmax.f32 %v3183, 0.0
      %v3272 = vmax.f32 %v3188, 0.0
      %v3273 = vmax.f32 %v3191, 0.0
      %v3274 = vmax.f32 %v3196, 0.0
      %v3275 = vmax.f32 %v3199, 0.0
      %v3276 = vmax.f32 %v3204, 0.0
      %v3277 = vmax.f32 %v3207, 0.0
      %v3278 = vmax.f32 %v3212, 0.0
      %v3279 = vmax.f32 %v3215, 0.0
      %v3280 = vmax.f32 %v3220, 0.0
      %v3281 = vmax.f32 %v3223, 0.0
      %v3282 = vmax.f32 %v3228, 0.0
      %v3283 = vmax.f32 %v3231, 0.0
      %v3284 = vmax.f32 %v3236, 0.0
      %v3285 = vmax.f32 %v3239, 0.0
      %v3286 = vmax.f32 %v3244, 0.0
      %v3287 = vmax.f32 %v3247, 0.0
      %v3288 = vmax.f32 %v3252, 0.0
      %v3289 = vmax.f32 %v3255, 0.0
      %v3290 = vpack.c.bf16 %v3259, %v3258
      %v3291 = vpack.c.bf16 %v3261, %v3260
      %v3292 = vpack.c.bf16 %v3263, %v3262
      %v3293 = vpack.c.bf16 %v3265, %v3264
      %v3294 = vpack.c.bf16 %v3267, %v3266
      %v3295 = vpack.c.bf16 %v3269, %v3268
      %v3296 = vpack.c.bf16 %v3271, %v3270
      %v3297 = vpack.c.bf16 %v3273, %v3272
      %v3298 = vpack.c.bf16 %v3275, %v3274
      %v3299 = vpack.c.bf16 %v3277, %v3276
      %v3300 = vpack.c.bf16 %v3279, %v3278
      %v3301 = vpack.c.bf16 %v3281, %v3280
      %v3302 = vpack.c.bf16 %v3283, %v3282
      %v3303 = vpack.c.bf16 %v3285, %v3284
      %v3304 = vpack.c.bf16 %v3287, %v3286
      %v3305 = vpack.c.bf16 %v3289, %v3288
      %s3306 = scalar_lea.vmem %s3, 256
      %v3307 = vld [vmem:[%s3306] sm:$0xf]
      %v3308 = vld [vmem:[%s3306 + $0x4] sm:$0xf]
      %v3309 = vld [vmem:[%s3306 + $0x8] sm:$0xf]
      %v3310 = vld [vmem:[%s3306 + $0xc] sm:$0xf]
      %v3311 = vld [vmem:[%s3306 + $0x10] sm:$0xf]
      %v3312 = vld [vmem:[%s3306 + $0x14] sm:$0xf]
      %v3313 = vld [vmem:[%s3306 + $0x18] sm:$0xf]
      %v3314 = vld [vmem:[%s3306 + $0x1c] sm:$0xf]
      %v3315 = vld [vmem:[%s3306 + $0x20] sm:$0xf]
      %v3316 = vld [vmem:[%s3306 + $0x24] sm:$0xf]
      %v3317 = vld [vmem:[%s3306 + $0x28] sm:$0xf]
      %v3318 = vld [vmem:[%s3306 + $0x2c] sm:$0xf]
      %v3319 = vld [vmem:[%s3306 + $0x30] sm:$0xf]
      %v3320 = vld [vmem:[%s3306 + $0x34] sm:$0xf]
      %v3321 = vld [vmem:[%s3306 + $0x38] sm:$0xf]
      %v3322 = vld [vmem:[%s3306 + $0x3c] sm:$0xf]
      %s3323 = scalar_lea.vmem %s5, 5
      %v3324 = vld [vmem:[%s3323] sm:$0x1]
      %v3326 = vlaneseq
      %v3327 = vshrl.u32 %v3326, 7
      %v3328 = vsub.s32 0, %v3327
      %v3329 = vrot.slane %v3324, %v3328
      %v3347 = vunpack.c.l.b16 %v3307
      %v3348 = vunpack.c.l.b16 %v3308
      %v3349 = vunpack.c.l.b16 %v3309
      %v3350 = vunpack.c.l.b16 %v3310
      %v3351 = vunpack.c.l.b16 %v3311
      %v3352 = vunpack.c.l.b16 %v3312
      %v3353 = vunpack.c.l.b16 %v3313
      %v3354 = vunpack.c.l.b16 %v3314
      %v3355 = vunpack.c.l.b16 %v3315
      %v3356 = vunpack.c.l.b16 %v3316
      %v3357 = vunpack.c.l.b16 %v3317
      %v3358 = vunpack.c.l.b16 %v3318
      %v3359 = vunpack.c.l.b16 %v3319
      %v3360 = vunpack.c.l.b16 %v3320
      %v3361 = vunpack.c.l.b16 %v3321
      %v3362 = vunpack.c.l.b16 %v3322
      %v3363 = vpack.c.b16 %v3348, %v3347
      %v3364 = vpack.c.b16 %v3350, %v3349
      %v3365 = vpack.c.b16 %v3352, %v3351
      %v3366 = vpack.c.b16 %v3354, %v3353
      %v3367 = vpack.c.b16 %v3356, %v3355
      %v3368 = vpack.c.b16 %v3358, %v3357
      %v3369 = vpack.c.b16 %v3360, %v3359
      %v3370 = vpack.c.b16 %v3362, %v3361
      %3379 = vmatprep.subr.bf16.mxu0 0
      %3380 = vmatpush1.bf16.msra.mxu0 %v3370
      %3381 = vmatprep.subr.bf16.mxu0 0
      %3382 = vmatpush1.bf16.msra.mxu0 %v3369
      %3383 = vmatprep.subr.bf16.mxu0 0
      %3384 = vmatpush1.bf16.msra.mxu0 %v3368
      %3385 = vmatprep.subr.bf16.mxu0 0
      %3386 = vmatpush1.bf16.msra.mxu0 %v3367
      %3387 = vmatprep.subr.bf16.mxu0 0
      %3388 = vmatpush1.bf16.msra.mxu0 %v3366
      %3389 = vmatprep.subr.bf16.mxu0 0
      %3390 = vmatpush1.bf16.msra.mxu0 %v3365
      %3391 = vmatprep.subr.bf16.mxu0 0
      %3392 = vmatpush1.bf16.msra.mxu0 %v3364
      %3393 = vmatprep.subr.bf16.mxu0 0
      %3394 = vmatpush1.bf16.msra.mxu0 %v3363
      %3395 = vmatprep.subr.bf16.mxu0 0
      %3396 = vmatpush2.bf16.msra.mxu0 0
      %3397 = vmatprep.subr.bf16.mxu0 0
      %3398 = vmatpush2.bf16.msra.mxu0 0
      %3399 = vmatprep.subr.bf16.mxu0 0
      %3400 = vmatpush2.bf16.msra.mxu0 0
      %3401 = vmatprep.subr.bf16.mxu0 0
      %3402 = vmatpush2.bf16.msra.mxu0 0
      %3403 = vmatprep.subr.bf16.mxu0 0
      %3404 = vmatpush2.bf16.msra.mxu0 0
      %3405 = vmatprep.subr.bf16.mxu0 0
      %3406 = vmatpush2.bf16.msra.mxu0 0
      %3407 = vmatprep.subr.bf16.mxu0 0
      %3408 = vmatpush2.bf16.msra.mxu0 0
      %3409 = vmatprep.subr.bf16.mxu0 0
      %3410 = vmatpush2.bf16.msra.mxu0 0
      %3411 = vmatprep.mubr.bf16.mxu0 0
      %3412 = vmatmul.mubr.bf16.gmra.mxu0 %v3290
      %v3413 = vpop.f32.mrf.mxu0
      %v3414 = vadd.f32 %v3329, %v3413
      %v3415 = vpop.f32.mrf.mxu0
      %v3416 = vpop.f32.mrf.mxu0
      %v3417 = vadd.f32 %v3329, %v3416
      %v3418 = vpop.f32.mrf.mxu0
      %3419 = vmatprep.mubr.bf16.mxu0 0
      %3420 = vmatmul.mubr.bf16.gmra.mxu0 %v3291
      %v3421 = vpop.f32.mrf.mxu0
      %v3422 = vadd.f32 %v3329, %v3421
      %v3423 = vpop.f32.mrf.mxu0
      %v3424 = vpop.f32.mrf.mxu0
      %v3425 = vadd.f32 %v3329, %v3424
      %v3426 = vpop.f32.mrf.mxu0
      %3427 = vmatprep.mubr.bf16.mxu0 0
      %3428 = vmatmul.mubr.bf16.gmra.mxu0 %v3292
      %v3429 = vpop.f32.mrf.mxu0
      %v3430 = vadd.f32 %v3329, %v3429
      %v3431 = vpop.f32.mrf.mxu0
      %v3432 = vpop.f32.mrf.mxu0
      %v3433 = vadd.f32 %v3329, %v3432
      %v3434 = vpop.f32.mrf.mxu0
      %3435 = vmatprep.mubr.bf16.mxu0 0
      %3436 = vmatmul.mubr.bf16.gmra.mxu0 %v3293
      %v3437 = vpop.f32.mrf.mxu0
      %v3438 = vadd.f32 %v3329, %v3437
      %v3439 = vpop.f32.mrf.mxu0
      %v3440 = vpop.f32.mrf.mxu0
      %v3441 = vadd.f32 %v3329, %v3440
      %v3442 = vpop.f32.mrf.mxu0
      %3443 = vmatprep.mubr.bf16.mxu0 0
      %3444 = vmatmul.mubr.bf16.gmra.mxu0 %v3294
      %v3445 = vpop.f32.mrf.mxu0
      %v3446 = vadd.f32 %v3329, %v3445
      %v3447 = vpop.f32.mrf.mxu0
      %v3448 = vpop.f32.mrf.mxu0
      %v3449 = vadd.f32 %v3329, %v3448
      %v3450 = vpop.f32.mrf.mxu0
      %3451 = vmatprep.mubr.bf16.mxu0 0
      %3452 = vmatmul.mubr.bf16.gmra.mxu0 %v3295
      %v3453 = vpop.f32.mrf.mxu0
      %v3454 = vadd.f32 %v3329, %v3453
      %v3455 = vpop.f32.mrf.mxu0
      %v3456 = vpop.f32.mrf.mxu0
      %v3457 = vadd.f32 %v3329, %v3456
      %v3458 = vpop.f32.mrf.mxu0
      %3459 = vmatprep.mubr.bf16.mxu0 0
      %3460 = vmatmul.mubr.bf16.gmra.mxu0 %v3296
      %v3461 = vpop.f32.mrf.mxu0
      %v3462 = vadd.f32 %v3329, %v3461
      %v3463 = vpop.f32.mrf.mxu0
      %v3464 = vpop.f32.mrf.mxu0
      %v3465 = vadd.f32 %v3329, %v3464
      %v3466 = vpop.f32.mrf.mxu0
      %3467 = vmatprep.mubr.bf16.mxu0 0
      %3468 = vmatmul.mubr.bf16.gmra.mxu0 %v3297
      %v3469 = vpop.f32.mrf.mxu0
      %v3470 = vadd.f32 %v3329, %v3469
      %v3471 = vpop.f32.mrf.mxu0
      %v3472 = vpop.f32.mrf.mxu0
      %v3473 = vadd.f32 %v3329, %v3472
      %v3474 = vpop.f32.mrf.mxu0
      %3475 = vmatprep.mubr.bf16.mxu0 0
      %3476 = vmatmul.mubr.bf16.gmra.mxu0 %v3298
      %v3477 = vpop.f32.mrf.mxu0
      %v3478 = vadd.f32 %v3329, %v3477
      %v3479 = vpop.f32.mrf.mxu0
      %v3480 = vpop.f32.mrf.mxu0
      %v3481 = vadd.f32 %v3329, %v3480
      %v3482 = vpop.f32.mrf.mxu0
      %3483 = vmatprep.mubr.bf16.mxu0 0
      %3484 = vmatmul.mubr.bf16.gmra.mxu0 %v3299
      %v3485 = vpop.f32.mrf.mxu0
      %v3486 = vadd.f32 %v3329, %v3485
      %v3487 = vpop.f32.mrf.mxu0
      %v3488 = vpop.f32.mrf.mxu0
      %v3489 = vadd.f32 %v3329, %v3488
      %v3490 = vpop.f32.mrf.mxu0
      %3491 = vmatprep.mubr.bf16.mxu0 0
      %3492 = vmatmul.mubr.bf16.gmra.mxu0 %v3300
      %v3493 = vpop.f32.mrf.mxu0
      %v3494 = vadd.f32 %v3329, %v3493
      %v3495 = vpop.f32.mrf.mxu0
      %v3496 = vpop.f32.mrf.mxu0
      %v3497 = vadd.f32 %v3329, %v3496
      %v3498 = vpop.f32.mrf.mxu0
      %3499 = vmatprep.mubr.bf16.mxu0 0
      %3500 = vmatmul.mubr.bf16.gmra.mxu0 %v3301
      %v3501 = vpop.f32.mrf.mxu0
      %v3502 = vadd.f32 %v3329, %v3501
      %v3503 = vpop.f32.mrf.mxu0
      %v3504 = vpop.f32.mrf.mxu0
      %v3505 = vadd.f32 %v3329, %v3504
      %v3506 = vpop.f32.mrf.mxu0
      %3507 = vmatprep.mubr.bf16.mxu0 0
      %3508 = vmatmul.mubr.bf16.gmra.mxu0 %v3302
      %v3509 = vpop.f32.mrf.mxu0
      %v3510 = vadd.f32 %v3329, %v3509
      %v3511 = vpop.f32.mrf.mxu0
      %v3512 = vpop.f32.mrf.mxu0
      %v3513 = vadd.f32 %v3329, %v3512
      %v3514 = vpop.f32.mrf.mxu0
      %3515 = vmatprep.mubr.bf16.mxu0 0
      %3516 = vmatmul.mubr.bf16.gmra.mxu0 %v3303
      %v3517 = vpop.f32.mrf.mxu0
      %v3518 = vadd.f32 %v3329, %v3517
      %v3519 = vpop.f32.mrf.mxu0
      %v3520 = vpop.f32.mrf.mxu0
      %v3521 = vadd.f32 %v3329, %v3520
      %v3522 = vpop.f32.mrf.mxu0
      %3523 = vmatprep.mubr.bf16.mxu0 0
      %3524 = vmatmul.mubr.bf16.gmra.mxu0 %v3304
      %v3525 = vpop.f32.mrf.mxu0
      %v3526 = vadd.f32 %v3329, %v3525
      %v3527 = vpop.f32.mrf.mxu0
      %v3528 = vpop.f32.mrf.mxu0
      %v3529 = vadd.f32 %v3329, %v3528
      %v3530 = vpop.f32.mrf.mxu0
      %3531 = vmatprep.mubr.bf16.mxu0 0
      %3532 = vmatmul.mubr.bf16.gmra.mxu0 %v3305
      %v3533 = vpop.f32.mrf.mxu0
      %v3534 = vadd.f32 %v3329, %v3533
      %v3535 = vpop.f32.mrf.mxu0
      %v3536 = vpop.f32.mrf.mxu0
      %v3537 = vadd.f32 %v3329, %v3536
      %v3538 = vpop.f32.mrf.mxu0
      %3539 = vdwg.mxu0
      %v3540 = vmax.f32 %v3414, 0.0
      %v3541 = vmax.f32 %v3417, 0.0
      %v3542 = vmax.f32 %v3422, 0.0
      %v3543 = vmax.f32 %v3425, 0.0
      %v3544 = vmax.f32 %v3430, 0.0
      %v3545 = vmax.f32 %v3433, 0.0
      %v3546 = vmax.f32 %v3438, 0.0
      %v3547 = vmax.f32 %v3441, 0.0
      %v3548 = vmax.f32 %v3446, 0.0
      %v3549 = vmax.f32 %v3449, 0.0
      %v3550 = vmax.f32 %v3454, 0.0
      %v3551 = vmax.f32 %v3457, 0.0
      %v3552 = vmax.f32 %v3462, 0.0
      %v3553 = vmax.f32 %v3465, 0.0
      %v3554 = vmax.f32 %v3470, 0.0
      %v3555 = vmax.f32 %v3473, 0.0
      %v3556 = vmax.f32 %v3478, 0.0
      %v3557 = vmax.f32 %v3481, 0.0
      %v3558 = vmax.f32 %v3486, 0.0
      %v3559 = vmax.f32 %v3489, 0.0
      %v3560 = vmax.f32 %v3494, 0.0
      %v3561 = vmax.f32 %v3497, 0.0
      %v3562 = vmax.f32 %v3502, 0.0
      %v3563 = vmax.f32 %v3505, 0.0
      %v3564 = vmax.f32 %v3510, 0.0
      %v3565 = vmax.f32 %v3513, 0.0
      %v3566 = vmax.f32 %v3518, 0.0
      %v3567 = vmax.f32 %v3521, 0.0
      %v3568 = vmax.f32 %v3526, 0.0
      %v3569 = vmax.f32 %v3529, 0.0
      %v3570 = vmax.f32 %v3534, 0.0
      %v3571 = vmax.f32 %v3537, 0.0
      %v3572 = vpack.c.bf16 %v3541, %v3540
      %v3573 = vpack.c.bf16 %v3543, %v3542
      %v3574 = vpack.c.bf16 %v3545, %v3544
      %v3575 = vpack.c.bf16 %v3547, %v3546
      %v3576 = vpack.c.bf16 %v3549, %v3548
      %v3577 = vpack.c.bf16 %v3551, %v3550
      %v3578 = vpack.c.bf16 %v3553, %v3552
      %v3579 = vpack.c.bf16 %v3555, %v3554
      %v3580 = vpack.c.bf16 %v3557, %v3556
      %v3581 = vpack.c.bf16 %v3559, %v3558
      %v3582 = vpack.c.bf16 %v3561, %v3560
      %v3583 = vpack.c.bf16 %v3563, %v3562
      %v3584 = vpack.c.bf16 %v3565, %v3564
      %v3585 = vpack.c.bf16 %v3567, %v3566
      %v3586 = vpack.c.bf16 %v3569, %v3568
      %v3587 = vpack.c.bf16 %v3571, %v3570
      %s3588 = scalar_lea.vmem %s3, 320
      %v3589 = vld [vmem:[%s3588] sm:$0xf]
      %v3590 = vld [vmem:[%s3588 + $0x4] sm:$0xf]
      %v3591 = vld [vmem:[%s3588 + $0x8] sm:$0xf]
      %v3592 = vld [vmem:[%s3588 + $0xc] sm:$0xf]
      %v3593 = vld [vmem:[%s3588 + $0x10] sm:$0xf]
      %v3594 = vld [vmem:[%s3588 + $0x14] sm:$0xf]
      %v3595 = vld [vmem:[%s3588 + $0x18] sm:$0xf]
      %v3596 = vld [vmem:[%s3588 + $0x1c] sm:$0xf]
      %v3597 = vld [vmem:[%s3588 + $0x20] sm:$0xf]
      %v3598 = vld [vmem:[%s3588 + $0x24] sm:$0xf]
      %v3599 = vld [vmem:[%s3588 + $0x28] sm:$0xf]
      %v3600 = vld [vmem:[%s3588 + $0x2c] sm:$0xf]
      %v3601 = vld [vmem:[%s3588 + $0x30] sm:$0xf]
      %v3602 = vld [vmem:[%s3588 + $0x34] sm:$0xf]
      %v3603 = vld [vmem:[%s3588 + $0x38] sm:$0xf]
      %v3604 = vld [vmem:[%s3588 + $0x3c] sm:$0xf]
      %s3605 = scalar_lea.vmem %s5, 6
      %v3606 = vld [vmem:[%s3605] sm:$0x1]
      %v3608 = vlaneseq
      %v3609 = vshrl.u32 %v3608, 7
      %v3610 = vsub.s32 0, %v3609
      %v3611 = vrot.slane %v3606, %v3610
      %v3629 = vunpack.c.l.b16 %v3589
      %v3630 = vunpack.c.l.b16 %v3590
      %v3631 = vunpack.c.l.b16 %v3591
      %v3632 = vunpack.c.l.b16 %v3592
      %v3633 = vunpack.c.l.b16 %v3593
      %v3634 = vunpack.c.l.b16 %v3594
      %v3635 = vunpack.c.l.b16 %v3595
      %v3636 = vunpack.c.l.b16 %v3596
      %v3637 = vunpack.c.l.b16 %v3597
      %v3638 = vunpack.c.l.b16 %v3598
      %v3639 = vunpack.c.l.b16 %v3599
      %v3640 = vunpack.c.l.b16 %v3600
      %v3641 = vunpack.c.l.b16 %v3601
      %v3642 = vunpack.c.l.b16 %v3602
      %v3643 = vunpack.c.l.b16 %v3603
      %v3644 = vunpack.c.l.b16 %v3604
      %v3645 = vpack.c.b16 %v3630, %v3629
      %v3646 = vpack.c.b16 %v3632, %v3631
      %v3647 = vpack.c.b16 %v3634, %v3633
      %v3648 = vpack.c.b16 %v3636, %v3635
      %v3649 = vpack.c.b16 %v3638, %v3637
      %v3650 = vpack.c.b16 %v3640, %v3639
      %v3651 = vpack.c.b16 %v3642, %v3641
      %v3652 = vpack.c.b16 %v3644, %v3643
      %3661 = vmatprep.subr.bf16.mxu0 0
      %3662 = vmatpush1.bf16.msra.mxu0 %v3652
      %3663 = vmatprep.subr.bf16.mxu0 0
      %3664 = vmatpush1.bf16.msra.mxu0 %v3651
      %3665 = vmatprep.subr.bf16.mxu0 0
      %3666 = vmatpush1.bf16.msra.mxu0 %v3650
      %3667 = vmatprep.subr.bf16.mxu0 0
      %3668 = vmatpush1.bf16.msra.mxu0 %v3649
      %3669 = vmatprep.subr.bf16.mxu0 0
      %3670 = vmatpush1.bf16.msra.mxu0 %v3648
      %3671 = vmatprep.subr.bf16.mxu0 0
      %3672 = vmatpush1.bf16.msra.mxu0 %v3647
      %3673 = vmatprep.subr.bf16.mxu0 0
      %3674 = vmatpush1.bf16.msra.mxu0 %v3646
      %3675 = vmatprep.subr.bf16.mxu0 0
      %3676 = vmatpush1.bf16.msra.mxu0 %v3645
      %3677 = vmatprep.subr.bf16.mxu0 0
      %3678 = vmatpush2.bf16.msra.mxu0 0
      %3679 = vmatprep.subr.bf16.mxu0 0
      %3680 = vmatpush2.bf16.msra.mxu0 0
      %3681 = vmatprep.subr.bf16.mxu0 0
      %3682 = vmatpush2.bf16.msra.mxu0 0
      %3683 = vmatprep.subr.bf16.mxu0 0
      %3684 = vmatpush2.bf16.msra.mxu0 0
      %3685 = vmatprep.subr.bf16.mxu0 0
      %3686 = vmatpush2.bf16.msra.mxu0 0
      %3687 = vmatprep.subr.bf16.mxu0 0
      %3688 = vmatpush2.bf16.msra.mxu0 0
      %3689 = vmatprep.subr.bf16.mxu0 0
      %3690 = vmatpush2.bf16.msra.mxu0 0
      %3691 = vmatprep.subr.bf16.mxu0 0
      %3692 = vmatpush2.bf16.msra.mxu0 0
      %3693 = vmatprep.mubr.bf16.mxu0 0
      %3694 = vmatmul.mubr.bf16.gmra.mxu0 %v3572
      %v3695 = vpop.f32.mrf.mxu0
      %v3696 = vadd.f32 %v3611, %v3695
      %v3697 = vpop.f32.mrf.mxu0
      %v3698 = vpop.f32.mrf.mxu0
      %v3699 = vadd.f32 %v3611, %v3698
      %v3700 = vpop.f32.mrf.mxu0
      %3701 = vmatprep.mubr.bf16.mxu0 0
      %3702 = vmatmul.mubr.bf16.gmra.mxu0 %v3573
      %v3703 = vpop.f32.mrf.mxu0
      %v3704 = vadd.f32 %v3611, %v3703
      %v3705 = vpop.f32.mrf.mxu0
      %v3706 = vpop.f32.mrf.mxu0
      %v3707 = vadd.f32 %v3611, %v3706
      %v3708 = vpop.f32.mrf.mxu0
      %3709 = vmatprep.mubr.bf16.mxu0 0
      %3710 = vmatmul.mubr.bf16.gmra.mxu0 %v3574
      %v3711 = vpop.f32.mrf.mxu0
      %v3712 = vadd.f32 %v3611, %v3711
      %v3713 = vpop.f32.mrf.mxu0
      %v3714 = vpop.f32.mrf.mxu0
      %v3715 = vadd.f32 %v3611, %v3714
      %v3716 = vpop.f32.mrf.mxu0
      %3717 = vmatprep.mubr.bf16.mxu0 0
      %3718 = vmatmul.mubr.bf16.gmra.mxu0 %v3575
      %v3719 = vpop.f32.mrf.mxu0
      %v3720 = vadd.f32 %v3611, %v3719
      %v3721 = vpop.f32.mrf.mxu0
      %v3722 = vpop.f32.mrf.mxu0
      %v3723 = vadd.f32 %v3611, %v3722
      %v3724 = vpop.f32.mrf.mxu0
      %3725 = vmatprep.mubr.bf16.mxu0 0
      %3726 = vmatmul.mubr.bf16.gmra.mxu0 %v3576
      %v3727 = vpop.f32.mrf.mxu0
      %v3728 = vadd.f32 %v3611, %v3727
      %v3729 = vpop.f32.mrf.mxu0
      %v3730 = vpop.f32.mrf.mxu0
      %v3731 = vadd.f32 %v3611, %v3730
      %v3732 = vpop.f32.mrf.mxu0
      %3733 = vmatprep.mubr.bf16.mxu0 0
      %3734 = vmatmul.mubr.bf16.gmra.mxu0 %v3577
      %v3735 = vpop.f32.mrf.mxu0
      %v3736 = vadd.f32 %v3611, %v3735
      %v3737 = vpop.f32.mrf.mxu0
      %v3738 = vpop.f32.mrf.mxu0
      %v3739 = vadd.f32 %v3611, %v3738
      %v3740 = vpop.f32.mrf.mxu0
      %3741 = vmatprep.mubr.bf16.mxu0 0
      %3742 = vmatmul.mubr.bf16.gmra.mxu0 %v3578
      %v3743 = vpop.f32.mrf.mxu0
      %v3744 = vadd.f32 %v3611, %v3743
      %v3745 = vpop.f32.mrf.mxu0
      %v3746 = vpop.f32.mrf.mxu0
      %v3747 = vadd.f32 %v3611, %v3746
      %v3748 = vpop.f32.mrf.mxu0
      %3749 = vmatprep.mubr.bf16.mxu0 0
      %3750 = vmatmul.mubr.bf16.gmra.mxu0 %v3579
      %v3751 = vpop.f32.mrf.mxu0
      %v3752 = vadd.f32 %v3611, %v3751
      %v3753 = vpop.f32.mrf.mxu0
      %v3754 = vpop.f32.mrf.mxu0
      %v3755 = vadd.f32 %v3611, %v3754
      %v3756 = vpop.f32.mrf.mxu0
      %3757 = vmatprep.mubr.bf16.mxu0 0
      %3758 = vmatmul.mubr.bf16.gmra.mxu0 %v3580
      %v3759 = vpop.f32.mrf.mxu0
      %v3760 = vadd.f32 %v3611, %v3759
      %v3761 = vpop.f32.mrf.mxu0
      %v3762 = vpop.f32.mrf.mxu0
      %v3763 = vadd.f32 %v3611, %v3762
      %v3764 = vpop.f32.mrf.mxu0
      %3765 = vmatprep.mubr.bf16.mxu0 0
      %3766 = vmatmul.mubr.bf16.gmra.mxu0 %v3581
      %v3767 = vpop.f32.mrf.mxu0
      %v3768 = vadd.f32 %v3611, %v3767
      %v3769 = vpop.f32.mrf.mxu0
      %v3770 = vpop.f32.mrf.mxu0
      %v3771 = vadd.f32 %v3611, %v3770
      %v3772 = vpop.f32.mrf.mxu0
      %3773 = vmatprep.mubr.bf16.mxu0 0
      %3774 = vmatmul.mubr.bf16.gmra.mxu0 %v3582
      %v3775 = vpop.f32.mrf.mxu0
      %v3776 = vadd.f32 %v3611, %v3775
      %v3777 = vpop.f32.mrf.mxu0
      %v3778 = vpop.f32.mrf.mxu0
      %v3779 = vadd.f32 %v3611, %v3778
      %v3780 = vpop.f32.mrf.mxu0
      %3781 = vmatprep.mubr.bf16.mxu0 0
      %3782 = vmatmul.mubr.bf16.gmra.mxu0 %v3583
      %v3783 = vpop.f32.mrf.mxu0
      %v3784 = vadd.f32 %v3611, %v3783
      %v3785 = vpop.f32.mrf.mxu0
      %v3786 = vpop.f32.mrf.mxu0
      %v3787 = vadd.f32 %v3611, %v3786
      %v3788 = vpop.f32.mrf.mxu0
      %3789 = vmatprep.mubr.bf16.mxu0 0
      %3790 = vmatmul.mubr.bf16.gmra.mxu0 %v3584
      %v3791 = vpop.f32.mrf.mxu0
      %v3792 = vadd.f32 %v3611, %v3791
      %v3793 = vpop.f32.mrf.mxu0
      %v3794 = vpop.f32.mrf.mxu0
      %v3795 = vadd.f32 %v3611, %v3794
      %v3796 = vpop.f32.mrf.mxu0
      %3797 = vmatprep.mubr.bf16.mxu0 0
      %3798 = vmatmul.mubr.bf16.gmra.mxu0 %v3585
      %v3799 = vpop.f32.mrf.mxu0
      %v3800 = vadd.f32 %v3611, %v3799
      %v3801 = vpop.f32.mrf.mxu0
      %v3802 = vpop.f32.mrf.mxu0
      %v3803 = vadd.f32 %v3611, %v3802
      %v3804 = vpop.f32.mrf.mxu0
      %3805 = vmatprep.mubr.bf16.mxu0 0
      %3806 = vmatmul.mubr.bf16.gmra.mxu0 %v3586
      %v3807 = vpop.f32.mrf.mxu0
      %v3808 = vadd.f32 %v3611, %v3807
      %v3809 = vpop.f32.mrf.mxu0
      %v3810 = vpop.f32.mrf.mxu0
      %v3811 = vadd.f32 %v3611, %v3810
      %v3812 = vpop.f32.mrf.mxu0
      %3813 = vmatprep.mubr.bf16.mxu0 0
      %3814 = vmatmul.mubr.bf16.gmra.mxu0 %v3587
      %v3815 = vpop.f32.mrf.mxu0
      %v3816 = vadd.f32 %v3611, %v3815
      %v3817 = vpop.f32.mrf.mxu0
      %v3818 = vpop.f32.mrf.mxu0
      %v3819 = vadd.f32 %v3611, %v3818
      %v3820 = vpop.f32.mrf.mxu0
      %3821 = vdwg.mxu0
      %vm3822 = vcmask 64512
      %3823 = vst.msk [vmem:[%s348] sm:$0xff] %vm3822, %v3696
      %3824 = vst.msk [vmem:[%s348 + $0x8] sm:$0xff] %vm3822, %v3699
      %3825 = vst.msk [vmem:[%s348 + $0x10] sm:$0xff] %vm3822, %v3704
      %3826 = vst.msk [vmem:[%s348 + $0x18] sm:$0xff] %vm3822, %v3707
      %3827 = vst.msk [vmem:[%s348 + $0x20] sm:$0xff] %vm3822, %v3712
      %3828 = vst.msk [vmem:[%s348 + $0x28] sm:$0xff] %vm3822, %v3715
      %3829 = vst.msk [vmem:[%s348 + $0x30] sm:$0xff] %vm3822, %v3720
      %3830 = vst.msk [vmem:[%s348 + $0x38] sm:$0xff] %vm3822, %v3723
      %3831 = vst.msk [vmem:[%s348 + $0x40] sm:$0xff] %vm3822, %v3728
      %3832 = vst.msk [vmem:[%s348 + $0x48] sm:$0xff] %vm3822, %v3731
      %3833 = vst.msk [vmem:[%s348 + $0x50] sm:$0xff] %vm3822, %v3736
      %3834 = vst.msk [vmem:[%s348 + $0x58] sm:$0xff] %vm3822, %v3739
      %3835 = vst.msk [vmem:[%s348 + $0x60] sm:$0xff] %vm3822, %v3744
      %3836 = vst.msk [vmem:[%s348 + $0x68] sm:$0xff] %vm3822, %v3747
      %3837 = vst.msk [vmem:[%s348 + $0x70] sm:$0xff] %vm3822, %v3752
      %3838 = vst.msk [vmem:[%s348 + $0x78] sm:$0xff] %vm3822, %v3755
      %3839 = vst.msk [vmem:[%s348 + $0x80] sm:$0xff] %vm3822, %v3760
      %3840 = vst.msk [vmem:[%s348 + $0x88] sm:$0xff] %vm3822, %v3763
      %3841 = vst.msk [vmem:[%s348 + $0x90] sm:$0xff] %vm3822, %v3768
      %3842 = vst.msk [vmem:[%s348 + $0x98] sm:$0xff] %vm3822, %v3771
      %3843 = vst.msk [vmem:[%s348 + $0xa0] sm:$0xff] %vm3822, %v3776
      %3844 = vst.msk [vmem:[%s348 + $0xa8] sm:$0xff] %vm3822, %v3779
      %3845 = vst.msk [vmem:[%s348 + $0xb0] sm:$0xff] %vm3822, %v3784
      %3846 = vst.msk [vmem:[%s348 + $0xb8] sm:$0xff] %vm3822, %v3787
      %3847 = vst.msk [vmem:[%s348 + $0xc0] sm:$0xff] %vm3822, %v3792
      %3848 = vst.msk [vmem:[%s348 + $0xc8] sm:$0xff] %vm3822, %v3795
      %3849 = vst.msk [vmem:[%s348 + $0xd0] sm:$0xff] %vm3822, %v3800
      %3850 = vst.msk [vmem:[%s348 + $0xd8] sm:$0xff] %vm3822, %v3803
      %3851 = vst.msk [vmem:[%s348 + $0xe0] sm:$0xff] %vm3822, %v3808
      %3852 = vst.msk [vmem:[%s348 + $0xe8] sm:$0xff] %vm3822, %v3811
      %3853 = vst.msk [vmem:[%s348 + $0xf0] sm:$0xff] %vm3822, %v3816
      %3854 = vst.msk [vmem:[%s348 + $0xf8] sm:$0xff] %vm3822, %v3819
      %v3855 = vlaneseq
      %v3856 = vand.u32 %v3855, 127
      %vm3857 = vcmp.lt.s32.totalorder %v3856, 2
      %v3858 = vsel %vm3857, 1, 0
      %v3859 = vcvt.s32.f32 %v3858
      %v3860 = vmul.f32 %v3696, %v3859
      %v3861 = vmul.f32 %v3699, %v3859
      %v3862 = vmul.f32 %v3704, %v3859
      %v3863 = vmul.f32 %v3707, %v3859
      %v3864 = vmul.f32 %v3712, %v3859
      %v3865 = vmul.f32 %v3715, %v3859
      %v3866 = vmul.f32 %v3720, %v3859
      %v3867 = vmul.f32 %v3723, %v3859
      %v3868 = vmul.f32 %v3728, %v3859
      %v3869 = vmul.f32 %v3731, %v3859
      %v3870 = vmul.f32 %v3736, %v3859
      %v3871 = vmul.f32 %v3739, %v3859
      %v3872 = vmul.f32 %v3744, %v3859
      %v3873 = vmul.f32 %v3747, %v3859
      %v3874 = vmul.f32 %v3752, %v3859
      %v3875 = vmul.f32 %v3755, %v3859
      %v3876 = vmul.f32 %v3760, %v3859
      %v3877 = vmul.f32 %v3763, %v3859
      %v3878 = vmul.f32 %v3768, %v3859
      %v3879 = vmul.f32 %v3771, %v3859
      %v3880 = vmul.f32 %v3776, %v3859
      %v3881 = vmul.f32 %v3779, %v3859
      %v3882 = vmul.f32 %v3784, %v3859
      %v3883 = vmul.f32 %v3787, %v3859
      %v3884 = vmul.f32 %v3792, %v3859
      %v3885 = vmul.f32 %v3795, %v3859
      %v3886 = vmul.f32 %v3800, %v3859
      %v3887 = vmul.f32 %v3803, %v3859
      %v3888 = vmul.f32 %v3808, %v3859
      %v3889 = vmul.f32 %v3811, %v3859
      %v3890 = vmul.f32 %v3816, %v3859
      %v3891 = vmul.f32 %v3819, %v3859
      %v3892 = vld [vmem:[%s335] sm:$0xff]
      %v3893 = vld [vmem:[%s335 + $0x8] sm:$0xff]
      %v3894 = vld [vmem:[%s335 + $0x10] sm:$0xff]
      %v3895 = vld [vmem:[%s335 + $0x18] sm:$0xff]
      %v3896 = vld [vmem:[%s335 + $0x20] sm:$0xff]
      %v3897 = vld [vmem:[%s335 + $0x28] sm:$0xff]
      %v3898 = vld [vmem:[%s335 + $0x30] sm:$0xff]
      %v3899 = vld [vmem:[%s335 + $0x38] sm:$0xff]
      %v3900 = vld [vmem:[%s335 + $0x40] sm:$0xff]
      %v3901 = vld [vmem:[%s335 + $0x48] sm:$0xff]
      %v3902 = vld [vmem:[%s335 + $0x50] sm:$0xff]
      %v3903 = vld [vmem:[%s335 + $0x58] sm:$0xff]
      %v3904 = vld [vmem:[%s335 + $0x60] sm:$0xff]
      %v3905 = vld [vmem:[%s335 + $0x68] sm:$0xff]
      %v3906 = vld [vmem:[%s335 + $0x70] sm:$0xff]
      %v3907 = vld [vmem:[%s335 + $0x78] sm:$0xff]
      %v3908 = vld [vmem:[%s335 + $0x80] sm:$0xff]
      %v3909 = vld [vmem:[%s335 + $0x88] sm:$0xff]
      %v3910 = vld [vmem:[%s335 + $0x90] sm:$0xff]
      %v3911 = vld [vmem:[%s335 + $0x98] sm:$0xff]
      %v3912 = vld [vmem:[%s335 + $0xa0] sm:$0xff]
      %v3913 = vld [vmem:[%s335 + $0xa8] sm:$0xff]
      %v3914 = vld [vmem:[%s335 + $0xb0] sm:$0xff]
      %v3915 = vld [vmem:[%s335 + $0xb8] sm:$0xff]
      %v3916 = vld [vmem:[%s335 + $0xc0] sm:$0xff]
      %v3917 = vld [vmem:[%s335 + $0xc8] sm:$0xff]
      %v3918 = vld [vmem:[%s335 + $0xd0] sm:$0xff]
      %v3919 = vld [vmem:[%s335 + $0xd8] sm:$0xff]
      %v3920 = vld [vmem:[%s335 + $0xe0] sm:$0xff]
      %v3921 = vld [vmem:[%s335 + $0xe8] sm:$0xff]
      %v3922 = vld [vmem:[%s335 + $0xf0] sm:$0xff]
      %v3923 = vld [vmem:[%s335 + $0xf8] sm:$0xff]
      %v3924 = vmul.f32 %v3696, 0.5
      %v3925 = vmul.f32 %v3699, 0.5
      %v3926 = vmul.f32 %v3704, 0.5
      %v3927 = vmul.f32 %v3707, 0.5
      %v3928 = vmul.f32 %v3712, 0.5
      %v3929 = vmul.f32 %v3715, 0.5
      %v3930 = vmul.f32 %v3720, 0.5
      %v3931 = vmul.f32 %v3723, 0.5
      %v3932 = vmul.f32 %v3728, 0.5
      %v3933 = vmul.f32 %v3731, 0.5
      %v3934 = vmul.f32 %v3736, 0.5
      %v3935 = vmul.f32 %v3739, 0.5
      %v3936 = vmul.f32 %v3744, 0.5
      %v3937 = vmul.f32 %v3747, 0.5
      %v3938 = vmul.f32 %v3752, 0.5
      %v3939 = vmul.f32 %v3755, 0.5
      %v3940 = vmul.f32 %v3760, 0.5
      %v3941 = vmul.f32 %v3763, 0.5
      %v3942 = vmul.f32 %v3768, 0.5
      %v3943 = vmul.f32 %v3771, 0.5
      %v3944 = vmul.f32 %v3776, 0.5
      %v3945 = vmul.f32 %v3779, 0.5
      %v3946 = vmul.f32 %v3784, 0.5
      %v3947 = vmul.f32 %v3787, 0.5
      %v3948 = vmul.f32 %v3792, 0.5
      %v3949 = vmul.f32 %v3795, 0.5
      %v3950 = vmul.f32 %v3800, 0.5
      %v3951 = vmul.f32 %v3803, 0.5
      %v3952 = vmul.f32 %v3808, 0.5
      %v3953 = vmul.f32 %v3811, 0.5
      %v3954 = vmul.f32 %v3816, 0.5
      %v3955 = vmul.f32 %v3819, 0.5
      %v3956 = vmul.f32 %v3924, 1.442695
      %v3957 = vpow.pop %v3956
      %v3958 = vmul.f32 %v3925, 1.442695
      %v3959 = vpow.pop %v3958
      %v3960 = vmul.f32 %v3926, 1.442695
      %v3961 = vpow.pop %v3960
      %v3962 = vmul.f32 %v3927, 1.442695
      %v3963 = vpow.pop %v3962
      %v3964 = vmul.f32 %v3928, 1.442695
      %v3965 = vpow.pop %v3964
      %v3966 = vmul.f32 %v3929, 1.442695
      %v3967 = vpow.pop %v3966
      %v3968 = vmul.f32 %v3930, 1.442695
      %v3969 = vpow.pop %v3968
      %v3970 = vmul.f32 %v3931, 1.442695
      %v3971 = vpow.pop %v3970
      %v3972 = vmul.f32 %v3932, 1.442695
      %v3973 = vpow.pop %v3972
      %v3974 = vmul.f32 %v3933, 1.442695
      %v3975 = vpow.pop %v3974
      %v3976 = vmul.f32 %v3934, 1.442695
      %v3977 = vpow.pop %v3976
      %v3978 = vmul.f32 %v3935, 1.442695
      %v3979 = vpow.pop %v3978
      %v3980 = vmul.f32 %v3936, 1.442695
      %v3981 = vpow.pop %v3980
      %v3982 = vmul.f32 %v3937, 1.442695
      %v3983 = vpow.pop %v3982
      %v3984 = vmul.f32 %v3938, 1.442695
      %v3985 = vpow.pop %v3984
      %v3986 = vmul.f32 %v3939, 1.442695
      %v3987 = vpow.pop %v3986
      %v3988 = vmul.f32 %v3940, 1.442695
      %v3989 = vpow.pop %v3988
      %v3990 = vmul.f32 %v3941, 1.442695
      %v3991 = vpow.pop %v3990
      %v3992 = vmul.f32 %v3942, 1.442695
      %v3993 = vpow.pop %v3992
      %v3994 = vmul.f32 %v3943, 1.442695
      %v3995 = vpow.pop %v3994
      %v3996 = vmul.f32 %v3944, 1.442695
      %v3997 = vpow.pop %v3996
      %v3998 = vmul.f32 %v3945, 1.442695
      %v3999 = vpow.pop %v3998
      %v4000 = vmul.f32 %v3946, 1.442695
      %v4001 = vpow.pop %v4000
      %v4002 = vmul.f32 %v3947, 1.442695
      %v4003 = vpow.pop %v4002
      %v4004 = vmul.f32 %v3948, 1.442695
      %v4005 = vpow.pop %v4004
      %v4006 = vmul.f32 %v3949, 1.442695
      %v4007 = vpow.pop %v4006
      %v4008 = vmul.f32 %v3950, 1.442695
      %v4009 = vpow.pop %v4008
      %v4010 = vmul.f32 %v3951, 1.442695
      %v4011 = vpow.pop %v4010
      %v4012 = vmul.f32 %v3952, 1.442695
      %v4013 = vpow.pop %v4012
      %v4014 = vmul.f32 %v3953, 1.442695
      %v4015 = vpow.pop %v4014
      %v4016 = vmul.f32 %v3954, 1.442695
      %v4017 = vpow.pop %v4016
      %v4018 = vmul.f32 %v3955, 1.442695
      %v4019 = vpow.pop %v4018
      %v4020 = vmul.f32 %v3892, %v3957
      %v4021 = vmul.f32 %v3893, %v3959
      %v4022 = vmul.f32 %v3894, %v3961
      %v4023 = vmul.f32 %v3895, %v3963
      %v4024 = vmul.f32 %v3896, %v3965
      %v4025 = vmul.f32 %v3897, %v3967
      %v4026 = vmul.f32 %v3898, %v3969
      %v4027 = vmul.f32 %v3899, %v3971
      %v4028 = vmul.f32 %v3900, %v3973
      %v4029 = vmul.f32 %v3901, %v3975
      %v4030 = vmul.f32 %v3902, %v3977
      %v4031 = vmul.f32 %v3903, %v3979
      %v4032 = vmul.f32 %v3904, %v3981
      %v4033 = vmul.f32 %v3905, %v3983
      %v4034 = vmul.f32 %v3906, %v3985
      %v4035 = vmul.f32 %v3907, %v3987
      %v4036 = vmul.f32 %v3908, %v3989
      %v4037 = vmul.f32 %v3909, %v3991
      %v4038 = vmul.f32 %v3910, %v3993
      %v4039 = vmul.f32 %v3911, %v3995
      %v4040 = vmul.f32 %v3912, %v3997
      %v4041 = vmul.f32 %v3913, %v3999
      %v4042 = vmul.f32 %v3914, %v4001
      %v4043 = vmul.f32 %v3915, %v4003
      %v4044 = vmul.f32 %v3916, %v4005
      %v4045 = vmul.f32 %v3917, %v4007
      %v4046 = vmul.f32 %v3918, %v4009
      %v4047 = vmul.f32 %v3919, %v4011
      %v4048 = vmul.f32 %v3920, %v4013
      %v4049 = vmul.f32 %v3921, %v4015
      %v4050 = vmul.f32 %v3922, %v4017
      %v4051 = vmul.f32 %v3923, %v4019
      %v4052 = vadd.f32 %v3860, %v4020
      %v4053 = vadd.f32 %v3861, %v4021
      %v4054 = vadd.f32 %v3862, %v4022
      %v4055 = vadd.f32 %v3863, %v4023
      %v4056 = vadd.f32 %v3864, %v4024
      %v4057 = vadd.f32 %v3865, %v4025
      %v4058 = vadd.f32 %v3866, %v4026
      %v4059 = vadd.f32 %v3867, %v4027
      %v4060 = vadd.f32 %v3868, %v4028
      %v4061 = vadd.f32 %v3869, %v4029
      %v4062 = vadd.f32 %v3870, %v4030
      %v4063 = vadd.f32 %v3871, %v4031
      %v4064 = vadd.f32 %v3872, %v4032
      %v4065 = vadd.f32 %v3873, %v4033
      %v4066 = vadd.f32 %v3874, %v4034
      %v4067 = vadd.f32 %v3875, %v4035
      %v4068 = vadd.f32 %v3876, %v4036
      %v4069 = vadd.f32 %v3877, %v4037
      %v4070 = vadd.f32 %v3878, %v4038
      %v4071 = vadd.f32 %v3879, %v4039
      %v4072 = vadd.f32 %v3880, %v4040
      %v4073 = vadd.f32 %v3881, %v4041
      %v4074 = vadd.f32 %v3882, %v4042
      %v4075 = vadd.f32 %v3883, %v4043
      %v4076 = vadd.f32 %v3884, %v4044
      %v4077 = vadd.f32 %v3885, %v4045
      %v4078 = vadd.f32 %v3886, %v4046
      %v4079 = vadd.f32 %v3887, %v4047
      %v4080 = vadd.f32 %v3888, %v4048
      %v4081 = vadd.f32 %v3889, %v4049
      %v4082 = vadd.f32 %v3890, %v4050
      %v4083 = vadd.f32 %v3891, %v4051
      %v4084 = vpack.c.bf16 %v4053, %v4052
      %v4085 = vpack.c.bf16 %v4055, %v4054
      %v4086 = vpack.c.bf16 %v4057, %v4056
      %v4087 = vpack.c.bf16 %v4059, %v4058
      %v4088 = vpack.c.bf16 %v4061, %v4060
      %v4089 = vpack.c.bf16 %v4063, %v4062
      %v4090 = vpack.c.bf16 %v4065, %v4064
      %v4091 = vpack.c.bf16 %v4067, %v4066
      %v4092 = vpack.c.bf16 %v4069, %v4068
      %v4093 = vpack.c.bf16 %v4071, %v4070
      %v4094 = vpack.c.bf16 %v4073, %v4072
      %v4095 = vpack.c.bf16 %v4075, %v4074
      %v4096 = vpack.c.bf16 %v4077, %v4076
      %v4097 = vpack.c.bf16 %v4079, %v4078
      %v4098 = vpack.c.bf16 %v4081, %v4080
      %v4099 = vpack.c.bf16 %v4083, %v4082
      %s4100 = scalar_lea.vmem %s3, 384
      %v4101 = vld [vmem:[%s4100] sm:$0xf]
      %v4102 = vld [vmem:[%s4100 + $0x4] sm:$0xf]
      %v4103 = vld [vmem:[%s4100 + $0x8] sm:$0xf]
      %v4104 = vld [vmem:[%s4100 + $0xc] sm:$0xf]
      %v4105 = vld [vmem:[%s4100 + $0x10] sm:$0xf]
      %v4106 = vld [vmem:[%s4100 + $0x14] sm:$0xf]
      %v4107 = vld [vmem:[%s4100 + $0x18] sm:$0xf]
      %v4108 = vld [vmem:[%s4100 + $0x1c] sm:$0xf]
      %v4109 = vld [vmem:[%s4100 + $0x20] sm:$0xf]
      %v4110 = vld [vmem:[%s4100 + $0x24] sm:$0xf]
      %v4111 = vld [vmem:[%s4100 + $0x28] sm:$0xf]
      %v4112 = vld [vmem:[%s4100 + $0x2c] sm:$0xf]
      %v4113 = vld [vmem:[%s4100 + $0x30] sm:$0xf]
      %v4114 = vld [vmem:[%s4100 + $0x34] sm:$0xf]
      %v4115 = vld [vmem:[%s4100 + $0x38] sm:$0xf]
      %v4116 = vld [vmem:[%s4100 + $0x3c] sm:$0xf]
      %s4117 = scalar_lea.vmem %s5, 7
      %v4118 = vld [vmem:[%s4117] sm:$0x1]
      %v4120 = vlaneseq
      %v4121 = vshrl.u32 %v4120, 7
      %v4122 = vsub.s32 0, %v4121
      %v4123 = vrot.slane %v4118, %v4122
      %v4141 = vunpack.c.l.b16 %v4101
      %v4142 = vunpack.c.l.b16 %v4102
      %v4143 = vunpack.c.l.b16 %v4103
      %v4144 = vunpack.c.l.b16 %v4104
      %v4145 = vunpack.c.l.b16 %v4105
      %v4146 = vunpack.c.l.b16 %v4106
      %v4147 = vunpack.c.l.b16 %v4107
      %v4148 = vunpack.c.l.b16 %v4108
      %v4149 = vunpack.c.l.b16 %v4109
      %v4150 = vunpack.c.l.b16 %v4110
      %v4151 = vunpack.c.l.b16 %v4111
      %v4152 = vunpack.c.l.b16 %v4112
      %v4153 = vunpack.c.l.b16 %v4113
      %v4154 = vunpack.c.l.b16 %v4114
      %v4155 = vunpack.c.l.b16 %v4115
      %v4156 = vunpack.c.l.b16 %v4116
      %v4157 = vpack.c.b16 %v4142, %v4141
      %v4158 = vpack.c.b16 %v4144, %v4143
      %v4159 = vpack.c.b16 %v4146, %v4145
      %v4160 = vpack.c.b16 %v4148, %v4147
      %v4161 = vpack.c.b16 %v4150, %v4149
      %v4162 = vpack.c.b16 %v4152, %v4151
      %v4163 = vpack.c.b16 %v4154, %v4153
      %v4164 = vpack.c.b16 %v4156, %v4155
      %4173 = vmatprep.subr.bf16.mxu0 0
      %4174 = vmatpush1.bf16.msra.mxu0 %v4164
      %4175 = vmatprep.subr.bf16.mxu0 0
      %4176 = vmatpush1.bf16.msra.mxu0 %v4163
      %4177 = vmatprep.subr.bf16.mxu0 0
      %4178 = vmatpush1.bf16.msra.mxu0 %v4162
      %4179 = vmatprep.subr.bf16.mxu0 0
      %4180 = vmatpush1.bf16.msra.mxu0 %v4161
      %4181 = vmatprep.subr.bf16.mxu0 0
      %4182 = vmatpush1.bf16.msra.mxu0 %v4160
      %4183 = vmatprep.subr.bf16.mxu0 0
      %4184 = vmatpush1.bf16.msra.mxu0 %v4159
      %4185 = vmatprep.subr.bf16.mxu0 0
      %4186 = vmatpush1.bf16.msra.mxu0 %v4158
      %4187 = vmatprep.subr.bf16.mxu0 0
      %4188 = vmatpush1.bf16.msra.mxu0 %v4157
      %4189 = vmatprep.subr.bf16.mxu0 0
      %4190 = vmatpush2.bf16.msra.mxu0 0
      %4191 = vmatprep.subr.bf16.mxu0 0
      %4192 = vmatpush2.bf16.msra.mxu0 0
      %4193 = vmatprep.subr.bf16.mxu0 0
      %4194 = vmatpush2.bf16.msra.mxu0 0
      %4195 = vmatprep.subr.bf16.mxu0 0
      %4196 = vmatpush2.bf16.msra.mxu0 0
      %4197 = vmatprep.subr.bf16.mxu0 0
      %4198 = vmatpush2.bf16.msra.mxu0 0
      %4199 = vmatprep.subr.bf16.mxu0 0
      %4200 = vmatpush2.bf16.msra.mxu0 0
      %4201 = vmatprep.subr.bf16.mxu0 0
      %4202 = vmatpush2.bf16.msra.mxu0 0
      %4203 = vmatprep.subr.bf16.mxu0 0
      %4204 = vmatpush2.bf16.msra.mxu0 0
      %4205 = vmatprep.mubr.bf16.mxu0 0
      %4206 = vmatmul.mubr.bf16.gmra.mxu0 %v4084
      %v4207 = vpop.f32.mrf.mxu0
      %v4208 = vadd.f32 %v4123, %v4207
      %v4209 = vpop.f32.mrf.mxu0
      %v4210 = vpop.f32.mrf.mxu0
      %v4211 = vadd.f32 %v4123, %v4210
      %v4212 = vpop.f32.mrf.mxu0
      %4213 = vmatprep.mubr.bf16.mxu0 0
      %4214 = vmatmul.mubr.bf16.gmra.mxu0 %v4085
      %v4215 = vpop.f32.mrf.mxu0
      %v4216 = vadd.f32 %v4123, %v4215
      %v4217 = vpop.f32.mrf.mxu0
      %v4218 = vpop.f32.mrf.mxu0
      %v4219 = vadd.f32 %v4123, %v4218
      %v4220 = vpop.f32.mrf.mxu0
      %4221 = vmatprep.mubr.bf16.mxu0 0
      %4222 = vmatmul.mubr.bf16.gmra.mxu0 %v4086
      %v4223 = vpop.f32.mrf.mxu0
      %v4224 = vadd.f32 %v4123, %v4223
      %v4225 = vpop.f32.mrf.mxu0
      %v4226 = vpop.f32.mrf.mxu0
      %v4227 = vadd.f32 %v4123, %v4226
      %v4228 = vpop.f32.mrf.mxu0
      %4229 = vmatprep.mubr.bf16.mxu0 0
      %4230 = vmatmul.mubr.bf16.gmra.mxu0 %v4087
      %v4231 = vpop.f32.mrf.mxu0
      %v4232 = vadd.f32 %v4123, %v4231
      %v4233 = vpop.f32.mrf.mxu0
      %v4234 = vpop.f32.mrf.mxu0
      %v4235 = vadd.f32 %v4123, %v4234
      %v4236 = vpop.f32.mrf.mxu0
      %4237 = vmatprep.mubr.bf16.mxu0 0
      %4238 = vmatmul.mubr.bf16.gmra.mxu0 %v4088
      %v4239 = vpop.f32.mrf.mxu0
      %v4240 = vadd.f32 %v4123, %v4239
      %v4241 = vpop.f32.mrf.mxu0
      %v4242 = vpop.f32.mrf.mxu0
      %v4243 = vadd.f32 %v4123, %v4242
      %v4244 = vpop.f32.mrf.mxu0
      %4245 = vmatprep.mubr.bf16.mxu0 0
      %4246 = vmatmul.mubr.bf16.gmra.mxu0 %v4089
      %v4247 = vpop.f32.mrf.mxu0
      %v4248 = vadd.f32 %v4123, %v4247
      %v4249 = vpop.f32.mrf.mxu0
      %v4250 = vpop.f32.mrf.mxu0
      %v4251 = vadd.f32 %v4123, %v4250
      %v4252 = vpop.f32.mrf.mxu0
      %4253 = vmatprep.mubr.bf16.mxu0 0
      %4254 = vmatmul.mubr.bf16.gmra.mxu0 %v4090
      %v4255 = vpop.f32.mrf.mxu0
      %v4256 = vadd.f32 %v4123, %v4255
      %v4257 = vpop.f32.mrf.mxu0
      %v4258 = vpop.f32.mrf.mxu0
      %v4259 = vadd.f32 %v4123, %v4258
      %v4260 = vpop.f32.mrf.mxu0
      %4261 = vmatprep.mubr.bf16.mxu0 0
      %4262 = vmatmul.mubr.bf16.gmra.mxu0 %v4091
      %v4263 = vpop.f32.mrf.mxu0
      %v4264 = vadd.f32 %v4123, %v4263
      %v4265 = vpop.f32.mrf.mxu0
      %v4266 = vpop.f32.mrf.mxu0
      %v4267 = vadd.f32 %v4123, %v4266
      %v4268 = vpop.f32.mrf.mxu0
      %4269 = vmatprep.mubr.bf16.mxu0 0
      %4270 = vmatmul.mubr.bf16.gmra.mxu0 %v4092
      %v4271 = vpop.f32.mrf.mxu0
      %v4272 = vadd.f32 %v4123, %v4271
      %v4273 = vpop.f32.mrf.mxu0
      %v4274 = vpop.f32.mrf.mxu0
      %v4275 = vadd.f32 %v4123, %v4274
      %v4276 = vpop.f32.mrf.mxu0
      %4277 = vmatprep.mubr.bf16.mxu0 0
      %4278 = vmatmul.mubr.bf16.gmra.mxu0 %v4093
      %v4279 = vpop.f32.mrf.mxu0
      %v4280 = vadd.f32 %v4123, %v4279
      %v4281 = vpop.f32.mrf.mxu0
      %v4282 = vpop.f32.mrf.mxu0
      %v4283 = vadd.f32 %v4123, %v4282
      %v4284 = vpop.f32.mrf.mxu0
      %4285 = vmatprep.mubr.bf16.mxu0 0
      %4286 = vmatmul.mubr.bf16.gmra.mxu0 %v4094
      %v4287 = vpop.f32.mrf.mxu0
      %v4288 = vadd.f32 %v4123, %v4287
      %v4289 = vpop.f32.mrf.mxu0
      %v4290 = vpop.f32.mrf.mxu0
      %v4291 = vadd.f32 %v4123, %v4290
      %v4292 = vpop.f32.mrf.mxu0
      %4293 = vmatprep.mubr.bf16.mxu0 0
      %4294 = vmatmul.mubr.bf16.gmra.mxu0 %v4095
      %v4295 = vpop.f32.mrf.mxu0
      %v4296 = vadd.f32 %v4123, %v4295
      %v4297 = vpop.f32.mrf.mxu0
      %v4298 = vpop.f32.mrf.mxu0
      %v4299 = vadd.f32 %v4123, %v4298
      %v4300 = vpop.f32.mrf.mxu0
      %4301 = vmatprep.mubr.bf16.mxu0 0
      %4302 = vmatmul.mubr.bf16.gmra.mxu0 %v4096
      %v4303 = vpop.f32.mrf.mxu0
      %v4304 = vadd.f32 %v4123, %v4303
      %v4305 = vpop.f32.mrf.mxu0
      %v4306 = vpop.f32.mrf.mxu0
      %v4307 = vadd.f32 %v4123, %v4306
      %v4308 = vpop.f32.mrf.mxu0
      %4309 = vmatprep.mubr.bf16.mxu0 0
      %4310 = vmatmul.mubr.bf16.gmra.mxu0 %v4097
      %v4311 = vpop.f32.mrf.mxu0
      %v4312 = vadd.f32 %v4123, %v4311
      %v4313 = vpop.f32.mrf.mxu0
      %v4314 = vpop.f32.mrf.mxu0
      %v4315 = vadd.f32 %v4123, %v4314
      %v4316 = vpop.f32.mrf.mxu0
      %4317 = vmatprep.mubr.bf16.mxu0 0
      %4318 = vmatmul.mubr.bf16.gmra.mxu0 %v4098
      %v4319 = vpop.f32.mrf.mxu0
      %v4320 = vadd.f32 %v4123, %v4319
      %v4321 = vpop.f32.mrf.mxu0
      %v4322 = vpop.f32.mrf.mxu0
      %v4323 = vadd.f32 %v4123, %v4322
      %v4324 = vpop.f32.mrf.mxu0
      %4325 = vmatprep.mubr.bf16.mxu0 0
      %4326 = vmatmul.mubr.bf16.gmra.mxu0 %v4099
      %v4327 = vpop.f32.mrf.mxu0
      %v4328 = vadd.f32 %v4123, %v4327
      %v4329 = vpop.f32.mrf.mxu0
      %v4330 = vpop.f32.mrf.mxu0
      %v4331 = vadd.f32 %v4123, %v4330
      %v4332 = vpop.f32.mrf.mxu0
      %4333 = vdwg.mxu0
      %v4334 = vmax.f32 %v4208, 0.0
      %v4335 = vmax.f32 %v4211, 0.0
      %v4336 = vmax.f32 %v4216, 0.0
      %v4337 = vmax.f32 %v4219, 0.0
      %v4338 = vmax.f32 %v4224, 0.0
      %v4339 = vmax.f32 %v4227, 0.0
      %v4340 = vmax.f32 %v4232, 0.0
      %v4341 = vmax.f32 %v4235, 0.0
      %v4342 = vmax.f32 %v4240, 0.0
      %v4343 = vmax.f32 %v4243, 0.0
      %v4344 = vmax.f32 %v4248, 0.0
      %v4345 = vmax.f32 %v4251, 0.0
      %v4346 = vmax.f32 %v4256, 0.0
      %v4347 = vmax.f32 %v4259, 0.0
      %v4348 = vmax.f32 %v4264, 0.0
      %v4349 = vmax.f32 %v4267, 0.0
      %v4350 = vmax.f32 %v4272, 0.0
      %v4351 = vmax.f32 %v4275, 0.0
      %v4352 = vmax.f32 %v4280, 0.0
      %v4353 = vmax.f32 %v4283, 0.0
      %v4354 = vmax.f32 %v4288, 0.0
      %v4355 = vmax.f32 %v4291, 0.0
      %v4356 = vmax.f32 %v4296, 0.0
      %v4357 = vmax.f32 %v4299, 0.0
      %v4358 = vmax.f32 %v4304, 0.0
      %v4359 = vmax.f32 %v4307, 0.0
      %v4360 = vmax.f32 %v4312, 0.0
      %v4361 = vmax.f32 %v4315, 0.0
      %v4362 = vmax.f32 %v4320, 0.0
      %v4363 = vmax.f32 %v4323, 0.0
      %v4364 = vmax.f32 %v4328, 0.0
      %v4365 = vmax.f32 %v4331, 0.0
      %v4366 = vpack.c.bf16 %v4335, %v4334
      %v4367 = vpack.c.bf16 %v4337, %v4336
      %v4368 = vpack.c.bf16 %v4339, %v4338
      %v4369 = vpack.c.bf16 %v4341, %v4340
      %v4370 = vpack.c.bf16 %v4343, %v4342
      %v4371 = vpack.c.bf16 %v4345, %v4344
      %v4372 = vpack.c.bf16 %v4347, %v4346
      %v4373 = vpack.c.bf16 %v4349, %v4348
      %v4374 = vpack.c.bf16 %v4351, %v4350
      %v4375 = vpack.c.bf16 %v4353, %v4352
      %v4376 = vpack.c.bf16 %v4355, %v4354
      %v4377 = vpack.c.bf16 %v4357, %v4356
      %v4378 = vpack.c.bf16 %v4359, %v4358
      %v4379 = vpack.c.bf16 %v4361, %v4360
      %v4380 = vpack.c.bf16 %v4363, %v4362
      %v4381 = vpack.c.bf16 %v4365, %v4364
      %s4382 = scalar_lea.vmem %s3, 448
      %v4383 = vld [vmem:[%s4382] sm:$0xf]
      %v4384 = vld [vmem:[%s4382 + $0x4] sm:$0xf]
      %v4385 = vld [vmem:[%s4382 + $0x8] sm:$0xf]
      %v4386 = vld [vmem:[%s4382 + $0xc] sm:$0xf]
      %v4387 = vld [vmem:[%s4382 + $0x10] sm:$0xf]
      %v4388 = vld [vmem:[%s4382 + $0x14] sm:$0xf]
      %v4389 = vld [vmem:[%s4382 + $0x18] sm:$0xf]
      %v4390 = vld [vmem:[%s4382 + $0x1c] sm:$0xf]
      %v4391 = vld [vmem:[%s4382 + $0x20] sm:$0xf]
      %v4392 = vld [vmem:[%s4382 + $0x24] sm:$0xf]
      %v4393 = vld [vmem:[%s4382 + $0x28] sm:$0xf]
      %v4394 = vld [vmem:[%s4382 + $0x2c] sm:$0xf]
      %v4395 = vld [vmem:[%s4382 + $0x30] sm:$0xf]
      %v4396 = vld [vmem:[%s4382 + $0x34] sm:$0xf]
      %v4397 = vld [vmem:[%s4382 + $0x38] sm:$0xf]
      %v4398 = vld [vmem:[%s4382 + $0x3c] sm:$0xf]
      %s4399 = scalar_lea.vmem %s5, 8
      %v4400 = vld [vmem:[%s4399] sm:$0x1]
      %v4402 = vlaneseq
      %v4403 = vshrl.u32 %v4402, 7
      %v4404 = vsub.s32 0, %v4403
      %v4405 = vrot.slane %v4400, %v4404
      %v4423 = vunpack.c.l.b16 %v4383
      %v4424 = vunpack.c.l.b16 %v4384
      %v4425 = vunpack.c.l.b16 %v4385
      %v4426 = vunpack.c.l.b16 %v4386
      %v4427 = vunpack.c.l.b16 %v4387
      %v4428 = vunpack.c.l.b16 %v4388
      %v4429 = vunpack.c.l.b16 %v4389
      %v4430 = vunpack.c.l.b16 %v4390
      %v4431 = vunpack.c.l.b16 %v4391
      %v4432 = vunpack.c.l.b16 %v4392
      %v4433 = vunpack.c.l.b16 %v4393
      %v4434 = vunpack.c.l.b16 %v4394
      %v4435 = vunpack.c.l.b16 %v4395
      %v4436 = vunpack.c.l.b16 %v4396
      %v4437 = vunpack.c.l.b16 %v4397
      %v4438 = vunpack.c.l.b16 %v4398
      %v4439 = vpack.c.b16 %v4424, %v4423
      %v4440 = vpack.c.b16 %v4426, %v4425
      %v4441 = vpack.c.b16 %v4428, %v4427
      %v4442 = vpack.c.b16 %v4430, %v4429
      %v4443 = vpack.c.b16 %v4432, %v4431
      %v4444 = vpack.c.b16 %v4434, %v4433
      %v4445 = vpack.c.b16 %v4436, %v4435
      %v4446 = vpack.c.b16 %v4438, %v4437
      %4455 = vmatprep.subr.bf16.mxu0 0
      %4456 = vmatpush1.bf16.msra.mxu0 %v4446
      %4457 = vmatprep.subr.bf16.mxu0 0
      %4458 = vmatpush1.bf16.msra.mxu0 %v4445
      %4459 = vmatprep.subr.bf16.mxu0 0
      %4460 = vmatpush1.bf16.msra.mxu0 %v4444
      %4461 = vmatprep.subr.bf16.mxu0 0
      %4462 = vmatpush1.bf16.msra.mxu0 %v4443
      %4463 = vmatprep.subr.bf16.mxu0 0
      %4464 = vmatpush1.bf16.msra.mxu0 %v4442
      %4465 = vmatprep.subr.bf16.mxu0 0
      %4466 = vmatpush1.bf16.msra.mxu0 %v4441
      %4467 = vmatprep.subr.bf16.mxu0 0
      %4468 = vmatpush1.bf16.msra.mxu0 %v4440
      %4469 = vmatprep.subr.bf16.mxu0 0
      %4470 = vmatpush1.bf16.msra.mxu0 %v4439
      %4471 = vmatprep.subr.bf16.mxu0 0
      %4472 = vmatpush2.bf16.msra.mxu0 0
      %4473 = vmatprep.subr.bf16.mxu0 0
      %4474 = vmatpush2.bf16.msra.mxu0 0
      %4475 = vmatprep.subr.bf16.mxu0 0
      %4476 = vmatpush2.bf16.msra.mxu0 0
      %4477 = vmatprep.subr.bf16.mxu0 0
      %4478 = vmatpush2.bf16.msra.mxu0 0
      %4479 = vmatprep.subr.bf16.mxu0 0
      %4480 = vmatpush2.bf16.msra.mxu0 0
      %4481 = vmatprep.subr.bf16.mxu0 0
      %4482 = vmatpush2.bf16.msra.mxu0 0
      %4483 = vmatprep.subr.bf16.mxu0 0
      %4484 = vmatpush2.bf16.msra.mxu0 0
      %4485 = vmatprep.subr.bf16.mxu0 0
      %4486 = vmatpush2.bf16.msra.mxu0 0
      %4487 = vmatprep.mubr.bf16.mxu0 0
      %4488 = vmatmul.mubr.bf16.gmra.mxu0 %v4366
      %v4489 = vpop.f32.mrf.mxu0
      %v4490 = vadd.f32 %v4405, %v4489
      %v4491 = vpop.f32.mrf.mxu0
      %v4492 = vpop.f32.mrf.mxu0
      %v4493 = vadd.f32 %v4405, %v4492
      %v4494 = vpop.f32.mrf.mxu0
      %4495 = vmatprep.mubr.bf16.mxu0 0
      %4496 = vmatmul.mubr.bf16.gmra.mxu0 %v4367
      %v4497 = vpop.f32.mrf.mxu0
      %v4498 = vadd.f32 %v4405, %v4497
      %v4499 = vpop.f32.mrf.mxu0
      %v4500 = vpop.f32.mrf.mxu0
      %v4501 = vadd.f32 %v4405, %v4500
      %v4502 = vpop.f32.mrf.mxu0
      %4503 = vmatprep.mubr.bf16.mxu0 0
      %4504 = vmatmul.mubr.bf16.gmra.mxu0 %v4368
      %v4505 = vpop.f32.mrf.mxu0
      %v4506 = vadd.f32 %v4405, %v4505
      %v4507 = vpop.f32.mrf.mxu0
      %v4508 = vpop.f32.mrf.mxu0
      %v4509 = vadd.f32 %v4405, %v4508
      %v4510 = vpop.f32.mrf.mxu0
      %4511 = vmatprep.mubr.bf16.mxu0 0
      %4512 = vmatmul.mubr.bf16.gmra.mxu0 %v4369
      %v4513 = vpop.f32.mrf.mxu0
      %v4514 = vadd.f32 %v4405, %v4513
      %v4515 = vpop.f32.mrf.mxu0
      %v4516 = vpop.f32.mrf.mxu0
      %v4517 = vadd.f32 %v4405, %v4516
      %v4518 = vpop.f32.mrf.mxu0
      %4519 = vmatprep.mubr.bf16.mxu0 0
      %4520 = vmatmul.mubr.bf16.gmra.mxu0 %v4370
      %v4521 = vpop.f32.mrf.mxu0
      %v4522 = vadd.f32 %v4405, %v4521
      %v4523 = vpop.f32.mrf.mxu0
      %v4524 = vpop.f32.mrf.mxu0
      %v4525 = vadd.f32 %v4405, %v4524
      %v4526 = vpop.f32.mrf.mxu0
      %4527 = vmatprep.mubr.bf16.mxu0 0
      %4528 = vmatmul.mubr.bf16.gmra.mxu0 %v4371
      %v4529 = vpop.f32.mrf.mxu0
      %v4530 = vadd.f32 %v4405, %v4529
      %v4531 = vpop.f32.mrf.mxu0
      %v4532 = vpop.f32.mrf.mxu0
      %v4533 = vadd.f32 %v4405, %v4532
      %v4534 = vpop.f32.mrf.mxu0
      %4535 = vmatprep.mubr.bf16.mxu0 0
      %4536 = vmatmul.mubr.bf16.gmra.mxu0 %v4372
      %v4537 = vpop.f32.mrf.mxu0
      %v4538 = vadd.f32 %v4405, %v4537
      %v4539 = vpop.f32.mrf.mxu0
      %v4540 = vpop.f32.mrf.mxu0
      %v4541 = vadd.f32 %v4405, %v4540
      %v4542 = vpop.f32.mrf.mxu0
      %4543 = vmatprep.mubr.bf16.mxu0 0
      %4544 = vmatmul.mubr.bf16.gmra.mxu0 %v4373
      %v4545 = vpop.f32.mrf.mxu0
      %v4546 = vadd.f32 %v4405, %v4545
      %v4547 = vpop.f32.mrf.mxu0
      %v4548 = vpop.f32.mrf.mxu0
      %v4549 = vadd.f32 %v4405, %v4548
      %v4550 = vpop.f32.mrf.mxu0
      %4551 = vmatprep.mubr.bf16.mxu0 0
      %4552 = vmatmul.mubr.bf16.gmra.mxu0 %v4374
      %v4553 = vpop.f32.mrf.mxu0
      %v4554 = vadd.f32 %v4405, %v4553
      %v4555 = vpop.f32.mrf.mxu0
      %v4556 = vpop.f32.mrf.mxu0
      %v4557 = vadd.f32 %v4405, %v4556
      %v4558 = vpop.f32.mrf.mxu0
      %4559 = vmatprep.mubr.bf16.mxu0 0
      %4560 = vmatmul.mubr.bf16.gmra.mxu0 %v4375
      %v4561 = vpop.f32.mrf.mxu0
      %v4562 = vadd.f32 %v4405, %v4561
      %v4563 = vpop.f32.mrf.mxu0
      %v4564 = vpop.f32.mrf.mxu0
      %v4565 = vadd.f32 %v4405, %v4564
      %v4566 = vpop.f32.mrf.mxu0
      %4567 = vmatprep.mubr.bf16.mxu0 0
      %4568 = vmatmul.mubr.bf16.gmra.mxu0 %v4376
      %v4569 = vpop.f32.mrf.mxu0
      %v4570 = vadd.f32 %v4405, %v4569
      %v4571 = vpop.f32.mrf.mxu0
      %v4572 = vpop.f32.mrf.mxu0
      %v4573 = vadd.f32 %v4405, %v4572
      %v4574 = vpop.f32.mrf.mxu0
      %4575 = vmatprep.mubr.bf16.mxu0 0
      %4576 = vmatmul.mubr.bf16.gmra.mxu0 %v4377
      %v4577 = vpop.f32.mrf.mxu0
      %v4578 = vadd.f32 %v4405, %v4577
      %v4579 = vpop.f32.mrf.mxu0
      %v4580 = vpop.f32.mrf.mxu0
      %v4581 = vadd.f32 %v4405, %v4580
      %v4582 = vpop.f32.mrf.mxu0
      %4583 = vmatprep.mubr.bf16.mxu0 0
      %4584 = vmatmul.mubr.bf16.gmra.mxu0 %v4378
      %v4585 = vpop.f32.mrf.mxu0
      %v4586 = vadd.f32 %v4405, %v4585
      %v4587 = vpop.f32.mrf.mxu0
      %v4588 = vpop.f32.mrf.mxu0
      %v4589 = vadd.f32 %v4405, %v4588
      %v4590 = vpop.f32.mrf.mxu0
      %4591 = vmatprep.mubr.bf16.mxu0 0
      %4592 = vmatmul.mubr.bf16.gmra.mxu0 %v4379
      %v4593 = vpop.f32.mrf.mxu0
      %v4594 = vadd.f32 %v4405, %v4593
      %v4595 = vpop.f32.mrf.mxu0
      %v4596 = vpop.f32.mrf.mxu0
      %v4597 = vadd.f32 %v4405, %v4596
      %v4598 = vpop.f32.mrf.mxu0
      %4599 = vmatprep.mubr.bf16.mxu0 0
      %4600 = vmatmul.mubr.bf16.gmra.mxu0 %v4380
      %v4601 = vpop.f32.mrf.mxu0
      %v4602 = vadd.f32 %v4405, %v4601
      %v4603 = vpop.f32.mrf.mxu0
      %v4604 = vpop.f32.mrf.mxu0
      %v4605 = vadd.f32 %v4405, %v4604
      %v4606 = vpop.f32.mrf.mxu0
      %4607 = vmatprep.mubr.bf16.mxu0 0
      %4608 = vmatmul.mubr.bf16.gmra.mxu0 %v4381
      %v4609 = vpop.f32.mrf.mxu0
      %v4610 = vadd.f32 %v4405, %v4609
      %v4611 = vpop.f32.mrf.mxu0
      %v4612 = vpop.f32.mrf.mxu0
      %v4613 = vadd.f32 %v4405, %v4612
      %v4614 = vpop.f32.mrf.mxu0
      %4615 = vdwg.mxu0
      %v4616 = vmax.f32 %v4490, 0.0
      %v4617 = vmax.f32 %v4493, 0.0
      %v4618 = vmax.f32 %v4498, 0.0
      %v4619 = vmax.f32 %v4501, 0.0
      %v4620 = vmax.f32 %v4506, 0.0
      %v4621 = vmax.f32 %v4509, 0.0
      %v4622 = vmax.f32 %v4514, 0.0
      %v4623 = vmax.f32 %v4517, 0.0
      %v4624 = vmax.f32 %v4522, 0.0
      %v4625 = vmax.f32 %v4525, 0.0
      %v4626 = vmax.f32 %v4530, 0.0
      %v4627 = vmax.f32 %v4533, 0.0
      %v4628 = vmax.f32 %v4538, 0.0
      %v4629 = vmax.f32 %v4541, 0.0
      %v4630 = vmax.f32 %v4546, 0.0
      %v4631 = vmax.f32 %v4549, 0.0
      %v4632 = vmax.f32 %v4554, 0.0
      %v4633 = vmax.f32 %v4557, 0.0
      %v4634 = vmax.f32 %v4562, 0.0
      %v4635 = vmax.f32 %v4565, 0.0
      %v4636 = vmax.f32 %v4570, 0.0
      %v4637 = vmax.f32 %v4573, 0.0
      %v4638 = vmax.f32 %v4578, 0.0
      %v4639 = vmax.f32 %v4581, 0.0
      %v4640 = vmax.f32 %v4586, 0.0
      %v4641 = vmax.f32 %v4589, 0.0
      %v4642 = vmax.f32 %v4594, 0.0
      %v4643 = vmax.f32 %v4597, 0.0
      %v4644 = vmax.f32 %v4602, 0.0
      %v4645 = vmax.f32 %v4605, 0.0
      %v4646 = vmax.f32 %v4610, 0.0
      %v4647 = vmax.f32 %v4613, 0.0
      %v4648 = vpack.c.bf16 %v4617, %v4616
      %v4649 = vpack.c.bf16 %v4619, %v4618
      %v4650 = vpack.c.bf16 %v4621, %v4620
      %v4651 = vpack.c.bf16 %v4623, %v4622
      %v4652 = vpack.c.bf16 %v4625, %v4624
      %v4653 = vpack.c.bf16 %v4627, %v4626
      %v4654 = vpack.c.bf16 %v4629, %v4628
      %v4655 = vpack.c.bf16 %v4631, %v4630
      %v4656 = vpack.c.bf16 %v4633, %v4632
      %v4657 = vpack.c.bf16 %v4635, %v4634
      %v4658 = vpack.c.bf16 %v4637, %v4636
      %v4659 = vpack.c.bf16 %v4639, %v4638
      %v4660 = vpack.c.bf16 %v4641, %v4640
      %v4661 = vpack.c.bf16 %v4643, %v4642
      %v4662 = vpack.c.bf16 %v4645, %v4644
      %v4663 = vpack.c.bf16 %v4647, %v4646
      %s4664 = scalar_lea.vmem %s3, 512
      %v4665 = vld [vmem:[%s4664] sm:$0xf]
      %v4666 = vld [vmem:[%s4664 + $0x4] sm:$0xf]
      %v4667 = vld [vmem:[%s4664 + $0x8] sm:$0xf]
      %v4668 = vld [vmem:[%s4664 + $0xc] sm:$0xf]
      %v4669 = vld [vmem:[%s4664 + $0x10] sm:$0xf]
      %v4670 = vld [vmem:[%s4664 + $0x14] sm:$0xf]
      %v4671 = vld [vmem:[%s4664 + $0x18] sm:$0xf]
      %v4672 = vld [vmem:[%s4664 + $0x1c] sm:$0xf]
      %v4673 = vld [vmem:[%s4664 + $0x20] sm:$0xf]
      %v4674 = vld [vmem:[%s4664 + $0x24] sm:$0xf]
      %v4675 = vld [vmem:[%s4664 + $0x28] sm:$0xf]
      %v4676 = vld [vmem:[%s4664 + $0x2c] sm:$0xf]
      %v4677 = vld [vmem:[%s4664 + $0x30] sm:$0xf]
      %v4678 = vld [vmem:[%s4664 + $0x34] sm:$0xf]
      %v4679 = vld [vmem:[%s4664 + $0x38] sm:$0xf]
      %v4680 = vld [vmem:[%s4664 + $0x3c] sm:$0xf]
      %s4681 = scalar_lea.vmem %s5, 9
      %v4682 = vld [vmem:[%s4681] sm:$0x1]
      %v4684 = vlaneseq
      %v4685 = vshrl.u32 %v4684, 7
      %v4686 = vsub.s32 0, %v4685
      %v4687 = vrot.slane %v4682, %v4686
      %v4705 = vunpack.c.l.b16 %v4665
      %v4706 = vunpack.c.l.b16 %v4666
      %v4707 = vunpack.c.l.b16 %v4667
      %v4708 = vunpack.c.l.b16 %v4668
      %v4709 = vunpack.c.l.b16 %v4669
      %v4710 = vunpack.c.l.b16 %v4670
      %v4711 = vunpack.c.l.b16 %v4671
      %v4712 = vunpack.c.l.b16 %v4672
      %v4713 = vunpack.c.l.b16 %v4673
      %v4714 = vunpack.c.l.b16 %v4674
      %v4715 = vunpack.c.l.b16 %v4675
      %v4716 = vunpack.c.l.b16 %v4676
      %v4717 = vunpack.c.l.b16 %v4677
      %v4718 = vunpack.c.l.b16 %v4678
      %v4719 = vunpack.c.l.b16 %v4679
      %v4720 = vunpack.c.l.b16 %v4680
      %v4721 = vpack.c.b16 %v4706, %v4705
      %v4722 = vpack.c.b16 %v4708, %v4707
      %v4723 = vpack.c.b16 %v4710, %v4709
      %v4724 = vpack.c.b16 %v4712, %v4711
      %v4725 = vpack.c.b16 %v4714, %v4713
      %v4726 = vpack.c.b16 %v4716, %v4715
      %v4727 = vpack.c.b16 %v4718, %v4717
      %v4728 = vpack.c.b16 %v4720, %v4719
      %4737 = vmatprep.subr.bf16.mxu0 0
      %4738 = vmatpush1.bf16.msra.mxu0 %v4728
      %4739 = vmatprep.subr.bf16.mxu0 0
      %4740 = vmatpush1.bf16.msra.mxu0 %v4727
      %4741 = vmatprep.subr.bf16.mxu0 0
      %4742 = vmatpush1.bf16.msra.mxu0 %v4726
      %4743 = vmatprep.subr.bf16.mxu0 0
      %4744 = vmatpush1.bf16.msra.mxu0 %v4725
      %4745 = vmatprep.subr.bf16.mxu0 0
      %4746 = vmatpush1.bf16.msra.mxu0 %v4724
      %4747 = vmatprep.subr.bf16.mxu0 0
      %4748 = vmatpush1.bf16.msra.mxu0 %v4723
      %4749 = vmatprep.subr.bf16.mxu0 0
      %4750 = vmatpush1.bf16.msra.mxu0 %v4722
      %4751 = vmatprep.subr.bf16.mxu0 0
      %4752 = vmatpush1.bf16.msra.mxu0 %v4721
      %4753 = vmatprep.subr.bf16.mxu0 0
      %4754 = vmatpush2.bf16.msra.mxu0 0
      %4755 = vmatprep.subr.bf16.mxu0 0
      %4756 = vmatpush2.bf16.msra.mxu0 0
      %4757 = vmatprep.subr.bf16.mxu0 0
      %4758 = vmatpush2.bf16.msra.mxu0 0
      %4759 = vmatprep.subr.bf16.mxu0 0
      %4760 = vmatpush2.bf16.msra.mxu0 0
      %4761 = vmatprep.subr.bf16.mxu0 0
      %4762 = vmatpush2.bf16.msra.mxu0 0
      %4763 = vmatprep.subr.bf16.mxu0 0
      %4764 = vmatpush2.bf16.msra.mxu0 0
      %4765 = vmatprep.subr.bf16.mxu0 0
      %4766 = vmatpush2.bf16.msra.mxu0 0
      %4767 = vmatprep.subr.bf16.mxu0 0
      %4768 = vmatpush2.bf16.msra.mxu0 0
      %4769 = vmatprep.mubr.bf16.mxu0 0
      %4770 = vmatmul.mubr.bf16.gmra.mxu0 %v4648
      %v4771 = vpop.f32.mrf.mxu0
      %v4772 = vadd.f32 %v4687, %v4771
      %v4773 = vpop.f32.mrf.mxu0
      %v4774 = vpop.f32.mrf.mxu0
      %v4775 = vadd.f32 %v4687, %v4774
      %v4776 = vpop.f32.mrf.mxu0
      %4777 = vmatprep.mubr.bf16.mxu0 0
      %4778 = vmatmul.mubr.bf16.gmra.mxu0 %v4649
      %v4779 = vpop.f32.mrf.mxu0
      %v4780 = vadd.f32 %v4687, %v4779
      %v4781 = vpop.f32.mrf.mxu0
      %v4782 = vpop.f32.mrf.mxu0
      %v4783 = vadd.f32 %v4687, %v4782
      %v4784 = vpop.f32.mrf.mxu0
      %4785 = vmatprep.mubr.bf16.mxu0 0
      %4786 = vmatmul.mubr.bf16.gmra.mxu0 %v4650
      %v4787 = vpop.f32.mrf.mxu0
      %v4788 = vadd.f32 %v4687, %v4787
      %v4789 = vpop.f32.mrf.mxu0
      %v4790 = vpop.f32.mrf.mxu0
      %v4791 = vadd.f32 %v4687, %v4790
      %v4792 = vpop.f32.mrf.mxu0
      %4793 = vmatprep.mubr.bf16.mxu0 0
      %4794 = vmatmul.mubr.bf16.gmra.mxu0 %v4651
      %v4795 = vpop.f32.mrf.mxu0
      %v4796 = vadd.f32 %v4687, %v4795
      %v4797 = vpop.f32.mrf.mxu0
      %v4798 = vpop.f32.mrf.mxu0
      %v4799 = vadd.f32 %v4687, %v4798
      %v4800 = vpop.f32.mrf.mxu0
      %4801 = vmatprep.mubr.bf16.mxu0 0
      %4802 = vmatmul.mubr.bf16.gmra.mxu0 %v4652
      %v4803 = vpop.f32.mrf.mxu0
      %v4804 = vadd.f32 %v4687, %v4803
      %v4805 = vpop.f32.mrf.mxu0
      %v4806 = vpop.f32.mrf.mxu0
      %v4807 = vadd.f32 %v4687, %v4806
      %v4808 = vpop.f32.mrf.mxu0
      %4809 = vmatprep.mubr.bf16.mxu0 0
      %4810 = vmatmul.mubr.bf16.gmra.mxu0 %v4653
      %v4811 = vpop.f32.mrf.mxu0
      %v4812 = vadd.f32 %v4687, %v4811
      %v4813 = vpop.f32.mrf.mxu0
      %v4814 = vpop.f32.mrf.mxu0
      %v4815 = vadd.f32 %v4687, %v4814
      %v4816 = vpop.f32.mrf.mxu0
      %4817 = vmatprep.mubr.bf16.mxu0 0
      %4818 = vmatmul.mubr.bf16.gmra.mxu0 %v4654
      %v4819 = vpop.f32.mrf.mxu0
      %v4820 = vadd.f32 %v4687, %v4819
      %v4821 = vpop.f32.mrf.mxu0
      %v4822 = vpop.f32.mrf.mxu0
      %v4823 = vadd.f32 %v4687, %v4822
      %v4824 = vpop.f32.mrf.mxu0
      %4825 = vmatprep.mubr.bf16.mxu0 0
      %4826 = vmatmul.mubr.bf16.gmra.mxu0 %v4655
      %v4827 = vpop.f32.mrf.mxu0
      %v4828 = vadd.f32 %v4687, %v4827
      %v4829 = vpop.f32.mrf.mxu0
      %v4830 = vpop.f32.mrf.mxu0
      %v4831 = vadd.f32 %v4687, %v4830
      %v4832 = vpop.f32.mrf.mxu0
      %4833 = vmatprep.mubr.bf16.mxu0 0
      %4834 = vmatmul.mubr.bf16.gmra.mxu0 %v4656
      %v4835 = vpop.f32.mrf.mxu0
      %v4836 = vadd.f32 %v4687, %v4835
      %v4837 = vpop.f32.mrf.mxu0
      %v4838 = vpop.f32.mrf.mxu0
      %v4839 = vadd.f32 %v4687, %v4838
      %v4840 = vpop.f32.mrf.mxu0
      %4841 = vmatprep.mubr.bf16.mxu0 0
      %4842 = vmatmul.mubr.bf16.gmra.mxu0 %v4657
      %v4843 = vpop.f32.mrf.mxu0
      %v4844 = vadd.f32 %v4687, %v4843
      %v4845 = vpop.f32.mrf.mxu0
      %v4846 = vpop.f32.mrf.mxu0
      %v4847 = vadd.f32 %v4687, %v4846
      %v4848 = vpop.f32.mrf.mxu0
      %4849 = vmatprep.mubr.bf16.mxu0 0
      %4850 = vmatmul.mubr.bf16.gmra.mxu0 %v4658
      %v4851 = vpop.f32.mrf.mxu0
      %v4852 = vadd.f32 %v4687, %v4851
      %v4853 = vpop.f32.mrf.mxu0
      %v4854 = vpop.f32.mrf.mxu0
      %v4855 = vadd.f32 %v4687, %v4854
      %v4856 = vpop.f32.mrf.mxu0
      %4857 = vmatprep.mubr.bf16.mxu0 0
      %4858 = vmatmul.mubr.bf16.gmra.mxu0 %v4659
      %v4859 = vpop.f32.mrf.mxu0
      %v4860 = vadd.f32 %v4687, %v4859
      %v4861 = vpop.f32.mrf.mxu0
      %v4862 = vpop.f32.mrf.mxu0
      %v4863 = vadd.f32 %v4687, %v4862
      %v4864 = vpop.f32.mrf.mxu0
      %4865 = vmatprep.mubr.bf16.mxu0 0
      %4866 = vmatmul.mubr.bf16.gmra.mxu0 %v4660
      %v4867 = vpop.f32.mrf.mxu0
      %v4868 = vadd.f32 %v4687, %v4867
      %v4869 = vpop.f32.mrf.mxu0
      %v4870 = vpop.f32.mrf.mxu0
      %v4871 = vadd.f32 %v4687, %v4870
      %v4872 = vpop.f32.mrf.mxu0
      %4873 = vmatprep.mubr.bf16.mxu0 0
      %4874 = vmatmul.mubr.bf16.gmra.mxu0 %v4661
      %v4875 = vpop.f32.mrf.mxu0
      %v4876 = vadd.f32 %v4687, %v4875
      %v4877 = vpop.f32.mrf.mxu0
      %v4878 = vpop.f32.mrf.mxu0
      %v4879 = vadd.f32 %v4687, %v4878
      %v4880 = vpop.f32.mrf.mxu0
      %4881 = vmatprep.mubr.bf16.mxu0 0
      %4882 = vmatmul.mubr.bf16.gmra.mxu0 %v4662
      %v4883 = vpop.f32.mrf.mxu0
      %v4884 = vadd.f32 %v4687, %v4883
      %v4885 = vpop.f32.mrf.mxu0
      %v4886 = vpop.f32.mrf.mxu0
      %v4887 = vadd.f32 %v4687, %v4886
      %v4888 = vpop.f32.mrf.mxu0
      %4889 = vmatprep.mubr.bf16.mxu0 0
      %4890 = vmatmul.mubr.bf16.gmra.mxu0 %v4663
      %v4891 = vpop.f32.mrf.mxu0
      %v4892 = vadd.f32 %v4687, %v4891
      %v4893 = vpop.f32.mrf.mxu0
      %v4894 = vpop.f32.mrf.mxu0
      %v4895 = vadd.f32 %v4687, %v4894
      %v4896 = vpop.f32.mrf.mxu0
      %4897 = vdwg.mxu0
      %v4898 = vmax.f32 %v4772, 0.0
      %v4899 = vmax.f32 %v4775, 0.0
      %v4900 = vmax.f32 %v4780, 0.0
      %v4901 = vmax.f32 %v4783, 0.0
      %v4902 = vmax.f32 %v4788, 0.0
      %v4903 = vmax.f32 %v4791, 0.0
      %v4904 = vmax.f32 %v4796, 0.0
      %v4905 = vmax.f32 %v4799, 0.0
      %v4906 = vmax.f32 %v4804, 0.0
      %v4907 = vmax.f32 %v4807, 0.0
      %v4908 = vmax.f32 %v4812, 0.0
      %v4909 = vmax.f32 %v4815, 0.0
      %v4910 = vmax.f32 %v4820, 0.0
      %v4911 = vmax.f32 %v4823, 0.0
      %v4912 = vmax.f32 %v4828, 0.0
      %v4913 = vmax.f32 %v4831, 0.0
      %v4914 = vmax.f32 %v4836, 0.0
      %v4915 = vmax.f32 %v4839, 0.0
      %v4916 = vmax.f32 %v4844, 0.0
      %v4917 = vmax.f32 %v4847, 0.0
      %v4918 = vmax.f32 %v4852, 0.0
      %v4919 = vmax.f32 %v4855, 0.0
      %v4920 = vmax.f32 %v4860, 0.0
      %v4921 = vmax.f32 %v4863, 0.0
      %v4922 = vmax.f32 %v4868, 0.0
      %v4923 = vmax.f32 %v4871, 0.0
      %v4924 = vmax.f32 %v4876, 0.0
      %v4925 = vmax.f32 %v4879, 0.0
      %v4926 = vmax.f32 %v4884, 0.0
      %v4927 = vmax.f32 %v4887, 0.0
      %v4928 = vmax.f32 %v4892, 0.0
      %v4929 = vmax.f32 %v4895, 0.0
      %v4930 = vpack.c.bf16 %v4899, %v4898
      %v4931 = vpack.c.bf16 %v4901, %v4900
      %v4932 = vpack.c.bf16 %v4903, %v4902
      %v4933 = vpack.c.bf16 %v4905, %v4904
      %v4934 = vpack.c.bf16 %v4907, %v4906
      %v4935 = vpack.c.bf16 %v4909, %v4908
      %v4936 = vpack.c.bf16 %v4911, %v4910
      %v4937 = vpack.c.bf16 %v4913, %v4912
      %v4938 = vpack.c.bf16 %v4915, %v4914
      %v4939 = vpack.c.bf16 %v4917, %v4916
      %v4940 = vpack.c.bf16 %v4919, %v4918
      %v4941 = vpack.c.bf16 %v4921, %v4920
      %v4942 = vpack.c.bf16 %v4923, %v4922
      %v4943 = vpack.c.bf16 %v4925, %v4924
      %v4944 = vpack.c.bf16 %v4927, %v4926
      %v4945 = vpack.c.bf16 %v4929, %v4928
      %s4946 = scalar_lea.vmem %s3, 576
      %v4947 = vld [vmem:[%s4946] sm:$0xf]
      %v4948 = vld [vmem:[%s4946 + $0x4] sm:$0xf]
      %v4949 = vld [vmem:[%s4946 + $0x8] sm:$0xf]
      %v4950 = vld [vmem:[%s4946 + $0xc] sm:$0xf]
      %v4951 = vld [vmem:[%s4946 + $0x10] sm:$0xf]
      %v4952 = vld [vmem:[%s4946 + $0x14] sm:$0xf]
      %v4953 = vld [vmem:[%s4946 + $0x18] sm:$0xf]
      %v4954 = vld [vmem:[%s4946 + $0x1c] sm:$0xf]
      %v4955 = vld [vmem:[%s4946 + $0x20] sm:$0xf]
      %v4956 = vld [vmem:[%s4946 + $0x24] sm:$0xf]
      %v4957 = vld [vmem:[%s4946 + $0x28] sm:$0xf]
      %v4958 = vld [vmem:[%s4946 + $0x2c] sm:$0xf]
      %v4959 = vld [vmem:[%s4946 + $0x30] sm:$0xf]
      %v4960 = vld [vmem:[%s4946 + $0x34] sm:$0xf]
      %v4961 = vld [vmem:[%s4946 + $0x38] sm:$0xf]
      %v4962 = vld [vmem:[%s4946 + $0x3c] sm:$0xf]
      %s4963 = scalar_lea.vmem %s5, 10
      %v4964 = vld [vmem:[%s4963] sm:$0x1]
      %v4966 = vlaneseq
      %v4967 = vshrl.u32 %v4966, 7
      %v4968 = vsub.s32 0, %v4967
      %v4969 = vrot.slane %v4964, %v4968
      %v4987 = vunpack.c.l.b16 %v4947
      %v4988 = vunpack.c.l.b16 %v4948
      %v4989 = vunpack.c.l.b16 %v4949
      %v4990 = vunpack.c.l.b16 %v4950
      %v4991 = vunpack.c.l.b16 %v4951
      %v4992 = vunpack.c.l.b16 %v4952
      %v4993 = vunpack.c.l.b16 %v4953
      %v4994 = vunpack.c.l.b16 %v4954
      %v4995 = vunpack.c.l.b16 %v4955
      %v4996 = vunpack.c.l.b16 %v4956
      %v4997 = vunpack.c.l.b16 %v4957
      %v4998 = vunpack.c.l.b16 %v4958
      %v4999 = vunpack.c.l.b16 %v4959
      %v5000 = vunpack.c.l.b16 %v4960
      %v5001 = vunpack.c.l.b16 %v4961
      %v5002 = vunpack.c.l.b16 %v4962
      %v5003 = vpack.c.b16 %v4988, %v4987
      %v5004 = vpack.c.b16 %v4990, %v4989
      %v5005 = vpack.c.b16 %v4992, %v4991
      %v5006 = vpack.c.b16 %v4994, %v4993
      %v5007 = vpack.c.b16 %v4996, %v4995
      %v5008 = vpack.c.b16 %v4998, %v4997
      %v5009 = vpack.c.b16 %v5000, %v4999
      %v5010 = vpack.c.b16 %v5002, %v5001
      %5019 = vmatprep.subr.bf16.mxu0 0
      %5020 = vmatpush1.bf16.msra.mxu0 %v5010
      %5021 = vmatprep.subr.bf16.mxu0 0
      %5022 = vmatpush1.bf16.msra.mxu0 %v5009
      %5023 = vmatprep.subr.bf16.mxu0 0
      %5024 = vmatpush1.bf16.msra.mxu0 %v5008
      %5025 = vmatprep.subr.bf16.mxu0 0
      %5026 = vmatpush1.bf16.msra.mxu0 %v5007
      %5027 = vmatprep.subr.bf16.mxu0 0
      %5028 = vmatpush1.bf16.msra.mxu0 %v5006
      %5029 = vmatprep.subr.bf16.mxu0 0
      %5030 = vmatpush1.bf16.msra.mxu0 %v5005
      %5031 = vmatprep.subr.bf16.mxu0 0
      %5032 = vmatpush1.bf16.msra.mxu0 %v5004
      %5033 = vmatprep.subr.bf16.mxu0 0
      %5034 = vmatpush1.bf16.msra.mxu0 %v5003
      %5035 = vmatprep.subr.bf16.mxu0 0
      %5036 = vmatpush2.bf16.msra.mxu0 0
      %5037 = vmatprep.subr.bf16.mxu0 0
      %5038 = vmatpush2.bf16.msra.mxu0 0
      %5039 = vmatprep.subr.bf16.mxu0 0
      %5040 = vmatpush2.bf16.msra.mxu0 0
      %5041 = vmatprep.subr.bf16.mxu0 0
      %5042 = vmatpush2.bf16.msra.mxu0 0
      %5043 = vmatprep.subr.bf16.mxu0 0
      %5044 = vmatpush2.bf16.msra.mxu0 0
      %5045 = vmatprep.subr.bf16.mxu0 0
      %5046 = vmatpush2.bf16.msra.mxu0 0
      %5047 = vmatprep.subr.bf16.mxu0 0
      %5048 = vmatpush2.bf16.msra.mxu0 0
      %5049 = vmatprep.subr.bf16.mxu0 0
      %5050 = vmatpush2.bf16.msra.mxu0 0
      %5051 = vmatprep.mubr.bf16.mxu0 0
      %5052 = vmatmul.mubr.bf16.gmra.mxu0 %v4930
      %v5053 = vpop.f32.mrf.mxu0
      %v5054 = vadd.f32 %v4969, %v5053
      %v5055 = vpop.f32.mrf.mxu0
      %v5056 = vpop.f32.mrf.mxu0
      %v5057 = vadd.f32 %v4969, %v5056
      %v5058 = vpop.f32.mrf.mxu0
      %5059 = vmatprep.mubr.bf16.mxu0 0
      %5060 = vmatmul.mubr.bf16.gmra.mxu0 %v4931
      %v5061 = vpop.f32.mrf.mxu0
      %v5062 = vadd.f32 %v4969, %v5061
      %v5063 = vpop.f32.mrf.mxu0
      %v5064 = vpop.f32.mrf.mxu0
      %v5065 = vadd.f32 %v4969, %v5064
      %v5066 = vpop.f32.mrf.mxu0
      %5067 = vmatprep.mubr.bf16.mxu0 0
      %5068 = vmatmul.mubr.bf16.gmra.mxu0 %v4932
      %v5069 = vpop.f32.mrf.mxu0
      %v5070 = vadd.f32 %v4969, %v5069
      %v5071 = vpop.f32.mrf.mxu0
      %v5072 = vpop.f32.mrf.mxu0
      %v5073 = vadd.f32 %v4969, %v5072
      %v5074 = vpop.f32.mrf.mxu0
      %5075 = vmatprep.mubr.bf16.mxu0 0
      %5076 = vmatmul.mubr.bf16.gmra.mxu0 %v4933
      %v5077 = vpop.f32.mrf.mxu0
      %v5078 = vadd.f32 %v4969, %v5077
      %v5079 = vpop.f32.mrf.mxu0
      %v5080 = vpop.f32.mrf.mxu0
      %v5081 = vadd.f32 %v4969, %v5080
      %v5082 = vpop.f32.mrf.mxu0
      %5083 = vmatprep.mubr.bf16.mxu0 0
      %5084 = vmatmul.mubr.bf16.gmra.mxu0 %v4934
      %v5085 = vpop.f32.mrf.mxu0
      %v5086 = vadd.f32 %v4969, %v5085
      %v5087 = vpop.f32.mrf.mxu0
      %v5088 = vpop.f32.mrf.mxu0
      %v5089 = vadd.f32 %v4969, %v5088
      %v5090 = vpop.f32.mrf.mxu0
      %5091 = vmatprep.mubr.bf16.mxu0 0
      %5092 = vmatmul.mubr.bf16.gmra.mxu0 %v4935
      %v5093 = vpop.f32.mrf.mxu0
      %v5094 = vadd.f32 %v4969, %v5093
      %v5095 = vpop.f32.mrf.mxu0
      %v5096 = vpop.f32.mrf.mxu0
      %v5097 = vadd.f32 %v4969, %v5096
      %v5098 = vpop.f32.mrf.mxu0
      %5099 = vmatprep.mubr.bf16.mxu0 0
      %5100 = vmatmul.mubr.bf16.gmra.mxu0 %v4936
      %v5101 = vpop.f32.mrf.mxu0
      %v5102 = vadd.f32 %v4969, %v5101
      %v5103 = vpop.f32.mrf.mxu0
      %v5104 = vpop.f32.mrf.mxu0
      %v5105 = vadd.f32 %v4969, %v5104
      %v5106 = vpop.f32.mrf.mxu0
      %5107 = vmatprep.mubr.bf16.mxu0 0
      %5108 = vmatmul.mubr.bf16.gmra.mxu0 %v4937
      %v5109 = vpop.f32.mrf.mxu0
      %v5110 = vadd.f32 %v4969, %v5109
      %v5111 = vpop.f32.mrf.mxu0
      %v5112 = vpop.f32.mrf.mxu0
      %v5113 = vadd.f32 %v4969, %v5112
      %v5114 = vpop.f32.mrf.mxu0
      %5115 = vmatprep.mubr.bf16.mxu0 0
      %5116 = vmatmul.mubr.bf16.gmra.mxu0 %v4938
      %v5117 = vpop.f32.mrf.mxu0
      %v5118 = vadd.f32 %v4969, %v5117
      %v5119 = vpop.f32.mrf.mxu0
      %v5120 = vpop.f32.mrf.mxu0
      %v5121 = vadd.f32 %v4969, %v5120
      %v5122 = vpop.f32.mrf.mxu0
      %5123 = vmatprep.mubr.bf16.mxu0 0
      %5124 = vmatmul.mubr.bf16.gmra.mxu0 %v4939
      %v5125 = vpop.f32.mrf.mxu0
      %v5126 = vadd.f32 %v4969, %v5125
      %v5127 = vpop.f32.mrf.mxu0
      %v5128 = vpop.f32.mrf.mxu0
      %v5129 = vadd.f32 %v4969, %v5128
      %v5130 = vpop.f32.mrf.mxu0
      %5131 = vmatprep.mubr.bf16.mxu0 0
      %5132 = vmatmul.mubr.bf16.gmra.mxu0 %v4940
      %v5133 = vpop.f32.mrf.mxu0
      %v5134 = vadd.f32 %v4969, %v5133
      %v5135 = vpop.f32.mrf.mxu0
      %v5136 = vpop.f32.mrf.mxu0
      %v5137 = vadd.f32 %v4969, %v5136
      %v5138 = vpop.f32.mrf.mxu0
      %5139 = vmatprep.mubr.bf16.mxu0 0
      %5140 = vmatmul.mubr.bf16.gmra.mxu0 %v4941
      %v5141 = vpop.f32.mrf.mxu0
      %v5142 = vadd.f32 %v4969, %v5141
      %v5143 = vpop.f32.mrf.mxu0
      %v5144 = vpop.f32.mrf.mxu0
      %v5145 = vadd.f32 %v4969, %v5144
      %v5146 = vpop.f32.mrf.mxu0
      %5147 = vmatprep.mubr.bf16.mxu0 0
      %5148 = vmatmul.mubr.bf16.gmra.mxu0 %v4942
      %v5149 = vpop.f32.mrf.mxu0
      %v5150 = vadd.f32 %v4969, %v5149
      %v5151 = vpop.f32.mrf.mxu0
      %v5152 = vpop.f32.mrf.mxu0
      %v5153 = vadd.f32 %v4969, %v5152
      %v5154 = vpop.f32.mrf.mxu0
      %5155 = vmatprep.mubr.bf16.mxu0 0
      %5156 = vmatmul.mubr.bf16.gmra.mxu0 %v4943
      %v5157 = vpop.f32.mrf.mxu0
      %v5158 = vadd.f32 %v4969, %v5157
      %v5159 = vpop.f32.mrf.mxu0
      %v5160 = vpop.f32.mrf.mxu0
      %v5161 = vadd.f32 %v4969, %v5160
      %v5162 = vpop.f32.mrf.mxu0
      %5163 = vmatprep.mubr.bf16.mxu0 0
      %5164 = vmatmul.mubr.bf16.gmra.mxu0 %v4944
      %v5165 = vpop.f32.mrf.mxu0
      %v5166 = vadd.f32 %v4969, %v5165
      %v5167 = vpop.f32.mrf.mxu0
      %v5168 = vpop.f32.mrf.mxu0
      %v5169 = vadd.f32 %v4969, %v5168
      %v5170 = vpop.f32.mrf.mxu0
      %5171 = vmatprep.mubr.bf16.mxu0 0
      %5172 = vmatmul.mubr.bf16.gmra.mxu0 %v4945
      %v5173 = vpop.f32.mrf.mxu0
      %v5174 = vadd.f32 %v4969, %v5173
      %v5175 = vpop.f32.mrf.mxu0
      %v5176 = vpop.f32.mrf.mxu0
      %v5177 = vadd.f32 %v4969, %v5176
      %v5178 = vpop.f32.mrf.mxu0
      %5179 = vdwg.mxu0
      %v5180 = vmax.f32 %v5054, 0.0
      %v5181 = vmax.f32 %v5057, 0.0
      %v5182 = vmax.f32 %v5062, 0.0
      %v5183 = vmax.f32 %v5065, 0.0
      %v5184 = vmax.f32 %v5070, 0.0
      %v5185 = vmax.f32 %v5073, 0.0
      %v5186 = vmax.f32 %v5078, 0.0
      %v5187 = vmax.f32 %v5081, 0.0
      %v5188 = vmax.f32 %v5086, 0.0
      %v5189 = vmax.f32 %v5089, 0.0
      %v5190 = vmax.f32 %v5094, 0.0
      %v5191 = vmax.f32 %v5097, 0.0
      %v5192 = vmax.f32 %v5102, 0.0
      %v5193 = vmax.f32 %v5105, 0.0
      %v5194 = vmax.f32 %v5110, 0.0
      %v5195 = vmax.f32 %v5113, 0.0
      %v5196 = vmax.f32 %v5118, 0.0
      %v5197 = vmax.f32 %v5121, 0.0
      %v5198 = vmax.f32 %v5126, 0.0
      %v5199 = vmax.f32 %v5129, 0.0
      %v5200 = vmax.f32 %v5134, 0.0
      %v5201 = vmax.f32 %v5137, 0.0
      %v5202 = vmax.f32 %v5142, 0.0
      %v5203 = vmax.f32 %v5145, 0.0
      %v5204 = vmax.f32 %v5150, 0.0
      %v5205 = vmax.f32 %v5153, 0.0
      %v5206 = vmax.f32 %v5158, 0.0
      %v5207 = vmax.f32 %v5161, 0.0
      %v5208 = vmax.f32 %v5166, 0.0
      %v5209 = vmax.f32 %v5169, 0.0
      %v5210 = vmax.f32 %v5174, 0.0
      %v5211 = vmax.f32 %v5177, 0.0
      %v5212 = vpack.c.bf16 %v5181, %v5180
      %v5213 = vpack.c.bf16 %v5183, %v5182
      %v5214 = vpack.c.bf16 %v5185, %v5184
      %v5215 = vpack.c.bf16 %v5187, %v5186
      %v5216 = vpack.c.bf16 %v5189, %v5188
      %v5217 = vpack.c.bf16 %v5191, %v5190
      %v5218 = vpack.c.bf16 %v5193, %v5192
      %v5219 = vpack.c.bf16 %v5195, %v5194
      %v5220 = vpack.c.bf16 %v5197, %v5196
      %v5221 = vpack.c.bf16 %v5199, %v5198
      %v5222 = vpack.c.bf16 %v5201, %v5200
      %v5223 = vpack.c.bf16 %v5203, %v5202
      %v5224 = vpack.c.bf16 %v5205, %v5204
      %v5225 = vpack.c.bf16 %v5207, %v5206
      %v5226 = vpack.c.bf16 %v5209, %v5208
      %v5227 = vpack.c.bf16 %v5211, %v5210
      %s5228 = scalar_lea.vmem %s3, 640
      %v5229 = vld [vmem:[%s5228] sm:$0xf]
      %v5230 = vld [vmem:[%s5228 + $0x4] sm:$0xf]
      %v5231 = vld [vmem:[%s5228 + $0x8] sm:$0xf]
      %v5232 = vld [vmem:[%s5228 + $0xc] sm:$0xf]
      %v5233 = vld [vmem:[%s5228 + $0x10] sm:$0xf]
      %v5234 = vld [vmem:[%s5228 + $0x14] sm:$0xf]
      %v5235 = vld [vmem:[%s5228 + $0x18] sm:$0xf]
      %v5236 = vld [vmem:[%s5228 + $0x1c] sm:$0xf]
      %v5237 = vld [vmem:[%s5228 + $0x20] sm:$0xf]
      %v5238 = vld [vmem:[%s5228 + $0x24] sm:$0xf]
      %v5239 = vld [vmem:[%s5228 + $0x28] sm:$0xf]
      %v5240 = vld [vmem:[%s5228 + $0x2c] sm:$0xf]
      %v5241 = vld [vmem:[%s5228 + $0x30] sm:$0xf]
      %v5242 = vld [vmem:[%s5228 + $0x34] sm:$0xf]
      %v5243 = vld [vmem:[%s5228 + $0x38] sm:$0xf]
      %v5244 = vld [vmem:[%s5228 + $0x3c] sm:$0xf]
      %s5245 = scalar_lea.vmem %s5, 11
      %v5246 = vld [vmem:[%s5245] sm:$0x1]
      %v5248 = vlaneseq
      %v5249 = vshrl.u32 %v5248, 7
      %v5250 = vsub.s32 0, %v5249
      %v5251 = vrot.slane %v5246, %v5250
      %v5269 = vunpack.c.l.b16 %v5229
      %v5270 = vunpack.c.l.b16 %v5230
      %v5271 = vunpack.c.l.b16 %v5231
      %v5272 = vunpack.c.l.b16 %v5232
      %v5273 = vunpack.c.l.b16 %v5233
      %v5274 = vunpack.c.l.b16 %v5234
      %v5275 = vunpack.c.l.b16 %v5235
      %v5276 = vunpack.c.l.b16 %v5236
      %v5277 = vunpack.c.l.b16 %v5237
      %v5278 = vunpack.c.l.b16 %v5238
      %v5279 = vunpack.c.l.b16 %v5239
      %v5280 = vunpack.c.l.b16 %v5240
      %v5281 = vunpack.c.l.b16 %v5241
      %v5282 = vunpack.c.l.b16 %v5242
      %v5283 = vunpack.c.l.b16 %v5243
      %v5284 = vunpack.c.l.b16 %v5244
      %v5285 = vpack.c.b16 %v5270, %v5269
      %v5286 = vpack.c.b16 %v5272, %v5271
      %v5287 = vpack.c.b16 %v5274, %v5273
      %v5288 = vpack.c.b16 %v5276, %v5275
      %v5289 = vpack.c.b16 %v5278, %v5277
      %v5290 = vpack.c.b16 %v5280, %v5279
      %v5291 = vpack.c.b16 %v5282, %v5281
      %v5292 = vpack.c.b16 %v5284, %v5283
      %5301 = vmatprep.subr.bf16.mxu0 0
      %5302 = vmatpush1.bf16.msra.mxu0 %v5292
      %5303 = vmatprep.subr.bf16.mxu0 0
      %5304 = vmatpush1.bf16.msra.mxu0 %v5291
      %5305 = vmatprep.subr.bf16.mxu0 0
      %5306 = vmatpush1.bf16.msra.mxu0 %v5290
      %5307 = vmatprep.subr.bf16.mxu0 0
      %5308 = vmatpush1.bf16.msra.mxu0 %v5289
      %5309 = vmatprep.subr.bf16.mxu0 0
      %5310 = vmatpush1.bf16.msra.mxu0 %v5288
      %5311 = vmatprep.subr.bf16.mxu0 0
      %5312 = vmatpush1.bf16.msra.mxu0 %v5287
      %5313 = vmatprep.subr.bf16.mxu0 0
      %5314 = vmatpush1.bf16.msra.mxu0 %v5286
      %5315 = vmatprep.subr.bf16.mxu0 0
      %5316 = vmatpush1.bf16.msra.mxu0 %v5285
      %5317 = vmatprep.subr.bf16.mxu0 0
      %5318 = vmatpush2.bf16.msra.mxu0 0
      %5319 = vmatprep.subr.bf16.mxu0 0
      %5320 = vmatpush2.bf16.msra.mxu0 0
      %5321 = vmatprep.subr.bf16.mxu0 0
      %5322 = vmatpush2.bf16.msra.mxu0 0
      %5323 = vmatprep.subr.bf16.mxu0 0
      %5324 = vmatpush2.bf16.msra.mxu0 0
      %5325 = vmatprep.subr.bf16.mxu0 0
      %5326 = vmatpush2.bf16.msra.mxu0 0
      %5327 = vmatprep.subr.bf16.mxu0 0
      %5328 = vmatpush2.bf16.msra.mxu0 0
      %5329 = vmatprep.subr.bf16.mxu0 0
      %5330 = vmatpush2.bf16.msra.mxu0 0
      %5331 = vmatprep.subr.bf16.mxu0 0
      %5332 = vmatpush2.bf16.msra.mxu0 0
      %5333 = vmatprep.mubr.bf16.mxu0 0
      %5334 = vmatmul.mubr.bf16.gmra.mxu0 %v5212
      %v5335 = vpop.f32.mrf.mxu0
      %v5336 = vadd.f32 %v5251, %v5335
      %v5337 = vpop.f32.mrf.mxu0
      %v5338 = vpop.f32.mrf.mxu0
      %v5339 = vadd.f32 %v5251, %v5338
      %v5340 = vpop.f32.mrf.mxu0
      %5341 = vmatprep.mubr.bf16.mxu0 0
      %5342 = vmatmul.mubr.bf16.gmra.mxu0 %v5213
      %v5343 = vpop.f32.mrf.mxu0
      %v5344 = vadd.f32 %v5251, %v5343
      %v5345 = vpop.f32.mrf.mxu0
      %v5346 = vpop.f32.mrf.mxu0
      %v5347 = vadd.f32 %v5251, %v5346
      %v5348 = vpop.f32.mrf.mxu0
      %5349 = vmatprep.mubr.bf16.mxu0 0
      %5350 = vmatmul.mubr.bf16.gmra.mxu0 %v5214
      %v5351 = vpop.f32.mrf.mxu0
      %v5352 = vadd.f32 %v5251, %v5351
      %v5353 = vpop.f32.mrf.mxu0
      %v5354 = vpop.f32.mrf.mxu0
      %v5355 = vadd.f32 %v5251, %v5354
      %v5356 = vpop.f32.mrf.mxu0
      %5357 = vmatprep.mubr.bf16.mxu0 0
      %5358 = vmatmul.mubr.bf16.gmra.mxu0 %v5215
      %v5359 = vpop.f32.mrf.mxu0
      %v5360 = vadd.f32 %v5251, %v5359
      %v5361 = vpop.f32.mrf.mxu0
      %v5362 = vpop.f32.mrf.mxu0
      %v5363 = vadd.f32 %v5251, %v5362
      %v5364 = vpop.f32.mrf.mxu0
      %5365 = vmatprep.mubr.bf16.mxu0 0
      %5366 = vmatmul.mubr.bf16.gmra.mxu0 %v5216
      %v5367 = vpop.f32.mrf.mxu0
      %v5368 = vadd.f32 %v5251, %v5367
      %v5369 = vpop.f32.mrf.mxu0
      %v5370 = vpop.f32.mrf.mxu0
      %v5371 = vadd.f32 %v5251, %v5370
      %v5372 = vpop.f32.mrf.mxu0
      %5373 = vmatprep.mubr.bf16.mxu0 0
      %5374 = vmatmul.mubr.bf16.gmra.mxu0 %v5217
      %v5375 = vpop.f32.mrf.mxu0
      %v5376 = vadd.f32 %v5251, %v5375
      %v5377 = vpop.f32.mrf.mxu0
      %v5378 = vpop.f32.mrf.mxu0
      %v5379 = vadd.f32 %v5251, %v5378
      %v5380 = vpop.f32.mrf.mxu0
      %5381 = vmatprep.mubr.bf16.mxu0 0
      %5382 = vmatmul.mubr.bf16.gmra.mxu0 %v5218
      %v5383 = vpop.f32.mrf.mxu0
      %v5384 = vadd.f32 %v5251, %v5383
      %v5385 = vpop.f32.mrf.mxu0
      %v5386 = vpop.f32.mrf.mxu0
      %v5387 = vadd.f32 %v5251, %v5386
      %v5388 = vpop.f32.mrf.mxu0
      %5389 = vmatprep.mubr.bf16.mxu0 0
      %5390 = vmatmul.mubr.bf16.gmra.mxu0 %v5219
      %v5391 = vpop.f32.mrf.mxu0
      %v5392 = vadd.f32 %v5251, %v5391
      %v5393 = vpop.f32.mrf.mxu0
      %v5394 = vpop.f32.mrf.mxu0
      %v5395 = vadd.f32 %v5251, %v5394
      %v5396 = vpop.f32.mrf.mxu0
      %5397 = vmatprep.mubr.bf16.mxu0 0
      %5398 = vmatmul.mubr.bf16.gmra.mxu0 %v5220
      %v5399 = vpop.f32.mrf.mxu0
      %v5400 = vadd.f32 %v5251, %v5399
      %v5401 = vpop.f32.mrf.mxu0
      %v5402 = vpop.f32.mrf.mxu0
      %v5403 = vadd.f32 %v5251, %v5402
      %v5404 = vpop.f32.mrf.mxu0
      %5405 = vmatprep.mubr.bf16.mxu0 0
      %5406 = vmatmul.mubr.bf16.gmra.mxu0 %v5221
      %v5407 = vpop.f32.mrf.mxu0
      %v5408 = vadd.f32 %v5251, %v5407
      %v5409 = vpop.f32.mrf.mxu0
      %v5410 = vpop.f32.mrf.mxu0
      %v5411 = vadd.f32 %v5251, %v5410
      %v5412 = vpop.f32.mrf.mxu0
      %5413 = vmatprep.mubr.bf16.mxu0 0
      %5414 = vmatmul.mubr.bf16.gmra.mxu0 %v5222
      %v5415 = vpop.f32.mrf.mxu0
      %v5416 = vadd.f32 %v5251, %v5415
      %v5417 = vpop.f32.mrf.mxu0
      %v5418 = vpop.f32.mrf.mxu0
      %v5419 = vadd.f32 %v5251, %v5418
      %v5420 = vpop.f32.mrf.mxu0
      %5421 = vmatprep.mubr.bf16.mxu0 0
      %5422 = vmatmul.mubr.bf16.gmra.mxu0 %v5223
      %v5423 = vpop.f32.mrf.mxu0
      %v5424 = vadd.f32 %v5251, %v5423
      %v5425 = vpop.f32.mrf.mxu0
      %v5426 = vpop.f32.mrf.mxu0
      %v5427 = vadd.f32 %v5251, %v5426
      %v5428 = vpop.f32.mrf.mxu0
      %5429 = vmatprep.mubr.bf16.mxu0 0
      %5430 = vmatmul.mubr.bf16.gmra.mxu0 %v5224
      %v5431 = vpop.f32.mrf.mxu0
      %v5432 = vadd.f32 %v5251, %v5431
      %v5433 = vpop.f32.mrf.mxu0
      %v5434 = vpop.f32.mrf.mxu0
      %v5435 = vadd.f32 %v5251, %v5434
      %v5436 = vpop.f32.mrf.mxu0
      %5437 = vmatprep.mubr.bf16.mxu0 0
      %5438 = vmatmul.mubr.bf16.gmra.mxu0 %v5225
      %v5439 = vpop.f32.mrf.mxu0
      %v5440 = vadd.f32 %v5251, %v5439
      %v5441 = vpop.f32.mrf.mxu0
      %v5442 = vpop.f32.mrf.mxu0
      %v5443 = vadd.f32 %v5251, %v5442
      %v5444 = vpop.f32.mrf.mxu0
      %5445 = vmatprep.mubr.bf16.mxu0 0
      %5446 = vmatmul.mubr.bf16.gmra.mxu0 %v5226
      %v5447 = vpop.f32.mrf.mxu0
      %v5448 = vadd.f32 %v5251, %v5447
      %v5449 = vpop.f32.mrf.mxu0
      %v5450 = vpop.f32.mrf.mxu0
      %v5451 = vadd.f32 %v5251, %v5450
      %v5452 = vpop.f32.mrf.mxu0
      %5453 = vmatprep.mubr.bf16.mxu0 0
      %5454 = vmatmul.mubr.bf16.gmra.mxu0 %v5227
      %v5455 = vpop.f32.mrf.mxu0
      %v5456 = vadd.f32 %v5251, %v5455
      %v5457 = vpop.f32.mrf.mxu0
      %v5458 = vpop.f32.mrf.mxu0
      %v5459 = vadd.f32 %v5251, %v5458
      %v5460 = vpop.f32.mrf.mxu0
      %5461 = vdwg.mxu0
      %v5462 = vmax.f32 %v5336, 0.0
      %v5463 = vmax.f32 %v5339, 0.0
      %v5464 = vmax.f32 %v5344, 0.0
      %v5465 = vmax.f32 %v5347, 0.0
      %v5466 = vmax.f32 %v5352, 0.0
      %v5467 = vmax.f32 %v5355, 0.0
      %v5468 = vmax.f32 %v5360, 0.0
      %v5469 = vmax.f32 %v5363, 0.0
      %v5470 = vmax.f32 %v5368, 0.0
      %v5471 = vmax.f32 %v5371, 0.0
      %v5472 = vmax.f32 %v5376, 0.0
      %v5473 = vmax.f32 %v5379, 0.0
      %v5474 = vmax.f32 %v5384, 0.0
      %v5475 = vmax.f32 %v5387, 0.0
      %v5476 = vmax.f32 %v5392, 0.0
      %v5477 = vmax.f32 %v5395, 0.0
      %v5478 = vmax.f32 %v5400, 0.0
      %v5479 = vmax.f32 %v5403, 0.0
      %v5480 = vmax.f32 %v5408, 0.0
      %v5481 = vmax.f32 %v5411, 0.0
      %v5482 = vmax.f32 %v5416, 0.0
      %v5483 = vmax.f32 %v5419, 0.0
      %v5484 = vmax.f32 %v5424, 0.0
      %v5485 = vmax.f32 %v5427, 0.0
      %v5486 = vmax.f32 %v5432, 0.0
      %v5487 = vmax.f32 %v5435, 0.0
      %v5488 = vmax.f32 %v5440, 0.0
      %v5489 = vmax.f32 %v5443, 0.0
      %v5490 = vmax.f32 %v5448, 0.0
      %v5491 = vmax.f32 %v5451, 0.0
      %v5492 = vmax.f32 %v5456, 0.0
      %v5493 = vmax.f32 %v5459, 0.0
      %v5494 = vpack.c.bf16 %v5463, %v5462
      %v5495 = vpack.c.bf16 %v5465, %v5464
      %v5496 = vpack.c.bf16 %v5467, %v5466
      %v5497 = vpack.c.bf16 %v5469, %v5468
      %v5498 = vpack.c.bf16 %v5471, %v5470
      %v5499 = vpack.c.bf16 %v5473, %v5472
      %v5500 = vpack.c.bf16 %v5475, %v5474
      %v5501 = vpack.c.bf16 %v5477, %v5476
      %v5502 = vpack.c.bf16 %v5479, %v5478
      %v5503 = vpack.c.bf16 %v5481, %v5480
      %v5504 = vpack.c.bf16 %v5483, %v5482
      %v5505 = vpack.c.bf16 %v5485, %v5484
      %v5506 = vpack.c.bf16 %v5487, %v5486
      %v5507 = vpack.c.bf16 %v5489, %v5488
      %v5508 = vpack.c.bf16 %v5491, %v5490
      %v5509 = vpack.c.bf16 %v5493, %v5492
      %s5510 = scalar_lea.vmem %s3, 704
      %v5511 = vld [vmem:[%s5510] sm:$0xf]
      %v5512 = vld [vmem:[%s5510 + $0x4] sm:$0xf]
      %v5513 = vld [vmem:[%s5510 + $0x8] sm:$0xf]
      %v5514 = vld [vmem:[%s5510 + $0xc] sm:$0xf]
      %v5515 = vld [vmem:[%s5510 + $0x10] sm:$0xf]
      %v5516 = vld [vmem:[%s5510 + $0x14] sm:$0xf]
      %v5517 = vld [vmem:[%s5510 + $0x18] sm:$0xf]
      %v5518 = vld [vmem:[%s5510 + $0x1c] sm:$0xf]
      %v5519 = vld [vmem:[%s5510 + $0x20] sm:$0xf]
      %v5520 = vld [vmem:[%s5510 + $0x24] sm:$0xf]
      %v5521 = vld [vmem:[%s5510 + $0x28] sm:$0xf]
      %v5522 = vld [vmem:[%s5510 + $0x2c] sm:$0xf]
      %v5523 = vld [vmem:[%s5510 + $0x30] sm:$0xf]
      %v5524 = vld [vmem:[%s5510 + $0x34] sm:$0xf]
      %v5525 = vld [vmem:[%s5510 + $0x38] sm:$0xf]
      %v5526 = vld [vmem:[%s5510 + $0x3c] sm:$0xf]
      %s5527 = scalar_lea.vmem %s5, 12
      %v5528 = vld [vmem:[%s5527] sm:$0x1]
      %v5530 = vlaneseq
      %v5531 = vshrl.u32 %v5530, 7
      %v5532 = vsub.s32 0, %v5531
      %v5533 = vrot.slane %v5528, %v5532
      %v5551 = vunpack.c.l.b16 %v5511
      %v5552 = vunpack.c.l.b16 %v5512
      %v5553 = vunpack.c.l.b16 %v5513
      %v5554 = vunpack.c.l.b16 %v5514
      %v5555 = vunpack.c.l.b16 %v5515
      %v5556 = vunpack.c.l.b16 %v5516
      %v5557 = vunpack.c.l.b16 %v5517
      %v5558 = vunpack.c.l.b16 %v5518
      %v5559 = vunpack.c.l.b16 %v5519
      %v5560 = vunpack.c.l.b16 %v5520
      %v5561 = vunpack.c.l.b16 %v5521
      %v5562 = vunpack.c.l.b16 %v5522
      %v5563 = vunpack.c.l.b16 %v5523
      %v5564 = vunpack.c.l.b16 %v5524
      %v5565 = vunpack.c.l.b16 %v5525
      %v5566 = vunpack.c.l.b16 %v5526
      %v5567 = vpack.c.b16 %v5552, %v5551
      %v5568 = vpack.c.b16 %v5554, %v5553
      %v5569 = vpack.c.b16 %v5556, %v5555
      %v5570 = vpack.c.b16 %v5558, %v5557
      %v5571 = vpack.c.b16 %v5560, %v5559
      %v5572 = vpack.c.b16 %v5562, %v5561
      %v5573 = vpack.c.b16 %v5564, %v5563
      %v5574 = vpack.c.b16 %v5566, %v5565
      %5583 = vmatprep.subr.bf16.mxu0 0
      %5584 = vmatpush1.bf16.msra.mxu0 %v5574
      %5585 = vmatprep.subr.bf16.mxu0 0
      %5586 = vmatpush1.bf16.msra.mxu0 %v5573
      %5587 = vmatprep.subr.bf16.mxu0 0
      %5588 = vmatpush1.bf16.msra.mxu0 %v5572
      %5589 = vmatprep.subr.bf16.mxu0 0
      %5590 = vmatpush1.bf16.msra.mxu0 %v5571
      %5591 = vmatprep.subr.bf16.mxu0 0
      %5592 = vmatpush1.bf16.msra.mxu0 %v5570
      %5593 = vmatprep.subr.bf16.mxu0 0
      %5594 = vmatpush1.bf16.msra.mxu0 %v5569
      %5595 = vmatprep.subr.bf16.mxu0 0
      %5596 = vmatpush1.bf16.msra.mxu0 %v5568
      %5597 = vmatprep.subr.bf16.mxu0 0
      %5598 = vmatpush1.bf16.msra.mxu0 %v5567
      %5599 = vmatprep.subr.bf16.mxu0 0
      %5600 = vmatpush2.bf16.msra.mxu0 0
      %5601 = vmatprep.subr.bf16.mxu0 0
      %5602 = vmatpush2.bf16.msra.mxu0 0
      %5603 = vmatprep.subr.bf16.mxu0 0
      %5604 = vmatpush2.bf16.msra.mxu0 0
      %5605 = vmatprep.subr.bf16.mxu0 0
      %5606 = vmatpush2.bf16.msra.mxu0 0
      %5607 = vmatprep.subr.bf16.mxu0 0
      %5608 = vmatpush2.bf16.msra.mxu0 0
      %5609 = vmatprep.subr.bf16.mxu0 0
      %5610 = vmatpush2.bf16.msra.mxu0 0
      %5611 = vmatprep.subr.bf16.mxu0 0
      %5612 = vmatpush2.bf16.msra.mxu0 0
      %5613 = vmatprep.subr.bf16.mxu0 0
      %5614 = vmatpush2.bf16.msra.mxu0 0
      %5615 = vmatprep.mubr.bf16.mxu0 0
      %5616 = vmatmul.mubr.bf16.gmra.mxu0 %v5494
      %v5617 = vpop.f32.mrf.mxu0
      %v5618 = vadd.f32 %v5533, %v5617
      %v5619 = vpop.f32.mrf.mxu0
      %v5620 = vpop.f32.mrf.mxu0
      %v5621 = vadd.f32 %v5533, %v5620
      %v5622 = vpop.f32.mrf.mxu0
      %5623 = vmatprep.mubr.bf16.mxu0 0
      %5624 = vmatmul.mubr.bf16.gmra.mxu0 %v5495
      %v5625 = vpop.f32.mrf.mxu0
      %v5626 = vadd.f32 %v5533, %v5625
      %v5627 = vpop.f32.mrf.mxu0
      %v5628 = vpop.f32.mrf.mxu0
      %v5629 = vadd.f32 %v5533, %v5628
      %v5630 = vpop.f32.mrf.mxu0
      %5631 = vmatprep.mubr.bf16.mxu0 0
      %5632 = vmatmul.mubr.bf16.gmra.mxu0 %v5496
      %v5633 = vpop.f32.mrf.mxu0
      %v5634 = vadd.f32 %v5533, %v5633
      %v5635 = vpop.f32.mrf.mxu0
      %v5636 = vpop.f32.mrf.mxu0
      %v5637 = vadd.f32 %v5533, %v5636
      %v5638 = vpop.f32.mrf.mxu0
      %5639 = vmatprep.mubr.bf16.mxu0 0
      %5640 = vmatmul.mubr.bf16.gmra.mxu0 %v5497
      %v5641 = vpop.f32.mrf.mxu0
      %v5642 = vadd.f32 %v5533, %v5641
      %v5643 = vpop.f32.mrf.mxu0
      %v5644 = vpop.f32.mrf.mxu0
      %v5645 = vadd.f32 %v5533, %v5644
      %v5646 = vpop.f32.mrf.mxu0
      %5647 = vmatprep.mubr.bf16.mxu0 0
      %5648 = vmatmul.mubr.bf16.gmra.mxu0 %v5498
      %v5649 = vpop.f32.mrf.mxu0
      %v5650 = vadd.f32 %v5533, %v5649
      %v5651 = vpop.f32.mrf.mxu0
      %v5652 = vpop.f32.mrf.mxu0
      %v5653 = vadd.f32 %v5533, %v5652
      %v5654 = vpop.f32.mrf.mxu0
      %5655 = vmatprep.mubr.bf16.mxu0 0
      %5656 = vmatmul.mubr.bf16.gmra.mxu0 %v5499
      %v5657 = vpop.f32.mrf.mxu0
      %v5658 = vadd.f32 %v5533, %v5657
      %v5659 = vpop.f32.mrf.mxu0
      %v5660 = vpop.f32.mrf.mxu0
      %v5661 = vadd.f32 %v5533, %v5660
      %v5662 = vpop.f32.mrf.mxu0
      %5663 = vmatprep.mubr.bf16.mxu0 0
      %5664 = vmatmul.mubr.bf16.gmra.mxu0 %v5500
      %v5665 = vpop.f32.mrf.mxu0
      %v5666 = vadd.f32 %v5533, %v5665
      %v5667 = vpop.f32.mrf.mxu0
      %v5668 = vpop.f32.mrf.mxu0
      %v5669 = vadd.f32 %v5533, %v5668
      %v5670 = vpop.f32.mrf.mxu0
      %5671 = vmatprep.mubr.bf16.mxu0 0
      %5672 = vmatmul.mubr.bf16.gmra.mxu0 %v5501
      %v5673 = vpop.f32.mrf.mxu0
      %v5674 = vadd.f32 %v5533, %v5673
      %v5675 = vpop.f32.mrf.mxu0
      %v5676 = vpop.f32.mrf.mxu0
      %v5677 = vadd.f32 %v5533, %v5676
      %v5678 = vpop.f32.mrf.mxu0
      %5679 = vmatprep.mubr.bf16.mxu0 0
      %5680 = vmatmul.mubr.bf16.gmra.mxu0 %v5502
      %v5681 = vpop.f32.mrf.mxu0
      %v5682 = vadd.f32 %v5533, %v5681
      %v5683 = vpop.f32.mrf.mxu0
      %v5684 = vpop.f32.mrf.mxu0
      %v5685 = vadd.f32 %v5533, %v5684
      %v5686 = vpop.f32.mrf.mxu0
      %5687 = vmatprep.mubr.bf16.mxu0 0
      %5688 = vmatmul.mubr.bf16.gmra.mxu0 %v5503
      %v5689 = vpop.f32.mrf.mxu0
      %v5690 = vadd.f32 %v5533, %v5689
      %v5691 = vpop.f32.mrf.mxu0
      %v5692 = vpop.f32.mrf.mxu0
      %v5693 = vadd.f32 %v5533, %v5692
      %v5694 = vpop.f32.mrf.mxu0
      %5695 = vmatprep.mubr.bf16.mxu0 0
      %5696 = vmatmul.mubr.bf16.gmra.mxu0 %v5504
      %v5697 = vpop.f32.mrf.mxu0
      %v5698 = vadd.f32 %v5533, %v5697
      %v5699 = vpop.f32.mrf.mxu0
      %v5700 = vpop.f32.mrf.mxu0
      %v5701 = vadd.f32 %v5533, %v5700
      %v5702 = vpop.f32.mrf.mxu0
      %5703 = vmatprep.mubr.bf16.mxu0 0
      %5704 = vmatmul.mubr.bf16.gmra.mxu0 %v5505
      %v5705 = vpop.f32.mrf.mxu0
      %v5706 = vadd.f32 %v5533, %v5705
      %v5707 = vpop.f32.mrf.mxu0
      %v5708 = vpop.f32.mrf.mxu0
      %v5709 = vadd.f32 %v5533, %v5708
      %v5710 = vpop.f32.mrf.mxu0
      %5711 = vmatprep.mubr.bf16.mxu0 0
      %5712 = vmatmul.mubr.bf16.gmra.mxu0 %v5506
      %v5713 = vpop.f32.mrf.mxu0
      %v5714 = vadd.f32 %v5533, %v5713
      %v5715 = vpop.f32.mrf.mxu0
      %v5716 = vpop.f32.mrf.mxu0
      %v5717 = vadd.f32 %v5533, %v5716
      %v5718 = vpop.f32.mrf.mxu0
      %5719 = vmatprep.mubr.bf16.mxu0 0
      %5720 = vmatmul.mubr.bf16.gmra.mxu0 %v5507
      %v5721 = vpop.f32.mrf.mxu0
      %v5722 = vadd.f32 %v5533, %v5721
      %v5723 = vpop.f32.mrf.mxu0
      %v5724 = vpop.f32.mrf.mxu0
      %v5725 = vadd.f32 %v5533, %v5724
      %v5726 = vpop.f32.mrf.mxu0
      %5727 = vmatprep.mubr.bf16.mxu0 0
      %5728 = vmatmul.mubr.bf16.gmra.mxu0 %v5508
      %v5729 = vpop.f32.mrf.mxu0
      %v5730 = vadd.f32 %v5533, %v5729
      %v5731 = vpop.f32.mrf.mxu0
      %v5732 = vpop.f32.mrf.mxu0
      %v5733 = vadd.f32 %v5533, %v5732
      %v5734 = vpop.f32.mrf.mxu0
      %5735 = vmatprep.mubr.bf16.mxu0 0
      %5736 = vmatmul.mubr.bf16.gmra.mxu0 %v5509
      %v5737 = vpop.f32.mrf.mxu0
      %v5738 = vadd.f32 %v5533, %v5737
      %v5739 = vpop.f32.mrf.mxu0
      %v5740 = vpop.f32.mrf.mxu0
      %v5741 = vadd.f32 %v5533, %v5740
      %v5742 = vpop.f32.mrf.mxu0
      %5743 = vdwg.mxu0
      %v5744 = vmax.f32 %v5618, 0.0
      %v5745 = vmax.f32 %v5621, 0.0
      %v5746 = vmax.f32 %v5626, 0.0
      %v5747 = vmax.f32 %v5629, 0.0
      %v5748 = vmax.f32 %v5634, 0.0
      %v5749 = vmax.f32 %v5637, 0.0
      %v5750 = vmax.f32 %v5642, 0.0
      %v5751 = vmax.f32 %v5645, 0.0
      %v5752 = vmax.f32 %v5650, 0.0
      %v5753 = vmax.f32 %v5653, 0.0
      %v5754 = vmax.f32 %v5658, 0.0
      %v5755 = vmax.f32 %v5661, 0.0
      %v5756 = vmax.f32 %v5666, 0.0
      %v5757 = vmax.f32 %v5669, 0.0
      %v5758 = vmax.f32 %v5674, 0.0
      %v5759 = vmax.f32 %v5677, 0.0
      %v5760 = vmax.f32 %v5682, 0.0
      %v5761 = vmax.f32 %v5685, 0.0
      %v5762 = vmax.f32 %v5690, 0.0
      %v5763 = vmax.f32 %v5693, 0.0
      %v5764 = vmax.f32 %v5698, 0.0
      %v5765 = vmax.f32 %v5701, 0.0
      %v5766 = vmax.f32 %v5706, 0.0
      %v5767 = vmax.f32 %v5709, 0.0
      %v5768 = vmax.f32 %v5714, 0.0
      %v5769 = vmax.f32 %v5717, 0.0
      %v5770 = vmax.f32 %v5722, 0.0
      %v5771 = vmax.f32 %v5725, 0.0
      %v5772 = vmax.f32 %v5730, 0.0
      %v5773 = vmax.f32 %v5733, 0.0
      %v5774 = vmax.f32 %v5738, 0.0
      %v5775 = vmax.f32 %v5741, 0.0
      %v5776 = vpack.c.bf16 %v5745, %v5744
      %v5777 = vpack.c.bf16 %v5747, %v5746
      %v5778 = vpack.c.bf16 %v5749, %v5748
      %v5779 = vpack.c.bf16 %v5751, %v5750
      %v5780 = vpack.c.bf16 %v5753, %v5752
      %v5781 = vpack.c.bf16 %v5755, %v5754
      %v5782 = vpack.c.bf16 %v5757, %v5756
      %v5783 = vpack.c.bf16 %v5759, %v5758
      %v5784 = vpack.c.bf16 %v5761, %v5760
      %v5785 = vpack.c.bf16 %v5763, %v5762
      %v5786 = vpack.c.bf16 %v5765, %v5764
      %v5787 = vpack.c.bf16 %v5767, %v5766
      %v5788 = vpack.c.bf16 %v5769, %v5768
      %v5789 = vpack.c.bf16 %v5771, %v5770
      %v5790 = vpack.c.bf16 %v5773, %v5772
      %v5791 = vpack.c.bf16 %v5775, %v5774
      %v5792 = vld [vmem:[%s4] sm:$0xff]
      %v5793 = vld [vmem:[%s4 + $0x8] sm:$0xff]
      %v5794 = vld [vmem:[%s4 + $0x10] sm:$0xff]
      %v5795 = vld [vmem:[%s4 + $0x18] sm:$0xf]
      %v5796 = vld [vmem:[%s4 + $0x1c] sm:$0xff]
      %v5797 = vld [vmem:[%s4 + $0x24] sm:$0xff]
      %v5798 = vld [vmem:[%s4 + $0x2c] sm:$0xff]
      %v5799 = vld [vmem:[%s4 + $0x34] sm:$0xf]
      %v5800 = vld [vmem:[%s4 + $0x38] sm:$0xff]
      %v5801 = vld [vmem:[%s4 + $0x40] sm:$0xff]
      %v5802 = vld [vmem:[%s4 + $0x48] sm:$0xff]
      %v5803 = vld [vmem:[%s4 + $0x50] sm:$0xf]
      %v5804 = vld [vmem:[%s4 + $0x54] sm:$0xff]
      %v5805 = vld [vmem:[%s4 + $0x5c] sm:$0xff]
      %v5806 = vld [vmem:[%s4 + $0x64] sm:$0xff]
      %v5807 = vld [vmem:[%s4 + $0x6c] sm:$0xf]
      %v5808 = vld [vmem:[%s4 + $0x70] sm:$0xff]
      %v5809 = vld [vmem:[%s4 + $0x78] sm:$0xff]
      %v5810 = vld [vmem:[%s4 + $0x80] sm:$0xff]
      %v5811 = vld [vmem:[%s4 + $0x88] sm:$0xf]
      %v5812 = vld [vmem:[%s4 + $0x8c] sm:$0xff]
      %v5813 = vld [vmem:[%s4 + $0x94] sm:$0xff]
      %v5814 = vld [vmem:[%s4 + $0x9c] sm:$0xff]
      %v5815 = vld [vmem:[%s4 + $0xa4] sm:$0xf]
      %v5816 = vld [vmem:[%s4 + $0xa8] sm:$0xff]
      %v5817 = vld [vmem:[%s4 + $0xb0] sm:$0xff]
      %v5818 = vld [vmem:[%s4 + $0xb8] sm:$0xff]
      %v5819 = vld [vmem:[%s4 + $0xc0] sm:$0xf]
      %v5820 = vld [vmem:[%s4 + $0xc4] sm:$0xff]
      %v5821 = vld [vmem:[%s4 + $0xcc] sm:$0xff]
      %v5822 = vld [vmem:[%s4 + $0xd4] sm:$0xff]
      %v5823 = vld [vmem:[%s4 + $0xdc] sm:$0xf]
      %v5824 = vld [vmem:[%s4 + $0xe0] sm:$0xff]
      %v5825 = vld [vmem:[%s4 + $0xe8] sm:$0xff]
      %v5826 = vld [vmem:[%s4 + $0xf0] sm:$0xff]
      %v5827 = vld [vmem:[%s4 + $0xf8] sm:$0xf]
      %v5828 = vld [vmem:[%s4 + $0xfc] sm:$0xff]
      %v5829 = vld [vmem:[%s4 + $0x104] sm:$0xff]
      %v5830 = vld [vmem:[%s4 + $0x10c] sm:$0xff]
      %v5831 = vld [vmem:[%s4 + $0x114] sm:$0xf]
      %v5832 = vld [vmem:[%s4 + $0x118] sm:$0xff]
      %v5833 = vld [vmem:[%s4 + $0x120] sm:$0xff]
      %v5834 = vld [vmem:[%s4 + $0x128] sm:$0xff]
      %v5835 = vld [vmem:[%s4 + $0x130] sm:$0xf]
      %v5836 = vld [vmem:[%s4 + $0x134] sm:$0xff]
      %v5837 = vld [vmem:[%s4 + $0x13c] sm:$0xff]
      %v5838 = vld [vmem:[%s4 + $0x144] sm:$0xff]
      %v5839 = vld [vmem:[%s4 + $0x14c] sm:$0xf]
      %v5840 = vld [vmem:[%s4 + $0x150] sm:$0xff]
      %v5841 = vld [vmem:[%s4 + $0x158] sm:$0xff]
      %v5842 = vld [vmem:[%s4 + $0x160] sm:$0xff]
      %v5843 = vld [vmem:[%s4 + $0x168] sm:$0xf]
      %v5844 = vld [vmem:[%s4 + $0x16c] sm:$0xff]
      %v5845 = vld [vmem:[%s4 + $0x174] sm:$0xff]
      %v5846 = vld [vmem:[%s4 + $0x17c] sm:$0xff]
      %v5847 = vld [vmem:[%s4 + $0x184] sm:$0xf]
      %v5848 = vld [vmem:[%s4 + $0x188] sm:$0xff]
      %v5849 = vld [vmem:[%s4 + $0x190] sm:$0xff]
      %v5850 = vld [vmem:[%s4 + $0x198] sm:$0xff]
      %v5851 = vld [vmem:[%s4 + $0x1a0] sm:$0xf]
      %v5852 = vld [vmem:[%s4 + $0x1a4] sm:$0xff]
      %v5853 = vld [vmem:[%s4 + $0x1ac] sm:$0xff]
      %v5854 = vld [vmem:[%s4 + $0x1b4] sm:$0xff]
      %v5855 = vld [vmem:[%s4 + $0x1bc] sm:$0xf]
      %v5856 = vld [vmem:[%s6] sm:$0x7f]
      %v5858 = vlaneseq
      %v5859 = vshrl.u32 %v5858, 7
      %v5860 = vsub.s32 0, %v5859
      %v5861 = vrot.slane %v5856, %v5860
      %v5862 = vlaneseq
      %v5863 = vshrl.u32 %v5862, 7
      %v5864 = vsub.s32 1, %v5863
      %v5865 = vrot.slane %v5856, %v5864
      %v5866 = vlaneseq
      %v5867 = vshrl.u32 %v5866, 7
      %v5868 = vsub.s32 2, %v5867
      %v5869 = vrot.slane %v5856, %v5868
      %v5870 = vlaneseq
      %v5871 = vshrl.u32 %v5870, 7
      %v5872 = vsub.s32 3, %v5871
      %v5873 = vrot.slane %v5856, %v5872
      %v5874 = vlaneseq
      %v5875 = vshrl.u32 %v5874, 7
      %v5876 = vsub.s32 4, %v5875
      %v5877 = vrot.slane %v5856, %v5876
      %v5878 = vlaneseq
      %v5879 = vshrl.u32 %v5878, 7
      %v5880 = vsub.s32 5, %v5879
      %v5881 = vrot.slane %v5856, %v5880
      %v5882 = vlaneseq
      %v5883 = vshrl.u32 %v5882, 7
      %v5884 = vsub.s32 6, %v5883
      %v5885 = vrot.slane %v5856, %v5884
      %v5957 = vunpack.c.l.b16 %v5792
      %v5958 = vunpack.c.h.b16 %v5792
      %v5959 = vunpack.c.l.b16 %v5793
      %v5960 = vunpack.c.h.b16 %v5793
      %v5961 = vunpack.c.l.b16 %v5794
      %v5962 = vunpack.c.h.b16 %v5794
      %v5963 = vunpack.c.l.b16 %v5795
      %v5964 = vunpack.c.l.b16 %v5796
      %v5965 = vunpack.c.h.b16 %v5796
      %v5966 = vunpack.c.l.b16 %v5797
      %v5967 = vunpack.c.h.b16 %v5797
      %v5968 = vunpack.c.l.b16 %v5798
      %v5969 = vunpack.c.h.b16 %v5798
      %v5970 = vunpack.c.l.b16 %v5799
      %v5971 = vunpack.c.l.b16 %v5800
      %v5972 = vunpack.c.h.b16 %v5800
      %v5973 = vunpack.c.l.b16 %v5801
      %v5974 = vunpack.c.h.b16 %v5801
      %v5975 = vunpack.c.l.b16 %v5802
      %v5976 = vunpack.c.h.b16 %v5802
      %v5977 = vunpack.c.l.b16 %v5803
      %v5978 = vunpack.c.l.b16 %v5804
      %v5979 = vunpack.c.h.b16 %v5804
      %v5980 = vunpack.c.l.b16 %v5805
      %v5981 = vunpack.c.h.b16 %v5805
      %v5982 = vunpack.c.l.b16 %v5806
      %v5983 = vunpack.c.h.b16 %v5806
      %v5984 = vunpack.c.l.b16 %v5807
      %v5985 = vunpack.c.l.b16 %v5808
      %v5986 = vunpack.c.h.b16 %v5808
      %v5987 = vunpack.c.l.b16 %v5809
      %v5988 = vunpack.c.h.b16 %v5809
      %v5989 = vunpack.c.l.b16 %v5810
      %v5990 = vunpack.c.h.b16 %v5810
      %v5991 = vunpack.c.l.b16 %v5811
      %v5992 = vunpack.c.l.b16 %v5812
      %v5993 = vunpack.c.h.b16 %v5812
      %v5994 = vunpack.c.l.b16 %v5813
      %v5995 = vunpack.c.h.b16 %v5813
      %v5996 = vunpack.c.l.b16 %v5814
      %v5997 = vunpack.c.h.b16 %v5814
      %v5998 = vunpack.c.l.b16 %v5815
      %v5999 = vunpack.c.l.b16 %v5816
      %v6000 = vunpack.c.h.b16 %v5816
      %v6001 = vunpack.c.l.b16 %v5817
      %v6002 = vunpack.c.h.b16 %v5817
      %v6003 = vunpack.c.l.b16 %v5818
      %v6004 = vunpack.c.h.b16 %v5818
      %v6005 = vunpack.c.l.b16 %v5819
      %v6006 = vunpack.c.l.b16 %v5820
      %v6007 = vunpack.c.h.b16 %v5820
      %v6008 = vunpack.c.l.b16 %v5821
      %v6009 = vunpack.c.h.b16 %v5821
      %v6010 = vunpack.c.l.b16 %v5822
      %v6011 = vunpack.c.h.b16 %v5822
      %v6012 = vunpack.c.l.b16 %v5823
      %v6013 = vunpack.c.l.b16 %v5824
      %v6014 = vunpack.c.h.b16 %v5824
      %v6015 = vunpack.c.l.b16 %v5825
      %v6016 = vunpack.c.h.b16 %v5825
      %v6017 = vunpack.c.l.b16 %v5826
      %v6018 = vunpack.c.h.b16 %v5826
      %v6019 = vunpack.c.l.b16 %v5827
      %v6020 = vunpack.c.l.b16 %v5828
      %v6021 = vunpack.c.h.b16 %v5828
      %v6022 = vunpack.c.l.b16 %v5829
      %v6023 = vunpack.c.h.b16 %v5829
      %v6024 = vunpack.c.l.b16 %v5830
      %v6025 = vunpack.c.h.b16 %v5830
      %v6026 = vunpack.c.l.b16 %v5831
      %v6027 = vunpack.c.l.b16 %v5832
      %v6028 = vunpack.c.h.b16 %v5832
      %v6029 = vunpack.c.l.b16 %v5833
      %v6030 = vunpack.c.h.b16 %v5833
      %v6031 = vunpack.c.l.b16 %v5834
      %v6032 = vunpack.c.h.b16 %v5834
      %v6033 = vunpack.c.l.b16 %v5835
      %v6034 = vunpack.c.l.b16 %v5836
      %v6035 = vunpack.c.h.b16 %v5836
      %v6036 = vunpack.c.l.b16 %v5837
      %v6037 = vunpack.c.h.b16 %v5837
      %v6038 = vunpack.c.l.b16 %v5838
      %v6039 = vunpack.c.h.b16 %v5838
      %v6040 = vunpack.c.l.b16 %v5839
      %v6041 = vunpack.c.l.b16 %v5840
      %v6042 = vunpack.c.h.b16 %v5840
      %v6043 = vunpack.c.l.b16 %v5841
      %v6044 = vunpack.c.h.b16 %v5841
      %v6045 = vunpack.c.l.b16 %v5842
      %v6046 = vunpack.c.h.b16 %v5842
      %v6047 = vunpack.c.l.b16 %v5843
      %v6048 = vunpack.c.l.b16 %v5844
      %v6049 = vunpack.c.h.b16 %v5844
      %v6050 = vunpack.c.l.b16 %v5845
      %v6051 = vunpack.c.h.b16 %v5845
      %v6052 = vunpack.c.l.b16 %v5846
      %v6053 = vunpack.c.h.b16 %v5846
      %v6054 = vunpack.c.l.b16 %v5847
      %v6055 = vunpack.c.l.b16 %v5848
      %v6056 = vunpack.c.h.b16 %v5848
      %v6057 = vunpack.c.l.b16 %v5849
      %v6058 = vunpack.c.h.b16 %v5849
      %v6059 = vunpack.c.l.b16 %v5850
      %v6060 = vunpack.c.h.b16 %v5850
      %v6061 = vunpack.c.l.b16 %v5851
      %v6062 = vunpack.c.l.b16 %v5852
      %v6063 = vunpack.c.h.b16 %v5852
      %v6064 = vunpack.c.l.b16 %v5853
      %v6065 = vunpack.c.h.b16 %v5853
      %v6066 = vunpack.c.l.b16 %v5854
      %v6067 = vunpack.c.h.b16 %v5854
      %v6068 = vunpack.c.l.b16 %v5855
      %v6069 = vpack.c.b16 %v5964, %v5957
      %v6070 = vpack.c.b16 %v5965, %v5958
      %v6071 = vpack.c.b16 %v5966, %v5959
      %v6072 = vpack.c.b16 %v5967, %v5960
      %v6073 = vpack.c.b16 %v5968, %v5961
      %v6074 = vpack.c.b16 %v5969, %v5962
      %v6075 = vpack.c.b16 %v5970, %v5963
      %v6076 = vpack.c.b16 %v5978, %v5971
      %v6077 = vpack.c.b16 %v5979, %v5972
      %v6078 = vpack.c.b16 %v5980, %v5973
      %v6079 = vpack.c.b16 %v5981, %v5974
      %v6080 = vpack.c.b16 %v5982, %v5975
      %v6081 = vpack.c.b16 %v5983, %v5976
      %v6082 = vpack.c.b16 %v5984, %v5977
      %v6083 = vpack.c.b16 %v5992, %v5985
      %v6084 = vpack.c.b16 %v5993, %v5986
      %v6085 = vpack.c.b16 %v5994, %v5987
      %v6086 = vpack.c.b16 %v5995, %v5988
      %v6087 = vpack.c.b16 %v5996, %v5989
      %v6088 = vpack.c.b16 %v5997, %v5990
      %v6089 = vpack.c.b16 %v5998, %v5991
      %v6090 = vpack.c.b16 %v6006, %v5999
      %v6091 = vpack.c.b16 %v6007, %v6000
      %v6092 = vpack.c.b16 %v6008, %v6001
      %v6093 = vpack.c.b16 %v6009, %v6002
      %v6094 = vpack.c.b16 %v6010, %v6003
      %v6095 = vpack.c.b16 %v6011, %v6004
      %v6096 = vpack.c.b16 %v6012, %v6005
      %v6097 = vpack.c.b16 %v6020, %v6013
      %v6098 = vpack.c.b16 %v6021, %v6014
      %v6099 = vpack.c.b16 %v6022, %v6015
      %v6100 = vpack.c.b16 %v6023, %v6016
      %v6101 = vpack.c.b16 %v6024, %v6017
      %v6102 = vpack.c.b16 %v6025, %v6018
      %v6103 = vpack.c.b16 %v6026, %v6019
      %v6104 = vpack.c.b16 %v6034, %v6027
      %v6105 = vpack.c.b16 %v6035, %v6028
      %v6106 = vpack.c.b16 %v6036, %v6029
      %v6107 = vpack.c.b16 %v6037, %v6030
      %v6108 = vpack.c.b16 %v6038, %v6031
      %v6109 = vpack.c.b16 %v6039, %v6032
      %v6110 = vpack.c.b16 %v6040, %v6033
      %v6111 = vpack.c.b16 %v6048, %v6041
      %v6112 = vpack.c.b16 %v6049, %v6042
      %v6113 = vpack.c.b16 %v6050, %v6043
      %v6114 = vpack.c.b16 %v6051, %v6044
      %v6115 = vpack.c.b16 %v6052, %v6045
      %v6116 = vpack.c.b16 %v6053, %v6046
      %v6117 = vpack.c.b16 %v6054, %v6047
      %v6118 = vpack.c.b16 %v6062, %v6055
      %v6119 = vpack.c.b16 %v6063, %v6056
      %v6120 = vpack.c.b16 %v6064, %v6057
      %v6121 = vpack.c.b16 %v6065, %v6058
      %v6122 = vpack.c.b16 %v6066, %v6059
      %v6123 = vpack.c.b16 %v6067, %v6060
      %v6124 = vpack.c.b16 %v6068, %v6061
      %6181 = vmatprep.subr.bf16.mxu0 %v6119
      %6182 = vmatpush1.bf16.msra.mxu0 %v6118
      %6183 = vmatprep.subr.bf16.mxu0 %v6112
      %6184 = vmatpush1.bf16.msra.mxu0 %v6111
      %6185 = vmatprep.subr.bf16.mxu0 %v6105
      %6186 = vmatpush1.bf16.msra.mxu0 %v6104
      %6187 = vmatprep.subr.bf16.mxu0 %v6098
      %6188 = vmatpush1.bf16.msra.mxu0 %v6097
      %6189 = vmatprep.subr.bf16.mxu0 %v6091
      %6190 = vmatpush1.bf16.msra.mxu0 %v6090
      %6191 = vmatprep.subr.bf16.mxu0 %v6084
      %6192 = vmatpush1.bf16.msra.mxu0 %v6083
      %6193 = vmatprep.subr.bf16.mxu0 %v6077
      %6194 = vmatpush1.bf16.msra.mxu0 %v6076
      %6195 = vmatprep.subr.bf16.mxu0 %v6070
      %6196 = vmatpush1.bf16.msra.mxu0 %v6069
      %6197 = vmatprep.subr.bf16.mxu0 0
      %6198 = vmatpush2.bf16.msra.mxu0 0
      %6199 = vmatprep.subr.bf16.mxu0 0
      %6200 = vmatpush2.bf16.msra.mxu0 0
      %6201 = vmatprep.subr.bf16.mxu0 0
      %6202 = vmatpush2.bf16.msra.mxu0 0
      %6203 = vmatprep.subr.bf16.mxu0 0
      %6204 = vmatpush2.bf16.msra.mxu0 0
      %6205 = vmatprep.subr.bf16.mxu0 0
      %6206 = vmatpush2.bf16.msra.mxu0 0
      %6207 = vmatprep.subr.bf16.mxu0 0
      %6208 = vmatpush2.bf16.msra.mxu0 0
      %6209 = vmatprep.subr.bf16.mxu0 0
      %6210 = vmatpush2.bf16.msra.mxu0 0
      %6211 = vmatprep.subr.bf16.mxu0 0
      %6212 = vmatpush2.bf16.msra.mxu0 0
      %6213 = vmatprep.mubr.bf16.mxu0 0
      %6214 = vmatmul.mubr.bf16.gmra.mxu0 %v5776
      %v6215 = vpop.f32.mrf.mxu0
      %v6216 = vadd.f32 %v5861, %v6215
      %v6217 = vpop.f32.mrf.mxu0
      %v6218 = vadd.f32 %v5865, %v6217
      %v6219 = vpop.f32.mrf.mxu0
      %v6220 = vadd.f32 %v5861, %v6219
      %v6221 = vpop.f32.mrf.mxu0
      %v6222 = vadd.f32 %v5865, %v6221
      %6223 = vmatprep.mubr.bf16.mxu0 0
      %6224 = vmatmul.mubr.bf16.gmra.mxu0 %v5777
      %v6225 = vpop.f32.mrf.mxu0
      %v6226 = vadd.f32 %v5861, %v6225
      %v6227 = vpop.f32.mrf.mxu0
      %v6228 = vadd.f32 %v5865, %v6227
      %v6229 = vpop.f32.mrf.mxu0
      %v6230 = vadd.f32 %v5861, %v6229
      %v6231 = vpop.f32.mrf.mxu0
      %v6232 = vadd.f32 %v5865, %v6231
      %6233 = vmatprep.mubr.bf16.mxu0 0
      %6234 = vmatmul.mubr.bf16.gmra.mxu0 %v5778
      %v6235 = vpop.f32.mrf.mxu0
      %v6236 = vadd.f32 %v5861, %v6235
      %v6237 = vpop.f32.mrf.mxu0
      %v6238 = vadd.f32 %v5865, %v6237
      %v6239 = vpop.f32.mrf.mxu0
      %v6240 = vadd.f32 %v5861, %v6239
      %v6241 = vpop.f32.mrf.mxu0
      %v6242 = vadd.f32 %v5865, %v6241
      %6243 = vmatprep.mubr.bf16.mxu0 0
      %6244 = vmatmul.mubr.bf16.gmra.mxu0 %v5779
      %v6245 = vpop.f32.mrf.mxu0
      %v6246 = vadd.f32 %v5861, %v6245
      %v6247 = vpop.f32.mrf.mxu0
      %v6248 = vadd.f32 %v5865, %v6247
      %v6249 = vpop.f32.mrf.mxu0
      %v6250 = vadd.f32 %v5861, %v6249
      %v6251 = vpop.f32.mrf.mxu0
      %v6252 = vadd.f32 %v5865, %v6251
      %6253 = vmatprep.mubr.bf16.mxu0 0
      %6254 = vmatmul.mubr.bf16.gmra.mxu0 %v5780
      %v6255 = vpop.f32.mrf.mxu0
      %v6256 = vadd.f32 %v5861, %v6255
      %v6257 = vpop.f32.mrf.mxu0
      %v6258 = vadd.f32 %v5865, %v6257
      %v6259 = vpop.f32.mrf.mxu0
      %v6260 = vadd.f32 %v5861, %v6259
      %v6261 = vpop.f32.mrf.mxu0
      %v6262 = vadd.f32 %v5865, %v6261
      %6263 = vmatprep.mubr.bf16.mxu0 0
      %6264 = vmatmul.mubr.bf16.gmra.mxu0 %v5781
      %v6265 = vpop.f32.mrf.mxu0
      %v6266 = vadd.f32 %v5861, %v6265
      %v6267 = vpop.f32.mrf.mxu0
      %v6268 = vadd.f32 %v5865, %v6267
      %v6269 = vpop.f32.mrf.mxu0
      %v6270 = vadd.f32 %v5861, %v6269
      %v6271 = vpop.f32.mrf.mxu0
      %v6272 = vadd.f32 %v5865, %v6271
      %6273 = vmatprep.mubr.bf16.mxu0 0
      %6274 = vmatmul.mubr.bf16.gmra.mxu0 %v5782
      %v6275 = vpop.f32.mrf.mxu0
      %v6276 = vadd.f32 %v5861, %v6275
      %v6277 = vpop.f32.mrf.mxu0
      %v6278 = vadd.f32 %v5865, %v6277
      %v6279 = vpop.f32.mrf.mxu0
      %v6280 = vadd.f32 %v5861, %v6279
      %v6281 = vpop.f32.mrf.mxu0
      %v6282 = vadd.f32 %v5865, %v6281
      %6283 = vmatprep.mubr.bf16.mxu0 0
      %6284 = vmatmul.mubr.bf16.gmra.mxu0 %v5783
      %v6285 = vpop.f32.mrf.mxu0
      %v6286 = vadd.f32 %v5861, %v6285
      %v6287 = vpop.f32.mrf.mxu0
      %v6288 = vadd.f32 %v5865, %v6287
      %v6289 = vpop.f32.mrf.mxu0
      %v6290 = vadd.f32 %v5861, %v6289
      %v6291 = vpop.f32.mrf.mxu0
      %v6292 = vadd.f32 %v5865, %v6291
      %6293 = vmatprep.mubr.bf16.mxu0 0
      %6294 = vmatmul.mubr.bf16.gmra.mxu0 %v5784
      %v6295 = vpop.f32.mrf.mxu0
      %v6296 = vadd.f32 %v5861, %v6295
      %v6297 = vpop.f32.mrf.mxu0
      %v6298 = vadd.f32 %v5865, %v6297
      %v6299 = vpop.f32.mrf.mxu0
      %v6300 = vadd.f32 %v5861, %v6299
      %v6301 = vpop.f32.mrf.mxu0
      %v6302 = vadd.f32 %v5865, %v6301
      %6303 = vmatprep.mubr.bf16.mxu0 0
      %6304 = vmatmul.mubr.bf16.gmra.mxu0 %v5785
      %v6305 = vpop.f32.mrf.mxu0
      %v6306 = vadd.f32 %v5861, %v6305
      %v6307 = vpop.f32.mrf.mxu0
      %v6308 = vadd.f32 %v5865, %v6307
      %v6309 = vpop.f32.mrf.mxu0
      %v6310 = vadd.f32 %v5861, %v6309
      %v6311 = vpop.f32.mrf.mxu0
      %v6312 = vadd.f32 %v5865, %v6311
      %6313 = vmatprep.mubr.bf16.mxu0 0
      %6314 = vmatmul.mubr.bf16.gmra.mxu0 %v5786
      %v6315 = vpop.f32.mrf.mxu0
      %v6316 = vadd.f32 %v5861, %v6315
      %v6317 = vpop.f32.mrf.mxu0
      %v6318 = vadd.f32 %v5865, %v6317
      %v6319 = vpop.f32.mrf.mxu0
      %v6320 = vadd.f32 %v5861, %v6319
      %v6321 = vpop.f32.mrf.mxu0
      %v6322 = vadd.f32 %v5865, %v6321
      %6323 = vmatprep.mubr.bf16.mxu0 0
      %6324 = vmatmul.mubr.bf16.gmra.mxu0 %v5787
      %v6325 = vpop.f32.mrf.mxu0
      %v6326 = vadd.f32 %v5861, %v6325
      %v6327 = vpop.f32.mrf.mxu0
      %v6328 = vadd.f32 %v5865, %v6327
      %v6329 = vpop.f32.mrf.mxu0
      %v6330 = vadd.f32 %v5861, %v6329
      %v6331 = vpop.f32.mrf.mxu0
      %v6332 = vadd.f32 %v5865, %v6331
      %6333 = vmatprep.mubr.bf16.mxu0 0
      %6334 = vmatmul.mubr.bf16.gmra.mxu0 %v5788
      %v6335 = vpop.f32.mrf.mxu0
      %v6336 = vadd.f32 %v5861, %v6335
      %v6337 = vpop.f32.mrf.mxu0
      %v6338 = vadd.f32 %v5865, %v6337
      %v6339 = vpop.f32.mrf.mxu0
      %v6340 = vadd.f32 %v5861, %v6339
      %v6341 = vpop.f32.mrf.mxu0
      %v6342 = vadd.f32 %v5865, %v6341
      %6343 = vmatprep.mubr.bf16.mxu0 0
      %6344 = vmatmul.mubr.bf16.gmra.mxu0 %v5789
      %v6345 = vpop.f32.mrf.mxu0
      %v6346 = vadd.f32 %v5861, %v6345
      %v6347 = vpop.f32.mrf.mxu0
      %v6348 = vadd.f32 %v5865, %v6347
      %v6349 = vpop.f32.mrf.mxu0
      %v6350 = vadd.f32 %v5861, %v6349
      %v6351 = vpop.f32.mrf.mxu0
      %v6352 = vadd.f32 %v5865, %v6351
      %6353 = vmatprep.mubr.bf16.mxu0 0
      %6354 = vmatmul.mubr.bf16.gmra.mxu0 %v5790
      %v6355 = vpop.f32.mrf.mxu0
      %v6356 = vadd.f32 %v5861, %v6355
      %v6357 = vpop.f32.mrf.mxu0
      %v6358 = vadd.f32 %v5865, %v6357
      %v6359 = vpop.f32.mrf.mxu0
      %v6360 = vadd.f32 %v5861, %v6359
      %v6361 = vpop.f32.mrf.mxu0
      %v6362 = vadd.f32 %v5865, %v6361
      %6363 = vmatprep.mubr.bf16.mxu0 0
      %6364 = vmatmul.mubr.bf16.gmra.mxu0 %v5791
      %v6365 = vpop.f32.mrf.mxu0
      %v6366 = vadd.f32 %v5861, %v6365
      %v6367 = vpop.f32.mrf.mxu0
      %v6368 = vadd.f32 %v5865, %v6367
      %v6369 = vpop.f32.mrf.mxu0
      %v6370 = vadd.f32 %v5861, %v6369
      %v6371 = vpop.f32.mrf.mxu0
      %v6372 = vadd.f32 %v5865, %v6371
      %6373 = vdwg.mxu0
      %6374 = vmatprep.subr.bf16.mxu0 %v6121
      %6375 = vmatpush1.bf16.msra.mxu0 %v6120
      %6376 = vmatprep.subr.bf16.mxu0 %v6114
      %6377 = vmatpush1.bf16.msra.mxu0 %v6113
      %6378 = vmatprep.subr.bf16.mxu0 %v6107
      %6379 = vmatpush1.bf16.msra.mxu0 %v6106
      %6380 = vmatprep.subr.bf16.mxu0 %v6100
      %6381 = vmatpush1.bf16.msra.mxu0 %v6099
      %6382 = vmatprep.subr.bf16.mxu0 %v6093
      %6383 = vmatpush1.bf16.msra.mxu0 %v6092
      %6384 = vmatprep.subr.bf16.mxu0 %v6086
      %6385 = vmatpush1.bf16.msra.mxu0 %v6085
      %6386 = vmatprep.subr.bf16.mxu0 %v6079
      %6387 = vmatpush1.bf16.msra.mxu0 %v6078
      %6388 = vmatprep.subr.bf16.mxu0 %v6072
      %6389 = vmatpush1.bf16.msra.mxu0 %v6071
      %6390 = vmatprep.subr.bf16.mxu0 0
      %6391 = vmatpush2.bf16.msra.mxu0 0
      %6392 = vmatprep.subr.bf16.mxu0 0
      %6393 = vmatpush2.bf16.msra.mxu0 0
      %6394 = vmatprep.subr.bf16.mxu0 0
      %6395 = vmatpush2.bf16.msra.mxu0 0
      %6396 = vmatprep.subr.bf16.mxu0 0
      %6397 = vmatpush2.bf16.msra.mxu0 0
      %6398 = vmatprep.subr.bf16.mxu0 0
      %6399 = vmatpush2.bf16.msra.mxu0 0
      %6400 = vmatprep.subr.bf16.mxu0 0
      %6401 = vmatpush2.bf16.msra.mxu0 0
      %6402 = vmatprep.subr.bf16.mxu0 0
      %6403 = vmatpush2.bf16.msra.mxu0 0
      %6404 = vmatprep.subr.bf16.mxu0 0
      %6405 = vmatpush2.bf16.msra.mxu0 0
      %6406 = vmatprep.mubr.bf16.mxu0 0
      %6407 = vmatmul.mubr.bf16.gmra.mxu0 %v5776
      %v6408 = vpop.f32.mrf.mxu0
      %v6409 = vadd.f32 %v5869, %v6408
      %v6410 = vpop.f32.mrf.mxu0
      %v6411 = vadd.f32 %v5873, %v6410
      %v6412 = vpop.f32.mrf.mxu0
      %v6413 = vadd.f32 %v5869, %v6412
      %v6414 = vpop.f32.mrf.mxu0
      %v6415 = vadd.f32 %v5873, %v6414
      %6416 = vmatprep.mubr.bf16.mxu0 0
      %6417 = vmatmul.mubr.bf16.gmra.mxu0 %v5777
      %v6418 = vpop.f32.mrf.mxu0
      %v6419 = vadd.f32 %v5869, %v6418
      %v6420 = vpop.f32.mrf.mxu0
      %v6421 = vadd.f32 %v5873, %v6420
      %v6422 = vpop.f32.mrf.mxu0
      %v6423 = vadd.f32 %v5869, %v6422
      %v6424 = vpop.f32.mrf.mxu0
      %v6425 = vadd.f32 %v5873, %v6424
      %6426 = vmatprep.mubr.bf16.mxu0 0
      %6427 = vmatmul.mubr.bf16.gmra.mxu0 %v5778
      %v6428 = vpop.f32.mrf.mxu0
      %v6429 = vadd.f32 %v5869, %v6428
      %v6430 = vpop.f32.mrf.mxu0
      %v6431 = vadd.f32 %v5873, %v6430
      %v6432 = vpop.f32.mrf.mxu0
      %v6433 = vadd.f32 %v5869, %v6432
      %v6434 = vpop.f32.mrf.mxu0
      %v6435 = vadd.f32 %v5873, %v6434
      %6436 = vmatprep.mubr.bf16.mxu0 0
      %6437 = vmatmul.mubr.bf16.gmra.mxu0 %v5779
      %v6438 = vpop.f32.mrf.mxu0
      %v6439 = vadd.f32 %v5869, %v6438
      %v6440 = vpop.f32.mrf.mxu0
      %v6441 = vadd.f32 %v5873, %v6440
      %v6442 = vpop.f32.mrf.mxu0
      %v6443 = vadd.f32 %v5869, %v6442
      %v6444 = vpop.f32.mrf.mxu0
      %v6445 = vadd.f32 %v5873, %v6444
      %6446 = vmatprep.mubr.bf16.mxu0 0
      %6447 = vmatmul.mubr.bf16.gmra.mxu0 %v5780
      %v6448 = vpop.f32.mrf.mxu0
      %v6449 = vadd.f32 %v5869, %v6448
      %v6450 = vpop.f32.mrf.mxu0
      %v6451 = vadd.f32 %v5873, %v6450
      %v6452 = vpop.f32.mrf.mxu0
      %v6453 = vadd.f32 %v5869, %v6452
      %v6454 = vpop.f32.mrf.mxu0
      %v6455 = vadd.f32 %v5873, %v6454
      %6456 = vmatprep.mubr.bf16.mxu0 0
      %6457 = vmatmul.mubr.bf16.gmra.mxu0 %v5781
      %v6458 = vpop.f32.mrf.mxu0
      %v6459 = vadd.f32 %v5869, %v6458
      %v6460 = vpop.f32.mrf.mxu0
      %v6461 = vadd.f32 %v5873, %v6460
      %v6462 = vpop.f32.mrf.mxu0
      %v6463 = vadd.f32 %v5869, %v6462
      %v6464 = vpop.f32.mrf.mxu0
      %v6465 = vadd.f32 %v5873, %v6464
      %6466 = vmatprep.mubr.bf16.mxu0 0
      %6467 = vmatmul.mubr.bf16.gmra.mxu0 %v5782
      %v6468 = vpop.f32.mrf.mxu0
      %v6469 = vadd.f32 %v5869, %v6468
      %v6470 = vpop.f32.mrf.mxu0
      %v6471 = vadd.f32 %v5873, %v6470
      %v6472 = vpop.f32.mrf.mxu0
      %v6473 = vadd.f32 %v5869, %v6472
      %v6474 = vpop.f32.mrf.mxu0
      %v6475 = vadd.f32 %v5873, %v6474
      %6476 = vmatprep.mubr.bf16.mxu0 0
      %6477 = vmatmul.mubr.bf16.gmra.mxu0 %v5783
      %v6478 = vpop.f32.mrf.mxu0
      %v6479 = vadd.f32 %v5869, %v6478
      %v6480 = vpop.f32.mrf.mxu0
      %v6481 = vadd.f32 %v5873, %v6480
      %v6482 = vpop.f32.mrf.mxu0
      %v6483 = vadd.f32 %v5869, %v6482
      %v6484 = vpop.f32.mrf.mxu0
      %v6485 = vadd.f32 %v5873, %v6484
      %6486 = vmatprep.mubr.bf16.mxu0 0
      %6487 = vmatmul.mubr.bf16.gmra.mxu0 %v5784
      %v6488 = vpop.f32.mrf.mxu0
      %v6489 = vadd.f32 %v5869, %v6488
      %v6490 = vpop.f32.mrf.mxu0
      %v6491 = vadd.f32 %v5873, %v6490
      %v6492 = vpop.f32.mrf.mxu0
      %v6493 = vadd.f32 %v5869, %v6492
      %v6494 = vpop.f32.mrf.mxu0
      %v6495 = vadd.f32 %v5873, %v6494
      %6496 = vmatprep.mubr.bf16.mxu0 0
      %6497 = vmatmul.mubr.bf16.gmra.mxu0 %v5785
      %v6498 = vpop.f32.mrf.mxu0
      %v6499 = vadd.f32 %v5869, %v6498
      %v6500 = vpop.f32.mrf.mxu0
      %v6501 = vadd.f32 %v5873, %v6500
      %v6502 = vpop.f32.mrf.mxu0
      %v6503 = vadd.f32 %v5869, %v6502
      %v6504 = vpop.f32.mrf.mxu0
      %v6505 = vadd.f32 %v5873, %v6504
      %6506 = vmatprep.mubr.bf16.mxu0 0
      %6507 = vmatmul.mubr.bf16.gmra.mxu0 %v5786
      %v6508 = vpop.f32.mrf.mxu0
      %v6509 = vadd.f32 %v5869, %v6508
      %v6510 = vpop.f32.mrf.mxu0
      %v6511 = vadd.f32 %v5873, %v6510
      %v6512 = vpop.f32.mrf.mxu0
      %v6513 = vadd.f32 %v5869, %v6512
      %v6514 = vpop.f32.mrf.mxu0
      %v6515 = vadd.f32 %v5873, %v6514
      %6516 = vmatprep.mubr.bf16.mxu0 0
      %6517 = vmatmul.mubr.bf16.gmra.mxu0 %v5787
      %v6518 = vpop.f32.mrf.mxu0
      %v6519 = vadd.f32 %v5869, %v6518
      %v6520 = vpop.f32.mrf.mxu0
      %v6521 = vadd.f32 %v5873, %v6520
      %v6522 = vpop.f32.mrf.mxu0
      %v6523 = vadd.f32 %v5869, %v6522
      %v6524 = vpop.f32.mrf.mxu0
      %v6525 = vadd.f32 %v5873, %v6524
      %6526 = vmatprep.mubr.bf16.mxu0 0
      %6527 = vmatmul.mubr.bf16.gmra.mxu0 %v5788
      %v6528 = vpop.f32.mrf.mxu0
      %v6529 = vadd.f32 %v5869, %v6528
      %v6530 = vpop.f32.mrf.mxu0
      %v6531 = vadd.f32 %v5873, %v6530
      %v6532 = vpop.f32.mrf.mxu0
      %v6533 = vadd.f32 %v5869, %v6532
      %v6534 = vpop.f32.mrf.mxu0
      %v6535 = vadd.f32 %v5873, %v6534
      %6536 = vmatprep.mubr.bf16.mxu0 0
      %6537 = vmatmul.mubr.bf16.gmra.mxu0 %v5789
      %v6538 = vpop.f32.mrf.mxu0
      %v6539 = vadd.f32 %v5869, %v6538
      %v6540 = vpop.f32.mrf.mxu0
      %v6541 = vadd.f32 %v5873, %v6540
      %v6542 = vpop.f32.mrf.mxu0
      %v6543 = vadd.f32 %v5869, %v6542
      %v6544 = vpop.f32.mrf.mxu0
      %v6545 = vadd.f32 %v5873, %v6544
      %6546 = vmatprep.mubr.bf16.mxu0 0
      %6547 = vmatmul.mubr.bf16.gmra.mxu0 %v5790
      %v6548 = vpop.f32.mrf.mxu0
      %v6549 = vadd.f32 %v5869, %v6548
      %v6550 = vpop.f32.mrf.mxu0
      %v6551 = vadd.f32 %v5873, %v6550
      %v6552 = vpop.f32.mrf.mxu0
      %v6553 = vadd.f32 %v5869, %v6552
      %v6554 = vpop.f32.mrf.mxu0
      %v6555 = vadd.f32 %v5873, %v6554
      %6556 = vmatprep.mubr.bf16.mxu0 0
      %6557 = vmatmul.mubr.bf16.gmra.mxu0 %v5791
      %v6558 = vpop.f32.mrf.mxu0
      %v6559 = vadd.f32 %v5869, %v6558
      %v6560 = vpop.f32.mrf.mxu0
      %v6561 = vadd.f32 %v5873, %v6560
      %v6562 = vpop.f32.mrf.mxu0
      %v6563 = vadd.f32 %v5869, %v6562
      %v6564 = vpop.f32.mrf.mxu0
      %v6565 = vadd.f32 %v5873, %v6564
      %6566 = vdwg.mxu0
      %6567 = vmatprep.subr.bf16.mxu0 %v6123
      %6568 = vmatpush1.bf16.msra.mxu0 %v6122
      %6569 = vmatprep.subr.bf16.mxu0 %v6116
      %6570 = vmatpush1.bf16.msra.mxu0 %v6115
      %6571 = vmatprep.subr.bf16.mxu0 %v6109
      %6572 = vmatpush1.bf16.msra.mxu0 %v6108
      %6573 = vmatprep.subr.bf16.mxu0 %v6102
      %6574 = vmatpush1.bf16.msra.mxu0 %v6101
      %6575 = vmatprep.subr.bf16.mxu0 %v6095
      %6576 = vmatpush1.bf16.msra.mxu0 %v6094
      %6577 = vmatprep.subr.bf16.mxu0 %v6088
      %6578 = vmatpush1.bf16.msra.mxu0 %v6087
      %6579 = vmatprep.subr.bf16.mxu0 %v6081
      %6580 = vmatpush1.bf16.msra.mxu0 %v6080
      %6581 = vmatprep.subr.bf16.mxu0 %v6074
      %6582 = vmatpush1.bf16.msra.mxu0 %v6073
      %6583 = vmatprep.subr.bf16.mxu0 0
      %6584 = vmatpush2.bf16.msra.mxu0 0
      %6585 = vmatprep.subr.bf16.mxu0 0
      %6586 = vmatpush2.bf16.msra.mxu0 0
      %6587 = vmatprep.subr.bf16.mxu0 0
      %6588 = vmatpush2.bf16.msra.mxu0 0
      %6589 = vmatprep.subr.bf16.mxu0 0
      %6590 = vmatpush2.bf16.msra.mxu0 0
      %6591 = vmatprep.subr.bf16.mxu0 0
      %6592 = vmatpush2.bf16.msra.mxu0 0
      %6593 = vmatprep.subr.bf16.mxu0 0
      %6594 = vmatpush2.bf16.msra.mxu0 0
      %6595 = vmatprep.subr.bf16.mxu0 0
      %6596 = vmatpush2.bf16.msra.mxu0 0
      %6597 = vmatprep.subr.bf16.mxu0 0
      %6598 = vmatpush2.bf16.msra.mxu0 0
      %6599 = vmatprep.mubr.bf16.mxu0 0
      %6600 = vmatmul.mubr.bf16.gmra.mxu0 %v5776
      %v6601 = vpop.f32.mrf.mxu0
      %v6602 = vadd.f32 %v5877, %v6601
      %v6603 = vpop.f32.mrf.mxu0
      %v6604 = vadd.f32 %v5881, %v6603
      %v6605 = vpop.f32.mrf.mxu0
      %v6606 = vadd.f32 %v5877, %v6605
      %v6607 = vpop.f32.mrf.mxu0
      %v6608 = vadd.f32 %v5881, %v6607
      %6609 = vmatprep.mubr.bf16.mxu0 0
      %6610 = vmatmul.mubr.bf16.gmra.mxu0 %v5777
      %v6611 = vpop.f32.mrf.mxu0
      %v6612 = vadd.f32 %v5877, %v6611
      %v6613 = vpop.f32.mrf.mxu0
      %v6614 = vadd.f32 %v5881, %v6613
      %v6615 = vpop.f32.mrf.mxu0
      %v6616 = vadd.f32 %v5877, %v6615
      %v6617 = vpop.f32.mrf.mxu0
      %v6618 = vadd.f32 %v5881, %v6617
      %6619 = vmatprep.mubr.bf16.mxu0 0
      %6620 = vmatmul.mubr.bf16.gmra.mxu0 %v5778
      %v6621 = vpop.f32.mrf.mxu0
      %v6622 = vadd.f32 %v5877, %v6621
      %v6623 = vpop.f32.mrf.mxu0
      %v6624 = vadd.f32 %v5881, %v6623
      %v6625 = vpop.f32.mrf.mxu0
      %v6626 = vadd.f32 %v5877, %v6625
      %v6627 = vpop.f32.mrf.mxu0
      %v6628 = vadd.f32 %v5881, %v6627
      %6629 = vmatprep.mubr.bf16.mxu0 0
      %6630 = vmatmul.mubr.bf16.gmra.mxu0 %v5779
      %v6631 = vpop.f32.mrf.mxu0
      %v6632 = vadd.f32 %v5877, %v6631
      %v6633 = vpop.f32.mrf.mxu0
      %v6634 = vadd.f32 %v5881, %v6633
      %v6635 = vpop.f32.mrf.mxu0
      %v6636 = vadd.f32 %v5877, %v6635
      %v6637 = vpop.f32.mrf.mxu0
      %v6638 = vadd.f32 %v5881, %v6637
      %6639 = vmatprep.mubr.bf16.mxu0 0
      %6640 = vmatmul.mubr.bf16.gmra.mxu0 %v5780
      %v6641 = vpop.f32.mrf.mxu0
      %v6642 = vadd.f32 %v5877, %v6641
      %v6643 = vpop.f32.mrf.mxu0
      %v6644 = vadd.f32 %v5881, %v6643
      %v6645 = vpop.f32.mrf.mxu0
      %v6646 = vadd.f32 %v5877, %v6645
      %v6647 = vpop.f32.mrf.mxu0
      %v6648 = vadd.f32 %v5881, %v6647
      %6649 = vmatprep.mubr.bf16.mxu0 0
      %6650 = vmatmul.mubr.bf16.gmra.mxu0 %v5781
      %v6651 = vpop.f32.mrf.mxu0
      %v6652 = vadd.f32 %v5877, %v6651
      %v6653 = vpop.f32.mrf.mxu0
      %v6654 = vadd.f32 %v5881, %v6653
      %v6655 = vpop.f32.mrf.mxu0
      %v6656 = vadd.f32 %v5877, %v6655
      %v6657 = vpop.f32.mrf.mxu0
      %v6658 = vadd.f32 %v5881, %v6657
      %6659 = vmatprep.mubr.bf16.mxu0 0
      %6660 = vmatmul.mubr.bf16.gmra.mxu0 %v5782
      %v6661 = vpop.f32.mrf.mxu0
      %v6662 = vadd.f32 %v5877, %v6661
      %v6663 = vpop.f32.mrf.mxu0
      %v6664 = vadd.f32 %v5881, %v6663
      %v6665 = vpop.f32.mrf.mxu0
      %v6666 = vadd.f32 %v5877, %v6665
      %v6667 = vpop.f32.mrf.mxu0
      %v6668 = vadd.f32 %v5881, %v6667
      %6669 = vmatprep.mubr.bf16.mxu0 0
      %6670 = vmatmul.mubr.bf16.gmra.mxu0 %v5783
      %v6671 = vpop.f32.mrf.mxu0
      %v6672 = vadd.f32 %v5877, %v6671
      %v6673 = vpop.f32.mrf.mxu0
      %v6674 = vadd.f32 %v5881, %v6673
      %v6675 = vpop.f32.mrf.mxu0
      %v6676 = vadd.f32 %v5877, %v6675
      %v6677 = vpop.f32.mrf.mxu0
      %v6678 = vadd.f32 %v5881, %v6677
      %6679 = vmatprep.mubr.bf16.mxu0 0
      %6680 = vmatmul.mubr.bf16.gmra.mxu0 %v5784
      %v6681 = vpop.f32.mrf.mxu0
      %v6682 = vadd.f32 %v5877, %v6681
      %v6683 = vpop.f32.mrf.mxu0
      %v6684 = vadd.f32 %v5881, %v6683
      %v6685 = vpop.f32.mrf.mxu0
      %v6686 = vadd.f32 %v5877, %v6685
      %v6687 = vpop.f32.mrf.mxu0
      %v6688 = vadd.f32 %v5881, %v6687
      %6689 = vmatprep.mubr.bf16.mxu0 0
      %6690 = vmatmul.mubr.bf16.gmra.mxu0 %v5785
      %v6691 = vpop.f32.mrf.mxu0
      %v6692 = vadd.f32 %v5877, %v6691
      %v6693 = vpop.f32.mrf.mxu0
      %v6694 = vadd.f32 %v5881, %v6693
      %v6695 = vpop.f32.mrf.mxu0
      %v6696 = vadd.f32 %v5877, %v6695
      %v6697 = vpop.f32.mrf.mxu0
      %v6698 = vadd.f32 %v5881, %v6697
      %6699 = vmatprep.mubr.bf16.mxu0 0
      %6700 = vmatmul.mubr.bf16.gmra.mxu0 %v5786
      %v6701 = vpop.f32.mrf.mxu0
      %v6702 = vadd.f32 %v5877, %v6701
      %v6703 = vpop.f32.mrf.mxu0
      %v6704 = vadd.f32 %v5881, %v6703
      %v6705 = vpop.f32.mrf.mxu0
      %v6706 = vadd.f32 %v5877, %v6705
      %v6707 = vpop.f32.mrf.mxu0
      %v6708 = vadd.f32 %v5881, %v6707
      %6709 = vmatprep.mubr.bf16.mxu0 0
      %6710 = vmatmul.mubr.bf16.gmra.mxu0 %v5787
      %v6711 = vpop.f32.mrf.mxu0
      %v6712 = vadd.f32 %v5877, %v6711
      %v6713 = vpop.f32.mrf.mxu0
      %v6714 = vadd.f32 %v5881, %v6713
      %v6715 = vpop.f32.mrf.mxu0
      %v6716 = vadd.f32 %v5877, %v6715
      %v6717 = vpop.f32.mrf.mxu0
      %v6718 = vadd.f32 %v5881, %v6717
      %6719 = vmatprep.mubr.bf16.mxu0 0
      %6720 = vmatmul.mubr.bf16.gmra.mxu0 %v5788
      %v6721 = vpop.f32.mrf.mxu0
      %v6722 = vadd.f32 %v5877, %v6721
      %v6723 = vpop.f32.mrf.mxu0
      %v6724 = vadd.f32 %v5881, %v6723
      %v6725 = vpop.f32.mrf.mxu0
      %v6726 = vadd.f32 %v5877, %v6725
      %v6727 = vpop.f32.mrf.mxu0
      %v6728 = vadd.f32 %v5881, %v6727
      %6729 = vmatprep.mubr.bf16.mxu0 0
      %6730 = vmatmul.mubr.bf16.gmra.mxu0 %v5789
      %v6731 = vpop.f32.mrf.mxu0
      %v6732 = vadd.f32 %v5877, %v6731
      %v6733 = vpop.f32.mrf.mxu0
      %v6734 = vadd.f32 %v5881, %v6733
      %v6735 = vpop.f32.mrf.mxu0
      %v6736 = vadd.f32 %v5877, %v6735
      %v6737 = vpop.f32.mrf.mxu0
      %v6738 = vadd.f32 %v5881, %v6737
      %6739 = vmatprep.mubr.bf16.mxu0 0
      %6740 = vmatmul.mubr.bf16.gmra.mxu0 %v5790
      %v6741 = vpop.f32.mrf.mxu0
      %v6742 = vadd.f32 %v5877, %v6741
      %v6743 = vpop.f32.mrf.mxu0
      %v6744 = vadd.f32 %v5881, %v6743
      %v6745 = vpop.f32.mrf.mxu0
      %v6746 = vadd.f32 %v5877, %v6745
      %v6747 = vpop.f32.mrf.mxu0
      %v6748 = vadd.f32 %v5881, %v6747
      %6749 = vmatprep.mubr.bf16.mxu0 0
      %6750 = vmatmul.mubr.bf16.gmra.mxu0 %v5791
      %v6751 = vpop.f32.mrf.mxu0
      %v6752 = vadd.f32 %v5877, %v6751
      %v6753 = vpop.f32.mrf.mxu0
      %v6754 = vadd.f32 %v5881, %v6753
      %v6755 = vpop.f32.mrf.mxu0
      %v6756 = vadd.f32 %v5877, %v6755
      %v6757 = vpop.f32.mrf.mxu0
      %v6758 = vadd.f32 %v5881, %v6757
      %6759 = vdwg.mxu0
      %6760 = vmatprep.subr.bf16.mxu0 0
      %6761 = vmatpush1.bf16.msra.mxu0 %v6124
      %6762 = vmatprep.subr.bf16.mxu0 0
      %6763 = vmatpush1.bf16.msra.mxu0 %v6117
      %6764 = vmatprep.subr.bf16.mxu0 0
      %6765 = vmatpush1.bf16.msra.mxu0 %v6110
      %6766 = vmatprep.subr.bf16.mxu0 0
      %6767 = vmatpush1.bf16.msra.mxu0 %v6103
      %6768 = vmatprep.subr.bf16.mxu0 0
      %6769 = vmatpush1.bf16.msra.mxu0 %v6096
      %6770 = vmatprep.subr.bf16.mxu0 0
      %6771 = vmatpush1.bf16.msra.mxu0 %v6089
      %6772 = vmatprep.subr.bf16.mxu0 0
      %6773 = vmatpush1.bf16.msra.mxu0 %v6082
      %6774 = vmatprep.subr.bf16.mxu0 0
      %6775 = vmatpush1.bf16.msra.mxu0 %v6075
      %6776 = vmatprep.subr.bf16.mxu0 0
      %6777 = vmatpush2.bf16.msra.mxu0 0
      %6778 = vmatprep.subr.bf16.mxu0 0
      %6779 = vmatpush2.bf16.msra.mxu0 0
      %6780 = vmatprep.subr.bf16.mxu0 0
      %6781 = vmatpush2.bf16.msra.mxu0 0
      %6782 = vmatprep.subr.bf16.mxu0 0
      %6783 = vmatpush2.bf16.msra.mxu0 0
      %6784 = vmatprep.subr.bf16.mxu0 0
      %6785 = vmatpush2.bf16.msra.mxu0 0
      %6786 = vmatprep.subr.bf16.mxu0 0
      %6787 = vmatpush2.bf16.msra.mxu0 0
      %6788 = vmatprep.subr.bf16.mxu0 0
      %6789 = vmatpush2.bf16.msra.mxu0 0
      %6790 = vmatprep.subr.bf16.mxu0 0
      %6791 = vmatpush2.bf16.msra.mxu0 0
      %6792 = vmatprep.mubr.bf16.mxu0 0
      %6793 = vmatmul.mubr.bf16.gmra.mxu0 %v5776
      %v6794 = vpop.f32.mrf.mxu0
      %v6795 = vadd.f32 %v5885, %v6794
      %v6796 = vpop.f32.mrf.mxu0
      %v6797 = vpop.f32.mrf.mxu0
      %v6798 = vadd.f32 %v5885, %v6797
      %v6799 = vpop.f32.mrf.mxu0
      %6800 = vmatprep.mubr.bf16.mxu0 0
      %6801 = vmatmul.mubr.bf16.gmra.mxu0 %v5777
      %v6802 = vpop.f32.mrf.mxu0
      %v6803 = vadd.f32 %v5885, %v6802
      %v6804 = vpop.f32.mrf.mxu0
      %v6805 = vpop.f32.mrf.mxu0
      %v6806 = vadd.f32 %v5885, %v6805
      %v6807 = vpop.f32.mrf.mxu0
      %6808 = vmatprep.mubr.bf16.mxu0 0
      %6809 = vmatmul.mubr.bf16.gmra.mxu0 %v5778
      %v6810 = vpop.f32.mrf.mxu0
      %v6811 = vadd.f32 %v5885, %v6810
      %v6812 = vpop.f32.mrf.mxu0
      %v6813 = vpop.f32.mrf.mxu0
      %v6814 = vadd.f32 %v5885, %v6813
      %v6815 = vpop.f32.mrf.mxu0
      %6816 = vmatprep.mubr.bf16.mxu0 0
      %6817 = vmatmul.mubr.bf16.gmra.mxu0 %v5779
      %v6818 = vpop.f32.mrf.mxu0
      %v6819 = vadd.f32 %v5885, %v6818
      %v6820 = vpop.f32.mrf.mxu0
      %v6821 = vpop.f32.mrf.mxu0
      %v6822 = vadd.f32 %v5885, %v6821
      %v6823 = vpop.f32.mrf.mxu0
      %6824 = vmatprep.mubr.bf16.mxu0 0
      %6825 = vmatmul.mubr.bf16.gmra.mxu0 %v5780
      %v6826 = vpop.f32.mrf.mxu0
      %v6827 = vadd.f32 %v5885, %v6826
      %v6828 = vpop.f32.mrf.mxu0
      %v6829 = vpop.f32.mrf.mxu0
      %v6830 = vadd.f32 %v5885, %v6829
      %v6831 = vpop.f32.mrf.mxu0
      %6832 = vmatprep.mubr.bf16.mxu0 0
      %6833 = vmatmul.mubr.bf16.gmra.mxu0 %v5781
      %v6834 = vpop.f32.mrf.mxu0
      %v6835 = vadd.f32 %v5885, %v6834
      %v6836 = vpop.f32.mrf.mxu0
      %v6837 = vpop.f32.mrf.mxu0
      %v6838 = vadd.f32 %v5885, %v6837
      %v6839 = vpop.f32.mrf.mxu0
      %6840 = vmatprep.mubr.bf16.mxu0 0
      %6841 = vmatmul.mubr.bf16.gmra.mxu0 %v5782
      %v6842 = vpop.f32.mrf.mxu0
      %v6843 = vadd.f32 %v5885, %v6842
      %v6844 = vpop.f32.mrf.mxu0
      %v6845 = vpop.f32.mrf.mxu0
      %v6846 = vadd.f32 %v5885, %v6845
      %v6847 = vpop.f32.mrf.mxu0
      %6848 = vmatprep.mubr.bf16.mxu0 0
      %6849 = vmatmul.mubr.bf16.gmra.mxu0 %v5783
      %v6850 = vpop.f32.mrf.mxu0
      %v6851 = vadd.f32 %v5885, %v6850
      %v6852 = vpop.f32.mrf.mxu0
      %v6853 = vpop.f32.mrf.mxu0
      %v6854 = vadd.f32 %v5885, %v6853
      %v6855 = vpop.f32.mrf.mxu0
      %6856 = vmatprep.mubr.bf16.mxu0 0
      %6857 = vmatmul.mubr.bf16.gmra.mxu0 %v5784
      %v6858 = vpop.f32.mrf.mxu0
      %v6859 = vadd.f32 %v5885, %v6858
      %v6860 = vpop.f32.mrf.mxu0
      %v6861 = vpop.f32.mrf.mxu0
      %v6862 = vadd.f32 %v5885, %v6861
      %v6863 = vpop.f32.mrf.mxu0
      %6864 = vmatprep.mubr.bf16.mxu0 0
      %6865 = vmatmul.mubr.bf16.gmra.mxu0 %v5785
      %v6866 = vpop.f32.mrf.mxu0
      %v6867 = vadd.f32 %v5885, %v6866
      %v6868 = vpop.f32.mrf.mxu0
      %v6869 = vpop.f32.mrf.mxu0
      %v6870 = vadd.f32 %v5885, %v6869
      %v6871 = vpop.f32.mrf.mxu0
      %6872 = vmatprep.mubr.bf16.mxu0 0
      %6873 = vmatmul.mubr.bf16.gmra.mxu0 %v5786
      %v6874 = vpop.f32.mrf.mxu0
      %v6875 = vadd.f32 %v5885, %v6874
      %v6876 = vpop.f32.mrf.mxu0
      %v6877 = vpop.f32.mrf.mxu0
      %v6878 = vadd.f32 %v5885, %v6877
      %v6879 = vpop.f32.mrf.mxu0
      %6880 = vmatprep.mubr.bf16.mxu0 0
      %6881 = vmatmul.mubr.bf16.gmra.mxu0 %v5787
      %v6882 = vpop.f32.mrf.mxu0
      %v6883 = vadd.f32 %v5885, %v6882
      %v6884 = vpop.f32.mrf.mxu0
      %v6885 = vpop.f32.mrf.mxu0
      %v6886 = vadd.f32 %v5885, %v6885
      %v6887 = vpop.f32.mrf.mxu0
      %6888 = vmatprep.mubr.bf16.mxu0 0
      %6889 = vmatmul.mubr.bf16.gmra.mxu0 %v5788
      %v6890 = vpop.f32.mrf.mxu0
      %v6891 = vadd.f32 %v5885, %v6890
      %v6892 = vpop.f32.mrf.mxu0
      %v6893 = vpop.f32.mrf.mxu0
      %v6894 = vadd.f32 %v5885, %v6893
      %v6895 = vpop.f32.mrf.mxu0
      %6896 = vmatprep.mubr.bf16.mxu0 0
      %6897 = vmatmul.mubr.bf16.gmra.mxu0 %v5789
      %v6898 = vpop.f32.mrf.mxu0
      %v6899 = vadd.f32 %v5885, %v6898
      %v6900 = vpop.f32.mrf.mxu0
      %v6901 = vpop.f32.mrf.mxu0
      %v6902 = vadd.f32 %v5885, %v6901
      %v6903 = vpop.f32.mrf.mxu0
      %6904 = vmatprep.mubr.bf16.mxu0 0
      %6905 = vmatmul.mubr.bf16.gmra.mxu0 %v5790
      %v6906 = vpop.f32.mrf.mxu0
      %v6907 = vadd.f32 %v5885, %v6906
      %v6908 = vpop.f32.mrf.mxu0
      %v6909 = vpop.f32.mrf.mxu0
      %v6910 = vadd.f32 %v5885, %v6909
      %v6911 = vpop.f32.mrf.mxu0
      %6912 = vmatprep.mubr.bf16.mxu0 0
      %6913 = vmatmul.mubr.bf16.gmra.mxu0 %v5791
      %v6914 = vpop.f32.mrf.mxu0
      %v6915 = vadd.f32 %v5885, %v6914
      %v6916 = vpop.f32.mrf.mxu0
      %v6917 = vpop.f32.mrf.mxu0
      %v6918 = vadd.f32 %v5885, %v6917
      %v6919 = vpop.f32.mrf.mxu0
      %6920 = vdwg.mxu0
      %v6921 = vsub.f32 0.0, %v6216
      %v6922 = vsub.f32 0.0, %v6218
      %v6923 = vsub.f32 0.0, %v6409
      %v6924 = vsub.f32 0.0, %v6411
      %v6925 = vsub.f32 0.0, %v6602
      %v6926 = vsub.f32 0.0, %v6604
      %v6927 = vsub.f32 0.0, %v6795
      %v6928 = vsub.f32 0.0, %v6220
      %v6929 = vsub.f32 0.0, %v6222
      %v6930 = vsub.f32 0.0, %v6413
      %v6931 = vsub.f32 0.0, %v6415
      %v6932 = vsub.f32 0.0, %v6606
      %v6933 = vsub.f32 0.0, %v6608
      %v6934 = vsub.f32 0.0, %v6798
      %v6935 = vsub.f32 0.0, %v6226
      %v6936 = vsub.f32 0.0, %v6228
      %v6937 = vsub.f32 0.0, %v6419
      %v6938 = vsub.f32 0.0, %v6421
      %v6939 = vsub.f32 0.0, %v6612
      %v6940 = vsub.f32 0.0, %v6614
      %v6941 = vsub.f32 0.0, %v6803
      %v6942 = vsub.f32 0.0, %v6230
      %v6943 = vsub.f32 0.0, %v6232
      %v6944 = vsub.f32 0.0, %v6423
      %v6945 = vsub.f32 0.0, %v6425
      %v6946 = vsub.f32 0.0, %v6616
      %v6947 = vsub.f32 0.0, %v6618
      %v6948 = vsub.f32 0.0, %v6806
      %v6949 = vsub.f32 0.0, %v6236
      %v6950 = vsub.f32 0.0, %v6238
      %v6951 = vsub.f32 0.0, %v6429
      %v6952 = vsub.f32 0.0, %v6431
      %v6953 = vsub.f32 0.0, %v6622
      %v6954 = vsub.f32 0.0, %v6624
      %v6955 = vsub.f32 0.0, %v6811
      %v6956 = vsub.f32 0.0, %v6240
      %v6957 = vsub.f32 0.0, %v6242
      %v6958 = vsub.f32 0.0, %v6433
      %v6959 = vsub.f32 0.0, %v6435
      %v6960 = vsub.f32 0.0, %v6626
      %v6961 = vsub.f32 0.0, %v6628
      %v6962 = vsub.f32 0.0, %v6814
      %v6963 = vsub.f32 0.0, %v6246
      %v6964 = vsub.f32 0.0, %v6248
      %v6965 = vsub.f32 0.0, %v6439
      %v6966 = vsub.f32 0.0, %v6441
      %v6967 = vsub.f32 0.0, %v6632
      %v6968 = vsub.f32 0.0, %v6634
      %v6969 = vsub.f32 0.0, %v6819
      %v6970 = vsub.f32 0.0, %v6250
      %v6971 = vsub.f32 0.0, %v6252
      %v6972 = vsub.f32 0.0, %v6443
      %v6973 = vsub.f32 0.0, %v6445
      %v6974 = vsub.f32 0.0, %v6636
      %v6975 = vsub.f32 0.0, %v6638
      %v6976 = vsub.f32 0.0, %v6822
      %v6977 = vsub.f32 0.0, %v6256
      %v6978 = vsub.f32 0.0, %v6258
      %v6979 = vsub.f32 0.0, %v6449
      %v6980 = vsub.f32 0.0, %v6451
      %v6981 = vsub.f32 0.0, %v6642
      %v6982 = vsub.f32 0.0, %v6644
      %v6983 = vsub.f32 0.0, %v6827
      %v6984 = vsub.f32 0.0, %v6260
      %v6985 = vsub.f32 0.0, %v6262
      %v6986 = vsub.f32 0.0, %v6453
      %v6987 = vsub.f32 0.0, %v6455
      %v6988 = vsub.f32 0.0, %v6646
      %v6989 = vsub.f32 0.0, %v6648
      %v6990 = vsub.f32 0.0, %v6830
      %v6991 = vsub.f32 0.0, %v6266
      %v6992 = vsub.f32 0.0, %v6268
      %v6993 = vsub.f32 0.0, %v6459
      %v6994 = vsub.f32 0.0, %v6461
      %v6995 = vsub.f32 0.0, %v6652
      %v6996 = vsub.f32 0.0, %v6654
      %v6997 = vsub.f32 0.0, %v6835
      %v6998 = vsub.f32 0.0, %v6270
      %v6999 = vsub.f32 0.0, %v6272
      %v7000 = vsub.f32 0.0, %v6463
      %v7001 = vsub.f32 0.0, %v6465
      %v7002 = vsub.f32 0.0, %v6656
      %v7003 = vsub.f32 0.0, %v6658
      %v7004 = vsub.f32 0.0, %v6838
      %v7005 = vsub.f32 0.0, %v6276
      %v7006 = vsub.f32 0.0, %v6278
      %v7007 = vsub.f32 0.0, %v6469
      %v7008 = vsub.f32 0.0, %v6471
      %v7009 = vsub.f32 0.0, %v6662
      %v7010 = vsub.f32 0.0, %v6664
      %v7011 = vsub.f32 0.0, %v6843
      %v7012 = vsub.f32 0.0, %v6280
      %v7013 = vsub.f32 0.0, %v6282
      %v7014 = vsub.f32 0.0, %v6473
      %v7015 = vsub.f32 0.0, %v6475
      %v7016 = vsub.f32 0.0, %v6666
      %v7017 = vsub.f32 0.0, %v6668
      %v7018 = vsub.f32 0.0, %v6846
      %v7019 = vsub.f32 0.0, %v6286
      %v7020 = vsub.f32 0.0, %v6288
      %v7021 = vsub.f32 0.0, %v6479
      %v7022 = vsub.f32 0.0, %v6481
      %v7023 = vsub.f32 0.0, %v6672
      %v7024 = vsub.f32 0.0, %v6674
      %v7025 = vsub.f32 0.0, %v6851
      %v7026 = vsub.f32 0.0, %v6290
      %v7027 = vsub.f32 0.0, %v6292
      %v7028 = vsub.f32 0.0, %v6483
      %v7029 = vsub.f32 0.0, %v6485
      %v7030 = vsub.f32 0.0, %v6676
      %v7031 = vsub.f32 0.0, %v6678
      %v7032 = vsub.f32 0.0, %v6854
      %v7033 = vsub.f32 0.0, %v6296
      %v7034 = vsub.f32 0.0, %v6298
      %v7035 = vsub.f32 0.0, %v6489
      %v7036 = vsub.f32 0.0, %v6491
      %v7037 = vsub.f32 0.0, %v6682
      %v7038 = vsub.f32 0.0, %v6684
      %v7039 = vsub.f32 0.0, %v6859
      %v7040 = vsub.f32 0.0, %v6300
      %v7041 = vsub.f32 0.0, %v6302
      %v7042 = vsub.f32 0.0, %v6493
      %v7043 = vsub.f32 0.0, %v6495
      %v7044 = vsub.f32 0.0, %v6686
      %v7045 = vsub.f32 0.0, %v6688
      %v7046 = vsub.f32 0.0, %v6862
      %v7047 = vsub.f32 0.0, %v6306
      %v7048 = vsub.f32 0.0, %v6308
      %v7049 = vsub.f32 0.0, %v6499
      %v7050 = vsub.f32 0.0, %v6501
      %v7051 = vsub.f32 0.0, %v6692
      %v7052 = vsub.f32 0.0, %v6694
      %v7053 = vsub.f32 0.0, %v6867
      %v7054 = vsub.f32 0.0, %v6310
      %v7055 = vsub.f32 0.0, %v6312
      %v7056 = vsub.f32 0.0, %v6503
      %v7057 = vsub.f32 0.0, %v6505
      %v7058 = vsub.f32 0.0, %v6696
      %v7059 = vsub.f32 0.0, %v6698
      %v7060 = vsub.f32 0.0, %v6870
      %v7061 = vsub.f32 0.0, %v6316
      %v7062 = vsub.f32 0.0, %v6318
      %v7063 = vsub.f32 0.0, %v6509
      %v7064 = vsub.f32 0.0, %v6511
      %v7065 = vsub.f32 0.0, %v6702
      %v7066 = vsub.f32 0.0, %v6704
      %v7067 = vsub.f32 0.0, %v6875
      %v7068 = vsub.f32 0.0, %v6320
      %v7069 = vsub.f32 0.0, %v6322
      %v7070 = vsub.f32 0.0, %v6513
      %v7071 = vsub.f32 0.0, %v6515
      %v7072 = vsub.f32 0.0, %v6706
      %v7073 = vsub.f32 0.0, %v6708
      %v7074 = vsub.f32 0.0, %v6878
      %v7075 = vsub.f32 0.0, %v6326
      %v7076 = vsub.f32 0.0, %v6328
      %v7077 = vsub.f32 0.0, %v6519
      %v7078 = vsub.f32 0.0, %v6521
      %v7079 = vsub.f32 0.0, %v6712
      %v7080 = vsub.f32 0.0, %v6714
      %v7081 = vsub.f32 0.0, %v6883
      %v7082 = vsub.f32 0.0, %v6330
      %v7083 = vsub.f32 0.0, %v6332
      %v7084 = vsub.f32 0.0, %v6523
      %v7085 = vsub.f32 0.0, %v6525
      %v7086 = vsub.f32 0.0, %v6716
      %v7087 = vsub.f32 0.0, %v6718
      %v7088 = vsub.f32 0.0, %v6886
      %v7089 = vsub.f32 0.0, %v6336
      %v7090 = vsub.f32 0.0, %v6338
      %v7091 = vsub.f32 0.0, %v6529
      %v7092 = vsub.f32 0.0, %v6531
      %v7093 = vsub.f32 0.0, %v6722
      %v7094 = vsub.f32 0.0, %v6724
      %v7095 = vsub.f32 0.0, %v6891
      %v7096 = vsub.f32 0.0, %v6340
      %v7097 = vsub.f32 0.0, %v6342
      %v7098 = vsub.f32 0.0, %v6533
      %v7099 = vsub.f32 0.0, %v6535
      %v7100 = vsub.f32 0.0, %v6726
      %v7101 = vsub.f32 0.0, %v6728
      %v7102 = vsub.f32 0.0, %v6894
      %v7103 = vsub.f32 0.0, %v6346
      %v7104 = vsub.f32 0.0, %v6348
      %v7105 = vsub.f32 0.0, %v6539
      %v7106 = vsub.f32 0.0, %v6541
      %v7107 = vsub.f32 0.0, %v6732
      %v7108 = vsub.f32 0.0, %v6734
      %v7109 = vsub.f32 0.0, %v6899
      %v7110 = vsub.f32 0.0, %v6350
      %v7111 = vsub.f32 0.0, %v6352
      %v7112 = vsub.f32 0.0, %v6543
      %v7113 = vsub.f32 0.0, %v6545
      %v7114 = vsub.f32 0.0, %v6736
      %v7115 = vsub.f32 0.0, %v6738
      %v7116 = vsub.f32 0.0, %v6902
      %v7117 = vsub.f32 0.0, %v6356
      %v7118 = vsub.f32 0.0, %v6358
      %v7119 = vsub.f32 0.0, %v6549
      %v7120 = vsub.f32 0.0, %v6551
      %v7121 = vsub.f32 0.0, %v6742
      %v7122 = vsub.f32 0.0, %v6744
      %v7123 = vsub.f32 0.0, %v6907
      %v7124 = vsub.f32 0.0, %v6360
      %v7125 = vsub.f32 0.0, %v6362
      %v7126 = vsub.f32 0.0, %v6553
      %v7127 = vsub.f32 0.0, %v6555
      %v7128 = vsub.f32 0.0, %v6746
      %v7129 = vsub.f32 0.0, %v6748
      %v7130 = vsub.f32 0.0, %v6910
      %v7131 = vsub.f32 0.0, %v6366
      %v7132 = vsub.f32 0.0, %v6368
      %v7133 = vsub.f32 0.0, %v6559
      %v7134 = vsub.f32 0.0, %v6561
      %v7135 = vsub.f32 0.0, %v6752
      %v7136 = vsub.f32 0.0, %v6754
      %v7137 = vsub.f32 0.0, %v6915
      %v7138 = vsub.f32 0.0, %v6370
      %v7139 = vsub.f32 0.0, %v6372
      %v7140 = vsub.f32 0.0, %v6563
      %v7141 = vsub.f32 0.0, %v6565
      %v7142 = vsub.f32 0.0, %v6756
      %v7143 = vsub.f32 0.0, %v6758
      %v7144 = vsub.f32 0.0, %v6918
      %v7145 = vmul.f32 %v6921, 1.442695
      %v7146 = vpow.pop %v7145
      %v7147 = vmul.f32 %v6922, 1.442695
      %v7148 = vpow.pop %v7147
      %v7149 = vmul.f32 %v6923, 1.442695
      %v7150 = vpow.pop %v7149
      %v7151 = vmul.f32 %v6924, 1.442695
      %v7152 = vpow.pop %v7151
      %v7153 = vmul.f32 %v6925, 1.442695
      %v7154 = vpow.pop %v7153
      %v7155 = vmul.f32 %v6926, 1.442695
      %v7156 = vpow.pop %v7155
      %v7157 = vmul.f32 %v6927, 1.442695
      %v7158 = vpow.pop %v7157
      %v7159 = vmul.f32 %v6928, 1.442695
      %v7160 = vpow.pop %v7159
      %v7161 = vmul.f32 %v6929, 1.442695
      %v7162 = vpow.pop %v7161
      %v7163 = vmul.f32 %v6930, 1.442695
      %v7164 = vpow.pop %v7163
      %v7165 = vmul.f32 %v6931, 1.442695
      %v7166 = vpow.pop %v7165
      %v7167 = vmul.f32 %v6932, 1.442695
      %v7168 = vpow.pop %v7167
      %v7169 = vmul.f32 %v6933, 1.442695
      %v7170 = vpow.pop %v7169
      %v7171 = vmul.f32 %v6934, 1.442695
      %v7172 = vpow.pop %v7171
      %v7173 = vmul.f32 %v6935, 1.442695
      %v7174 = vpow.pop %v7173
      %v7175 = vmul.f32 %v6936, 1.442695
      %v7176 = vpow.pop %v7175
      %v7177 = vmul.f32 %v6937, 1.442695
      %v7178 = vpow.pop %v7177
      %v7179 = vmul.f32 %v6938, 1.442695
      %v7180 = vpow.pop %v7179
      %v7181 = vmul.f32 %v6939, 1.442695
      %v7182 = vpow.pop %v7181
      %v7183 = vmul.f32 %v6940, 1.442695
      %v7184 = vpow.pop %v7183
      %v7185 = vmul.f32 %v6941, 1.442695
      %v7186 = vpow.pop %v7185
      %v7187 = vmul.f32 %v6942, 1.442695
      %v7188 = vpow.pop %v7187
      %v7189 = vmul.f32 %v6943, 1.442695
      %v7190 = vpow.pop %v7189
      %v7191 = vmul.f32 %v6944, 1.442695
      %v7192 = vpow.pop %v7191
      %v7193 = vmul.f32 %v6945, 1.442695
      %v7194 = vpow.pop %v7193
      %v7195 = vmul.f32 %v6946, 1.442695
      %v7196 = vpow.pop %v7195
      %v7197 = vmul.f32 %v6947, 1.442695
      %v7198 = vpow.pop %v7197
      %v7199 = vmul.f32 %v6948, 1.442695
      %v7200 = vpow.pop %v7199
      %v7201 = vmul.f32 %v6949, 1.442695
      %v7202 = vpow.pop %v7201
      %v7203 = vmul.f32 %v6950, 1.442695
      %v7204 = vpow.pop %v7203
      %v7205 = vmul.f32 %v6951, 1.442695
      %v7206 = vpow.pop %v7205
      %v7207 = vmul.f32 %v6952, 1.442695
      %v7208 = vpow.pop %v7207
      %v7209 = vmul.f32 %v6953, 1.442695
      %v7210 = vpow.pop %v7209
      %v7211 = vmul.f32 %v6954, 1.442695
      %v7212 = vpow.pop %v7211
      %v7213 = vmul.f32 %v6955, 1.442695
      %v7214 = vpow.pop %v7213
      %v7215 = vmul.f32 %v6956, 1.442695
      %v7216 = vpow.pop %v7215
      %v7217 = vmul.f32 %v6957, 1.442695
      %v7218 = vpow.pop %v7217
      %v7219 = vmul.f32 %v6958, 1.442695
      %v7220 = vpow.pop %v7219
      %v7221 = vmul.f32 %v6959, 1.442695
      %v7222 = vpow.pop %v7221
      %v7223 = vmul.f32 %v6960, 1.442695
      %v7224 = vpow.pop %v7223
      %v7225 = vmul.f32 %v6961, 1.442695
      %v7226 = vpow.pop %v7225
      %v7227 = vmul.f32 %v6962, 1.442695
      %v7228 = vpow.pop %v7227
      %v7229 = vmul.f32 %v6963, 1.442695
      %v7230 = vpow.pop %v7229
      %v7231 = vmul.f32 %v6964, 1.442695
      %v7232 = vpow.pop %v7231
      %v7233 = vmul.f32 %v6965, 1.442695
      %v7234 = vpow.pop %v7233
      %v7235 = vmul.f32 %v6966, 1.442695
      %v7236 = vpow.pop %v7235
      %v7237 = vmul.f32 %v6967, 1.442695
      %v7238 = vpow.pop %v7237
      %v7239 = vmul.f32 %v6968, 1.442695
      %v7240 = vpow.pop %v7239
      %v7241 = vmul.f32 %v6969, 1.442695
      %v7242 = vpow.pop %v7241
      %v7243 = vmul.f32 %v6970, 1.442695
      %v7244 = vpow.pop %v7243
      %v7245 = vmul.f32 %v6971, 1.442695
      %v7246 = vpow.pop %v7245
      %v7247 = vmul.f32 %v6972, 1.442695
      %v7248 = vpow.pop %v7247
      %v7249 = vmul.f32 %v6973, 1.442695
      %v7250 = vpow.pop %v7249
      %v7251 = vmul.f32 %v6974, 1.442695
      %v7252 = vpow.pop %v7251
      %v7253 = vmul.f32 %v6975, 1.442695
      %v7254 = vpow.pop %v7253
      %v7255 = vmul.f32 %v6976, 1.442695
      %v7256 = vpow.pop %v7255
      %v7257 = vmul.f32 %v6977, 1.442695
      %v7258 = vpow.pop %v7257
      %v7259 = vmul.f32 %v6978, 1.442695
      %v7260 = vpow.pop %v7259
      %v7261 = vmul.f32 %v6979, 1.442695
      %v7262 = vpow.pop %v7261
      %v7263 = vmul.f32 %v6980, 1.442695
      %v7264 = vpow.pop %v7263
      %v7265 = vmul.f32 %v6981, 1.442695
      %v7266 = vpow.pop %v7265
      %v7267 = vmul.f32 %v6982, 1.442695
      %v7268 = vpow.pop %v7267
      %v7269 = vmul.f32 %v6983, 1.442695
      %v7270 = vpow.pop %v7269
      %v7271 = vmul.f32 %v6984, 1.442695
      %v7272 = vpow.pop %v7271
      %v7273 = vmul.f32 %v6985, 1.442695
      %v7274 = vpow.pop %v7273
      %v7275 = vmul.f32 %v6986, 1.442695
      %v7276 = vpow.pop %v7275
      %v7277 = vmul.f32 %v6987, 1.442695
      %v7278 = vpow.pop %v7277
      %v7279 = vmul.f32 %v6988, 1.442695
      %v7280 = vpow.pop %v7279
      %v7281 = vmul.f32 %v6989, 1.442695
      %v7282 = vpow.pop %v7281
      %v7283 = vmul.f32 %v6990, 1.442695
      %v7284 = vpow.pop %v7283
      %v7285 = vmul.f32 %v6991, 1.442695
      %v7286 = vpow.pop %v7285
      %v7287 = vmul.f32 %v6992, 1.442695
      %v7288 = vpow.pop %v7287
      %v7289 = vmul.f32 %v6993, 1.442695
      %v7290 = vpow.pop %v7289
      %v7291 = vmul.f32 %v6994, 1.442695
      %v7292 = vpow.pop %v7291
      %v7293 = vmul.f32 %v6995, 1.442695
      %v7294 = vpow.pop %v7293
      %v7295 = vmul.f32 %v6996, 1.442695
      %v7296 = vpow.pop %v7295
      %v7297 = vmul.f32 %v6997, 1.442695
      %v7298 = vpow.pop %v7297
      %v7299 = vmul.f32 %v6998, 1.442695
      %v7300 = vpow.pop %v7299
      %v7301 = vmul.f32 %v6999, 1.442695
      %v7302 = vpow.pop %v7301
      %v7303 = vmul.f32 %v7000, 1.442695
      %v7304 = vpow.pop %v7303
      %v7305 = vmul.f32 %v7001, 1.442695
      %v7306 = vpow.pop %v7305
      %v7307 = vmul.f32 %v7002, 1.442695
      %v7308 = vpow.pop %v7307
      %v7309 = vmul.f32 %v7003, 1.442695
      %v7310 = vpow.pop %v7309
      %v7311 = vmul.f32 %v7004, 1.442695
      %v7312 = vpow.pop %v7311
      %v7313 = vmul.f32 %v7005, 1.442695
      %v7314 = vpow.pop %v7313
      %v7315 = vmul.f32 %v7006, 1.442695
      %v7316 = vpow.pop %v7315
      %v7317 = vmul.f32 %v7007, 1.442695
      %v7318 = vpow.pop %v7317
      %v7319 = vmul.f32 %v7008, 1.442695
      %v7320 = vpow.pop %v7319
      %v7321 = vmul.f32 %v7009, 1.442695
      %v7322 = vpow.pop %v7321
      %v7323 = vmul.f32 %v7010, 1.442695
      %v7324 = vpow.pop %v7323
      %v7325 = vmul.f32 %v7011, 1.442695
      %v7326 = vpow.pop %v7325
      %v7327 = vmul.f32 %v7012, 1.442695
      %v7328 = vpow.pop %v7327
      %v7329 = vmul.f32 %v7013, 1.442695
      %v7330 = vpow.pop %v7329
      %v7331 = vmul.f32 %v7014, 1.442695
      %v7332 = vpow.pop %v7331
      %v7333 = vmul.f32 %v7015, 1.442695
      %v7334 = vpow.pop %v7333
      %v7335 = vmul.f32 %v7016, 1.442695
      %v7336 = vpow.pop %v7335
      %v7337 = vmul.f32 %v7017, 1.442695
      %v7338 = vpow.pop %v7337
      %v7339 = vmul.f32 %v7018, 1.442695
      %v7340 = vpow.pop %v7339
      %v7341 = vmul.f32 %v7019, 1.442695
      %v7342 = vpow.pop %v7341
      %v7343 = vmul.f32 %v7020, 1.442695
      %v7344 = vpow.pop %v7343
      %v7345 = vmul.f32 %v7021, 1.442695
      %v7346 = vpow.pop %v7345
      %v7347 = vmul.f32 %v7022, 1.442695
      %v7348 = vpow.pop %v7347
      %v7349 = vmul.f32 %v7023, 1.442695
      %v7350 = vpow.pop %v7349
      %v7351 = vmul.f32 %v7024, 1.442695
      %v7352 = vpow.pop %v7351
      %v7353 = vmul.f32 %v7025, 1.442695
      %v7354 = vpow.pop %v7353
      %v7355 = vmul.f32 %v7026, 1.442695
      %v7356 = vpow.pop %v7355
      %v7357 = vmul.f32 %v7027, 1.442695
      %v7358 = vpow.pop %v7357
      %v7359 = vmul.f32 %v7028, 1.442695
      %v7360 = vpow.pop %v7359
      %v7361 = vmul.f32 %v7029, 1.442695
      %v7362 = vpow.pop %v7361
      %v7363 = vmul.f32 %v7030, 1.442695
      %v7364 = vpow.pop %v7363
      %v7365 = vmul.f32 %v7031, 1.442695
      %v7366 = vpow.pop %v7365
      %v7367 = vmul.f32 %v7032, 1.442695
      %v7368 = vpow.pop %v7367
      %v7369 = vmul.f32 %v7033, 1.442695
      %v7370 = vpow.pop %v7369
      %v7371 = vmul.f32 %v7034, 1.442695
      %v7372 = vpow.pop %v7371
      %v7373 = vmul.f32 %v7035, 1.442695
      %v7374 = vpow.pop %v7373
      %v7375 = vmul.f32 %v7036, 1.442695
      %v7376 = vpow.pop %v7375
      %v7377 = vmul.f32 %v7037, 1.442695
      %v7378 = vpow.pop %v7377
      %v7379 = vmul.f32 %v7038, 1.442695
      %v7380 = vpow.pop %v7379
      %v7381 = vmul.f32 %v7039, 1.442695
      %v7382 = vpow.pop %v7381
      %v7383 = vmul.f32 %v7040, 1.442695
      %v7384 = vpow.pop %v7383
      %v7385 = vmul.f32 %v7041, 1.442695
      %v7386 = vpow.pop %v7385
      %v7387 = vmul.f32 %v7042, 1.442695
      %v7388 = vpow.pop %v7387
      %v7389 = vmul.f32 %v7043, 1.442695
      %v7390 = vpow.pop %v7389
      %v7391 = vmul.f32 %v7044, 1.442695
      %v7392 = vpow.pop %v7391
      %v7393 = vmul.f32 %v7045, 1.442695
      %v7394 = vpow.pop %v7393
      %v7395 = vmul.f32 %v7046, 1.442695
      %v7396 = vpow.pop %v7395
      %v7397 = vmul.f32 %v7047, 1.442695
      %v7398 = vpow.pop %v7397
      %v7399 = vmul.f32 %v7048, 1.442695
      %v7400 = vpow.pop %v7399
      %v7401 = vmul.f32 %v7049, 1.442695
      %v7402 = vpow.pop %v7401
      %v7403 = vmul.f32 %v7050, 1.442695
      %v7404 = vpow.pop %v7403
      %v7405 = vmul.f32 %v7051, 1.442695
      %v7406 = vpow.pop %v7405
      %v7407 = vmul.f32 %v7052, 1.442695
      %v7408 = vpow.pop %v7407
      %v7409 = vmul.f32 %v7053, 1.442695
      %v7410 = vpow.pop %v7409
      %v7411 = vmul.f32 %v7054, 1.442695
      %v7412 = vpow.pop %v7411
      %v7413 = vmul.f32 %v7055, 1.442695
      %v7414 = vpow.pop %v7413
      %v7415 = vmul.f32 %v7056, 1.442695
      %v7416 = vpow.pop %v7415
      %v7417 = vmul.f32 %v7057, 1.442695
      %v7418 = vpow.pop %v7417
      %v7419 = vmul.f32 %v7058, 1.442695
      %v7420 = vpow.pop %v7419
      %v7421 = vmul.f32 %v7059, 1.442695
      %v7422 = vpow.pop %v7421
      %v7423 = vmul.f32 %v7060, 1.442695
      %v7424 = vpow.pop %v7423
      %v7425 = vmul.f32 %v7061, 1.442695
      %v7426 = vpow.pop %v7425
      %v7427 = vmul.f32 %v7062, 1.442695
      %v7428 = vpow.pop %v7427
      %v7429 = vmul.f32 %v7063, 1.442695
      %v7430 = vpow.pop %v7429
      %v7431 = vmul.f32 %v7064, 1.442695
      %v7432 = vpow.pop %v7431
      %v7433 = vmul.f32 %v7065, 1.442695
      %v7434 = vpow.pop %v7433
      %v7435 = vmul.f32 %v7066, 1.442695
      %v7436 = vpow.pop %v7435
      %v7437 = vmul.f32 %v7067, 1.442695
      %v7438 = vpow.pop %v7437
      %v7439 = vmul.f32 %v7068, 1.442695
      %v7440 = vpow.pop %v7439
      %v7441 = vmul.f32 %v7069, 1.442695
      %v7442 = vpow.pop %v7441
      %v7443 = vmul.f32 %v7070, 1.442695
      %v7444 = vpow.pop %v7443
      %v7445 = vmul.f32 %v7071, 1.442695
      %v7446 = vpow.pop %v7445
      %v7447 = vmul.f32 %v7072, 1.442695
      %v7448 = vpow.pop %v7447
      %v7449 = vmul.f32 %v7073, 1.442695
      %v7450 = vpow.pop %v7449
      %v7451 = vmul.f32 %v7074, 1.442695
      %v7452 = vpow.pop %v7451
      %v7453 = vmul.f32 %v7075, 1.442695
      %v7454 = vpow.pop %v7453
      %v7455 = vmul.f32 %v7076, 1.442695
      %v7456 = vpow.pop %v7455
      %v7457 = vmul.f32 %v7077, 1.442695
      %v7458 = vpow.pop %v7457
      %v7459 = vmul.f32 %v7078, 1.442695
      %v7460 = vpow.pop %v7459
      %v7461 = vmul.f32 %v7079, 1.442695
      %v7462 = vpow.pop %v7461
      %v7463 = vmul.f32 %v7080, 1.442695
      %v7464 = vpow.pop %v7463
      %v7465 = vmul.f32 %v7081, 1.442695
      %v7466 = vpow.pop %v7465
      %v7467 = vmul.f32 %v7082, 1.442695
      %v7468 = vpow.pop %v7467
      %v7469 = vmul.f32 %v7083, 1.442695
      %v7470 = vpow.pop %v7469
      %v7471 = vmul.f32 %v7084, 1.442695
      %v7472 = vpow.pop %v7471
      %v7473 = vmul.f32 %v7085, 1.442695
      %v7474 = vpow.pop %v7473
      %v7475 = vmul.f32 %v7086, 1.442695
      %v7476 = vpow.pop %v7475
      %v7477 = vmul.f32 %v7087, 1.442695
      %v7478 = vpow.pop %v7477
      %v7479 = vmul.f32 %v7088, 1.442695
      %v7480 = vpow.pop %v7479
      %v7481 = vmul.f32 %v7089, 1.442695
      %v7482 = vpow.pop %v7481
      %v7483 = vmul.f32 %v7090, 1.442695
      %v7484 = vpow.pop %v7483
      %v7485 = vmul.f32 %v7091, 1.442695
      %v7486 = vpow.pop %v7485
      %v7487 = vmul.f32 %v7092, 1.442695
      %v7488 = vpow.pop %v7487
      %v7489 = vmul.f32 %v7093, 1.442695
      %v7490 = vpow.pop %v7489
      %v7491 = vmul.f32 %v7094, 1.442695
      %v7492 = vpow.pop %v7491
      %v7493 = vmul.f32 %v7095, 1.442695
      %v7494 = vpow.pop %v7493
      %v7495 = vmul.f32 %v7096, 1.442695
      %v7496 = vpow.pop %v7495
      %v7497 = vmul.f32 %v7097, 1.442695
      %v7498 = vpow.pop %v7497
      %v7499 = vmul.f32 %v7098, 1.442695
      %v7500 = vpow.pop %v7499
      %v7501 = vmul.f32 %v7099, 1.442695
      %v7502 = vpow.pop %v7501
      %v7503 = vmul.f32 %v7100, 1.442695
      %v7504 = vpow.pop %v7503
      %v7505 = vmul.f32 %v7101, 1.442695
      %v7506 = vpow.pop %v7505
      %v7507 = vmul.f32 %v7102, 1.442695
      %v7508 = vpow.pop %v7507
      %v7509 = vmul.f32 %v7103, 1.442695
      %v7510 = vpow.pop %v7509
      %v7511 = vmul.f32 %v7104, 1.442695
      %v7512 = vpow.pop %v7511
      %v7513 = vmul.f32 %v7105, 1.442695
      %v7514 = vpow.pop %v7513
      %v7515 = vmul.f32 %v7106, 1.442695
      %v7516 = vpow.pop %v7515
      %v7517 = vmul.f32 %v7107, 1.442695
      %v7518 = vpow.pop %v7517
      %v7519 = vmul.f32 %v7108, 1.442695
      %v7520 = vpow.pop %v7519
      %v7521 = vmul.f32 %v7109, 1.442695
      %v7522 = vpow.pop %v7521
      %v7523 = vmul.f32 %v7110, 1.442695
      %v7524 = vpow.pop %v7523
      %v7525 = vmul.f32 %v7111, 1.442695
      %v7526 = vpow.pop %v7525
      %v7527 = vmul.f32 %v7112, 1.442695
      %v7528 = vpow.pop %v7527
      %v7529 = vmul.f32 %v7113, 1.442695
      %v7530 = vpow.pop %v7529
      %v7531 = vmul.f32 %v7114, 1.442695
      %v7532 = vpow.pop %v7531
      %v7533 = vmul.f32 %v7115, 1.442695
      %v7534 = vpow.pop %v7533
      %v7535 = vmul.f32 %v7116, 1.442695
      %v7536 = vpow.pop %v7535
      %v7537 = vmul.f32 %v7117, 1.442695
      %v7538 = vpow.pop %v7537
      %v7539 = vmul.f32 %v7118, 1.442695
      %v7540 = vpow.pop %v7539
      %v7541 = vmul.f32 %v7119, 1.442695
      %v7542 = vpow.pop %v7541
      %v7543 = vmul.f32 %v7120, 1.442695
      %v7544 = vpow.pop %v7543
      %v7545 = vmul.f32 %v7121, 1.442695
      %v7546 = vpow.pop %v7545
      %v7547 = vmul.f32 %v7122, 1.442695
      %v7548 = vpow.pop %v7547
      %v7549 = vmul.f32 %v7123, 1.442695
      %v7550 = vpow.pop %v7549
      %v7551 = vmul.f32 %v7124, 1.442695
      %v7552 = vpow.pop %v7551
      %v7553 = vmul.f32 %v7125, 1.442695
      %v7554 = vpow.pop %v7553
      %v7555 = vmul.f32 %v7126, 1.442695
      %v7556 = vpow.pop %v7555
      %v7557 = vmul.f32 %v7127, 1.442695
      %v7558 = vpow.pop %v7557
      %v7559 = vmul.f32 %v7128, 1.442695
      %v7560 = vpow.pop %v7559
      %v7561 = vmul.f32 %v7129, 1.442695
      %v7562 = vpow.pop %v7561
      %v7563 = vmul.f32 %v7130, 1.442695
      %v7564 = vpow.pop %v7563
      %v7565 = vmul.f32 %v7131, 1.442695
      %v7566 = vpow.pop %v7565
      %v7567 = vmul.f32 %v7132, 1.442695
      %v7568 = vpow.pop %v7567
      %v7569 = vmul.f32 %v7133, 1.442695
      %v7570 = vpow.pop %v7569
      %v7571 = vmul.f32 %v7134, 1.442695
      %v7572 = vpow.pop %v7571
      %v7573 = vmul.f32 %v7135, 1.442695
      %v7574 = vpow.pop %v7573
      %v7575 = vmul.f32 %v7136, 1.442695
      %v7576 = vpow.pop %v7575
      %v7577 = vmul.f32 %v7137, 1.442695
      %v7578 = vpow.pop %v7577
      %v7579 = vmul.f32 %v7138, 1.442695
      %v7580 = vpow.pop %v7579
      %v7581 = vmul.f32 %v7139, 1.442695
      %v7582 = vpow.pop %v7581
      %v7583 = vmul.f32 %v7140, 1.442695
      %v7584 = vpow.pop %v7583
      %v7585 = vmul.f32 %v7141, 1.442695
      %v7586 = vpow.pop %v7585
      %v7587 = vmul.f32 %v7142, 1.442695
      %v7588 = vpow.pop %v7587
      %v7589 = vmul.f32 %v7143, 1.442695
      %v7590 = vpow.pop %v7589
      %v7591 = vmul.f32 %v7144, 1.442695
      %v7592 = vpow.pop %v7591
      %v7593 = vadd.f32 %v7146, 1.0
      %v7594 = vadd.f32 %v7148, 1.0
      %v7595 = vadd.f32 %v7150, 1.0
      %v7596 = vadd.f32 %v7152, 1.0
      %v7597 = vadd.f32 %v7154, 1.0
      %v7598 = vadd.f32 %v7156, 1.0
      %v7599 = vadd.f32 %v7158, 1.0
      %v7600 = vadd.f32 %v7160, 1.0
      %v7601 = vadd.f32 %v7162, 1.0
      %v7602 = vadd.f32 %v7164, 1.0
      %v7603 = vadd.f32 %v7166, 1.0
      %v7604 = vadd.f32 %v7168, 1.0
      %v7605 = vadd.f32 %v7170, 1.0
      %v7606 = vadd.f32 %v7172, 1.0
      %v7607 = vadd.f32 %v7174, 1.0
      %v7608 = vadd.f32 %v7176, 1.0
      %v7609 = vadd.f32 %v7178, 1.0
      %v7610 = vadd.f32 %v7180, 1.0
      %v7611 = vadd.f32 %v7182, 1.0
      %v7612 = vadd.f32 %v7184, 1.0
      %v7613 = vadd.f32 %v7186, 1.0
      %v7614 = vadd.f32 %v7188, 1.0
      %v7615 = vadd.f32 %v7190, 1.0
      %v7616 = vadd.f32 %v7192, 1.0
      %v7617 = vadd.f32 %v7194, 1.0
      %v7618 = vadd.f32 %v7196, 1.0
      %v7619 = vadd.f32 %v7198, 1.0
      %v7620 = vadd.f32 %v7200, 1.0
      %v7621 = vadd.f32 %v7202, 1.0
      %v7622 = vadd.f32 %v7204, 1.0
      %v7623 = vadd.f32 %v7206, 1.0
      %v7624 = vadd.f32 %v7208, 1.0
      %v7625 = vadd.f32 %v7210, 1.0
      %v7626 = vadd.f32 %v7212, 1.0
      %v7627 = vadd.f32 %v7214, 1.0
      %v7628 = vadd.f32 %v7216, 1.0
      %v7629 = vadd.f32 %v7218, 1.0
      %v7630 = vadd.f32 %v7220, 1.0
      %v7631 = vadd.f32 %v7222, 1.0
      %v7632 = vadd.f32 %v7224, 1.0
      %v7633 = vadd.f32 %v7226, 1.0
      %v7634 = vadd.f32 %v7228, 1.0
      %v7635 = vadd.f32 %v7230, 1.0
      %v7636 = vadd.f32 %v7232, 1.0
      %v7637 = vadd.f32 %v7234, 1.0
      %v7638 = vadd.f32 %v7236, 1.0
      %v7639 = vadd.f32 %v7238, 1.0
      %v7640 = vadd.f32 %v7240, 1.0
      %v7641 = vadd.f32 %v7242, 1.0
      %v7642 = vadd.f32 %v7244, 1.0
      %v7643 = vadd.f32 %v7246, 1.0
      %v7644 = vadd.f32 %v7248, 1.0
      %v7645 = vadd.f32 %v7250, 1.0
      %v7646 = vadd.f32 %v7252, 1.0
      %v7647 = vadd.f32 %v7254, 1.0
      %v7648 = vadd.f32 %v7256, 1.0
      %v7649 = vadd.f32 %v7258, 1.0
      %v7650 = vadd.f32 %v7260, 1.0
      %v7651 = vadd.f32 %v7262, 1.0
      %v7652 = vadd.f32 %v7264, 1.0
      %v7653 = vadd.f32 %v7266, 1.0
      %v7654 = vadd.f32 %v7268, 1.0
      %v7655 = vadd.f32 %v7270, 1.0
      %v7656 = vadd.f32 %v7272, 1.0
      %v7657 = vadd.f32 %v7274, 1.0
      %v7658 = vadd.f32 %v7276, 1.0
      %v7659 = vadd.f32 %v7278, 1.0
      %v7660 = vadd.f32 %v7280, 1.0
      %v7661 = vadd.f32 %v7282, 1.0
      %v7662 = vadd.f32 %v7284, 1.0
      %v7663 = vadd.f32 %v7286, 1.0
      %v7664 = vadd.f32 %v7288, 1.0
      %v7665 = vadd.f32 %v7290, 1.0
      %v7666 = vadd.f32 %v7292, 1.0
      %v7667 = vadd.f32 %v7294, 1.0
      %v7668 = vadd.f32 %v7296, 1.0
      %v7669 = vadd.f32 %v7298, 1.0
      %v7670 = vadd.f32 %v7300, 1.0
      %v7671 = vadd.f32 %v7302, 1.0
      %v7672 = vadd.f32 %v7304, 1.0
      %v7673 = vadd.f32 %v7306, 1.0
      %v7674 = vadd.f32 %v7308, 1.0
      %v7675 = vadd.f32 %v7310, 1.0
      %v7676 = vadd.f32 %v7312, 1.0
      %v7677 = vadd.f32 %v7314, 1.0
      %v7678 = vadd.f32 %v7316, 1.0
      %v7679 = vadd.f32 %v7318, 1.0
      %v7680 = vadd.f32 %v7320, 1.0
      %v7681 = vadd.f32 %v7322, 1.0
      %v7682 = vadd.f32 %v7324, 1.0
      %v7683 = vadd.f32 %v7326, 1.0
      %v7684 = vadd.f32 %v7328, 1.0
      %v7685 = vadd.f32 %v7330, 1.0
      %v7686 = vadd.f32 %v7332, 1.0
      %v7687 = vadd.f32 %v7334, 1.0
      %v7688 = vadd.f32 %v7336, 1.0
      %v7689 = vadd.f32 %v7338, 1.0
      %v7690 = vadd.f32 %v7340, 1.0
      %v7691 = vadd.f32 %v7342, 1.0
      %v7692 = vadd.f32 %v7344, 1.0
      %v7693 = vadd.f32 %v7346, 1.0
      %v7694 = vadd.f32 %v7348, 1.0
      %v7695 = vadd.f32 %v7350, 1.0
      %v7696 = vadd.f32 %v7352, 1.0
      %v7697 = vadd.f32 %v7354, 1.0
      %v7698 = vadd.f32 %v7356, 1.0
      %v7699 = vadd.f32 %v7358, 1.0
      %v7700 = vadd.f32 %v7360, 1.0
      %v7701 = vadd.f32 %v7362, 1.0
      %v7702 = vadd.f32 %v7364, 1.0
      %v7703 = vadd.f32 %v7366, 1.0
      %v7704 = vadd.f32 %v7368, 1.0
      %v7705 = vadd.f32 %v7370, 1.0
      %v7706 = vadd.f32 %v7372, 1.0
      %v7707 = vadd.f32 %v7374, 1.0
      %v7708 = vadd.f32 %v7376, 1.0
      %v7709 = vadd.f32 %v7378, 1.0
      %v7710 = vadd.f32 %v7380, 1.0
      %v7711 = vadd.f32 %v7382, 1.0
      %v7712 = vadd.f32 %v7384, 1.0
      %v7713 = vadd.f32 %v7386, 1.0
      %v7714 = vadd.f32 %v7388, 1.0
      %v7715 = vadd.f32 %v7390, 1.0
      %v7716 = vadd.f32 %v7392, 1.0
      %v7717 = vadd.f32 %v7394, 1.0
      %v7718 = vadd.f32 %v7396, 1.0
      %v7719 = vadd.f32 %v7398, 1.0
      %v7720 = vadd.f32 %v7400, 1.0
      %v7721 = vadd.f32 %v7402, 1.0
      %v7722 = vadd.f32 %v7404, 1.0
      %v7723 = vadd.f32 %v7406, 1.0
      %v7724 = vadd.f32 %v7408, 1.0
      %v7725 = vadd.f32 %v7410, 1.0
      %v7726 = vadd.f32 %v7412, 1.0
      %v7727 = vadd.f32 %v7414, 1.0
      %v7728 = vadd.f32 %v7416, 1.0
      %v7729 = vadd.f32 %v7418, 1.0
      %v7730 = vadd.f32 %v7420, 1.0
      %v7731 = vadd.f32 %v7422, 1.0
      %v7732 = vadd.f32 %v7424, 1.0
      %v7733 = vadd.f32 %v7426, 1.0
      %v7734 = vadd.f32 %v7428, 1.0
      %v7735 = vadd.f32 %v7430, 1.0
      %v7736 = vadd.f32 %v7432, 1.0
      %v7737 = vadd.f32 %v7434, 1.0
      %v7738 = vadd.f32 %v7436, 1.0
      %v7739 = vadd.f32 %v7438, 1.0
      %v7740 = vadd.f32 %v7440, 1.0
      %v7741 = vadd.f32 %v7442, 1.0
      %v7742 = vadd.f32 %v7444, 1.0
      %v7743 = vadd.f32 %v7446, 1.0
      %v7744 = vadd.f32 %v7448, 1.0
      %v7745 = vadd.f32 %v7450, 1.0
      %v7746 = vadd.f32 %v7452, 1.0
      %v7747 = vadd.f32 %v7454, 1.0
      %v7748 = vadd.f32 %v7456, 1.0
      %v7749 = vadd.f32 %v7458, 1.0
      %v7750 = vadd.f32 %v7460, 1.0
      %v7751 = vadd.f32 %v7462, 1.0
      %v7752 = vadd.f32 %v7464, 1.0
      %v7753 = vadd.f32 %v7466, 1.0
      %v7754 = vadd.f32 %v7468, 1.0
      %v7755 = vadd.f32 %v7470, 1.0
      %v7756 = vadd.f32 %v7472, 1.0
      %v7757 = vadd.f32 %v7474, 1.0
      %v7758 = vadd.f32 %v7476, 1.0
      %v7759 = vadd.f32 %v7478, 1.0
      %v7760 = vadd.f32 %v7480, 1.0
      %v7761 = vadd.f32 %v7482, 1.0
      %v7762 = vadd.f32 %v7484, 1.0
      %v7763 = vadd.f32 %v7486, 1.0
      %v7764 = vadd.f32 %v7488, 1.0
      %v7765 = vadd.f32 %v7490, 1.0
      %v7766 = vadd.f32 %v7492, 1.0
      %v7767 = vadd.f32 %v7494, 1.0
      %v7768 = vadd.f32 %v7496, 1.0
      %v7769 = vadd.f32 %v7498, 1.0
      %v7770 = vadd.f32 %v7500, 1.0
      %v7771 = vadd.f32 %v7502, 1.0
      %v7772 = vadd.f32 %v7504, 1.0
      %v7773 = vadd.f32 %v7506, 1.0
      %v7774 = vadd.f32 %v7508, 1.0
      %v7775 = vadd.f32 %v7510, 1.0
      %v7776 = vadd.f32 %v7512, 1.0
      %v7777 = vadd.f32 %v7514, 1.0
      %v7778 = vadd.f32 %v7516, 1.0
      %v7779 = vadd.f32 %v7518, 1.0
      %v7780 = vadd.f32 %v7520, 1.0
      %v7781 = vadd.f32 %v7522, 1.0
      %v7782 = vadd.f32 %v7524, 1.0
      %v7783 = vadd.f32 %v7526, 1.0
      %v7784 = vadd.f32 %v7528, 1.0
      %v7785 = vadd.f32 %v7530, 1.0
      %v7786 = vadd.f32 %v7532, 1.0
      %v7787 = vadd.f32 %v7534, 1.0
      %v7788 = vadd.f32 %v7536, 1.0
      %v7789 = vadd.f32 %v7538, 1.0
      %v7790 = vadd.f32 %v7540, 1.0
      %v7791 = vadd.f32 %v7542, 1.0
      %v7792 = vadd.f32 %v7544, 1.0
      %v7793 = vadd.f32 %v7546, 1.0
      %v7794 = vadd.f32 %v7548, 1.0
      %v7795 = vadd.f32 %v7550, 1.0
      %v7796 = vadd.f32 %v7552, 1.0
      %v7797 = vadd.f32 %v7554, 1.0
      %v7798 = vadd.f32 %v7556, 1.0
      %v7799 = vadd.f32 %v7558, 1.0
      %v7800 = vadd.f32 %v7560, 1.0
      %v7801 = vadd.f32 %v7562, 1.0
      %v7802 = vadd.f32 %v7564, 1.0
      %v7803 = vadd.f32 %v7566, 1.0
      %v7804 = vadd.f32 %v7568, 1.0
      %v7805 = vadd.f32 %v7570, 1.0
      %v7806 = vadd.f32 %v7572, 1.0
      %v7807 = vadd.f32 %v7574, 1.0
      %v7808 = vadd.f32 %v7576, 1.0
      %v7809 = vadd.f32 %v7578, 1.0
      %v7810 = vadd.f32 %v7580, 1.0
      %v7811 = vadd.f32 %v7582, 1.0
      %v7812 = vadd.f32 %v7584, 1.0
      %v7813 = vadd.f32 %v7586, 1.0
      %v7814 = vadd.f32 %v7588, 1.0
      %v7815 = vadd.f32 %v7590, 1.0
      %v7816 = vadd.f32 %v7592, 1.0
      %v7817 = vrcp.pop %v7593
      %v7818 = vrcp.pop %v7594
      %v7819 = vrcp.pop %v7595
      %v7820 = vrcp.pop %v7596
      %v7821 = vrcp.pop %v7597
      %v7822 = vrcp.pop %v7598
      %v7823 = vrcp.pop %v7599
      %v7824 = vrcp.pop %v7600
      %v7825 = vrcp.pop %v7601
      %v7826 = vrcp.pop %v7602
      %v7827 = vrcp.pop %v7603
      %v7828 = vrcp.pop %v7604
      %v7829 = vrcp.pop %v7605
      %v7830 = vrcp.pop %v7606
      %v7831 = vrcp.pop %v7607
      %v7832 = vrcp.pop %v7608
      %v7833 = vrcp.pop %v7609
      %v7834 = vrcp.pop %v7610
      %v7835 = vrcp.pop %v7611
      %v7836 = vrcp.pop %v7612
      %v7837 = vrcp.pop %v7613
      %v7838 = vrcp.pop %v7614
      %v7839 = vrcp.pop %v7615
      %v7840 = vrcp.pop %v7616
      %v7841 = vrcp.pop %v7617
      %v7842 = vrcp.pop %v7618
      %v7843 = vrcp.pop %v7619
      %v7844 = vrcp.pop %v7620
      %v7845 = vrcp.pop %v7621
      %v7846 = vrcp.pop %v7622
      %v7847 = vrcp.pop %v7623
      %v7848 = vrcp.pop %v7624
      %v7849 = vrcp.pop %v7625
      %v7850 = vrcp.pop %v7626
      %v7851 = vrcp.pop %v7627
      %v7852 = vrcp.pop %v7628
      %v7853 = vrcp.pop %v7629
      %v7854 = vrcp.pop %v7630
      %v7855 = vrcp.pop %v7631
      %v7856 = vrcp.pop %v7632
      %v7857 = vrcp.pop %v7633
      %v7858 = vrcp.pop %v7634
      %v7859 = vrcp.pop %v7635
      %v7860 = vrcp.pop %v7636
      %v7861 = vrcp.pop %v7637
      %v7862 = vrcp.pop %v7638
      %v7863 = vrcp.pop %v7639
      %v7864 = vrcp.pop %v7640
      %v7865 = vrcp.pop %v7641
      %v7866 = vrcp.pop %v7642
      %v7867 = vrcp.pop %v7643
      %v7868 = vrcp.pop %v7644
      %v7869 = vrcp.pop %v7645
      %v7870 = vrcp.pop %v7646
      %v7871 = vrcp.pop %v7647
      %v7872 = vrcp.pop %v7648
      %v7873 = vrcp.pop %v7649
      %v7874 = vrcp.pop %v7650
      %v7875 = vrcp.pop %v7651
      %v7876 = vrcp.pop %v7652
      %v7877 = vrcp.pop %v7653
      %v7878 = vrcp.pop %v7654
      %v7879 = vrcp.pop %v7655
      %v7880 = vrcp.pop %v7656
      %v7881 = vrcp.pop %v7657
      %v7882 = vrcp.pop %v7658
      %v7883 = vrcp.pop %v7659
      %v7884 = vrcp.pop %v7660
      %v7885 = vrcp.pop %v7661
      %v7886 = vrcp.pop %v7662
      %v7887 = vrcp.pop %v7663
      %v7888 = vrcp.pop %v7664
      %v7889 = vrcp.pop %v7665
      %v7890 = vrcp.pop %v7666
      %v7891 = vrcp.pop %v7667
      %v7892 = vrcp.pop %v7668
      %v7893 = vrcp.pop %v7669
      %v7894 = vrcp.pop %v7670
      %v7895 = vrcp.pop %v7671
      %v7896 = vrcp.pop %v7672
      %v7897 = vrcp.pop %v7673
      %v7898 = vrcp.pop %v7674
      %v7899 = vrcp.pop %v7675
      %v7900 = vrcp.pop %v7676
      %v7901 = vrcp.pop %v7677
      %v7902 = vrcp.pop %v7678
      %v7903 = vrcp.pop %v7679
      %v7904 = vrcp.pop %v7680
      %v7905 = vrcp.pop %v7681
      %v7906 = vrcp.pop %v7682
      %v7907 = vrcp.pop %v7683
      %v7908 = vrcp.pop %v7684
      %v7909 = vrcp.pop %v7685
      %v7910 = vrcp.pop %v7686
      %v7911 = vrcp.pop %v7687
      %v7912 = vrcp.pop %v7688
      %v7913 = vrcp.pop %v7689
      %v7914 = vrcp.pop %v7690
      %v7915 = vrcp.pop %v7691
      %v7916 = vrcp.pop %v7692
      %v7917 = vrcp.pop %v7693
      %v7918 = vrcp.pop %v7694
      %v7919 = vrcp.pop %v7695
      %v7920 = vrcp.pop %v7696
      %v7921 = vrcp.pop %v7697
      %v7922 = vrcp.pop %v7698
      %v7923 = vrcp.pop %v7699
      %v7924 = vrcp.pop %v7700
      %v7925 = vrcp.pop %v7701
      %v7926 = vrcp.pop %v7702
      %v7927 = vrcp.pop %v7703
      %v7928 = vrcp.pop %v7704
      %v7929 = vrcp.pop %v7705
      %v7930 = vrcp.pop %v7706
      %v7931 = vrcp.pop %v7707
      %v7932 = vrcp.pop %v7708
      %v7933 = vrcp.pop %v7709
      %v7934 = vrcp.pop %v7710
      %v7935 = vrcp.pop %v7711
      %v7936 = vrcp.pop %v7712
      %v7937 = vrcp.pop %v7713
      %v7938 = vrcp.pop %v7714
      %v7939 = vrcp.pop %v7715
      %v7940 = vrcp.pop %v7716
      %v7941 = vrcp.pop %v7717
      %v7942 = vrcp.pop %v7718
      %v7943 = vrcp.pop %v7719
      %v7944 = vrcp.pop %v7720
      %v7945 = vrcp.pop %v7721
      %v7946 = vrcp.pop %v7722
      %v7947 = vrcp.pop %v7723
      %v7948 = vrcp.pop %v7724
      %v7949 = vrcp.pop %v7725
      %v7950 = vrcp.pop %v7726
      %v7951 = vrcp.pop %v7727
      %v7952 = vrcp.pop %v7728
      %v7953 = vrcp.pop %v7729
      %v7954 = vrcp.pop %v7730
      %v7955 = vrcp.pop %v7731
      %v7956 = vrcp.pop %v7732
      %v7957 = vrcp.pop %v7733
      %v7958 = vrcp.pop %v7734
      %v7959 = vrcp.pop %v7735
      %v7960 = vrcp.pop %v7736
      %v7961 = vrcp.pop %v7737
      %v7962 = vrcp.pop %v7738
      %v7963 = vrcp.pop %v7739
      %v7964 = vrcp.pop %v7740
      %v7965 = vrcp.pop %v7741
      %v7966 = vrcp.pop %v7742
      %v7967 = vrcp.pop %v7743
      %v7968 = vrcp.pop %v7744
      %v7969 = vrcp.pop %v7745
      %v7970 = vrcp.pop %v7746
      %v7971 = vrcp.pop %v7747
      %v7972 = vrcp.pop %v7748
      %v7973 = vrcp.pop %v7749
      %v7974 = vrcp.pop %v7750
      %v7975 = vrcp.pop %v7751
      %v7976 = vrcp.pop %v7752
      %v7977 = vrcp.pop %v7753
      %v7978 = vrcp.pop %v7754
      %v7979 = vrcp.pop %v7755
      %v7980 = vrcp.pop %v7756
      %v7981 = vrcp.pop %v7757
      %v7982 = vrcp.pop %v7758
      %v7983 = vrcp.pop %v7759
      %v7984 = vrcp.pop %v7760
      %v7985 = vrcp.pop %v7761
      %v7986 = vrcp.pop %v7762
      %v7987 = vrcp.pop %v7763
      %v7988 = vrcp.pop %v7764
      %v7989 = vrcp.pop %v7765
      %v7990 = vrcp.pop %v7766
      %v7991 = vrcp.pop %v7767
      %v7992 = vrcp.pop %v7768
      %v7993 = vrcp.pop %v7769
      %v7994 = vrcp.pop %v7770
      %v7995 = vrcp.pop %v7771
      %v7996 = vrcp.pop %v7772
      %v7997 = vrcp.pop %v7773
      %v7998 = vrcp.pop %v7774
      %v7999 = vrcp.pop %v7775
      %v8000 = vrcp.pop %v7776
      %v8001 = vrcp.pop %v7777
      %v8002 = vrcp.pop %v7778
      %v8003 = vrcp.pop %v7779
      %v8004 = vrcp.pop %v7780
      %v8005 = vrcp.pop %v7781
      %v8006 = vrcp.pop %v7782
      %v8007 = vrcp.pop %v7783
      %v8008 = vrcp.pop %v7784
      %v8009 = vrcp.pop %v7785
      %v8010 = vrcp.pop %v7786
      %v8011 = vrcp.pop %v7787
      %v8012 = vrcp.pop %v7788
      %v8013 = vrcp.pop %v7789
      %v8014 = vrcp.pop %v7790
      %v8015 = vrcp.pop %v7791
      %v8016 = vrcp.pop %v7792
      %v8017 = vrcp.pop %v7793
      %v8018 = vrcp.pop %v7794
      %v8019 = vrcp.pop %v7795
      %v8020 = vrcp.pop %v7796
      %v8021 = vrcp.pop %v7797
      %v8022 = vrcp.pop %v7798
      %v8023 = vrcp.pop %v7799
      %v8024 = vrcp.pop %v7800
      %v8025 = vrcp.pop %v7801
      %v8026 = vrcp.pop %v7802
      %v8027 = vrcp.pop %v7803
      %v8028 = vrcp.pop %v7804
      %v8029 = vrcp.pop %v7805
      %v8030 = vrcp.pop %v7806
      %v8031 = vrcp.pop %v7807
      %v8032 = vrcp.pop %v7808
      %v8033 = vrcp.pop %v7809
      %v8034 = vrcp.pop %v7810
      %v8035 = vrcp.pop %v7811
      %v8036 = vrcp.pop %v7812
      %v8037 = vrcp.pop %v7813
      %v8038 = vrcp.pop %v7814
      %v8039 = vrcp.pop %v7815
      %v8040 = vrcp.pop %v7816
      %v8041 = vpack.c.bf16 %v7824, %v7817
      %v8042 = vpack.c.bf16 %v7825, %v7818
      %v8043 = vpack.c.bf16 %v7826, %v7819
      %v8044 = vpack.c.bf16 %v7827, %v7820
      %v8045 = vpack.c.bf16 %v7828, %v7821
      %v8046 = vpack.c.bf16 %v7829, %v7822
      %v8047 = vpack.c.bf16 %v7830, %v7823
      %v8048 = vpack.c.bf16 %v7838, %v7831
      %v8049 = vpack.c.bf16 %v7839, %v7832
      %v8050 = vpack.c.bf16 %v7840, %v7833
      %v8051 = vpack.c.bf16 %v7841, %v7834
      %v8052 = vpack.c.bf16 %v7842, %v7835
      %v8053 = vpack.c.bf16 %v7843, %v7836
      %v8054 = vpack.c.bf16 %v7844, %v7837
      %v8055 = vpack.c.bf16 %v7852, %v7845
      %v8056 = vpack.c.bf16 %v7853, %v7846
      %v8057 = vpack.c.bf16 %v7854, %v7847
      %v8058 = vpack.c.bf16 %v7855, %v7848
      %v8059 = vpack.c.bf16 %v7856, %v7849
      %v8060 = vpack.c.bf16 %v7857, %v7850
      %v8061 = vpack.c.bf16 %v7858, %v7851
      %v8062 = vpack.c.bf16 %v7866, %v7859
      %v8063 = vpack.c.bf16 %v7867, %v7860
      %v8064 = vpack.c.bf16 %v7868, %v7861
      %v8065 = vpack.c.bf16 %v7869, %v7862
      %v8066 = vpack.c.bf16 %v7870, %v7863
      %v8067 = vpack.c.bf16 %v7871, %v7864
      %v8068 = vpack.c.bf16 %v7872, %v7865
      %v8069 = vpack.c.bf16 %v7880, %v7873
      %v8070 = vpack.c.bf16 %v7881, %v7874
      %v8071 = vpack.c.bf16 %v7882, %v7875
      %v8072 = vpack.c.bf16 %v7883, %v7876
      %v8073 = vpack.c.bf16 %v7884, %v7877
      %v8074 = vpack.c.bf16 %v7885, %v7878
      %v8075 = vpack.c.bf16 %v7886, %v7879
      %v8076 = vpack.c.bf16 %v7894, %v7887
      %v8077 = vpack.c.bf16 %v7895, %v7888
      %v8078 = vpack.c.bf16 %v7896, %v7889
      %v8079 = vpack.c.bf16 %v7897, %v7890
      %v8080 = vpack.c.bf16 %v7898, %v7891
      %v8081 = vpack.c.bf16 %v7899, %v7892
      %v8082 = vpack.c.bf16 %v7900, %v7893
      %v8083 = vpack.c.bf16 %v7908, %v7901
      %v8084 = vpack.c.bf16 %v7909, %v7902
      %v8085 = vpack.c.bf16 %v7910, %v7903
      %v8086 = vpack.c.bf16 %v7911, %v7904
      %v8087 = vpack.c.bf16 %v7912, %v7905
      %v8088 = vpack.c.bf16 %v7913, %v7906
      %v8089 = vpack.c.bf16 %v7914, %v7907
      %v8090 = vpack.c.bf16 %v7922, %v7915
      %v8091 = vpack.c.bf16 %v7923, %v7916
      %v8092 = vpack.c.bf16 %v7924, %v7917
      %v8093 = vpack.c.bf16 %v7925, %v7918
      %v8094 = vpack.c.bf16 %v7926, %v7919
      %v8095 = vpack.c.bf16 %v7927, %v7920
      %v8096 = vpack.c.bf16 %v7928, %v7921
      %v8097 = vpack.c.bf16 %v7936, %v7929
      %v8098 = vpack.c.bf16 %v7937, %v7930
      %v8099 = vpack.c.bf16 %v7938, %v7931
      %v8100 = vpack.c.bf16 %v7939, %v7932
      %v8101 = vpack.c.bf16 %v7940, %v7933
      %v8102 = vpack.c.bf16 %v7941, %v7934
      %v8103 = vpack.c.bf16 %v7942, %v7935
      %v8104 = vpack.c.bf16 %v7950, %v7943
      %v8105 = vpack.c.bf16 %v7951, %v7944
      %v8106 = vpack.c.bf16 %v7952, %v7945
      %v8107 = vpack.c.bf16 %v7953, %v7946
      %v8108 = vpack.c.bf16 %v7954, %v7947
      %v8109 = vpack.c.bf16 %v7955, %v7948
      %v8110 = vpack.c.bf16 %v7956, %v7949
      %v8111 = vpack.c.bf16 %v7964, %v7957
      %v8112 = vpack.c.bf16 %v7965, %v7958
      %v8113 = vpack.c.bf16 %v7966, %v7959
      %v8114 = vpack.c.bf16 %v7967, %v7960
      %v8115 = vpack.c.bf16 %v7968, %v7961
      %v8116 = vpack.c.bf16 %v7969, %v7962
      %v8117 = vpack.c.bf16 %v7970, %v7963
      %v8118 = vpack.c.bf16 %v7978, %v7971
      %v8119 = vpack.c.bf16 %v7979, %v7972
      %v8120 = vpack.c.bf16 %v7980, %v7973
      %v8121 = vpack.c.bf16 %v7981, %v7974
      %v8122 = vpack.c.bf16 %v7982, %v7975
      %v8123 = vpack.c.bf16 %v7983, %v7976
      %v8124 = vpack.c.bf16 %v7984, %v7977
      %v8125 = vpack.c.bf16 %v7992, %v7985
      %v8126 = vpack.c.bf16 %v7993, %v7986
      %v8127 = vpack.c.bf16 %v7994, %v7987
      %v8128 = vpack.c.bf16 %v7995, %v7988
      %v8129 = vpack.c.bf16 %v7996, %v7989
      %v8130 = vpack.c.bf16 %v7997, %v7990
      %v8131 = vpack.c.bf16 %v7998, %v7991
      %v8132 = vpack.c.bf16 %v8006, %v7999
      %v8133 = vpack.c.bf16 %v8007, %v8000
      %v8134 = vpack.c.bf16 %v8008, %v8001
      %v8135 = vpack.c.bf16 %v8009, %v8002
      %v8136 = vpack.c.bf16 %v8010, %v8003
      %v8137 = vpack.c.bf16 %v8011, %v8004
      %v8138 = vpack.c.bf16 %v8012, %v8005
      %v8139 = vpack.c.bf16 %v8020, %v8013
      %v8140 = vpack.c.bf16 %v8021, %v8014
      %v8141 = vpack.c.bf16 %v8022, %v8015
      %v8142 = vpack.c.bf16 %v8023, %v8016
      %v8143 = vpack.c.bf16 %v8024, %v8017
      %v8144 = vpack.c.bf16 %v8025, %v8018
      %v8145 = vpack.c.bf16 %v8026, %v8019
      %v8146 = vpack.c.bf16 %v8034, %v8027
      %v8147 = vpack.c.bf16 %v8035, %v8028
      %v8148 = vpack.c.bf16 %v8036, %v8029
      %v8149 = vpack.c.bf16 %v8037, %v8030
      %v8150 = vpack.c.bf16 %v8038, %v8031
      %v8151 = vpack.c.bf16 %v8039, %v8032
      %v8152 = vpack.c.bf16 %v8040, %v8033
      %v8265 = vunpack.c.l.b16 %v8041
      %v8266 = vunpack.c.l.b16 %v8042
      %v8267 = vunpack.c.l.b16 %v8043
      %v8268 = vunpack.c.l.b16 %v8044
      %v8269 = vunpack.c.l.b16 %v8045
      %v8270 = vunpack.c.l.b16 %v8046
      %v8271 = vunpack.c.l.b16 %v8047
      %v8272 = vunpack.c.h.b16 %v8041
      %v8273 = vunpack.c.h.b16 %v8042
      %v8274 = vunpack.c.h.b16 %v8043
      %v8275 = vunpack.c.h.b16 %v8044
      %v8276 = vunpack.c.h.b16 %v8045
      %v8277 = vunpack.c.h.b16 %v8046
      %v8278 = vunpack.c.h.b16 %v8047
      %v8279 = vunpack.c.l.b16 %v8048
      %v8280 = vunpack.c.l.b16 %v8049
      %v8281 = vunpack.c.l.b16 %v8050
      %v8282 = vunpack.c.l.b16 %v8051
      %v8283 = vunpack.c.l.b16 %v8052
      %v8284 = vunpack.c.l.b16 %v8053
      %v8285 = vunpack.c.l.b16 %v8054
      %v8286 = vunpack.c.h.b16 %v8048
      %v8287 = vunpack.c.h.b16 %v8049
      %v8288 = vunpack.c.h.b16 %v8050
      %v8289 = vunpack.c.h.b16 %v8051
      %v8290 = vunpack.c.h.b16 %v8052
      %v8291 = vunpack.c.h.b16 %v8053
      %v8292 = vunpack.c.h.b16 %v8054
      %v8293 = vunpack.c.l.b16 %v8055
      %v8294 = vunpack.c.l.b16 %v8056
      %v8295 = vunpack.c.l.b16 %v8057
      %v8296 = vunpack.c.l.b16 %v8058
      %v8297 = vunpack.c.l.b16 %v8059
      %v8298 = vunpack.c.l.b16 %v8060
      %v8299 = vunpack.c.l.b16 %v8061
      %v8300 = vunpack.c.h.b16 %v8055
      %v8301 = vunpack.c.h.b16 %v8056
      %v8302 = vunpack.c.h.b16 %v8057
      %v8303 = vunpack.c.h.b16 %v8058
      %v8304 = vunpack.c.h.b16 %v8059
      %v8305 = vunpack.c.h.b16 %v8060
      %v8306 = vunpack.c.h.b16 %v8061
      %v8307 = vunpack.c.l.b16 %v8062
      %v8308 = vunpack.c.l.b16 %v8063
      %v8309 = vunpack.c.l.b16 %v8064
      %v8310 = vunpack.c.l.b16 %v8065
      %v8311 = vunpack.c.l.b16 %v8066
      %v8312 = vunpack.c.l.b16 %v8067
      %v8313 = vunpack.c.l.b16 %v8068
      %v8314 = vunpack.c.h.b16 %v8062
      %v8315 = vunpack.c.h.b16 %v8063
      %v8316 = vunpack.c.h.b16 %v8064
      %v8317 = vunpack.c.h.b16 %v8065
      %v8318 = vunpack.c.h.b16 %v8066
      %v8319 = vunpack.c.h.b16 %v8067
      %v8320 = vunpack.c.h.b16 %v8068
      %v8321 = vunpack.c.l.b16 %v8069
      %v8322 = vunpack.c.l.b16 %v8070
      %v8323 = vunpack.c.l.b16 %v8071
      %v8324 = vunpack.c.l.b16 %v8072
      %v8325 = vunpack.c.l.b16 %v8073
      %v8326 = vunpack.c.l.b16 %v8074
      %v8327 = vunpack.c.l.b16 %v8075
      %v8328 = vunpack.c.h.b16 %v8069
      %v8329 = vunpack.c.h.b16 %v8070
      %v8330 = vunpack.c.h.b16 %v8071
      %v8331 = vunpack.c.h.b16 %v8072
      %v8332 = vunpack.c.h.b16 %v8073
      %v8333 = vunpack.c.h.b16 %v8074
      %v8334 = vunpack.c.h.b16 %v8075
      %v8335 = vunpack.c.l.b16 %v8076
      %v8336 = vunpack.c.l.b16 %v8077
      %v8337 = vunpack.c.l.b16 %v8078
      %v8338 = vunpack.c.l.b16 %v8079
      %v8339 = vunpack.c.l.b16 %v8080
      %v8340 = vunpack.c.l.b16 %v8081
      %v8341 = vunpack.c.l.b16 %v8082
      %v8342 = vunpack.c.h.b16 %v8076
      %v8343 = vunpack.c.h.b16 %v8077
      %v8344 = vunpack.c.h.b16 %v8078
      %v8345 = vunpack.c.h.b16 %v8079
      %v8346 = vunpack.c.h.b16 %v8080
      %v8347 = vunpack.c.h.b16 %v8081
      %v8348 = vunpack.c.h.b16 %v8082
      %v8349 = vunpack.c.l.b16 %v8083
      %v8350 = vunpack.c.l.b16 %v8084
      %v8351 = vunpack.c.l.b16 %v8085
      %v8352 = vunpack.c.l.b16 %v8086
      %v8353 = vunpack.c.l.b16 %v8087
      %v8354 = vunpack.c.l.b16 %v8088
      %v8355 = vunpack.c.l.b16 %v8089
      %v8356 = vunpack.c.h.b16 %v8083
      %v8357 = vunpack.c.h.b16 %v8084
      %v8358 = vunpack.c.h.b16 %v8085
      %v8359 = vunpack.c.h.b16 %v8086
      %v8360 = vunpack.c.h.b16 %v8087
      %v8361 = vunpack.c.h.b16 %v8088
      %v8362 = vunpack.c.h.b16 %v8089
      %v8363 = vunpack.c.l.b16 %v8090
      %v8364 = vunpack.c.l.b16 %v8091
      %v8365 = vunpack.c.l.b16 %v8092
      %v8366 = vunpack.c.l.b16 %v8093
      %v8367 = vunpack.c.l.b16 %v8094
      %v8368 = vunpack.c.l.b16 %v8095
      %v8369 = vunpack.c.l.b16 %v8096
      %v8370 = vunpack.c.h.b16 %v8090
      %v8371 = vunpack.c.h.b16 %v8091
      %v8372 = vunpack.c.h.b16 %v8092
      %v8373 = vunpack.c.h.b16 %v8093
      %v8374 = vunpack.c.h.b16 %v8094
      %v8375 = vunpack.c.h.b16 %v8095
      %v8376 = vunpack.c.h.b16 %v8096
      %v8377 = vunpack.c.l.b16 %v8097
      %v8378 = vunpack.c.l.b16 %v8098
      %v8379 = vunpack.c.l.b16 %v8099
      %v8380 = vunpack.c.l.b16 %v8100
      %v8381 = vunpack.c.l.b16 %v8101
      %v8382 = vunpack.c.l.b16 %v8102
      %v8383 = vunpack.c.l.b16 %v8103
      %v8384 = vunpack.c.h.b16 %v8097
      %v8385 = vunpack.c.h.b16 %v8098
      %v8386 = vunpack.c.h.b16 %v8099
      %v8387 = vunpack.c.h.b16 %v8100
      %v8388 = vunpack.c.h.b16 %v8101
      %v8389 = vunpack.c.h.b16 %v8102
      %v8390 = vunpack.c.h.b16 %v8103
      %v8391 = vunpack.c.l.b16 %v8104
      %v8392 = vunpack.c.l.b16 %v8105
      %v8393 = vunpack.c.l.b16 %v8106
      %v8394 = vunpack.c.l.b16 %v8107
      %v8395 = vunpack.c.l.b16 %v8108
      %v8396 = vunpack.c.l.b16 %v8109
      %v8397 = vunpack.c.l.b16 %v8110
      %v8398 = vunpack.c.h.b16 %v8104
      %v8399 = vunpack.c.h.b16 %v8105
      %v8400 = vunpack.c.h.b16 %v8106
      %v8401 = vunpack.c.h.b16 %v8107
      %v8402 = vunpack.c.h.b16 %v8108
      %v8403 = vunpack.c.h.b16 %v8109
      %v8404 = vunpack.c.h.b16 %v8110
      %v8405 = vunpack.c.l.b16 %v8111
      %v8406 = vunpack.c.l.b16 %v8112
      %v8407 = vunpack.c.l.b16 %v8113
      %v8408 = vunpack.c.l.b16 %v8114
      %v8409 = vunpack.c.l.b16 %v8115
      %v8410 = vunpack.c.l.b16 %v8116
      %v8411 = vunpack.c.l.b16 %v8117
      %v8412 = vunpack.c.h.b16 %v8111
      %v8413 = vunpack.c.h.b16 %v8112
      %v8414 = vunpack.c.h.b16 %v8113
      %v8415 = vunpack.c.h.b16 %v8114
      %v8416 = vunpack.c.h.b16 %v8115
      %v8417 = vunpack.c.h.b16 %v8116
      %v8418 = vunpack.c.h.b16 %v8117
      %v8419 = vunpack.c.l.b16 %v8118
      %v8420 = vunpack.c.l.b16 %v8119
      %v8421 = vunpack.c.l.b16 %v8120
      %v8422 = vunpack.c.l.b16 %v8121
      %v8423 = vunpack.c.l.b16 %v8122
      %v8424 = vunpack.c.l.b16 %v8123
      %v8425 = vunpack.c.l.b16 %v8124
      %v8426 = vunpack.c.h.b16 %v8118
      %v8427 = vunpack.c.h.b16 %v8119
      %v8428 = vunpack.c.h.b16 %v8120
      %v8429 = vunpack.c.h.b16 %v8121
      %v8430 = vunpack.c.h.b16 %v8122
      %v8431 = vunpack.c.h.b16 %v8123
      %v8432 = vunpack.c.h.b16 %v8124
      %v8433 = vunpack.c.l.b16 %v8125
      %v8434 = vunpack.c.l.b16 %v8126
      %v8435 = vunpack.c.l.b16 %v8127
      %v8436 = vunpack.c.l.b16 %v8128
      %v8437 = vunpack.c.l.b16 %v8129
      %v8438 = vunpack.c.l.b16 %v8130
      %v8439 = vunpack.c.l.b16 %v8131
      %v8440 = vunpack.c.h.b16 %v8125
      %v8441 = vunpack.c.h.b16 %v8126
      %v8442 = vunpack.c.h.b16 %v8127
      %v8443 = vunpack.c.h.b16 %v8128
      %v8444 = vunpack.c.h.b16 %v8129
      %v8445 = vunpack.c.h.b16 %v8130
      %v8446 = vunpack.c.h.b16 %v8131
      %v8447 = vunpack.c.l.b16 %v8132
      %v8448 = vunpack.c.l.b16 %v8133
      %v8449 = vunpack.c.l.b16 %v8134
      %v8450 = vunpack.c.l.b16 %v8135
      %v8451 = vunpack.c.l.b16 %v8136
      %v8452 = vunpack.c.l.b16 %v8137
      %v8453 = vunpack.c.l.b16 %v8138
      %v8454 = vunpack.c.h.b16 %v8132
      %v8455 = vunpack.c.h.b16 %v8133
      %v8456 = vunpack.c.h.b16 %v8134
      %v8457 = vunpack.c.h.b16 %v8135
      %v8458 = vunpack.c.h.b16 %v8136
      %v8459 = vunpack.c.h.b16 %v8137
      %v8460 = vunpack.c.h.b16 %v8138
      %v8461 = vunpack.c.l.b16 %v8139
      %v8462 = vunpack.c.l.b16 %v8140
      %v8463 = vunpack.c.l.b16 %v8141
      %v8464 = vunpack.c.l.b16 %v8142
      %v8465 = vunpack.c.l.b16 %v8143
      %v8466 = vunpack.c.l.b16 %v8144
      %v8467 = vunpack.c.l.b16 %v8145
      %v8468 = vunpack.c.h.b16 %v8139
      %v8469 = vunpack.c.h.b16 %v8140
      %v8470 = vunpack.c.h.b16 %v8141
      %v8471 = vunpack.c.h.b16 %v8142
      %v8472 = vunpack.c.h.b16 %v8143
      %v8473 = vunpack.c.h.b16 %v8144
      %v8474 = vunpack.c.h.b16 %v8145
      %v8475 = vunpack.c.l.b16 %v8146
      %v8476 = vunpack.c.l.b16 %v8147
      %v8477 = vunpack.c.l.b16 %v8148
      %v8478 = vunpack.c.l.b16 %v8149
      %v8479 = vunpack.c.l.b16 %v8150
      %v8480 = vunpack.c.l.b16 %v8151
      %v8481 = vunpack.c.l.b16 %v8152
      %v8482 = vunpack.c.h.b16 %v8146
      %v8483 = vunpack.c.h.b16 %v8147
      %v8484 = vunpack.c.h.b16 %v8148
      %v8485 = vunpack.c.h.b16 %v8149
      %v8486 = vunpack.c.h.b16 %v8150
      %v8487 = vunpack.c.h.b16 %v8151
      %v8488 = vunpack.c.h.b16 %v8152
      %v8489 = vpack.c.b16 %v8266, %v8265
      %v8490 = vpack.c.b16 %v8268, %v8267
      %v8491 = vpack.c.b16 %v8270, %v8269
      %v8492 = vpack.c.b16 %v8271, %v8271
      %v8493 = vpack.c.b16 %v8273, %v8272
      %v8494 = vpack.c.b16 %v8275, %v8274
      %v8495 = vpack.c.b16 %v8277, %v8276
      %v8496 = vpack.c.b16 %v8278, %v8278
      %v8497 = vpack.c.b16 %v8280, %v8279
      %v8498 = vpack.c.b16 %v8282, %v8281
      %v8499 = vpack.c.b16 %v8284, %v8283
      %v8500 = vpack.c.b16 %v8285, %v8285
      %v8501 = vpack.c.b16 %v8287, %v8286
      %v8502 = vpack.c.b16 %v8289, %v8288
      %v8503 = vpack.c.b16 %v8291, %v8290
      %v8504 = vpack.c.b16 %v8292, %v8292
      %v8505 = vpack.c.b16 %v8294, %v8293
      %v8506 = vpack.c.b16 %v8296, %v8295
      %v8507 = vpack.c.b16 %v8298, %v8297
      %v8508 = vpack.c.b16 %v8299, %v8299
      %v8509 = vpack.c.b16 %v8301, %v8300
      %v8510 = vpack.c.b16 %v8303, %v8302
      %v8511 = vpack.c.b16 %v8305, %v8304
      %v8512 = vpack.c.b16 %v8306, %v8306
      %v8513 = vpack.c.b16 %v8308, %v8307
      %v8514 = vpack.c.b16 %v8310, %v8309
      %v8515 = vpack.c.b16 %v8312, %v8311
      %v8516 = vpack.c.b16 %v8313, %v8313
      %v8517 = vpack.c.b16 %v8315, %v8314
      %v8518 = vpack.c.b16 %v8317, %v8316
      %v8519 = vpack.c.b16 %v8319, %v8318
      %v8520 = vpack.c.b16 %v8320, %v8320
      %v8521 = vpack.c.b16 %v8322, %v8321
      %v8522 = vpack.c.b16 %v8324, %v8323
      %v8523 = vpack.c.b16 %v8326, %v8325
      %v8524 = vpack.c.b16 %v8327, %v8327
      %v8525 = vpack.c.b16 %v8329, %v8328
      %v8526 = vpack.c.b16 %v8331, %v8330
      %v8527 = vpack.c.b16 %v8333, %v8332
      %v8528 = vpack.c.b16 %v8334, %v8334
      %v8529 = vpack.c.b16 %v8336, %v8335
      %v8530 = vpack.c.b16 %v8338, %v8337
      %v8531 = vpack.c.b16 %v8340, %v8339
      %v8532 = vpack.c.b16 %v8341, %v8341
      %v8533 = vpack.c.b16 %v8343, %v8342
      %v8534 = vpack.c.b16 %v8345, %v8344
      %v8535 = vpack.c.b16 %v8347, %v8346
      %v8536 = vpack.c.b16 %v8348, %v8348
      %v8537 = vpack.c.b16 %v8350, %v8349
      %v8538 = vpack.c.b16 %v8352, %v8351
      %v8539 = vpack.c.b16 %v8354, %v8353
      %v8540 = vpack.c.b16 %v8355, %v8355
      %v8541 = vpack.c.b16 %v8357, %v8356
      %v8542 = vpack.c.b16 %v8359, %v8358
      %v8543 = vpack.c.b16 %v8361, %v8360
      %v8544 = vpack.c.b16 %v8362, %v8362
      %v8545 = vpack.c.b16 %v8364, %v8363
      %v8546 = vpack.c.b16 %v8366, %v8365
      %v8547 = vpack.c.b16 %v8368, %v8367
      %v8548 = vpack.c.b16 %v8369, %v8369
      %v8549 = vpack.c.b16 %v8371, %v8370
      %v8550 = vpack.c.b16 %v8373, %v8372
      %v8551 = vpack.c.b16 %v8375, %v8374
      %v8552 = vpack.c.b16 %v8376, %v8376
      %v8553 = vpack.c.b16 %v8378, %v8377
      %v8554 = vpack.c.b16 %v8380, %v8379
      %v8555 = vpack.c.b16 %v8382, %v8381
      %v8556 = vpack.c.b16 %v8383, %v8383
      %v8557 = vpack.c.b16 %v8385, %v8384
      %v8558 = vpack.c.b16 %v8387, %v8386
      %v8559 = vpack.c.b16 %v8389, %v8388
      %v8560 = vpack.c.b16 %v8390, %v8390
      %v8561 = vpack.c.b16 %v8392, %v8391
      %v8562 = vpack.c.b16 %v8394, %v8393
      %v8563 = vpack.c.b16 %v8396, %v8395
      %v8564 = vpack.c.b16 %v8397, %v8397
      %v8565 = vpack.c.b16 %v8399, %v8398
      %v8566 = vpack.c.b16 %v8401, %v8400
      %v8567 = vpack.c.b16 %v8403, %v8402
      %v8568 = vpack.c.b16 %v8404, %v8404
      %v8569 = vpack.c.b16 %v8406, %v8405
      %v8570 = vpack.c.b16 %v8408, %v8407
      %v8571 = vpack.c.b16 %v8410, %v8409
      %v8572 = vpack.c.b16 %v8411, %v8411
      %v8573 = vpack.c.b16 %v8413, %v8412
      %v8574 = vpack.c.b16 %v8415, %v8414
      %v8575 = vpack.c.b16 %v8417, %v8416
      %v8576 = vpack.c.b16 %v8418, %v8418
      %v8577 = vpack.c.b16 %v8420, %v8419
      %v8578 = vpack.c.b16 %v8422, %v8421
      %v8579 = vpack.c.b16 %v8424, %v8423
      %v8580 = vpack.c.b16 %v8425, %v8425
      %v8581 = vpack.c.b16 %v8427, %v8426
      %v8582 = vpack.c.b16 %v8429, %v8428
      %v8583 = vpack.c.b16 %v8431, %v8430
      %v8584 = vpack.c.b16 %v8432, %v8432
      %v8585 = vpack.c.b16 %v8434, %v8433
      %v8586 = vpack.c.b16 %v8436, %v8435
      %v8587 = vpack.c.b16 %v8438, %v8437
      %v8588 = vpack.c.b16 %v8439, %v8439
      %v8589 = vpack.c.b16 %v8441, %v8440
      %v8590 = vpack.c.b16 %v8443, %v8442
      %v8591 = vpack.c.b16 %v8445, %v8444
      %v8592 = vpack.c.b16 %v8446, %v8446
      %v8593 = vpack.c.b16 %v8448, %v8447
      %v8594 = vpack.c.b16 %v8450, %v8449
      %v8595 = vpack.c.b16 %v8452, %v8451
      %v8596 = vpack.c.b16 %v8453, %v8453
      %v8597 = vpack.c.b16 %v8455, %v8454
      %v8598 = vpack.c.b16 %v8457, %v8456
      %v8599 = vpack.c.b16 %v8459, %v8458
      %v8600 = vpack.c.b16 %v8460, %v8460
      %v8601 = vpack.c.b16 %v8462, %v8461
      %v8602 = vpack.c.b16 %v8464, %v8463
      %v8603 = vpack.c.b16 %v8466, %v8465
      %v8604 = vpack.c.b16 %v8467, %v8467
      %v8605 = vpack.c.b16 %v8469, %v8468
      %v8606 = vpack.c.b16 %v8471, %v8470
      %v8607 = vpack.c.b16 %v8473, %v8472
      %v8608 = vpack.c.b16 %v8474, %v8474
      %v8609 = vpack.c.b16 %v8476, %v8475
      %v8610 = vpack.c.b16 %v8478, %v8477
      %v8611 = vpack.c.b16 %v8480, %v8479
      %v8612 = vpack.c.b16 %v8481, %v8481
      %v8613 = vpack.c.b16 %v8483, %v8482
      %v8614 = vpack.c.b16 %v8485, %v8484
      %v8615 = vpack.c.b16 %v8487, %v8486
      %v8616 = vpack.c.b16 %v8488, %v8488
      %8745 = vst [vmem:[%s342] sm:$0xff] %v8489
      %8746 = vst [vmem:[%s342 + $0x8] sm:$0xff] %v8490
      %8747 = vst [vmem:[%s342 + $0x10] sm:$0xff] %v8491
      %vm8748 = vcmask 125952
      %8749 = vst.msk [vmem:[%s342 + $0x18] sm:$0xf] %vm8748, %v8492
      %8750 = vst [vmem:[%s342 + $0x1c] sm:$0xff] %v8493
      %8751 = vst [vmem:[%s342 + $0x24] sm:$0xff] %v8494
      %8752 = vst [vmem:[%s342 + $0x2c] sm:$0xff] %v8495
      %8753 = vst.msk [vmem:[%s342 + $0x34] sm:$0xf] %vm8748, %v8496
      %8754 = vst [vmem:[%s342 + $0x38] sm:$0xff] %v8497
      %8755 = vst [vmem:[%s342 + $0x40] sm:$0xff] %v8498
      %8756 = vst [vmem:[%s342 + $0x48] sm:$0xff] %v8499
      %8757 = vst.msk [vmem:[%s342 + $0x50] sm:$0xf] %vm8748, %v8500
      %8758 = vst [vmem:[%s342 + $0x54] sm:$0xff] %v8501
      %8759 = vst [vmem:[%s342 + $0x5c] sm:$0xff] %v8502
      %8760 = vst [vmem:[%s342 + $0x64] sm:$0xff] %v8503
      %8761 = vst.msk [vmem:[%s342 + $0x6c] sm:$0xf] %vm8748, %v8504
      %8762 = vst [vmem:[%s342 + $0x70] sm:$0xff] %v8505
      %8763 = vst [vmem:[%s342 + $0x78] sm:$0xff] %v8506
      %8764 = vst [vmem:[%s342 + $0x80] sm:$0xff] %v8507
      %8765 = vst.msk [vmem:[%s342 + $0x88] sm:$0xf] %vm8748, %v8508
      %8766 = vst [vmem:[%s342 + $0x8c] sm:$0xff] %v8509
      %8767 = vst [vmem:[%s342 + $0x94] sm:$0xff] %v8510
      %8768 = vst [vmem:[%s342 + $0x9c] sm:$0xff] %v8511
      %8769 = vst.msk [vmem:[%s342 + $0xa4] sm:$0xf] %vm8748, %v8512
      %8770 = vst [vmem:[%s342 + $0xa8] sm:$0xff] %v8513
      %8771 = vst [vmem:[%s342 + $0xb0] sm:$0xff] %v8514
      %8772 = vst [vmem:[%s342 + $0xb8] sm:$0xff] %v8515
      %8773 = vst.msk [vmem:[%s342 + $0xc0] sm:$0xf] %vm8748, %v8516
      %8774 = vst [vmem:[%s342 + $0xc4] sm:$0xff] %v8517
      %8775 = vst [vmem:[%s342 + $0xcc] sm:$0xff] %v8518
      %8776 = vst [vmem:[%s342 + $0xd4] sm:$0xff] %v8519
      %8777 = vst.msk [vmem:[%s342 + $0xdc] sm:$0xf] %vm8748, %v8520
      %8778 = vst [vmem:[%s342 + $0xe0] sm:$0xff] %v8521
      %8779 = vst [vmem:[%s342 + $0xe8] sm:$0xff] %v8522
      %8780 = vst [vmem:[%s342 + $0xf0] sm:$0xff] %v8523
      %8781 = vst.msk [vmem:[%s342 + $0xf8] sm:$0xf] %vm8748, %v8524
      %8782 = vst [vmem:[%s342 + $0xfc] sm:$0xff] %v8525
      %8783 = vst [vmem:[%s342 + $0x104] sm:$0xff] %v8526
      %8784 = vst [vmem:[%s342 + $0x10c] sm:$0xff] %v8527
      %8785 = vst.msk [vmem:[%s342 + $0x114] sm:$0xf] %vm8748, %v8528
      %8786 = vst [vmem:[%s342 + $0x118] sm:$0xff] %v8529
      %8787 = vst [vmem:[%s342 + $0x120] sm:$0xff] %v8530
      %8788 = vst [vmem:[%s342 + $0x128] sm:$0xff] %v8531
      %8789 = vst.msk [vmem:[%s342 + $0x130] sm:$0xf] %vm8748, %v8532
      %8790 = vst [vmem:[%s342 + $0x134] sm:$0xff] %v8533
      %8791 = vst [vmem:[%s342 + $0x13c] sm:$0xff] %v8534
      %8792 = vst [vmem:[%s342 + $0x144] sm:$0xff] %v8535
      %8793 = vst.msk [vmem:[%s342 + $0x14c] sm:$0xf] %vm8748, %v8536
      %8794 = vst [vmem:[%s342 + $0x150] sm:$0xff] %v8537
      %8795 = vst [vmem:[%s342 + $0x158] sm:$0xff] %v8538
      %8796 = vst [vmem:[%s342 + $0x160] sm:$0xff] %v8539
      %8797 = vst.msk [vmem:[%s342 + $0x168] sm:$0xf] %vm8748, %v8540
      %8798 = vst [vmem:[%s342 + $0x16c] sm:$0xff] %v8541
      %8799 = vst [vmem:[%s342 + $0x174] sm:$0xff] %v8542
      %8800 = vst [vmem:[%s342 + $0x17c] sm:$0xff] %v8543
      %8801 = vst.msk [vmem:[%s342 + $0x184] sm:$0xf] %vm8748, %v8544
      %8802 = vst [vmem:[%s342 + $0x188] sm:$0xff] %v8545
      %8803 = vst [vmem:[%s342 + $0x190] sm:$0xff] %v8546
      %8804 = vst [vmem:[%s342 + $0x198] sm:$0xff] %v8547
      %8805 = vst.msk [vmem:[%s342 + $0x1a0] sm:$0xf] %vm8748, %v8548
      %8806 = vst [vmem:[%s342 + $0x1a4] sm:$0xff] %v8549
      %8807 = vst [vmem:[%s342 + $0x1ac] sm:$0xff] %v8550
      %8808 = vst [vmem:[%s342 + $0x1b4] sm:$0xff] %v8551
      %8809 = vst.msk [vmem:[%s342 + $0x1bc] sm:$0xf] %vm8748, %v8552
      %8810 = vst [vmem:[%s342 + $0x1c0] sm:$0xff] %v8553
      %8811 = vst [vmem:[%s342 + $0x1c8] sm:$0xff] %v8554
      %8812 = vst [vmem:[%s342 + $0x1d0] sm:$0xff] %v8555
      %8813 = vst.msk [vmem:[%s342 + $0x1d8] sm:$0xf] %vm8748, %v8556
      %8814 = vst [vmem:[%s342 + $0x1dc] sm:$0xff] %v8557
      %8815 = vst [vmem:[%s342 + $0x1e4] sm:$0xff] %v8558
      %8816 = vst [vmem:[%s342 + $0x1ec] sm:$0xff] %v8559
      %8817 = vst.msk [vmem:[%s342 + $0x1f4] sm:$0xf] %vm8748, %v8560
      %8818 = vst [vmem:[%s342 + $0x1f8] sm:$0xff] %v8561
      %8819 = vst [vmem:[%s342 + $0x200] sm:$0xff] %v8562
      %8820 = vst [vmem:[%s342 + $0x208] sm:$0xff] %v8563
      %8821 = vst.msk [vmem:[%s342 + $0x210] sm:$0xf] %vm8748, %v8564
      %8822 = vst [vmem:[%s342 + $0x214] sm:$0xff] %v8565
      %8823 = vst [vmem:[%s342 + $0x21c] sm:$0xff] %v8566
      %8824 = vst [vmem:[%s342 + $0x224] sm:$0xff] %v8567
      %8825 = vst.msk [vmem:[%s342 + $0x22c] sm:$0xf] %vm8748, %v8568
      %8826 = vst [vmem:[%s342 + $0x230] sm:$0xff] %v8569
      %8827 = vst [vmem:[%s342 + $0x238] sm:$0xff] %v8570
      %8828 = vst [vmem:[%s342 + $0x240] sm:$0xff] %v8571
      %8829 = vst.msk [vmem:[%s342 + $0x248] sm:$0xf] %vm8748, %v8572
      %8830 = vst [vmem:[%s342 + $0x24c] sm:$0xff] %v8573
      %8831 = vst [vmem:[%s342 + $0x254] sm:$0xff] %v8574
      %8832 = vst [vmem:[%s342 + $0x25c] sm:$0xff] %v8575
      %8833 = vst.msk [vmem:[%s342 + $0x264] sm:$0xf] %vm8748, %v8576
      %8834 = vst [vmem:[%s342 + $0x268] sm:$0xff] %v8577
      %8835 = vst [vmem:[%s342 + $0x270] sm:$0xff] %v8578
      %8836 = vst [vmem:[%s342 + $0x278] sm:$0xff] %v8579
      %8837 = vst.msk [vmem:[%s342 + $0x280] sm:$0xf] %vm8748, %v8580
      %8838 = vst [vmem:[%s342 + $0x284] sm:$0xff] %v8581
      %8839 = vst [vmem:[%s342 + $0x28c] sm:$0xff] %v8582
      %8840 = vst [vmem:[%s342 + $0x294] sm:$0xff] %v8583
      %8841 = vst.msk [vmem:[%s342 + $0x29c] sm:$0xf] %vm8748, %v8584
      %8842 = vst [vmem:[%s342 + $0x2a0] sm:$0xff] %v8585
      %8843 = vst [vmem:[%s342 + $0x2a8] sm:$0xff] %v8586
      %8844 = vst [vmem:[%s342 + $0x2b0] sm:$0xff] %v8587
      %8845 = vst.msk [vmem:[%s342 + $0x2b8] sm:$0xf] %vm8748, %v8588
      %8846 = vst [vmem:[%s342 + $0x2bc] sm:$0xff] %v8589
      %8847 = vst [vmem:[%s342 + $0x2c4] sm:$0xff] %v8590
      %8848 = vst [vmem:[%s342 + $0x2cc] sm:$0xff] %v8591
      %8849 = vst.msk [vmem:[%s342 + $0x2d4] sm:$0xf] %vm8748, %v8592
      %8850 = vst [vmem:[%s342 + $0x2d8] sm:$0xff] %v8593
      %8851 = vst [vmem:[%s342 + $0x2e0] sm:$0xff] %v8594
      %8852 = vst [vmem:[%s342 + $0x2e8] sm:$0xff] %v8595
      %8853 = vst.msk [vmem:[%s342 + $0x2f0] sm:$0xf] %vm8748, %v8596
      %8854 = vst [vmem:[%s342 + $0x2f4] sm:$0xff] %v8597
      %8855 = vst [vmem:[%s342 + $0x2fc] sm:$0xff] %v8598
      %8856 = vst [vmem:[%s342 + $0x304] sm:$0xff] %v8599
      %8857 = vst.msk [vmem:[%s342 + $0x30c] sm:$0xf] %vm8748, %v8600
      %8858 = vst [vmem:[%s342 + $0x310] sm:$0xff] %v8601
      %8859 = vst [vmem:[%s342 + $0x318] sm:$0xff] %v8602
      %8860 = vst [vmem:[%s342 + $0x320] sm:$0xff] %v8603
      %8861 = vst.msk [vmem:[%s342 + $0x328] sm:$0xf] %vm8748, %v8604
      %8862 = vst [vmem:[%s342 + $0x32c] sm:$0xff] %v8605
      %8863 = vst [vmem:[%s342 + $0x334] sm:$0xff] %v8606
      %8864 = vst [vmem:[%s342 + $0x33c] sm:$0xff] %v8607
      %8865 = vst.msk [vmem:[%s342 + $0x344] sm:$0xf] %vm8748, %v8608
      %8866 = vst [vmem:[%s342 + $0x348] sm:$0xff] %v8609
      %8867 = vst [vmem:[%s342 + $0x350] sm:$0xff] %v8610
      %8868 = vst [vmem:[%s342 + $0x358] sm:$0xff] %v8611
      %8869 = vst.msk [vmem:[%s342 + $0x360] sm:$0xf] %vm8748, %v8612
      %8870 = vst [vmem:[%s342 + $0x364] sm:$0xff] %v8613
      %8871 = vst [vmem:[%s342 + $0x36c] sm:$0xff] %v8614
      %8872 = vst [vmem:[%s342 + $0x374] sm:$0xff] %v8615
      %8873 = vst.msk [vmem:[%s342 + $0x37c] sm:$0xf] %vm8748, %v8616
      %s8874 = smul.u32 32, %s20
      %p8875 = scmp.lt.s32.totalorder %s8874, 63
      %s8876 = scalar_select %p8875, %s8874, 63
      %s8877 = smul.addr %s8876, 7
      %s8878 = smul.addr %s8877, 4
      %s8879 = scalar_lea.vmem %s7, %s8878
      %s8880 = smul.u32 32, %s20
      %p8881 = scmp.lt.s32.totalorder %s8880, 63
      %s8882 = scalar_select %p8881, %s8880, 63
      %s8883 = smul.addr %s8882, 8
      %s8884 = scalar_lea.vmem %s8, %s8883
      // Predicated region
      $region49: #{vae_forward.1} parent=47 // pred_check
        %p8885 = pneg %p195
      $region50: #{vae_forward.1} parent=47 // pred_check_branch
        %8887 = sbr.rel (%p8885) target = $region52
      $region51: #{vae_forward.1} parent=47 // pred_region
        %s8888 = smul.u32 32, %s20
      $region52: #{vae_forward.1} parent=47 // pred_fallthru
        _
      // Predicated region
      $region53: #{vae_forward.1} parent=47 // pred_check
        %p8889 = pneg %p221
      $region54: #{vae_forward.1} parent=47 // pred_check_branch
        %8891 = sbr.rel (%p8889) target = $region56
      $region55: #{vae_forward.1} parent=47 // pred_region
        %s8892 = smul.u32 32, %s20
      $region56: #{vae_forward.1} parent=47 // pred_fallthru
        _
    $region48: #{vae_forward.1} parent=5 // pred_fallthru
      _
    %p8893 = scmp.le.s32.totalorder 2, %s15
    // Predicated region
    $region57: #{vae_forward.1} parent=5 // pred_check
      %p8894 = pneg %p8893
    $region58: #{vae_forward.1} parent=5 // pred_check_branch
      %8896 = sbr.rel (%p8894) target = $region60
    $region59: #{vae_forward.1} parent=5 // pred_region
      %s8897 = ssub.s32 %s15, 2
      // Predicated region
      $region61: #{vae_forward.1} parent=59 // pred_check
        %p8898 = pneg %p201
      $region62: #{vae_forward.1} parent=59 // pred_check_branch
        %8900 = sbr.rel (%p8898) target = $region64
      $region63: #{vae_forward.1} parent=59 // pred_region
        %s8901 = smul.u32 32, %s21
        %p8902 = scmp.lt.s32.totalorder %s8901, 63
        %s8903 = scalar_select %p8902, %s8901, 63
        %s8904 = smul.addr %s8903, 7
        %s8905 = smul.addr %s8904, 4
        %s8906 = scalar_lea.vmem %s7, %s8905
      $region64: #{vae_forward.1} parent=59 // pred_fallthru
        _
      // Predicated region
      $region65: #{vae_forward.1} parent=59 // pred_check
        %p8907 = pneg %p227
      $region66: #{vae_forward.1} parent=59 // pred_check_branch
        %8909 = sbr.rel (%p8907) target = $region68
      $region67: #{vae_forward.1} parent=59 // pred_region
        %s8910 = smul.u32 32, %s21
        %p8911 = scmp.lt.s32.totalorder %s8910, 63
        %s8912 = scalar_select %p8911, %s8910, 63
        %s8913 = smul.addr %s8912, 8
        %s8914 = scalar_lea.vmem %s8, %s8913
      $region68: #{vae_forward.1} parent=59 // pred_fallthru
        _
    $region60: #{vae_forward.1} parent=5 // pred_fallthru
      _
  $region6: #{vae_forward.1} parent=0 // loop_footer
    %s19 = sadd.s32 1, %s15
  $region7: #{vae_forward.1} parent=0 // loop_footer_branch
    %14 = sbr.rel target = $region3
  $region8: #{vae_forward.1} parent=0 // loop_exit
    _

</llo_original>
